<compile_context>
chip_gen: v7x
topology: tpu7x:2x2x1
jax: 0.10.0
libtpu: 0.0.40
codegen_flags: <defaults>
</compile_context>

<pallas_src>
import math

import jax
import jax.numpy as jnp
from jax.experimental import pallas as pl
from jax.experimental.pallas import tpu as pltpu

D_IN, D_H1, D_H2, D_OUT = 4096, 1024, 256, 20
D_OUT_PAD = 128          # lane-dense fc3 output (sliced back to 20 outside)
TK = 2048                # fc1 reduction tile -> 2 k-steps
TN_SPLIT = 512           # fc1 output split for the optional 2-TensorCore path


# ---------------------------------------------------------------------------
# Default path: one fused kernel.
#   grid = (D_IN // TK,)  -- reduction only ("arbitrary").
#   bn1 + ReLU + fc1 (bn2 folded) accumulated over k; on the last k step:
#   ReLU + fc2 (bn3 folded) + ReLU + fc3 (lane-padded), written straight to HBM.
# ---------------------------------------------------------------------------
def _mlp_fused_kernel(x_ref, s1_ref, t1_ref, w1_ref, b1_ref,
                      w2_ref, b2_ref, w3_ref, b3_ref, o_ref, acc_ref):
    k = pl.program_id(0)

    @pl.when(k == 0)
    def _():
        # Initialize the fc1 accumulator with the (bn2-folded) bias.
        acc_ref[...] = jnp.broadcast_to(b1_ref[...], acc_ref.shape)

    # bn1 (folded scale/shift) + ReLU in f32; drop1 = identity (inference).
    r = jnp.maximum(x_ref[...] * s1_ref[...] + t1_ref[...], 0.0)
    # Cast to bf16 only at the MXU input; accumulate in f32.
    acc_ref[...] += jnp.dot(r.astype(jnp.bfloat16), w1_ref[...],
                            preferred_element_type=jnp.float32)

    @pl.when(k == pl.num_programs(0) - 1)
    def _():
        r2 = jnp.maximum(acc_ref[...], 0.0)                   # relu after bn2-folded fc1
        z2 = jnp.dot(r2.astype(jnp.bfloat16), w2_ref[...],
                     preferred_element_type=jnp.float32) + b2_ref[...]
        r3 = jnp.maximum(z2, 0.0)                             # relu after bn3-folded fc2
        o_ref[...] = (jnp.dot(r3.astype(jnp.bfloat16), w3_ref[...],
                              preferred_element_type=jnp.float32)
                      + b3_ref[...]).astype(o_ref.dtype)


def _mlp_forward_fused(x, p):
    B = x.shape[0]
    n_k = D_IN // TK
    flops = 2 * B * (D_IN * D_H1 + D_H1 * D_H2 + D_H2 * D_OUT_PAD)
    bytes_accessed = (2 * (D_IN * D_H1 + D_H1 * D_H2 + D_H2 * D_OUT_PAD)  # bf16 weights
                      + 4 * B * (D_IN + D_OUT_PAD)                        # x in, out
                      + 4 * (2 * D_IN + D_H1 + D_H2 + D_OUT_PAD))         # scales/biases
    return pl.pallas_call(
        _mlp_fused_kernel,
        out_shape=jax.ShapeDtypeStruct((B, D_OUT_PAD), jnp.float32),
        grid=(n_k,),
        in_specs=[
            pl.BlockSpec((B, TK), lambda k: (0, k)),             # x
            pl.BlockSpec((1, TK), lambda k: (0, k)),             # bn1 scale
            pl.BlockSpec((1, TK), lambda k: (0, k)),             # bn1 shift
            pl.BlockSpec((TK, D_H1), lambda k: (k, 0)),          # w1 (bf16, bn2 folded)
            pl.BlockSpec((1, D_H1), lambda k: (0, 0)),           # b1 (bn2 folded)
            pl.BlockSpec((D_H1, D_H2), lambda k: (0, 0)),        # w2 (bf16, bn3 folded)
            pl.BlockSpec((1, D_H2), lambda k: (0, 0)),           # b2 (bn3 folded)
            pl.BlockSpec((D_H2, D_OUT_PAD), lambda k: (0, 0)),   # w3 (bf16, lane-padded)
            pl.BlockSpec((1, D_OUT_PAD), lambda k: (0, 0)),      # b3 (lane-padded)
        ],
        out_specs=pl.BlockSpec((B, D_OUT_PAD), lambda k: (0, 0)),
        scratch_shapes=[pltpu.VMEM((B, D_H1), jnp.float32)],
        compiler_params=pltpu.CompilerParams(
            dimension_semantics=("arbitrary",)),
        cost_estimate=pl.CostEstimate(flops=flops, transcendentals=0,
                                      bytes_accessed=bytes_accessed),
    )(x, p["s1"], p["t1"], p["w1"], p["b1"],
      p["w2"], p["b2"], p["w3"], p["b3"])


# ---------------------------------------------------------------------------
# Optional v7x path: 2-way "parallel" N split on fc1 (each TensorCore streams
# half of w1, 2 k-steps each) + a tiny head call that needs the full h1.
# ---------------------------------------------------------------------------
def _fc1_split_kernel(x_ref, s1_ref, t1_ref, w1_ref, b1_ref, h1_ref):
    k = pl.program_id(1)

    @pl.when(k == 0)
    def _():
        # Accumulate directly into the resident output block; init with bias.
        h1_ref[...] = jnp.broadcast_to(b1_ref[...], h1_ref.shape)

    r = jnp.maximum(x_ref[...] * s1_ref[...] + t1_ref[...], 0.0)
    h1_ref[...] += jnp.dot(r.astype(jnp.bfloat16), w1_ref[...],
                           preferred_element_type=jnp.float32)


def _head_kernel(h1_ref, w2_ref, b2_ref, w3_ref, b3_ref, o_ref):
    r2 = jnp.maximum(h1_ref[...], 0.0)
    z2 = jnp.dot(r2.astype(jnp.bfloat16), w2_ref[...],
                 preferred_element_type=jnp.float32) + b2_ref[...]
    r3 = jnp.maximum(z2, 0.0)
    o_ref[...] = (jnp.dot(r3.astype(jnp.bfloat16), w3_ref[...],
                          preferred_element_type=jnp.float32)
                  + b3_ref[...]).astype(o_ref.dtype)


def _mlp_forward_split(x, p):
    B = x.shape[0]

    fc1_flops = 2 * B * D_IN * D_H1
    fc1_bytes = 2 * D_IN * D_H1 + 4 * B * (D_IN + D_H1) + 4 * (2 * D_IN + D_H1)
    h1 = pl.pallas_call(
        _fc1_split_kernel,
        out_shape=jax.ShapeDtypeStruct((B, D_H1), jnp.float32),
        grid=(D_H1 // TN_SPLIT, D_IN // TK),
        in_specs=[
            pl.BlockSpec((B, TK), lambda n, k: (0, k)),          # x
            pl.BlockSpec((1, TK), lambda n, k: (0, k)),          # bn1 scale
            pl.BlockSpec((1, TK), lambda n, k: (0, k)),          # bn1 shift
            pl.BlockSpec((TK, TN_SPLIT), lambda n, k: (k, n)),   # w1 (bf16, bn2 folded)
            pl.BlockSpec((1, TN_SPLIT), lambda n, k: (0, n)),    # b1 (bn2 folded)
        ],
        out_specs=pl.BlockSpec((B, TN_SPLIT), lambda n, k: (0, n)),
        compiler_params=pltpu.CompilerParams(
            dimension_semantics=("parallel", "arbitrary")),
        cost_estimate=pl.CostEstimate(flops=fc1_flops, transcendentals=0,
                                      bytes_accessed=fc1_bytes),
    )(x, p["s1"], p["t1"], p["w1"], p["b1"])

    head_flops = 2 * B * (D_H1 * D_H2 + D_H2 * D_OUT_PAD)
    head_bytes = (2 * (D_H1 * D_H2 + D_H2 * D_OUT_PAD)
                  + 4 * B * (D_H1 + D_OUT_PAD) + 4 * (D_H2 + D_OUT_PAD))
    out_pad = pl.pallas_call(
        _head_kernel,
        out_shape=jax.ShapeDtypeStruct((B, D_OUT_PAD), jnp.float32),
        in_specs=[
            pl.BlockSpec((B, D_H1), lambda: (0, 0)),
            pl.BlockSpec((D_H1, D_H2), lambda: (0, 0)),
            pl.BlockSpec((1, D_H2), lambda: (0, 0)),
            pl.BlockSpec((D_H2, D_OUT_PAD), lambda: (0, 0)),
            pl.BlockSpec((1, D_OUT_PAD), lambda: (0, 0)),
        ],
        out_specs=pl.BlockSpec((B, D_OUT_PAD), lambda: (0, 0)),
        cost_estimate=pl.CostEstimate(flops=head_flops, transcendentals=0,
                                      bytes_accessed=head_bytes),
    )(h1, p["w2"], p["b2"], p["w3"], p["b3"])
    return out_pad


def mlp_forward(x, p, two_core_split=False):
    """x: (B, 4096) float32 feature (output of feat_net). Returns (B, 20) float32.

    two_core_split=False (default): single fused kernel, best on single-TC v5e/v6e.
    two_core_split=True: 2-way parallel fc1 split + tiny head call, best on v7x
    (2 TensorCores each stream half of w1).
    """
    if two_core_split:
        out_pad = _mlp_forward_split(x, p)
    else:
        out_pad = _mlp_forward_fused(x, p)
    return out_pad[:, :D_OUT]


# ---------------------------------------------------------------------------
# Parameter construction (matches PyTorch init) + host-side folding / casting
# ---------------------------------------------------------------------------
def _xavier_normal(key, fan_in, fan_out, gain):
    std = gain * math.sqrt(2.0 / (fan_in + fan_out))
    # stored as (in, out) so the kernel does x @ W  (== x @ W_pt.T)
    return std * jax.random.normal(key, (fan_in, fan_out), dtype=jnp.float32)


def _linear_bias(key, fan_in, fan_out):
    bound = 1.0 / math.sqrt(fan_in)
    return jax.random.uniform(key, (1, fan_out), dtype=jnp.float32,
                              minval=-bound, maxval=bound)


def _folded_bn(num_feat, eps=1e-5):
    # Freshly-initialized BatchNorm1d in eval mode:
    # gamma=1, beta=0, running_mean=0, running_var=1 -> scale=1/sqrt(1+eps), shift=0
    gamma = jnp.ones((1, num_feat), jnp.float32)
    beta = jnp.zeros((1, num_feat), jnp.float32)
    mean = jnp.zeros((1, num_feat), jnp.float32)
    var = jnp.ones((1, num_feat), jnp.float32)
    scale = gamma / jnp.sqrt(var + eps)
    shift = beta - mean * scale
    return scale, shift


def init_params(key):
    gain_relu = math.sqrt(2.0)  # nn.init.calculate_gain('relu')
    k1, k2, k3, k4, k5, k6 = jax.random.split(key, 6)
    s1, t1 = _folded_bn(D_IN)
    s2, t2 = _folded_bn(D_H1)
    s3, t3 = _folded_bn(D_H2)
    return {
        "s1": s1, "t1": t1,
        "w1": _xavier_normal(k1, D_IN, D_H1, gain_relu),
        "b1": _linear_bias(k2, D_IN, D_H1),
        "s2": s2, "t2": t2,
        "w2": _xavier_normal(k3, D_H1, D_H2, gain_relu),
        "b2": _linear_bias(k4, D_H1, D_H2),
        "s3": s3, "t3": t3,
        "w3": _xavier_normal(k5, D_H2, D_OUT, gain_relu),
        "b3": _linear_bias(k6, D_H2, D_OUT),
    }


def prepare_params(raw):
    """Fold bn2 into fc1 and bn3 into fc2, cast weights to bf16, pad fc3 lanes."""
    w1 = (raw["w1"] * raw["s2"]).astype(jnp.bfloat16)          # (4096, 1024) bf16
    b1 = raw["b1"] * raw["s2"] + raw["t2"]                     # (1, 1024) f32
    w2 = (raw["w2"] * raw["s3"]).astype(jnp.bfloat16)          # (1024, 256) bf16
    b2 = raw["b2"] * raw["s3"] + raw["t3"]                     # (1, 256) f32
    w3 = jnp.zeros((D_H2, D_OUT_PAD), jnp.float32)
    w3 = w3.at[:, :D_OUT].set(raw["w3"]).astype(jnp.bfloat16)  # (256, 128) bf16
    b3 = jnp.zeros((1, D_OUT_PAD), jnp.float32).at[:, :D_OUT].set(raw["b3"])
    return {"s1": raw["s1"], "t1": raw["t1"],
            "w1": w1, "b1": b1, "w2": w2, "b2": b2, "w3": w3, "b3": b3}


def mlp_reference(x, p):
    """Pure-JAX reference with identical quantization choices."""
    r1 = jnp.maximum(x * p["s1"] + p["t1"], 0.0)
    z1 = jnp.dot(r1.astype(jnp.bfloat16), p["w1"],
                 preferred_element_type=jnp.float32) + p["b1"]
    r2 = jnp.maximum(z1, 0.0)
    z2 = jnp.dot(r2.astype(jnp.bfloat16), p["w2"],
                 preferred_element_type=jnp.float32) + p["b2"]
    r3 = jnp.maximum(z2, 0.0)
    z3 = jnp.dot(r3.astype(jnp.bfloat16), p["w3"],
                 preferred_element_type=jnp.float32) + p["b3"]
    return z3[:, :D_OUT]


if __name__ == "__main__":
    key = jax.random.PRNGKey(0)
    k_param, k_x = jax.random.split(key)

    params = prepare_params(init_params(k_param))

    # Small batch; the 4096-d feature width is fixed by the module (bn1/fc1).
    # For real workloads, batch many (64-256) rows per call to amortize the
    # ~8.6 MiB weight fetch, which is the only expensive stream.
    B = 8
    x = jax.random.normal(k_x, (B, D_IN), dtype=jnp.float32)

    ref = jax.block_until_ready(mlp_reference(x, params))

    out_fused = jax.block_until_ready(mlp_forward(x, params, two_core_split=False))
    out_split = jax.block_until_ready(mlp_forward(x, params, two_core_split=True))

    for out in (out_fused, out_split):
        assert out.shape == (B, D_OUT) and out.dtype == jnp.float32
        assert bool(jnp.all(jnp.isfinite(out)))
        assert bool(jnp.allclose(out, ref, rtol=1e-2, atol=1e-2)), \
            float(jnp.max(jnp.abs(out - ref)))
    print("KERNEL_OK")
</pallas_src>

<mosaic_0001>
module attributes {stable_mosaic.version = 11 : i64} {
  func.func @_mlp_fused_kernel(%arg0: i32, %arg1: memref<8x2048xf32, #tpu.memory_space<vmem>>, %arg2: memref<1x2048xf32, #tpu.memory_space<vmem>>, %arg3: memref<1x2048xf32, #tpu.memory_space<vmem>>, %arg4: memref<2048x1024xbf16, #tpu.memory_space<vmem>>, %arg5: memref<1x1024xf32, #tpu.memory_space<vmem>>, %arg6: memref<1024x256xbf16, #tpu.memory_space<vmem>>, %arg7: memref<1x256xf32, #tpu.memory_space<vmem>>, %arg8: memref<256x128xbf16, #tpu.memory_space<vmem>>, %arg9: memref<1x128xf32, #tpu.memory_space<vmem>>, %arg10: memref<8x128xf32, #tpu.memory_space<vmem>>, %arg11: memref<8x1024xf32, #tpu.memory_space<vmem>>) attributes {dimension_semantics = [#tpu.dimension_semantics<arbitrary>], iteration_bounds = array<i64: 2>, scalar_prefetch = 0 : i64, scratch_operands = 1 : i64, tpu.core_type = #tpu.core_type<tc>, window_params = [{transform_indices = @transform_0, window_bounds = array<i64: 8, 2048>}, {transform_indices = @transform_1, window_bounds = array<i64: 1, 2048>}, {transform_indices = @transform_2, window_bounds = array<i64: 1, 2048>}, {transform_indices = @transform_3, window_bounds = array<i64: 2048, 1024>}, {pipeline_mode = #tpu.pipeline_mode<synchronous>, transform_indices = @transform_4, window_bounds = array<i64: 1, 1024>}, {pipeline_mode = #tpu.pipeline_mode<synchronous>, transform_indices = @transform_5, window_bounds = array<i64: 1024, 256>}, {pipeline_mode = #tpu.pipeline_mode<synchronous>, transform_indices = @transform_6, window_bounds = array<i64: 1, 256>}, {pipeline_mode = #tpu.pipeline_mode<synchronous>, transform_indices = @transform_7, window_bounds = array<i64: 256, 128>}, {pipeline_mode = #tpu.pipeline_mode<synchronous>, transform_indices = @transform_8, window_bounds = array<i64: 1, 128>}, {pipeline_mode = #tpu.pipeline_mode<synchronous>, transform_indices = @transform_9, window_bounds = array<i64: 8, 128>}]} {
    %c0_i32 = arith.constant 0 : i32
    %0 = arith.cmpi eq, %arg0, %c0_i32 : i32
    %1 = arith.extui %0 : i1 to i32
    %c0_i32_0 = arith.constant 0 : i32
    %2 = arith.cmpi ne, %1, %c0_i32_0 : i32
    scf.if %2 {
      %c0_14 = arith.constant 0 : index
      %c0_15 = arith.constant 0 : index
      %21 = vector.load %arg5[%c0_14, %c0_15] : memref<1x1024xf32, #tpu.memory_space<vmem>>, vector<1x1024xf32>
      %22 = vector.shape_cast %21 : vector<1x1024xf32> to vector<1x1024xf32>
      %23 = vector.broadcast %22 : vector<1x1024xf32> to vector<8x1024xf32>
      %c0_16 = arith.constant 0 : index
      %c0_17 = arith.constant 0 : index
      %24 = vector.load %arg11[%c0_16, %c0_17] : memref<8x1024xf32, #tpu.memory_space<vmem>>, vector<8x1024xf32>
      tpu.vector_store %arg11[%c0_16, %c0_17], %23 {strides = array<i32>} : memref<8x1024xf32, #tpu.memory_space<vmem>>, vector<8x1024xf32>,
    } else {
    }
    %c0 = arith.constant 0 : index
    %c0_1 = arith.constant 0 : index
    %3 = vector.load %arg1[%c0, %c0_1] : memref<8x2048xf32, #tpu.memory_space<vmem>>, vector<8x2048xf32>
    %c0_2 = arith.constant 0 : index
    %c0_3 = arith.constant 0 : index
    %4 = vector.load %arg2[%c0_2, %c0_3] : memref<1x2048xf32, #tpu.memory_space<vmem>>, vector<1x2048xf32>
    %5 = vector.broadcast %4 : vector<1x2048xf32> to vector<8x2048xf32>
    %6 = arith.mulf %3, %5 : vector<8x2048xf32>
    %c0_4 = arith.constant 0 : index
    %c0_5 = arith.constant 0 : index
    %7 = vector.load %arg3[%c0_4, %c0_5] : memref<1x2048xf32, #tpu.memory_space<vmem>>, vector<1x2048xf32>
    %8 = vector.broadcast %7 : vector<1x2048xf32> to vector<8x2048xf32>
    %9 = arith.addf %6, %8 : vector<8x2048xf32>
    %cst = arith.constant 0.000000e+00 : f32
    %10 = vector.broadcast %cst : f32 to vector<8x2048xf32>
    %11 = arith.maximumf %9, %10 : vector<8x2048xf32>
    %c0_6 = arith.constant 0 : index
    %c0_7 = arith.constant 0 : index
    %12 = vector.load %arg11[%c0_6, %c0_7] : memref<8x1024xf32, #tpu.memory_space<vmem>>, vector<8x1024xf32>
    %13 = arith.truncf %11 : vector<8x2048xf32> to vector<8x2048xbf16>
    %c0_8 = arith.constant 0 : index
    %c0_9 = arith.constant 0 : index
    %14 = vector.load %arg4[%c0_8, %c0_9] : memref<2048x1024xbf16, #tpu.memory_space<vmem>>, vector<2048x1024xbf16>
    %cst_10 = arith.constant dense<0.000000e+00> : vector<8x1024xf32>
    %15 = tpu.matmul %13, %14, %cst_10 {dimension_numbers = #tpu.dot_dimension_numbers<[1], [0], [0], [1], [0, 0, 1, 1], [], []>} : vector<8x2048xbf16>, vector<2048x1024xbf16>, vector<8x1024xf32> -> vector<8x1024xf32>
    %16 = arith.addf %12, %15 : vector<8x1024xf32>
    %c0_11 = arith.constant 0 : index
    %c0_12 = arith.constant 0 : index
    %17 = vector.load %arg11[%c0_11, %c0_12] : memref<8x1024xf32, #tpu.memory_space<vmem>>, vector<8x1024xf32>
    tpu.vector_store %arg11[%c0_11, %c0_12], %16 {strides = array<i32>} : memref<8x1024xf32, #tpu.memory_space<vmem>>, vector<8x1024xf32>,
    %c1_i32 = arith.constant 1 : i32
    %18 = arith.cmpi eq, %arg0, %c1_i32 : i32
    %19 = arith.extui %18 : i1 to i32
    %c0_i32_13 = arith.constant 0 : i32
    %20 = arith.cmpi ne, %19, %c0_i32_13 : i32
    scf.if %20 {
      %c0_14 = arith.constant 0 : index
      %c0_15 = arith.constant 0 : index
      %21 = vector.load %arg11[%c0_14, %c0_15] : memref<8x1024xf32, #tpu.memory_space<vmem>>, vector<8x1024xf32>
      %cst_16 = arith.constant 0.000000e+00 : f32
      %22 = vector.broadcast %cst_16 : f32 to vector<8x1024xf32>
      %23 = arith.maximumf %21, %22 : vector<8x1024xf32>
      %24 = arith.truncf %23 : vector<8x1024xf32> to vector<8x1024xbf16>
      %c0_17 = arith.constant 0 : index
      %c0_18 = arith.constant 0 : index
      %25 = vector.load %arg6[%c0_17, %c0_18] : memref<1024x256xbf16, #tpu.memory_space<vmem>>, vector<1024x256xbf16>
      %cst_19 = arith.constant dense<0.000000e+00> : vector<8x256xf32>
      %26 = tpu.matmul %24, %25, %cst_19 {dimension_numbers = #tpu.dot_dimension_numbers<[1], [0], [0], [1], [0, 0, 1, 1], [], []>} : vector<8x1024xbf16>, vector<1024x256xbf16>, vector<8x256xf32> -> vector<8x256xf32>
      %c0_20 = arith.constant 0 : index
      %c0_21 = arith.constant 0 : index
      %27 = vector.load %arg7[%c0_20, %c0_21] : memref<1x256xf32, #tpu.memory_space<vmem>>, vector<1x256xf32>
      %28 = vector.broadcast %27 : vector<1x256xf32> to vector<8x256xf32>
      %29 = arith.addf %26, %28 : vector<8x256xf32>
      %cst_22 = arith.constant 0.000000e+00 : f32
      %30 = vector.broadcast %cst_22 : f32 to vector<8x256xf32>
      %31 = arith.maximumf %29, %30 : vector<8x256xf32>
      %32 = arith.truncf %31 : vector<8x256xf32> to vector<8x256xbf16>
      %c0_23 = arith.constant 0 : index
      %c0_24 = arith.constant 0 : index
      %33 = vector.load %arg8[%c0_23, %c0_24] : memref<256x128xbf16, #tpu.memory_space<vmem>>, vector<256x128xbf16>
      %cst_25 = arith.constant dense<0.000000e+00> : vector<8x128xf32>
      %34 = tpu.matmul %32, %33, %cst_25 {dimension_numbers = #tpu.dot_dimension_numbers<[1], [0], [0], [1], [0, 0, 1, 1], [], []>} : vector<8x256xbf16>, vector<256x128xbf16>, vector<8x128xf32> -> vector<8x128xf32>
      %c0_26 = arith.constant 0 : index
      %c0_27 = arith.constant 0 : index
      %35 = vector.load %arg9[%c0_26, %c0_27] : memref<1x128xf32, #tpu.memory_space<vmem>>, vector<1x128xf32>
      %36 = vector.broadcast %35 : vector<1x128xf32> to vector<8x128xf32>
      %37 = arith.addf %34, %36 : vector<8x128xf32>
      %c0_28 = arith.constant 0 : index
      %c0_29 = arith.constant 0 : index
      %38 = vector.load %arg10[%c0_28, %c0_29] : memref<8x128xf32, #tpu.memory_space<vmem>>, vector<8x128xf32>
      tpu.vector_store %arg10[%c0_28, %c0_29], %37 {strides = array<i32>} : memref<8x128xf32, #tpu.memory_space<vmem>>, vector<8x128xf32>,
    } else {
    }
    return
  }
  func.func @transform_0(%arg0: i32) -> (i32, i32) {
    %c0_i32 = arith.constant 0 : i32
    %c0_i32_0 = arith.constant 0 : i32
    return %c0_i32, %arg0 : i32, i32
  }
  func.func @transform_1(%arg0: i32) -> (i32, i32) {
    %c0_i32 = arith.constant 0 : i32
    %c0_i32_0 = arith.constant 0 : i32
    return %c0_i32, %arg0 : i32, i32
  }
  func.func @transform_2(%arg0: i32) -> (i32, i32) {
    %c0_i32 = arith.constant 0 : i32
    %c0_i32_0 = arith.constant 0 : i32
    return %c0_i32, %arg0 : i32, i32
  }
  func.func @transform_3(%arg0: i32) -> (i32, i32) {
    %c0_i32 = arith.constant 0 : i32
    %c0_i32_0 = arith.constant 0 : i32
    return %arg0, %c0_i32 : i32, i32
  }
  func.func @transform_4(%arg0: i32) -> (i32, i32) {
    %c0_i32 = arith.constant 0 : i32
    %c0_i32_0 = arith.constant 0 : i32
    %c0_i32_1 = arith.constant 0 : i32
    return %c0_i32, %c0_i32_0 : i32, i32
  }
  func.func @transform_5(%arg0: i32) -> (i32, i32) {
    %c0_i32 = arith.constant 0 : i32
    %c0_i32_0 = arith.constant 0 : i32
    %c0_i32_1 = arith.constant 0 : i32
    return %c0_i32, %c0_i32_0 : i32, i32
  }
  func.func @transform_6(%arg0: i32) -> (i32, i32) {
    %c0_i32 = arith.constant 0 : i32
    %c0_i32_0 = arith.constant 0 : i32
    %c0_i32_1 = arith.constant 0 : i32
    return %c0_i32, %c0_i32_0 : i32, i32
  }
  func.func @transform_7(%arg0: i32) -> (i32, i32) {
    %c0_i32 = arith.constant 0 : i32
    %c0_i32_0 = arith.constant 0 : i32
    %c0_i32_1 = arith.constant 0 : i32
    return %c0_i32, %c0_i32_0 : i32, i32
  }
  func.func @transform_8(%arg0: i32) -> (i32, i32) {
    %c0_i32 = arith.constant 0 : i32
    %c0_i32_0 = arith.constant 0 : i32
    %c0_i32_1 = arith.constant 0 : i32
    return %c0_i32, %c0_i32_0 : i32, i32
  }
  func.func @transform_9(%arg0: i32) -> (i32, i32) {
    %c0_i32 = arith.constant 0 : i32
    %c0_i32_0 = arith.constant 0 : i32
    %c0_i32_1 = arith.constant 0 : i32
    return %c0_i32, %c0_i32_0 : i32, i32
  }
}

</mosaic_0001>

<llo_original>
// kernel: tpu_custom_call.1
$region0: #{tpu_custom_call.1}
  #allocation0 [shape = 'u32[]', space=smem, size = 0x4, offset = 0x4, fixed_abs, tag = 'smem constant byte address 0x4 - core index']
  #allocation1 [shape = 'u32[144,128]{1,0:T(1,128)}', space=vmem, size = 0x12000, scoped, tag = 'internal scratch']
  #allocation2 [shape = 'f32[8,1024]{1,0:T(8,128)}', space=vmem, size = 0x8000, scoped, tag = 'scratch operand']
  %s0 = inlined_call_operand.hbm [shape: f32[8,4096], index: 0, kind: input, shape index: {}]
  %s1 = inlined_call_operand.hbm [shape: f32[1,4096], index: 1, kind: input, shape index: {}]
  %s2 = inlined_call_operand.hbm [shape: f32[1,4096], index: 2, kind: input, shape index: {}]
  %s3 = inlined_call_operand.hbm [shape: bf16[4096,1024], index: 3, kind: input, shape index: {}]
  %s4 = inlined_call_operand.hbm [shape: f32[1,1024], index: 4, kind: input, shape index: {}]
  %s5 = inlined_call_operand.hbm [shape: bf16[1024,256], index: 5, kind: input, shape index: {}]
  %s6 = inlined_call_operand.hbm [shape: f32[1,256], index: 6, kind: input, shape index: {}]
  %s7 = inlined_call_operand.hbm [shape: bf16[256,128], index: 7, kind: input, shape index: {}]
  %s8 = inlined_call_operand.hbm [shape: f32[1,128], index: 8, kind: input, shape index: {}]
  %s9 = inlined_call_operand.hbm [shape: f32[8,128], index: 9, kind: output, shape index: {}]
  %s10 = sld [smem:[#allocation0]]
  $region113: #{tpu_custom_call.1} parent=0
    _
  %s12 = ssub.s32 1, %s10
  %s13 = scalar_select 0, %s12, %s10
  $region1: #{tpu_custom_call.1} parent=0
    #allocation3 [shape = 'u8[131072]{0}', space=vmem, size = 0x20000, scoped, tag = 'input window, operand 0']
    #allocation4 [shape = 's32[2]{0}', space=sflag, size = 0x8, scoped, tag = 'scoped memory for tpu_custom_call.1']
    #allocation5 [shape = 's32[2]{0}', space=sflag, size = 0x8, scoped, tag = 'scoped memory for tpu_custom_call.1']
    #allocation6 [shape = 'u8[16384]{0}', space=vmem, size = 0x4000, scoped, tag = 'input window, operand 1']
    #allocation7 [shape = 's32[2]{0}', space=sflag, size = 0x8, scoped, tag = 'scoped memory for tpu_custom_call.1']
    #allocation8 [shape = 'u8[16384]{0}', space=vmem, size = 0x4000, scoped, tag = 'input window, operand 2']
    #allocation9 [shape = 'u8[8388608]{0}', space=vmem, size = 0x800000, scoped, tag = 'input window, operand 3']
    #allocation10 [shape = 's32[2]{0}', space=sflag, size = 0x8, scoped, tag = 'scoped memory for tpu_custom_call.1']
    #allocation11 [shape = 'u8[4096]{0}', space=vmem, size = 0x1000, scoped, tag = 'input window, operand 4, single buffered']
    #allocation12 [shape = 'u8[524288]{0}', space=vmem, size = 0x80000, scoped, tag = 'input window, operand 5, single buffered']
    #allocation13 [shape = 's32[1]{0}', space=sflag, size = 0x4, scoped, tag = 'scoped memory for tpu_custom_call.1']
    #allocation14 [shape = 'u8[1024]{0}', space=vmem, size = 0x400, scoped, tag = 'input window, operand 6, single buffered']
    #allocation15 [shape = 'u8[65536]{0}', space=vmem, size = 0x10000, scoped, tag = 'input window, operand 7, single buffered']
    #allocation16 [shape = 's32[1]{0}', space=sflag, size = 0x4, scoped, tag = 'scoped memory for tpu_custom_call.1']
    #allocation17 [shape = 'u8[512]{0}', space=vmem, size = 0x400, scoped, tag = 'input window, operand 8, single buffered']
    #allocation18 [shape = 'u8[4096]{0}', space=vmem, size = 0x1000, scoped, tag = 'output window, operand 0, single buffered']
    %14 = vsyncpa [#allocation4], 0
    %s15 = scalar_lea.sflag [#allocation4], 1
    %16 = vsyncpa %s15, 0
    %17 = vsyncpa [#allocation7], 0
    %s18 = scalar_lea.sflag [#allocation7], 1
    %19 = vsyncpa %s18, 0
    %20 = vsyncpa [#allocation10], 0
    %s21 = scalar_lea.sflag [#allocation10], 1
    %22 = vsyncpa %s21, 0
    %23 = vsyncpa [#allocation13], 0
    %24 = vsyncpa [#allocation16], 0
    %25 = vsyncpa [#allocation5], 0
    loop: start=0, step=1, limit=4
    $region2: #{tpu_custom_call.1} parent=1 // loop_pre_header
      _
    $region3: #{tpu_custom_call.1} parent=1 // loop_header
      %s27 = sphi 0, %s31
      %p28 = scmp.ge.s32.totalorder %s27, 4
      %s37 = sphi 0, %s39
      %s40 = sphi 0, %s37
      %s41 = sphi 0, %s40
      %s57 = sphi 0, %s41
      %s63 = sphi 0, %s65
      %s66 = sphi 0, %s63
      %s67 = sphi 0, %s66
      %s83 = sphi 0, %s67
      %s89 = sphi 0, %s91
      %s92 = sphi 0, %s89
      %s93 = sphi 0, %s92
      %s109 = sphi 0, %s93
      %s115 = sphi 0, %s117
      %s118 = sphi 0, %s115
      %s119 = sphi 0, %s118
      %s135 = sphi 0, %s119
      %s139 = sphi 0, %s139
      %s141 = sphi 0, %s139
      %s142 = sphi 0, %s141
      %s156 = sphi 0, %s142
      %s160 = sphi 0, %s160
      %s162 = sphi 0, %s160
      %s163 = sphi 0, %s162
      %s177 = sphi 0, %s163
      %s181 = sphi 0, %s181
      %s183 = sphi 0, %s181
      %s184 = sphi 0, %s183
      %s198 = sphi 0, %s184
      %s202 = sphi 0, %s202
      %s204 = sphi 0, %s202
      %s205 = sphi 0, %s204
      %s219 = sphi 0, %s205
      %s223 = sphi 0, %s223
      %s225 = sphi 0, %s223
      %s226 = sphi 0, %s225
      %s240 = sphi 0, %s226
      %s244 = sphi 0, %s244
      %s246 = sphi 0, %s244
      %s247 = sphi 0, %s246
      %s261 = sphi 0, %s247
    $region4: #{tpu_custom_call.1} parent=1 // loop_header_branch
      %30 = sbr.rel (%p28) target = $region8
    $region5: #{tpu_custom_call.1} parent=1 // loop_body
      %s32 = ssub.s32 %s27, 1
      %s33 = ssub.s32 %s27, 2
      %s34 = sadd.s32 %s27, 1
      %s35 = ssub.s32 %s27, %s34
      %p36 = scmp.eq.s32.totalorder %s35, 0
      %s38 = sadd.s32 %s37, 1
      %s39 = scalar_select %p36, %s37, %s38
      %p42 = pneg %p36
      %p43 = scmp.eq.s32.totalorder %s27, 1
      %p44 = por %p42, %p43
      %p45 = scmp.ne.s32.totalorder %s37, %s40
      %p46 = scmp.eq.s32.totalorder %s27, 0
      %p47 = por %p45, %p46
      %p48 = scmp.ne.s32.totalorder %s37, %s40
      %p49 = scmp.eq.s32.totalorder %s32, 1
      %p50 = por %p48, %p49
      %p51 = scmp.ne.s32.totalorder %s40, %s41
      %p52 = scmp.eq.s32.totalorder %s32, 0
      %p53 = por %p51, %p52
      %p54 = scmp.ne.s32.totalorder %s40, %s41
      %p55 = scmp.eq.s32.totalorder %s33, 1
      %p56 = por %p54, %p55
      %p58 = scmp.ne.s32.totalorder %s41, %s57
      %p59 = scmp.eq.s32.totalorder %s33, 0
      %p60 = por %p58, %p59
      %s61 = ssub.s32 %s27, %s34
      %p62 = scmp.eq.s32.totalorder %s61, 0
      %s64 = sadd.s32 %s63, 1
      %s65 = scalar_select %p62, %s63, %s64
      %p68 = pneg %p62
      %p69 = scmp.eq.s32.totalorder %s27, 1
      %p70 = por %p68, %p69
      %p71 = scmp.ne.s32.totalorder %s63, %s66
      %p72 = scmp.eq.s32.totalorder %s27, 0
      %p73 = por %p71, %p72
      %p74 = scmp.ne.s32.totalorder %s63, %s66
      %p75 = scmp.eq.s32.totalorder %s32, 1
      %p76 = por %p74, %p75
      %p77 = scmp.ne.s32.totalorder %s66, %s67
      %p78 = scmp.eq.s32.totalorder %s32, 0
      %p79 = por %p77, %p78
      %p80 = scmp.ne.s32.totalorder %s66, %s67
      %p81 = scmp.eq.s32.totalorder %s33, 1
      %p82 = por %p80, %p81
      %p84 = scmp.ne.s32.totalorder %s67, %s83
      %p85 = scmp.eq.s32.totalorder %s33, 0
      %p86 = por %p84, %p85
      %s87 = ssub.s32 %s27, %s34
      %p88 = scmp.eq.s32.totalorder %s87, 0
      %s90 = sadd.s32 %s89, 1
      %s91 = scalar_select %p88, %s89, %s90
      %p94 = pneg %p88
      %p95 = scmp.eq.s32.totalorder %s27, 1
      %p96 = por %p94, %p95
      %p97 = scmp.ne.s32.totalorder %s89, %s92
      %p98 = scmp.eq.s32.totalorder %s27, 0
      %p99 = por %p97, %p98
      %p100 = scmp.ne.s32.totalorder %s89, %s92
      %p101 = scmp.eq.s32.totalorder %s32, 1
      %p102 = por %p100, %p101
      %p103 = scmp.ne.s32.totalorder %s92, %s93
      %p104 = scmp.eq.s32.totalorder %s32, 0
      %p105 = por %p103, %p104
      %p106 = scmp.ne.s32.totalorder %s92, %s93
      %p107 = scmp.eq.s32.totalorder %s33, 1
      %p108 = por %p106, %p107
      %p110 = scmp.ne.s32.totalorder %s93, %s109
      %p111 = scmp.eq.s32.totalorder %s33, 0
      %p112 = por %p110, %p111
      %s113 = ssub.s32 %s27, %s34
      %p114 = scmp.eq.s32.totalorder %s113, 0
      %s116 = sadd.s32 %s115, 1
      %s117 = scalar_select %p114, %s115, %s116
      %p120 = pneg %p114
      %p121 = scmp.eq.s32.totalorder %s27, 1
      %p122 = por %p120, %p121
      %p123 = scmp.ne.s32.totalorder %s115, %s118
      %p124 = scmp.eq.s32.totalorder %s27, 0
      %p125 = por %p123, %p124
      %p126 = scmp.ne.s32.totalorder %s115, %s118
      %p127 = scmp.eq.s32.totalorder %s32, 1
      %p128 = por %p126, %p127
      %p129 = scmp.ne.s32.totalorder %s118, %s119
      %p130 = scmp.eq.s32.totalorder %s32, 0
      %p131 = por %p129, %p130
      %p132 = scmp.ne.s32.totalorder %s118, %s119
      %p133 = scmp.eq.s32.totalorder %s33, 1
      %p134 = por %p132, %p133
      %p136 = scmp.ne.s32.totalorder %s119, %s135
      %p137 = scmp.eq.s32.totalorder %s33, 0
      %p138 = por %p136, %p137
      %s140 = sadd.s32 %s139, 1
      %p143 = scmp.eq.s32.totalorder %s27, 1
      %p144 = scmp.ne.s32.totalorder %s139, %s141
      %p145 = scmp.eq.s32.totalorder %s27, 0
      %p146 = por %p144, %p145
      %p147 = scmp.ne.s32.totalorder %s139, %s141
      %p148 = scmp.eq.s32.totalorder %s32, 1
      %p149 = por %p147, %p148
      %p150 = scmp.ne.s32.totalorder %s141, %s142
      %p151 = scmp.eq.s32.totalorder %s32, 0
      %p152 = por %p150, %p151
      %p153 = scmp.ne.s32.totalorder %s141, %s142
      %p154 = scmp.eq.s32.totalorder %s33, 1
      %p155 = por %p153, %p154
      %p157 = scmp.ne.s32.totalorder %s142, %s156
      %p158 = scmp.eq.s32.totalorder %s33, 0
      %p159 = por %p157, %p158
      %s161 = sadd.s32 %s160, 1
      %p164 = scmp.eq.s32.totalorder %s27, 1
      %p165 = scmp.ne.s32.totalorder %s160, %s162
      %p166 = scmp.eq.s32.totalorder %s27, 0
      %p167 = por %p165, %p166
      %p168 = scmp.ne.s32.totalorder %s160, %s162
      %p169 = scmp.eq.s32.totalorder %s32, 1
      %p170 = por %p168, %p169
      %p171 = scmp.ne.s32.totalorder %s162, %s163
      %p172 = scmp.eq.s32.totalorder %s32, 0
      %p173 = por %p171, %p172
      %p174 = scmp.ne.s32.totalorder %s162, %s163
      %p175 = scmp.eq.s32.totalorder %s33, 1
      %p176 = por %p174, %p175
      %p178 = scmp.ne.s32.totalorder %s163, %s177
      %p179 = scmp.eq.s32.totalorder %s33, 0
      %p180 = por %p178, %p179
      %s182 = sadd.s32 %s181, 1
      %p185 = scmp.eq.s32.totalorder %s27, 1
      %p186 = scmp.ne.s32.totalorder %s181, %s183
      %p187 = scmp.eq.s32.totalorder %s27, 0
      %p188 = por %p186, %p187
      %p189 = scmp.ne.s32.totalorder %s181, %s183
      %p190 = scmp.eq.s32.totalorder %s32, 1
      %p191 = por %p189, %p190
      %p192 = scmp.ne.s32.totalorder %s183, %s184
      %p193 = scmp.eq.s32.totalorder %s32, 0
      %p194 = por %p192, %p193
      %p195 = scmp.ne.s32.totalorder %s183, %s184
      %p196 = scmp.eq.s32.totalorder %s33, 1
      %p197 = por %p195, %p196
      %p199 = scmp.ne.s32.totalorder %s184, %s198
      %p200 = scmp.eq.s32.totalorder %s33, 0
      %p201 = por %p199, %p200
      %s203 = sadd.s32 %s202, 1
      %p206 = scmp.eq.s32.totalorder %s27, 1
      %p207 = scmp.ne.s32.totalorder %s202, %s204
      %p208 = scmp.eq.s32.totalorder %s27, 0
      %p209 = por %p207, %p208
      %p210 = scmp.ne.s32.totalorder %s202, %s204
      %p211 = scmp.eq.s32.totalorder %s32, 1
      %p212 = por %p210, %p211
      %p213 = scmp.ne.s32.totalorder %s204, %s205
      %p214 = scmp.eq.s32.totalorder %s32, 0
      %p215 = por %p213, %p214
      %p216 = scmp.ne.s32.totalorder %s204, %s205
      %p217 = scmp.eq.s32.totalorder %s33, 1
      %p218 = por %p216, %p217
      %p220 = scmp.ne.s32.totalorder %s205, %s219
      %p221 = scmp.eq.s32.totalorder %s33, 0
      %p222 = por %p220, %p221
      %s224 = sadd.s32 %s223, 1
      %p227 = scmp.eq.s32.totalorder %s27, 1
      %p228 = scmp.ne.s32.totalorder %s223, %s225
      %p229 = scmp.eq.s32.totalorder %s27, 0
      %p230 = por %p228, %p229
      %p231 = scmp.ne.s32.totalorder %s223, %s225
      %p232 = scmp.eq.s32.totalorder %s32, 1
      %p233 = por %p231, %p232
      %p234 = scmp.ne.s32.totalorder %s225, %s226
      %p235 = scmp.eq.s32.totalorder %s32, 0
      %p236 = por %p234, %p235
      %p237 = scmp.ne.s32.totalorder %s225, %s226
      %p238 = scmp.eq.s32.totalorder %s33, 1
      %p239 = por %p237, %p238
      %p241 = scmp.ne.s32.totalorder %s226, %s240
      %p242 = scmp.eq.s32.totalorder %s33, 0
      %p243 = por %p241, %p242
      %s245 = sadd.s32 %s244, 1
      %p248 = scmp.eq.s32.totalorder %s27, 1
      %p249 = scmp.ne.s32.totalorder %s244, %s246
      %p250 = scmp.eq.s32.totalorder %s27, 0
      %p251 = por %p249, %p250
      %p252 = scmp.ne.s32.totalorder %s244, %s246
      %p253 = scmp.eq.s32.totalorder %s32, 1
      %p254 = por %p252, %p253
      %p255 = scmp.ne.s32.totalorder %s246, %s247
      %p256 = scmp.eq.s32.totalorder %s32, 0
      %p257 = por %p255, %p256
      %p258 = scmp.ne.s32.totalorder %s246, %s247
      %p259 = scmp.eq.s32.totalorder %s33, 1
      %p260 = por %p258, %p259
      %p262 = scmp.ne.s32.totalorder %s247, %s261
      %p263 = scmp.eq.s32.totalorder %s33, 0
      %p264 = por %p262, %p263
      %p265 = scmp.le.s32.totalorder 1, %s27
      %p266 = scmp.lt.s32.totalorder %s27, 3
      %p267 = pnand %p265, %p266
      %p268 = pneg %p267
      // Predicated region
      $region9: #{tpu_custom_call.1} parent=5 // pred_check
        _
      $region10: #{tpu_custom_call.1} parent=5 // pred_check_branch
        %270 = sbr.rel (%p267) target = $region12
      $region11: #{tpu_custom_call.1} parent=5 // pred_region
        %s271 = ssub.s32 %s27, 1
        // Predicated region
        $region13: #{tpu_custom_call.1} parent=11 // pred_check
          %p272 = pneg %p152
        $region14: #{tpu_custom_call.1} parent=11 // pred_check_branch
          %274 = sbr.rel (%p272) target = $region16
        $region15: #{tpu_custom_call.1} parent=11 // pred_region
          %s276 = ssub.s32 128, 128
          %277 = vsyncadd [#allocation10], %s276
          %s279 = sshll.u32 [#allocation11], 4
          %s280 = int_to_ptr.vmem [resolvable:$true] %s279
          %282 = dma.hbm_to_vmem [thread:$0]  %s4, 128, %s280, [#allocation10]
        $region16: #{tpu_custom_call.1} parent=11 // pred_fallthru
          _
        // Predicated region
        $region17: #{tpu_custom_call.1} parent=11 // pred_check
          %p283 = pneg %p173
        $region18: #{tpu_custom_call.1} parent=11 // pred_check_branch
          %285 = sbr.rel (%p283) target = $region20
        $region19: #{tpu_custom_call.1} parent=11 // pred_region
          %s287 = ssub.s32 16384, 16384
          %288 = vsyncadd [#allocation13], %s287
          %s289 = sshll.u32 [#allocation12], 4
          %s290 = int_to_ptr.vmem [resolvable:$true] %s289
          %295 = dma.hbm_to_vmem [thread:$0]  %s5, 16384, %s290, [#allocation13], 128, 128, 8
        $region20: #{tpu_custom_call.1} parent=11 // pred_fallthru
          _
        // Predicated region
        $region21: #{tpu_custom_call.1} parent=11 // pred_check
          %p296 = pneg %p194
        $region22: #{tpu_custom_call.1} parent=11 // pred_check_branch
          %298 = sbr.rel (%p296) target = $region24
        $region23: #{tpu_custom_call.1} parent=11 // pred_region
          %s300 = ssub.s32 32, 32
          %301 = vsyncadd [#allocation13], %s300
          %s303 = sshll.u32 [#allocation14], 4
          %s304 = int_to_ptr.vmem [resolvable:$true] %s303
          %306 = dma.hbm_to_vmem [thread:$0]  %s6, 32, %s304, [#allocation13]
        $region24: #{tpu_custom_call.1} parent=11 // pred_fallthru
          _
        // Predicated region
        $region25: #{tpu_custom_call.1} parent=11 // pred_check
          %p307 = pneg %p215
        $region26: #{tpu_custom_call.1} parent=11 // pred_check_branch
          %309 = sbr.rel (%p307) target = $region28
        $region27: #{tpu_custom_call.1} parent=11 // pred_region
          %s311 = ssub.s32 2048, 2048
          %312 = vsyncadd [#allocation16], %s311
          %s313 = sshll.u32 [#allocation15], 4
          %s314 = int_to_ptr.vmem [resolvable:$true] %s313
          %319 = dma.hbm_to_vmem [thread:$0]  %s7, 2048, %s314, [#allocation16], 64, 64, 4
        $region28: #{tpu_custom_call.1} parent=11 // pred_fallthru
          _
        // Predicated region
        $region29: #{tpu_custom_call.1} parent=11 // pred_check
          %p320 = pneg %p236
        $region30: #{tpu_custom_call.1} parent=11 // pred_check_branch
          %322 = sbr.rel (%p320) target = $region32
        $region31: #{tpu_custom_call.1} parent=11 // pred_region
          %s324 = ssub.s32 16, 16
          %325 = vsyncadd [#allocation16], %s324
          %s327 = sshll.u32 [#allocation17], 4
          %s328 = int_to_ptr.vmem [resolvable:$true] %s327
          %330 = dma.hbm_to_vmem [thread:$0]  %s8, 16, %s328, [#allocation16]
        $region32: #{tpu_custom_call.1} parent=11 // pred_fallthru
          _
      $region12: #{tpu_custom_call.1} parent=5 // pred_fallthru
        _
      %p331 = scmp.lt.s32.totalorder %s27, 2
      // Predicated region
      $region33: #{tpu_custom_call.1} parent=5 // pred_check
        %p332 = pneg %p331
      $region34: #{tpu_custom_call.1} parent=5 // pred_check_branch
        %334 = sbr.rel (%p332) target = $region36
      $region35: #{tpu_custom_call.1} parent=5 // pred_region
        // Predicated region
        $region37: #{tpu_custom_call.1} parent=35 // pred_check
          %p335 = pneg %p47
        $region38: #{tpu_custom_call.1} parent=35 // pred_check_branch
          %337 = sbr.rel (%p335) target = $region40
        $region39: #{tpu_custom_call.1} parent=35 // pred_region
          %s338 = sand.u32 %s37, 1
          %s339 = scalar_lea.sflag [#allocation4], %s338
          %s340 = sand.u32 %s37, 1
          %s341 = smul.addr %s340, 128
          %s342 = scalar_lea.vmem [#allocation3], %s341
          %s343 = smul.u32 16, %s27
          %s345 = ssub.s32 2048, 2048
          %346 = vsyncadd %s339, %s345
          %s347 = smul.addr %s343, 128
          %s348 = scalar_lea.hbm %s0, %s347
          %s350 = sshll.u32 %s342, 4
          %s351 = int_to_ptr.vmem [resolvable:$true] %s350
          %353 = dma.hbm_to_vmem [thread:$0]  %s348, 2048, %s351, %s339
        $region40: #{tpu_custom_call.1} parent=35 // pred_fallthru
          _
        // Predicated region
        $region41: #{tpu_custom_call.1} parent=35 // pred_check
          %p354 = pneg %p73
        $region42: #{tpu_custom_call.1} parent=35 // pred_check_branch
          %356 = sbr.rel (%p354) target = $region44
        $region43: #{tpu_custom_call.1} parent=35 // pred_region
          %s357 = sand.u32 %s27, 1
          %s358 = scalar_lea.sflag [#allocation7], %s357
          %s359 = sand.u32 %s63, 1
          %s360 = smul.addr %s359, 16
          %s361 = scalar_lea.vmem [#allocation6], %s360
          %s362 = smul.u32 16, %s27
          %s364 = ssub.s32 256, 256
          %365 = vsyncadd %s358, %s364
          %s366 = smul.addr %s362, 16
          %s367 = scalar_lea.hbm %s1, %s366
          %s369 = sshll.u32 %s361, 4
          %s370 = int_to_ptr.vmem [resolvable:$true] %s369
          %372 = dma.hbm_to_vmem [thread:$0]  %s367, 256, %s370, %s358
        $region44: #{tpu_custom_call.1} parent=35 // pred_fallthru
          _
        // Predicated region
        $region45: #{tpu_custom_call.1} parent=35 // pred_check
          %p373 = pneg %p99
        $region46: #{tpu_custom_call.1} parent=35 // pred_check_branch
          %375 = sbr.rel (%p373) target = $region48
        $region47: #{tpu_custom_call.1} parent=35 // pred_region
          %s376 = sand.u32 %s27, 1
          %s377 = scalar_lea.sflag [#allocation7], %s376
          %s378 = sand.u32 %s89, 1
          %s379 = smul.addr %s378, 16
          %s380 = scalar_lea.vmem [#allocation8], %s379
          %s381 = smul.u32 16, %s27
          %s383 = ssub.s32 256, 256
          %384 = vsyncadd %s377, %s383
          %s385 = smul.addr %s381, 16
          %s386 = scalar_lea.hbm %s2, %s385
          %s388 = sshll.u32 %s380, 4
          %s389 = int_to_ptr.vmem [resolvable:$true] %s388
          %391 = dma.hbm_to_vmem [thread:$0]  %s386, 256, %s389, %s377
        $region48: #{tpu_custom_call.1} parent=35 // pred_fallthru
          _
        // Predicated region
        $region49: #{tpu_custom_call.1} parent=35 // pred_check
          %p392 = pneg %p125
        $region50: #{tpu_custom_call.1} parent=35 // pred_check_branch
          %394 = sbr.rel (%p392) target = $region52
        $region51: #{tpu_custom_call.1} parent=35 // pred_region
          %s395 = sand.u32 %s27, 1
          %s396 = scalar_lea.sflag [#allocation10], %s395
          %s397 = sand.u32 %s115, 1
          %s398 = smul.addr %s397, 8192
          %s399 = scalar_lea.vmem [#allocation9], %s398
          %s400 = smul.u32 256, %s27
          %s402 = ssub.s32 131072, 131072
          %403 = vsyncadd %s396, %s402
          %s404 = smul.addr %s400, 8
          %s405 = smul.addr %s404, 64
          %s406 = scalar_lea.hbm %s3, %s405
          %s407 = sshll.u32 %s399, 4
          %s408 = int_to_ptr.vmem [resolvable:$true] %s407
          %413 = dma.hbm_to_vmem [thread:$0]  %s406, 131072, %s408, %s396, 512, 512, 32
        $region52: #{tpu_custom_call.1} parent=35 // pred_fallthru
          _
      $region36: #{tpu_custom_call.1} parent=5 // pred_fallthru
        _
      %p414 = scmp.le.s32.totalorder 1, %s27
      %p415 = scmp.lt.s32.totalorder %s27, 3
      %p416 = pnand %p414, %p415
      %p417 = pneg %p416
      // Predicated region
      $region53: #{tpu_custom_call.1} parent=5 // pred_check
        _
      $region54: #{tpu_custom_call.1} parent=5 // pred_check_branch
        %419 = sbr.rel (%p416) target = $region56
      $region55: #{tpu_custom_call.1} parent=5 // pred_region
        %s420 = ssub.s32 %s27, 1
        %s421 = sand.u32 %s40, 1
        %s422 = scalar_lea.sflag [#allocation4], %s421
        %s423 = sand.u32 %s40, 1
        %s424 = smul.addr %s423, 128
        %s425 = scalar_lea.vmem [#allocation3], %s424
        // Predicated region
        $region57: #{tpu_custom_call.1} parent=55 // pred_check
          %p426 = pneg %p53
        $region58: #{tpu_custom_call.1} parent=55 // pred_check_branch
          %428 = sbr.rel (%p426) target = $region60
        $region59: #{tpu_custom_call.1} parent=55 // pred_region
          %429 = dma.done %s422, 2048
        $region60: #{tpu_custom_call.1} parent=55 // pred_fallthru
          _
        %s430 = sand.u32 %s32, 1
        %s431 = scalar_lea.sflag [#allocation7], %s430
        %s432 = sand.u32 %s66, 1
        %s433 = smul.addr %s432, 16
        %s434 = scalar_lea.vmem [#allocation6], %s433
        // Predicated region
        $region61: #{tpu_custom_call.1} parent=55 // pred_check
          %p435 = pneg %p79
        $region62: #{tpu_custom_call.1} parent=55 // pred_check_branch
          %437 = sbr.rel (%p435) target = $region64
        $region63: #{tpu_custom_call.1} parent=55 // pred_region
          %438 = dma.done %s431, 256
        $region64: #{tpu_custom_call.1} parent=55 // pred_fallthru
          _
        %s439 = sand.u32 %s32, 1
        %s440 = scalar_lea.sflag [#allocation7], %s439
        %s441 = sand.u32 %s92, 1
        %s442 = smul.addr %s441, 16
        %s443 = scalar_lea.vmem [#allocation8], %s442
        // Predicated region
        $region65: #{tpu_custom_call.1} parent=55 // pred_check
          %p444 = pneg %p105
        $region66: #{tpu_custom_call.1} parent=55 // pred_check_branch
          %446 = sbr.rel (%p444) target = $region68
        $region67: #{tpu_custom_call.1} parent=55 // pred_region
          %447 = dma.done %s440, 256
        $region68: #{tpu_custom_call.1} parent=55 // pred_fallthru
          _
        %s448 = sand.u32 %s32, 1
        %s449 = scalar_lea.sflag [#allocation10], %s448
        %s450 = sand.u32 %s118, 1
        %s451 = smul.addr %s450, 8192
        %s452 = scalar_lea.vmem [#allocation9], %s451
        // Predicated region
        $region69: #{tpu_custom_call.1} parent=55 // pred_check
          %p453 = pneg %p131
        $region70: #{tpu_custom_call.1} parent=55 // pred_check_branch
          %455 = sbr.rel (%p453) target = $region72
        $region71: #{tpu_custom_call.1} parent=55 // pred_region
          %456 = dma.done %s449, 131072
        $region72: #{tpu_custom_call.1} parent=55 // pred_fallthru
          _
        // Predicated region
        $region73: #{tpu_custom_call.1} parent=55 // pred_check
          %p457 = pneg %p152
        $region74: #{tpu_custom_call.1} parent=55 // pred_check_branch
          %459 = sbr.rel (%p457) target = $region76
        $region75: #{tpu_custom_call.1} parent=55 // pred_region
          %460 = dma.done [#allocation10], 128
        $region76: #{tpu_custom_call.1} parent=55 // pred_fallthru
          _
        // Predicated region
        $region77: #{tpu_custom_call.1} parent=55 // pred_check
          %p461 = pneg %p173
        $region78: #{tpu_custom_call.1} parent=55 // pred_check_branch
          %463 = sbr.rel (%p461) target = $region80
        $region79: #{tpu_custom_call.1} parent=55 // pred_region
          %464 = dma.done [#allocation13], 16384
        $region80: #{tpu_custom_call.1} parent=55 // pred_fallthru
          _
        // Predicated region
        $region81: #{tpu_custom_call.1} parent=55 // pred_check
          %p465 = pneg %p194
        $region82: #{tpu_custom_call.1} parent=55 // pred_check_branch
          %467 = sbr.rel (%p465) target = $region84
        $region83: #{tpu_custom_call.1} parent=55 // pred_region
          %468 = dma.done [#allocation13], 32
        $region84: #{tpu_custom_call.1} parent=55 // pred_fallthru
          _
        // Predicated region
        $region85: #{tpu_custom_call.1} parent=55 // pred_check
          %p469 = pneg %p215
        $region86: #{tpu_custom_call.1} parent=55 // pred_check_branch
          %471 = sbr.rel (%p469) target = $region88
        $region87: #{tpu_custom_call.1} parent=55 // pred_region
          %472 = dma.done [#allocation16], 2048
        $region88: #{tpu_custom_call.1} parent=55 // pred_fallthru
          _
        // Predicated region
        $region89: #{tpu_custom_call.1} parent=55 // pred_check
          %p473 = pneg %p236
        $region90: #{tpu_custom_call.1} parent=55 // pred_check_branch
          %475 = sbr.rel (%p473) target = $region92
        $region91: #{tpu_custom_call.1} parent=55 // pred_region
          %476 = dma.done [#allocation16], 16
        $region92: #{tpu_custom_call.1} parent=55 // pred_fallthru
          _
        %s477 = sand.u32 %s40, 1
        %s478 = scalar_lea.sflag [#allocation4], %s477
        %s479 = sand.u32 %s40, 1
        %s480 = smul.addr %s479, 128
        %s481 = scalar_lea.vmem [#allocation3], %s480
        %p482 = pneg %p53
        %p483 = pneg %p50
        %s484 = sand.u32 %s32, 1
        %s485 = scalar_lea.sflag [#allocation7], %s484
        %s486 = sand.u32 %s66, 1
        %s487 = smul.addr %s486, 16
        %s488 = scalar_lea.vmem [#allocation6], %s487
        %p489 = pneg %p79
        %p490 = pneg %p76
        %s491 = sand.u32 %s32, 1
        %s492 = scalar_lea.sflag [#allocation7], %s491
        %s493 = sand.u32 %s92, 1
        %s494 = smul.addr %s493, 16
        %s495 = scalar_lea.vmem [#allocation8], %s494
        %p496 = pneg %p105
        %p497 = pneg %p102
        %s498 = sand.u32 %s32, 1
        %s499 = scalar_lea.sflag [#allocation10], %s498
        %s500 = sand.u32 %s118, 1
        %s501 = smul.addr %s500, 8192
        %s502 = scalar_lea.vmem [#allocation9], %s501
        %p503 = pneg %p131
        %p504 = pneg %p128
        %p505 = pneg %p152
        %p506 = pneg %p149
        %p507 = pneg %p173
        %p508 = pneg %p170
        %p509 = pneg %p194
        %p510 = pneg %p191
        %p511 = pneg %p215
        %p512 = pneg %p212
        %p513 = pneg %p236
        %p514 = pneg %p233
        %p515 = pneg %p257
        %p516 = pneg %p254
        %s517 = smul.u32 16, %s32
        %s518 = smul.u32 16, %s32
        %s519 = smul.u32 16, %s32
        %s520 = smul.u32 256, %s32
        %p522 = scmp.eq.s32.totalorder %s32, 0
        // Predicated region
        $region93: #{tpu_custom_call.1} parent=55 // pred_check
          %p523 = pneg %p522
        $region94: #{tpu_custom_call.1} parent=55 // pred_check_branch
          %525 = sbr.rel (%p523) target = $region96
        $region95: #{tpu_custom_call.1} parent=55 // pred_region
          %v526 = vld [vmem:[#allocation11] sm:$0xff]
          %v528 = vlaneseq
          %v529 = vshrl.u32 %v528, 7
          %v530 = vsub.s32 0, %v529
          %v531 = vrot.slane %v526, %v530
          %v532 = vlaneseq
          %v533 = vshrl.u32 %v532, 7
          %v534 = vsub.s32 1, %v533
          %v535 = vrot.slane %v526, %v534
          %v536 = vlaneseq
          %v537 = vshrl.u32 %v536, 7
          %v538 = vsub.s32 2, %v537
          %v539 = vrot.slane %v526, %v538
          %v540 = vlaneseq
          %v541 = vshrl.u32 %v540, 7
          %v542 = vsub.s32 3, %v541
          %v543 = vrot.slane %v526, %v542
          %v544 = vlaneseq
          %v545 = vshrl.u32 %v544, 7
          %v546 = vsub.s32 4, %v545
          %v547 = vrot.slane %v526, %v546
          %v548 = vlaneseq
          %v549 = vshrl.u32 %v548, 7
          %v550 = vsub.s32 5, %v549
          %v551 = vrot.slane %v526, %v550
          %v552 = vlaneseq
          %v553 = vshrl.u32 %v552, 7
          %v554 = vsub.s32 6, %v553
          %v555 = vrot.slane %v526, %v554
          %v556 = vlaneseq
          %v557 = vshrl.u32 %v556, 7
          %v558 = vsub.s32 7, %v557
          %v559 = vrot.slane %v526, %v558
          %568 = vst [vmem:[#allocation2] sm:$0xff] %v531
          %569 = vst [vmem:[#allocation2 + $0x8] sm:$0xff] %v535
          %570 = vst [vmem:[#allocation2 + $0x10] sm:$0xff] %v539
          %571 = vst [vmem:[#allocation2 + $0x18] sm:$0xff] %v543
          %572 = vst [vmem:[#allocation2 + $0x20] sm:$0xff] %v547
          %573 = vst [vmem:[#allocation2 + $0x28] sm:$0xff] %v551
          %574 = vst [vmem:[#allocation2 + $0x30] sm:$0xff] %v555
          %575 = vst [vmem:[#allocation2 + $0x38] sm:$0xff] %v559
        $region96: #{tpu_custom_call.1} parent=55 // pred_fallthru
          _
        %v576 = vld [vmem:[%s425] sm:$0xff]
        %v577 = vld [vmem:[%s425 + $0x8] sm:$0xff]
        %v578 = vld [vmem:[%s425 + $0x10] sm:$0xff]
        %v579 = vld [vmem:[%s425 + $0x18] sm:$0xff]
        %v580 = vld [vmem:[%s425 + $0x20] sm:$0xff]
        %v581 = vld [vmem:[%s425 + $0x28] sm:$0xff]
        %v582 = vld [vmem:[%s425 + $0x30] sm:$0xff]
        %v583 = vld [vmem:[%s425 + $0x38] sm:$0xff]
        %v584 = vld [vmem:[%s425 + $0x40] sm:$0xff]
        %v585 = vld [vmem:[%s425 + $0x48] sm:$0xff]
        %v586 = vld [vmem:[%s425 + $0x50] sm:$0xff]
        %v587 = vld [vmem:[%s425 + $0x58] sm:$0xff]
        %v588 = vld [vmem:[%s425 + $0x60] sm:$0xff]
        %v589 = vld [vmem:[%s425 + $0x68] sm:$0xff]
        %v590 = vld [vmem:[%s425 + $0x70] sm:$0xff]
        %v591 = vld [vmem:[%s425 + $0x78] sm:$0xff]
        %v592 = vld [vmem:[%s434] sm:$0xff]
        %v593 = vld [vmem:[%s434 + $0x8] sm:$0xff]
        %v596 = vlaneseq
        %v597 = vshrl.u32 %v596, 7
        %v598 = vsub.s32 0, %v597
        %v599 = vrot.slane %v592, %v598
        %v600 = vlaneseq
        %v601 = vshrl.u32 %v600, 7
        %v602 = vsub.s32 1, %v601
        %v603 = vrot.slane %v592, %v602
        %v604 = vlaneseq
        %v605 = vshrl.u32 %v604, 7
        %v606 = vsub.s32 2, %v605
        %v607 = vrot.slane %v592, %v606
        %v608 = vlaneseq
        %v609 = vshrl.u32 %v608, 7
        %v610 = vsub.s32 3, %v609
        %v611 = vrot.slane %v592, %v610
        %v612 = vlaneseq
        %v613 = vshrl.u32 %v612, 7
        %v614 = vsub.s32 4, %v613
        %v615 = vrot.slane %v592, %v614
        %v616 = vlaneseq
        %v617 = vshrl.u32 %v616, 7
        %v618 = vsub.s32 5, %v617
        %v619 = vrot.slane %v592, %v618
        %v620 = vlaneseq
        %v621 = vshrl.u32 %v620, 7
        %v622 = vsub.s32 6, %v621
        %v623 = vrot.slane %v592, %v622
        %v624 = vlaneseq
        %v625 = vshrl.u32 %v624, 7
        %v626 = vsub.s32 7, %v625
        %v627 = vrot.slane %v592, %v626
        %v628 = vlaneseq
        %v629 = vshrl.u32 %v628, 7
        %v630 = vsub.s32 0, %v629
        %v631 = vrot.slane %v593, %v630
        %v632 = vlaneseq
        %v633 = vshrl.u32 %v632, 7
        %v634 = vsub.s32 1, %v633
        %v635 = vrot.slane %v593, %v634
        %v636 = vlaneseq
        %v637 = vshrl.u32 %v636, 7
        %v638 = vsub.s32 2, %v637
        %v639 = vrot.slane %v593, %v638
        %v640 = vlaneseq
        %v641 = vshrl.u32 %v640, 7
        %v642 = vsub.s32 3, %v641
        %v643 = vrot.slane %v593, %v642
        %v644 = vlaneseq
        %v645 = vshrl.u32 %v644, 7
        %v646 = vsub.s32 4, %v645
        %v647 = vrot.slane %v593, %v646
        %v648 = vlaneseq
        %v649 = vshrl.u32 %v648, 7
        %v650 = vsub.s32 5, %v649
        %v651 = vrot.slane %v593, %v650
        %v652 = vlaneseq
        %v653 = vshrl.u32 %v652, 7
        %v654 = vsub.s32 6, %v653
        %v655 = vrot.slane %v593, %v654
        %v656 = vlaneseq
        %v657 = vshrl.u32 %v656, 7
        %v658 = vsub.s32 7, %v657
        %v659 = vrot.slane %v593, %v658
        %v676 = vmul.f32 %v576, %v599
        %v677 = vmul.f32 %v577, %v603
        %v678 = vmul.f32 %v578, %v607
        %v679 = vmul.f32 %v579, %v611
        %v680 = vmul.f32 %v580, %v615
        %v681 = vmul.f32 %v581, %v619
        %v682 = vmul.f32 %v582, %v623
        %v683 = vmul.f32 %v583, %v627
        %v684 = vmul.f32 %v584, %v631
        %v685 = vmul.f32 %v585, %v635
        %v686 = vmul.f32 %v586, %v639
        %v687 = vmul.f32 %v587, %v643
        %v688 = vmul.f32 %v588, %v647
        %v689 = vmul.f32 %v589, %v651
        %v690 = vmul.f32 %v590, %v655
        %v691 = vmul.f32 %v591, %v659
        %v692 = vld [vmem:[%s443] sm:$0xff]
        %v693 = vld [vmem:[%s443 + $0x8] sm:$0xff]
        %v696 = vlaneseq
        %v697 = vshrl.u32 %v696, 7
        %v698 = vsub.s32 0, %v697
        %v699 = vrot.slane %v692, %v698
        %v700 = vlaneseq
        %v701 = vshrl.u32 %v700, 7
        %v702 = vsub.s32 1, %v701
        %v703 = vrot.slane %v692, %v702
        %v704 = vlaneseq
        %v705 = vshrl.u32 %v704, 7
        %v706 = vsub.s32 2, %v705
        %v707 = vrot.slane %v692, %v706
        %v708 = vlaneseq
        %v709 = vshrl.u32 %v708, 7
        %v710 = vsub.s32 3, %v709
        %v711 = vrot.slane %v692, %v710
        %v712 = vlaneseq
        %v713 = vshrl.u32 %v712, 7
        %v714 = vsub.s32 4, %v713
        %v715 = vrot.slane %v692, %v714
        %v716 = vlaneseq
        %v717 = vshrl.u32 %v716, 7
        %v718 = vsub.s32 5, %v717
        %v719 = vrot.slane %v692, %v718
        %v720 = vlaneseq
        %v721 = vshrl.u32 %v720, 7
        %v722 = vsub.s32 6, %v721
        %v723 = vrot.slane %v692, %v722
        %v724 = vlaneseq
        %v725 = vshrl.u32 %v724, 7
        %v726 = vsub.s32 7, %v725
        %v727 = vrot.slane %v692, %v726
        %v728 = vlaneseq
        %v729 = vshrl.u32 %v728, 7
        %v730 = vsub.s32 0, %v729
        %v731 = vrot.slane %v693, %v730
        %v732 = vlaneseq
        %v733 = vshrl.u32 %v732, 7
        %v734 = vsub.s32 1, %v733
        %v735 = vrot.slane %v693, %v734
        %v736 = vlaneseq
        %v737 = vshrl.u32 %v736, 7
        %v738 = vsub.s32 2, %v737
        %v739 = vrot.slane %v693, %v738
        %v740 = vlaneseq
        %v741 = vshrl.u32 %v740, 7
        %v742 = vsub.s32 3, %v741
        %v743 = vrot.slane %v693, %v742
        %v744 = vlaneseq
        %v745 = vshrl.u32 %v744, 7
        %v746 = vsub.s32 4, %v745
        %v747 = vrot.slane %v693, %v746
        %v748 = vlaneseq
        %v749 = vshrl.u32 %v748, 7
        %v750 = vsub.s32 5, %v749
        %v751 = vrot.slane %v693, %v750
        %v752 = vlaneseq
        %v753 = vshrl.u32 %v752, 7
        %v754 = vsub.s32 6, %v753
        %v755 = vrot.slane %v693, %v754
        %v756 = vlaneseq
        %v757 = vshrl.u32 %v756, 7
        %v758 = vsub.s32 7, %v757
        %v759 = vrot.slane %v693, %v758
        %v776 = vadd.f32 %v676, %v699
        %v777 = vadd.f32 %v677, %v703
        %v778 = vadd.f32 %v678, %v707
        %v779 = vadd.f32 %v679, %v711
        %v780 = vadd.f32 %v680, %v715
        %v781 = vadd.f32 %v681, %v719
        %v782 = vadd.f32 %v682, %v723
        %v783 = vadd.f32 %v683, %v727
        %v784 = vadd.f32 %v684, %v731
        %v785 = vadd.f32 %v685, %v735
        %v786 = vadd.f32 %v686, %v739
        %v787 = vadd.f32 %v687, %v743
        %v788 = vadd.f32 %v688, %v747
        %v789 = vadd.f32 %v689, %v751
        %v790 = vadd.f32 %v690, %v755
        %v791 = vadd.f32 %v691, %v759
        %v792 = vmax.f32 %v776, 0.0
        %v793 = vmax.f32 %v777, 0.0
        %v794 = vmax.f32 %v778, 0.0
        %v795 = vmax.f32 %v779, 0.0
        %v796 = vmax.f32 %v780, 0.0
        %v797 = vmax.f32 %v781, 0.0
        %v798 = vmax.f32 %v782, 0.0
        %v799 = vmax.f32 %v783, 0.0
        %v800 = vmax.f32 %v784, 0.0
        %v801 = vmax.f32 %v785, 0.0
        %v802 = vmax.f32 %v786, 0.0
        %v803 = vmax.f32 %v787, 0.0
        %v804 = vmax.f32 %v788, 0.0
        %v805 = vmax.f32 %v789, 0.0
        %v806 = vmax.f32 %v790, 0.0
        %v807 = vmax.f32 %v791, 0.0
        %v808 = vld [vmem:[#allocation2] sm:$0xff]
        %v809 = vld [vmem:[#allocation2 + $0x8] sm:$0xff]
        %v810 = vld [vmem:[#allocation2 + $0x10] sm:$0xff]
        %v811 = vld [vmem:[#allocation2 + $0x18] sm:$0xff]
        %v812 = vld [vmem:[#allocation2 + $0x20] sm:$0xff]
        %v813 = vld [vmem:[#allocation2 + $0x28] sm:$0xff]
        %v814 = vld [vmem:[#allocation2 + $0x30] sm:$0xff]
        %v815 = vld [vmem:[#allocation2 + $0x38] sm:$0xff]
        %v816 = vpack.c.bf16 %v792, %v792
        %v817 = vpack.c.bf16 %v793, %v793
        %v818 = vpack.c.bf16 %v794, %v794
        %v819 = vpack.c.bf16 %v795, %v795
        %v820 = vpack.c.bf16 %v796, %v796
        %v821 = vpack.c.bf16 %v797, %v797
        %v822 = vpack.c.bf16 %v798, %v798
        %v823 = vpack.c.bf16 %v799, %v799
        %v824 = vpack.c.bf16 %v800, %v800
        %v825 = vpack.c.bf16 %v801, %v801
        %v826 = vpack.c.bf16 %v802, %v802
        %v827 = vpack.c.bf16 %v803, %v803
        %v828 = vpack.c.bf16 %v804, %v804
        %v829 = vpack.c.bf16 %v805, %v805
        %v830 = vpack.c.bf16 %v806, %v806
        %v831 = vpack.c.bf16 %v807, %v807
        %v832 = vld [vmem:[%s452] sm:$0xff]
        %v833 = vld [vmem:[%s452 + $0x8] sm:$0xff]
        %v834 = vld [vmem:[%s452 + $0x10] sm:$0xff]
        %v835 = vld [vmem:[%s452 + $0x18] sm:$0xff]
        %v836 = vld [vmem:[%s452 + $0x20] sm:$0xff]
        %v837 = vld [vmem:[%s452 + $0x28] sm:$0xff]
        %v838 = vld [vmem:[%s452 + $0x30] sm:$0xff]
        %v839 = vld [vmem:[%s452 + $0x38] sm:$0xff]
        %v840 = vld [vmem:[%s452 + $0x40] sm:$0xff]
        %v841 = vld [vmem:[%s452 + $0x48] sm:$0xff]
        %v842 = vld [vmem:[%s452 + $0x50] sm:$0xff]
        %v843 = vld [vmem:[%s452 + $0x58] sm:$0xff]
        %v844 = vld [vmem:[%s452 + $0x60] sm:$0xff]
        %v845 = vld [vmem:[%s452 + $0x68] sm:$0xff]
        %v846 = vld [vmem:[%s452 + $0x70] sm:$0xff]
        %v847 = vld [vmem:[%s452 + $0x78] sm:$0xff]
        %v848 = vld [vmem:[%s452 + $0x80] sm:$0xff]
        %v849 = vld [vmem:[%s452 + $0x88] sm:$0xff]
        %v850 = vld [vmem:[%s452 + $0x90] sm:$0xff]
        %v851 = vld [vmem:[%s452 + $0x98] sm:$0xff]
        %v852 = vld [vmem:[%s452 + $0xa0] sm:$0xff]
        %v853 = vld [vmem:[%s452 + $0xa8] sm:$0xff]
        %v854 = vld [vmem:[%s452 + $0xb0] sm:$0xff]
        %v855 = vld [vmem:[%s452 + $0xb8] sm:$0xff]
        %v856 = vld [vmem:[%s452 + $0xc0] sm:$0xff]
        %v857 = vld [vmem:[%s452 + $0xc8] sm:$0xff]
        %v858 = vld [vmem:[%s452 + $0xd0] sm:$0xff]
        %v859 = vld [vmem:[%s452 + $0xd8] sm:$0xff]
        %v860 = vld [vmem:[%s452 + $0xe0] sm:$0xff]
        %v861 = vld [vmem:[%s452 + $0xe8] sm:$0xff]
        %v862 = vld [vmem:[%s452 + $0xf0] sm:$0xff]
        %v863 = vld [vmem:[%s452 + $0xf8] sm:$0xff]
        %v864 = vld [vmem:[%s452 + $0x100] sm:$0xff]
        %v865 = vld [vmem:[%s452 + $0x108] sm:$0xff]
        %v866 = vld [vmem:[%s452 + $0x110] sm:$0xff]
        %v867 = vld [vmem:[%s452 + $0x118] sm:$0xff]
        %v868 = vld [vmem:[%s452 + $0x120] sm:$0xff]
        %v869 = vld [vmem:[%s452 + $0x128] sm:$0xff]
        %v870 = vld [vmem:[%s452 + $0x130] sm:$0xff]
        %v871 = vld [vmem:[%s452 + $0x138] sm:$0xff]
        %v872 = vld [vmem:[%s452 + $0x140] sm:$0xff]
        %v873 = vld [vmem:[%s452 + $0x148] sm:$0xff]
        %v874 = vld [vmem:[%s452 + $0x150] sm:$0xff]
        %v875 = vld [vmem:[%s452 + $0x158] sm:$0xff]
        %v876 = vld [vmem:[%s452 + $0x160] sm:$0xff]
        %v877 = vld [vmem:[%s452 + $0x168] sm:$0xff]
        %v878 = vld [vmem:[%s452 + $0x170] sm:$0xff]
        %v879 = vld [vmem:[%s452 + $0x178] sm:$0xff]
        %v880 = vld [vmem:[%s452 + $0x180] sm:$0xff]
        %v881 = vld [vmem:[%s452 + $0x188] sm:$0xff]
        %v882 = vld [vmem:[%s452 + $0x190] sm:$0xff]
        %v883 = vld [vmem:[%s452 + $0x198] sm:$0xff]
        %v884 = vld [vmem:[%s452 + $0x1a0] sm:$0xff]
        %v885 = vld [vmem:[%s452 + $0x1a8] sm:$0xff]
        %v886 = vld [vmem:[%s452 + $0x1b0] sm:$0xff]
        %v887 = vld [vmem:[%s452 + $0x1b8] sm:$0xff]
        %v888 = vld [vmem:[%s452 + $0x1c0] sm:$0xff]
        %v889 = vld [vmem:[%s452 + $0x1c8] sm:$0xff]
        %v890 = vld [vmem:[%s452 + $0x1d0] sm:$0xff]
        %v891 = vld [vmem:[%s452 + $0x1d8] sm:$0xff]
        %v892 = vld [vmem:[%s452 + $0x1e0] sm:$0xff]
        %v893 = vld [vmem:[%s452 + $0x1e8] sm:$0xff]
        %v894 = vld [vmem:[%s452 + $0x1f0] sm:$0xff]
        %v895 = vld [vmem:[%s452 + $0x1f8] sm:$0xff]
        %v896 = vld [vmem:[%s452 + $0x200] sm:$0xff]
        %v897 = vld [vmem:[%s452 + $0x208] sm:$0xff]
        %v898 = vld [vmem:[%s452 + $0x210] sm:$0xff]
        %v899 = vld [vmem:[%s452 + $0x218] sm:$0xff]
        %v900 = vld [vmem:[%s452 + $0x220] sm:$0xff]
        %v901 = vld [vmem:[%s452 + $0x228] sm:$0xff]
        %v902 = vld [vmem:[%s452 + $0x230] sm:$0xff]
        %v903 = vld [vmem:[%s452 + $0x238] sm:$0xff]
        %v904 = vld [vmem:[%s452 + $0x240] sm:$0xff]
        %v905 = vld [vmem:[%s452 + $0x248] sm:$0xff]
        %v906 = vld [vmem:[%s452 + $0x250] sm:$0xff]
        %v907 = vld [vmem:[%s452 + $0x258] sm:$0xff]
        %v908 = vld [vmem:[%s452 + $0x260] sm:$0xff]
        %v909 = vld [vmem:[%s452 + $0x268] sm:$0xff]
        %v910 = vld [vmem:[%s452 + $0x270] sm:$0xff]
        %v911 = vld [vmem:[%s452 + $0x278] sm:$0xff]
        %v912 = vld [vmem:[%s452 + $0x280] sm:$0xff]
        %v913 = vld [vmem:[%s452 + $0x288] sm:$0xff]
        %v914 = vld [vmem:[%s452 + $0x290] sm:$0xff]
        %v915 = vld [vmem:[%s452 + $0x298] sm:$0xff]
        %v916 = vld [vmem:[%s452 + $0x2a0] sm:$0xff]
        %v917 = vld [vmem:[%s452 + $0x2a8] sm:$0xff]
        %v918 = vld [vmem:[%s452 + $0x2b0] sm:$0xff]
        %v919 = vld [vmem:[%s452 + $0x2b8] sm:$0xff]
        %v920 = vld [vmem:[%s452 + $0x2c0] sm:$0xff]
        %v921 = vld [vmem:[%s452 + $0x2c8] sm:$0xff]
        %v922 = vld [vmem:[%s452 + $0x2d0] sm:$0xff]
        %v923 = vld [vmem:[%s452 + $0x2d8] sm:$0xff]
        %v924 = vld [vmem:[%s452 + $0x2e0] sm:$0xff]
        %v925 = vld [vmem:[%s452 + $0x2e8] sm:$0xff]
        %v926 = vld [vmem:[%s452 + $0x2f0] sm:$0xff]
        %v927 = vld [vmem:[%s452 + $0x2f8] sm:$0xff]
        %v928 = vld [vmem:[%s452 + $0x300] sm:$0xff]
        %v929 = vld [vmem:[%s452 + $0x308] sm:$0xff]
        %v930 = vld [vmem:[%s452 + $0x310] sm:$0xff]
        %v931 = vld [vmem:[%s452 + $0x318] sm:$0xff]
        %v932 = vld [vmem:[%s452 + $0x320] sm:$0xff]
        %v933 = vld [vmem:[%s452 + $0x328] sm:$0xff]
        %v934 = vld [vmem:[%s452 + $0x330] sm:$0xff]
        %v935 = vld [vmem:[%s452 + $0x338] sm:$0xff]
        %v936 = vld [vmem:[%s452 + $0x340] sm:$0xff]
        %v937 = vld [vmem:[%s452 + $0x348] sm:$0xff]
        %v938 = vld [vmem:[%s452 + $0x350] sm:$0xff]
        %v939 = vld [vmem:[%s452 + $0x358] sm:$0xff]
        %v940 = vld [vmem:[%s452 + $0x360] sm:$0xff]
        %v941 = vld [vmem:[%s452 + $0x368] sm:$0xff]
        %v942 = vld [vmem:[%s452 + $0x370] sm:$0xff]
        %v943 = vld [vmem:[%s452 + $0x378] sm:$0xff]
        %v944 = vld [vmem:[%s452 + $0x380] sm:$0xff]
        %v945 = vld [vmem:[%s452 + $0x388] sm:$0xff]
        %v946 = vld [vmem:[%s452 + $0x390] sm:$0xff]
        %v947 = vld [vmem:[%s452 + $0x398] sm:$0xff]
        %v948 = vld [vmem:[%s452 + $0x3a0] sm:$0xff]
        %v949 = vld [vmem:[%s452 + $0x3a8] sm:$0xff]
        %v950 = vld [vmem:[%s452 + $0x3b0] sm:$0xff]
        %v951 = vld [vmem:[%s452 + $0x3b8] sm:$0xff]
        %v952 = vld [vmem:[%s452 + $0x3c0] sm:$0xff]
        %v953 = vld [vmem:[%s452 + $0x3c8] sm:$0xff]
        %v954 = vld [vmem:[%s452 + $0x3d0] sm:$0xff]
        %v955 = vld [vmem:[%s452 + $0x3d8] sm:$0xff]
        %v956 = vld [vmem:[%s452 + $0x3e0] sm:$0xff]
        %v957 = vld [vmem:[%s452 + $0x3e8] sm:$0xff]
        %v958 = vld [vmem:[%s452 + $0x3f0] sm:$0xff]
        %v959 = vld [vmem:[%s452 + $0x3f8] sm:$0xff]
        %v960 = vld [vmem:[%s452 + $0x400] sm:$0xff]
        %v961 = vld [vmem:[%s452 + $0x408] sm:$0xff]
        %v962 = vld [vmem:[%s452 + $0x410] sm:$0xff]
        %v963 = vld [vmem:[%s452 + $0x418] sm:$0xff]
        %v964 = vld [vmem:[%s452 + $0x420] sm:$0xff]
        %v965 = vld [vmem:[%s452 + $0x428] sm:$0xff]
        %v966 = vld [vmem:[%s452 + $0x430] sm:$0xff]
        %v967 = vld [vmem:[%s452 + $0x438] sm:$0xff]
        %v968 = vld [vmem:[%s452 + $0x440] sm:$0xff]
        %v969 = vld [vmem:[%s452 + $0x448] sm:$0xff]
        %v970 = vld [vmem:[%s452 + $0x450] sm:$0xff]
        %v971 = vld [vmem:[%s452 + $0x458] sm:$0xff]
        %v972 = vld [vmem:[%s452 + $0x460] sm:$0xff]
        %v973 = vld [vmem:[%s452 + $0x468] sm:$0xff]
        %v974 = vld [vmem:[%s452 + $0x470] sm:$0xff]
        %v975 = vld [vmem:[%s452 + $0x478] sm:$0xff]
        %v976 = vld [vmem:[%s452 + $0x480] sm:$0xff]
        %v977 = vld [vmem:[%s452 + $0x488] sm:$0xff]
        %v978 = vld [vmem:[%s452 + $0x490] sm:$0xff]
        %v979 = vld [vmem:[%s452 + $0x498] sm:$0xff]
        %v980 = vld [vmem:[%s452 + $0x4a0] sm:$0xff]
        %v981 = vld [vmem:[%s452 + $0x4a8] sm:$0xff]
        %v982 = vld [vmem:[%s452 + $0x4b0] sm:$0xff]
        %v983 = vld [vmem:[%s452 + $0x4b8] sm:$0xff]
        %v984 = vld [vmem:[%s452 + $0x4c0] sm:$0xff]
        %v985 = vld [vmem:[%s452 + $0x4c8] sm:$0xff]
        %v986 = vld [vmem:[%s452 + $0x4d0] sm:$0xff]
        %v987 = vld [vmem:[%s452 + $0x4d8] sm:$0xff]
        %v988 = vld [vmem:[%s452 + $0x4e0] sm:$0xff]
        %v989 = vld [vmem:[%s452 + $0x4e8] sm:$0xff]
        %v990 = vld [vmem:[%s452 + $0x4f0] sm:$0xff]
        %v991 = vld [vmem:[%s452 + $0x4f8] sm:$0xff]
        %v992 = vld [vmem:[%s452 + $0x500] sm:$0xff]
        %v993 = vld [vmem:[%s452 + $0x508] sm:$0xff]
        %v994 = vld [vmem:[%s452 + $0x510] sm:$0xff]
        %v995 = vld [vmem:[%s452 + $0x518] sm:$0xff]
        %v996 = vld [vmem:[%s452 + $0x520] sm:$0xff]
        %v997 = vld [vmem:[%s452 + $0x528] sm:$0xff]
        %v998 = vld [vmem:[%s452 + $0x530] sm:$0xff]
        %v999 = vld [vmem:[%s452 + $0x538] sm:$0xff]
        %v1000 = vld [vmem:[%s452 + $0x540] sm:$0xff]
        %v1001 = vld [vmem:[%s452 + $0x548] sm:$0xff]
        %v1002 = vld [vmem:[%s452 + $0x550] sm:$0xff]
        %v1003 = vld [vmem:[%s452 + $0x558] sm:$0xff]
        %v1004 = vld [vmem:[%s452 + $0x560] sm:$0xff]
        %v1005 = vld [vmem:[%s452 + $0x568] sm:$0xff]
        %v1006 = vld [vmem:[%s452 + $0x570] sm:$0xff]
        %v1007 = vld [vmem:[%s452 + $0x578] sm:$0xff]
        %v1008 = vld [vmem:[%s452 + $0x580] sm:$0xff]
        %v1009 = vld [vmem:[%s452 + $0x588] sm:$0xff]
        %v1010 = vld [vmem:[%s452 + $0x590] sm:$0xff]
        %v1011 = vld [vmem:[%s452 + $0x598] sm:$0xff]
        %v1012 = vld [vmem:[%s452 + $0x5a0] sm:$0xff]
        %v1013 = vld [vmem:[%s452 + $0x5a8] sm:$0xff]
        %v1014 = vld [vmem:[%s452 + $0x5b0] sm:$0xff]
        %v1015 = vld [vmem:[%s452 + $0x5b8] sm:$0xff]
        %v1016 = vld [vmem:[%s452 + $0x5c0] sm:$0xff]
        %v1017 = vld [vmem:[%s452 + $0x5c8] sm:$0xff]
        %v1018 = vld [vmem:[%s452 + $0x5d0] sm:$0xff]
        %v1019 = vld [vmem:[%s452 + $0x5d8] sm:$0xff]
        %v1020 = vld [vmem:[%s452 + $0x5e0] sm:$0xff]
        %v1021 = vld [vmem:[%s452 + $0x5e8] sm:$0xff]
        %v1022 = vld [vmem:[%s452 + $0x5f0] sm:$0xff]
        %v1023 = vld [vmem:[%s452 + $0x5f8] sm:$0xff]
        %v1024 = vld [vmem:[%s452 + $0x600] sm:$0xff]
        %v1025 = vld [vmem:[%s452 + $0x608] sm:$0xff]
        %v1026 = vld [vmem:[%s452 + $0x610] sm:$0xff]
        %v1027 = vld [vmem:[%s452 + $0x618] sm:$0xff]
        %v1028 = vld [vmem:[%s452 + $0x620] sm:$0xff]
        %v1029 = vld [vmem:[%s452 + $0x628] sm:$0xff]
        %v1030 = vld [vmem:[%s452 + $0x630] sm:$0xff]
        %v1031 = vld [vmem:[%s452 + $0x638] sm:$0xff]
        %v1032 = vld [vmem:[%s452 + $0x640] sm:$0xff]
        %v1033 = vld [vmem:[%s452 + $0x648] sm:$0xff]
        %v1034 = vld [vmem:[%s452 + $0x650] sm:$0xff]
        %v1035 = vld [vmem:[%s452 + $0x658] sm:$0xff]
        %v1036 = vld [vmem:[%s452 + $0x660] sm:$0xff]
        %v1037 = vld [vmem:[%s452 + $0x668] sm:$0xff]
        %v1038 = vld [vmem:[%s452 + $0x670] sm:$0xff]
        %v1039 = vld [vmem:[%s452 + $0x678] sm:$0xff]
        %v1040 = vld [vmem:[%s452 + $0x680] sm:$0xff]
        %v1041 = vld [vmem:[%s452 + $0x688] sm:$0xff]
        %v1042 = vld [vmem:[%s452 + $0x690] sm:$0xff]
        %v1043 = vld [vmem:[%s452 + $0x698] sm:$0xff]
        %v1044 = vld [vmem:[%s452 + $0x6a0] sm:$0xff]
        %v1045 = vld [vmem:[%s452 + $0x6a8] sm:$0xff]
        %v1046 = vld [vmem:[%s452 + $0x6b0] sm:$0xff]
        %v1047 = vld [vmem:[%s452 + $0x6b8] sm:$0xff]
        %v1048 = vld [vmem:[%s452 + $0x6c0] sm:$0xff]
        %v1049 = vld [vmem:[%s452 + $0x6c8] sm:$0xff]
        %v1050 = vld [vmem:[%s452 + $0x6d0] sm:$0xff]
        %v1051 = vld [vmem:[%s452 + $0x6d8] sm:$0xff]
        %v1052 = vld [vmem:[%s452 + $0x6e0] sm:$0xff]
        %v1053 = vld [vmem:[%s452 + $0x6e8] sm:$0xff]
        %v1054 = vld [vmem:[%s452 + $0x6f0] sm:$0xff]
        %v1055 = vld [vmem:[%s452 + $0x6f8] sm:$0xff]
        %v1056 = vld [vmem:[%s452 + $0x700] sm:$0xff]
        %v1057 = vld [vmem:[%s452 + $0x708] sm:$0xff]
        %v1058 = vld [vmem:[%s452 + $0x710] sm:$0xff]
        %v1059 = vld [vmem:[%s452 + $0x718] sm:$0xff]
        %v1060 = vld [vmem:[%s452 + $0x720] sm:$0xff]
        %v1061 = vld [vmem:[%s452 + $0x728] sm:$0xff]
        %v1062 = vld [vmem:[%s452 + $0x730] sm:$0xff]
        %v1063 = vld [vmem:[%s452 + $0x738] sm:$0xff]
        %v1064 = vld [vmem:[%s452 + $0x740] sm:$0xff]
        %v1065 = vld [vmem:[%s452 + $0x748] sm:$0xff]
        %v1066 = vld [vmem:[%s452 + $0x750] sm:$0xff]
        %v1067 = vld [vmem:[%s452 + $0x758] sm:$0xff]
        %v1068 = vld [vmem:[%s452 + $0x760] sm:$0xff]
        %v1069 = vld [vmem:[%s452 + $0x768] sm:$0xff]
        %v1070 = vld [vmem:[%s452 + $0x770] sm:$0xff]
        %v1071 = vld [vmem:[%s452 + $0x778] sm:$0xff]
        %v1072 = vld [vmem:[%s452 + $0x780] sm:$0xff]
        %v1073 = vld [vmem:[%s452 + $0x788] sm:$0xff]
        %v1074 = vld [vmem:[%s452 + $0x790] sm:$0xff]
        %v1075 = vld [vmem:[%s452 + $0x798] sm:$0xff]
        %v1076 = vld [vmem:[%s452 + $0x7a0] sm:$0xff]
        %v1077 = vld [vmem:[%s452 + $0x7a8] sm:$0xff]
        %v1078 = vld [vmem:[%s452 + $0x7b0] sm:$0xff]
        %v1079 = vld [vmem:[%s452 + $0x7b8] sm:$0xff]
        %v1080 = vld [vmem:[%s452 + $0x7c0] sm:$0xff]
        %v1081 = vld [vmem:[%s452 + $0x7c8] sm:$0xff]
        %v1082 = vld [vmem:[%s452 + $0x7d0] sm:$0xff]
        %v1083 = vld [vmem:[%s452 + $0x7d8] sm:$0xff]
        %v1084 = vld [vmem:[%s452 + $0x7e0] sm:$0xff]
        %v1085 = vld [vmem:[%s452 + $0x7e8] sm:$0xff]
        %v1086 = vld [vmem:[%s452 + $0x7f0] sm:$0xff]
        %v1087 = vld [vmem:[%s452 + $0x7f8] sm:$0xff]
        %v1088 = vld [vmem:[%s452 + $0x800] sm:$0xff]
        %v1089 = vld [vmem:[%s452 + $0x808] sm:$0xff]
        %v1090 = vld [vmem:[%s452 + $0x810] sm:$0xff]
        %v1091 = vld [vmem:[%s452 + $0x818] sm:$0xff]
        %v1092 = vld [vmem:[%s452 + $0x820] sm:$0xff]
        %v1093 = vld [vmem:[%s452 + $0x828] sm:$0xff]
        %v1094 = vld [vmem:[%s452 + $0x830] sm:$0xff]
        %v1095 = vld [vmem:[%s452 + $0x838] sm:$0xff]
        %v1096 = vld [vmem:[%s452 + $0x840] sm:$0xff]
        %v1097 = vld [vmem:[%s452 + $0x848] sm:$0xff]
        %v1098 = vld [vmem:[%s452 + $0x850] sm:$0xff]
        %v1099 = vld [vmem:[%s452 + $0x858] sm:$0xff]
        %v1100 = vld [vmem:[%s452 + $0x860] sm:$0xff]
        %v1101 = vld [vmem:[%s452 + $0x868] sm:$0xff]
        %v1102 = vld [vmem:[%s452 + $0x870] sm:$0xff]
        %v1103 = vld [vmem:[%s452 + $0x878] sm:$0xff]
        %v1104 = vld [vmem:[%s452 + $0x880] sm:$0xff]
        %v1105 = vld [vmem:[%s452 + $0x888] sm:$0xff]
        %v1106 = vld [vmem:[%s452 + $0x890] sm:$0xff]
        %v1107 = vld [vmem:[%s452 + $0x898] sm:$0xff]
        %v1108 = vld [vmem:[%s452 + $0x8a0] sm:$0xff]
        %v1109 = vld [vmem:[%s452 + $0x8a8] sm:$0xff]
        %v1110 = vld [vmem:[%s452 + $0x8b0] sm:$0xff]
        %v1111 = vld [vmem:[%s452 + $0x8b8] sm:$0xff]
        %v1112 = vld [vmem:[%s452 + $0x8c0] sm:$0xff]
        %v1113 = vld [vmem:[%s452 + $0x8c8] sm:$0xff]
        %v1114 = vld [vmem:[%s452 + $0x8d0] sm:$0xff]
        %v1115 = vld [vmem:[%s452 + $0x8d8] sm:$0xff]
        %v1116 = vld [vmem:[%s452 + $0x8e0] sm:$0xff]
        %v1117 = vld [vmem:[%s452 + $0x8e8] sm:$0xff]
        %v1118 = vld [vmem:[%s452 + $0x8f0] sm:$0xff]
        %v1119 = vld [vmem:[%s452 + $0x8f8] sm:$0xff]
        %v1120 = vld [vmem:[%s452 + $0x900] sm:$0xff]
        %v1121 = vld [vmem:[%s452 + $0x908] sm:$0xff]
        %v1122 = vld [vmem:[%s452 + $0x910] sm:$0xff]
        %v1123 = vld [vmem:[%s452 + $0x918] sm:$0xff]
        %v1124 = vld [vmem:[%s452 + $0x920] sm:$0xff]
        %v1125 = vld [vmem:[%s452 + $0x928] sm:$0xff]
        %v1126 = vld [vmem:[%s452 + $0x930] sm:$0xff]
        %v1127 = vld [vmem:[%s452 + $0x938] sm:$0xff]
        %v1128 = vld [vmem:[%s452 + $0x940] sm:$0xff]
        %v1129 = vld [vmem:[%s452 + $0x948] sm:$0xff]
        %v1130 = vld [vmem:[%s452 + $0x950] sm:$0xff]
        %v1131 = vld [vmem:[%s452 + $0x958] sm:$0xff]
        %v1132 = vld [vmem:[%s452 + $0x960] sm:$0xff]
        %v1133 = vld [vmem:[%s452 + $0x968] sm:$0xff]
        %v1134 = vld [vmem:[%s452 + $0x970] sm:$0xff]
        %v1135 = vld [vmem:[%s452 + $0x978] sm:$0xff]
        %v1136 = vld [vmem:[%s452 + $0x980] sm:$0xff]
        %v1137 = vld [vmem:[%s452 + $0x988] sm:$0xff]
        %v1138 = vld [vmem:[%s452 + $0x990] sm:$0xff]
        %v1139 = vld [vmem:[%s452 + $0x998] sm:$0xff]
        %v1140 = vld [vmem:[%s452 + $0x9a0] sm:$0xff]
        %v1141 = vld [vmem:[%s452 + $0x9a8] sm:$0xff]
        %v1142 = vld [vmem:[%s452 + $0x9b0] sm:$0xff]
        %v1143 = vld [vmem:[%s452 + $0x9b8] sm:$0xff]
        %v1144 = vld [vmem:[%s452 + $0x9c0] sm:$0xff]
        %v1145 = vld [vmem:[%s452 + $0x9c8] sm:$0xff]
        %v1146 = vld [vmem:[%s452 + $0x9d0] sm:$0xff]
        %v1147 = vld [vmem:[%s452 + $0x9d8] sm:$0xff]
        %v1148 = vld [vmem:[%s452 + $0x9e0] sm:$0xff]
        %v1149 = vld [vmem:[%s452 + $0x9e8] sm:$0xff]
        %v1150 = vld [vmem:[%s452 + $0x9f0] sm:$0xff]
        %v1151 = vld [vmem:[%s452 + $0x9f8] sm:$0xff]
        %v1152 = vld [vmem:[%s452 + $0xa00] sm:$0xff]
        %v1153 = vld [vmem:[%s452 + $0xa08] sm:$0xff]
        %v1154 = vld [vmem:[%s452 + $0xa10] sm:$0xff]
        %v1155 = vld [vmem:[%s452 + $0xa18] sm:$0xff]
        %v1156 = vld [vmem:[%s452 + $0xa20] sm:$0xff]
        %v1157 = vld [vmem:[%s452 + $0xa28] sm:$0xff]
        %v1158 = vld [vmem:[%s452 + $0xa30] sm:$0xff]
        %v1159 = vld [vmem:[%s452 + $0xa38] sm:$0xff]
        %v1160 = vld [vmem:[%s452 + $0xa40] sm:$0xff]
        %v1161 = vld [vmem:[%s452 + $0xa48] sm:$0xff]
        %v1162 = vld [vmem:[%s452 + $0xa50] sm:$0xff]
        %v1163 = vld [vmem:[%s452 + $0xa58] sm:$0xff]
        %v1164 = vld [vmem:[%s452 + $0xa60] sm:$0xff]
        %v1165 = vld [vmem:[%s452 + $0xa68] sm:$0xff]
        %v1166 = vld [vmem:[%s452 + $0xa70] sm:$0xff]
        %v1167 = vld [vmem:[%s452 + $0xa78] sm:$0xff]
        %v1168 = vld [vmem:[%s452 + $0xa80] sm:$0xff]
        %v1169 = vld [vmem:[%s452 + $0xa88] sm:$0xff]
        %v1170 = vld [vmem:[%s452 + $0xa90] sm:$0xff]
        %v1171 = vld [vmem:[%s452 + $0xa98] sm:$0xff]
        %v1172 = vld [vmem:[%s452 + $0xaa0] sm:$0xff]
        %v1173 = vld [vmem:[%s452 + $0xaa8] sm:$0xff]
        %v1174 = vld [vmem:[%s452 + $0xab0] sm:$0xff]
        %v1175 = vld [vmem:[%s452 + $0xab8] sm:$0xff]
        %v1176 = vld [vmem:[%s452 + $0xac0] sm:$0xff]
        %v1177 = vld [vmem:[%s452 + $0xac8] sm:$0xff]
        %v1178 = vld [vmem:[%s452 + $0xad0] sm:$0xff]
        %v1179 = vld [vmem:[%s452 + $0xad8] sm:$0xff]
        %v1180 = vld [vmem:[%s452 + $0xae0] sm:$0xff]
        %v1181 = vld [vmem:[%s452 + $0xae8] sm:$0xff]
        %v1182 = vld [vmem:[%s452 + $0xaf0] sm:$0xff]
        %v1183 = vld [vmem:[%s452 + $0xaf8] sm:$0xff]
        %v1184 = vld [vmem:[%s452 + $0xb00] sm:$0xff]
        %v1185 = vld [vmem:[%s452 + $0xb08] sm:$0xff]
        %v1186 = vld [vmem:[%s452 + $0xb10] sm:$0xff]
        %v1187 = vld [vmem:[%s452 + $0xb18] sm:$0xff]
        %v1188 = vld [vmem:[%s452 + $0xb20] sm:$0xff]
        %v1189 = vld [vmem:[%s452 + $0xb28] sm:$0xff]
        %v1190 = vld [vmem:[%s452 + $0xb30] sm:$0xff]
        %v1191 = vld [vmem:[%s452 + $0xb38] sm:$0xff]
        %v1192 = vld [vmem:[%s452 + $0xb40] sm:$0xff]
        %v1193 = vld [vmem:[%s452 + $0xb48] sm:$0xff]
        %v1194 = vld [vmem:[%s452 + $0xb50] sm:$0xff]
        %v1195 = vld [vmem:[%s452 + $0xb58] sm:$0xff]
        %v1196 = vld [vmem:[%s452 + $0xb60] sm:$0xff]
        %v1197 = vld [vmem:[%s452 + $0xb68] sm:$0xff]
        %v1198 = vld [vmem:[%s452 + $0xb70] sm:$0xff]
        %v1199 = vld [vmem:[%s452 + $0xb78] sm:$0xff]
        %v1200 = vld [vmem:[%s452 + $0xb80] sm:$0xff]
        %v1201 = vld [vmem:[%s452 + $0xb88] sm:$0xff]
        %v1202 = vld [vmem:[%s452 + $0xb90] sm:$0xff]
        %v1203 = vld [vmem:[%s452 + $0xb98] sm:$0xff]
        %v1204 = vld [vmem:[%s452 + $0xba0] sm:$0xff]
        %v1205 = vld [vmem:[%s452 + $0xba8] sm:$0xff]
        %v1206 = vld [vmem:[%s452 + $0xbb0] sm:$0xff]
        %v1207 = vld [vmem:[%s452 + $0xbb8] sm:$0xff]
        %v1208 = vld [vmem:[%s452 + $0xbc0] sm:$0xff]
        %v1209 = vld [vmem:[%s452 + $0xbc8] sm:$0xff]
        %v1210 = vld [vmem:[%s452 + $0xbd0] sm:$0xff]
        %v1211 = vld [vmem:[%s452 + $0xbd8] sm:$0xff]
        %v1212 = vld [vmem:[%s452 + $0xbe0] sm:$0xff]
        %v1213 = vld [vmem:[%s452 + $0xbe8] sm:$0xff]
        %v1214 = vld [vmem:[%s452 + $0xbf0] sm:$0xff]
        %v1215 = vld [vmem:[%s452 + $0xbf8] sm:$0xff]
        %v1216 = vld [vmem:[%s452 + $0xc00] sm:$0xff]
        %v1217 = vld [vmem:[%s452 + $0xc08] sm:$0xff]
        %v1218 = vld [vmem:[%s452 + $0xc10] sm:$0xff]
        %v1219 = vld [vmem:[%s452 + $0xc18] sm:$0xff]
        %v1220 = vld [vmem:[%s452 + $0xc20] sm:$0xff]
        %v1221 = vld [vmem:[%s452 + $0xc28] sm:$0xff]
        %v1222 = vld [vmem:[%s452 + $0xc30] sm:$0xff]
        %v1223 = vld [vmem:[%s452 + $0xc38] sm:$0xff]
        %v1224 = vld [vmem:[%s452 + $0xc40] sm:$0xff]
        %v1225 = vld [vmem:[%s452 + $0xc48] sm:$0xff]
        %v1226 = vld [vmem:[%s452 + $0xc50] sm:$0xff]
        %v1227 = vld [vmem:[%s452 + $0xc58] sm:$0xff]
        %v1228 = vld [vmem:[%s452 + $0xc60] sm:$0xff]
        %v1229 = vld [vmem:[%s452 + $0xc68] sm:$0xff]
        %v1230 = vld [vmem:[%s452 + $0xc70] sm:$0xff]
        %v1231 = vld [vmem:[%s452 + $0xc78] sm:$0xff]
        %v1232 = vld [vmem:[%s452 + $0xc80] sm:$0xff]
        %v1233 = vld [vmem:[%s452 + $0xc88] sm:$0xff]
        %v1234 = vld [vmem:[%s452 + $0xc90] sm:$0xff]
        %v1235 = vld [vmem:[%s452 + $0xc98] sm:$0xff]
        %v1236 = vld [vmem:[%s452 + $0xca0] sm:$0xff]
        %v1237 = vld [vmem:[%s452 + $0xca8] sm:$0xff]
        %v1238 = vld [vmem:[%s452 + $0xcb0] sm:$0xff]
        %v1239 = vld [vmem:[%s452 + $0xcb8] sm:$0xff]
        %v1240 = vld [vmem:[%s452 + $0xcc0] sm:$0xff]
        %v1241 = vld [vmem:[%s452 + $0xcc8] sm:$0xff]
        %v1242 = vld [vmem:[%s452 + $0xcd0] sm:$0xff]
        %v1243 = vld [vmem:[%s452 + $0xcd8] sm:$0xff]
        %v1244 = vld [vmem:[%s452 + $0xce0] sm:$0xff]
        %v1245 = vld [vmem:[%s452 + $0xce8] sm:$0xff]
        %v1246 = vld [vmem:[%s452 + $0xcf0] sm:$0xff]
        %v1247 = vld [vmem:[%s452 + $0xcf8] sm:$0xff]
        %v1248 = vld [vmem:[%s452 + $0xd00] sm:$0xff]
        %v1249 = vld [vmem:[%s452 + $0xd08] sm:$0xff]
        %v1250 = vld [vmem:[%s452 + $0xd10] sm:$0xff]
        %v1251 = vld [vmem:[%s452 + $0xd18] sm:$0xff]
        %v1252 = vld [vmem:[%s452 + $0xd20] sm:$0xff]
        %v1253 = vld [vmem:[%s452 + $0xd28] sm:$0xff]
        %v1254 = vld [vmem:[%s452 + $0xd30] sm:$0xff]
        %v1255 = vld [vmem:[%s452 + $0xd38] sm:$0xff]
        %v1256 = vld [vmem:[%s452 + $0xd40] sm:$0xff]
        %v1257 = vld [vmem:[%s452 + $0xd48] sm:$0xff]
        %v1258 = vld [vmem:[%s452 + $0xd50] sm:$0xff]
        %v1259 = vld [vmem:[%s452 + $0xd58] sm:$0xff]
        %v1260 = vld [vmem:[%s452 + $0xd60] sm:$0xff]
        %v1261 = vld [vmem:[%s452 + $0xd68] sm:$0xff]
        %v1262 = vld [vmem:[%s452 + $0xd70] sm:$0xff]
        %v1263 = vld [vmem:[%s452 + $0xd78] sm:$0xff]
        %v1264 = vld [vmem:[%s452 + $0xd80] sm:$0xff]
        %v1265 = vld [vmem:[%s452 + $0xd88] sm:$0xff]
        %v1266 = vld [vmem:[%s452 + $0xd90] sm:$0xff]
        %v1267 = vld [vmem:[%s452 + $0xd98] sm:$0xff]
        %v1268 = vld [vmem:[%s452 + $0xda0] sm:$0xff]
        %v1269 = vld [vmem:[%s452 + $0xda8] sm:$0xff]
        %v1270 = vld [vmem:[%s452 + $0xdb0] sm:$0xff]
        %v1271 = vld [vmem:[%s452 + $0xdb8] sm:$0xff]
        %v1272 = vld [vmem:[%s452 + $0xdc0] sm:$0xff]
        %v1273 = vld [vmem:[%s452 + $0xdc8] sm:$0xff]
        %v1274 = vld [vmem:[%s452 + $0xdd0] sm:$0xff]
        %v1275 = vld [vmem:[%s452 + $0xdd8] sm:$0xff]
        %v1276 = vld [vmem:[%s452 + $0xde0] sm:$0xff]
        %v1277 = vld [vmem:[%s452 + $0xde8] sm:$0xff]
        %v1278 = vld [vmem:[%s452 + $0xdf0] sm:$0xff]
        %v1279 = vld [vmem:[%s452 + $0xdf8] sm:$0xff]
        %v1280 = vld [vmem:[%s452 + $0xe00] sm:$0xff]
        %v1281 = vld [vmem:[%s452 + $0xe08] sm:$0xff]
        %v1282 = vld [vmem:[%s452 + $0xe10] sm:$0xff]
        %v1283 = vld [vmem:[%s452 + $0xe18] sm:$0xff]
        %v1284 = vld [vmem:[%s452 + $0xe20] sm:$0xff]
        %v1285 = vld [vmem:[%s452 + $0xe28] sm:$0xff]
        %v1286 = vld [vmem:[%s452 + $0xe30] sm:$0xff]
        %v1287 = vld [vmem:[%s452 + $0xe38] sm:$0xff]
        %v1288 = vld [vmem:[%s452 + $0xe40] sm:$0xff]
        %v1289 = vld [vmem:[%s452 + $0xe48] sm:$0xff]
        %v1290 = vld [vmem:[%s452 + $0xe50] sm:$0xff]
        %v1291 = vld [vmem:[%s452 + $0xe58] sm:$0xff]
        %v1292 = vld [vmem:[%s452 + $0xe60] sm:$0xff]
        %v1293 = vld [vmem:[%s452 + $0xe68] sm:$0xff]
        %v1294 = vld [vmem:[%s452 + $0xe70] sm:$0xff]
        %v1295 = vld [vmem:[%s452 + $0xe78] sm:$0xff]
        %v1296 = vld [vmem:[%s452 + $0xe80] sm:$0xff]
        %v1297 = vld [vmem:[%s452 + $0xe88] sm:$0xff]
        %v1298 = vld [vmem:[%s452 + $0xe90] sm:$0xff]
        %v1299 = vld [vmem:[%s452 + $0xe98] sm:$0xff]
        %v1300 = vld [vmem:[%s452 + $0xea0] sm:$0xff]
        %v1301 = vld [vmem:[%s452 + $0xea8] sm:$0xff]
        %v1302 = vld [vmem:[%s452 + $0xeb0] sm:$0xff]
        %v1303 = vld [vmem:[%s452 + $0xeb8] sm:$0xff]
        %v1304 = vld [vmem:[%s452 + $0xec0] sm:$0xff]
        %v1305 = vld [vmem:[%s452 + $0xec8] sm:$0xff]
        %v1306 = vld [vmem:[%s452 + $0xed0] sm:$0xff]
        %v1307 = vld [vmem:[%s452 + $0xed8] sm:$0xff]
        %v1308 = vld [vmem:[%s452 + $0xee0] sm:$0xff]
        %v1309 = vld [vmem:[%s452 + $0xee8] sm:$0xff]
        %v1310 = vld [vmem:[%s452 + $0xef0] sm:$0xff]
        %v1311 = vld [vmem:[%s452 + $0xef8] sm:$0xff]
        %v1312 = vld [vmem:[%s452 + $0xf00] sm:$0xff]
        %v1313 = vld [vmem:[%s452 + $0xf08] sm:$0xff]
        %v1314 = vld [vmem:[%s452 + $0xf10] sm:$0xff]
        %v1315 = vld [vmem:[%s452 + $0xf18] sm:$0xff]
        %v1316 = vld [vmem:[%s452 + $0xf20] sm:$0xff]
        %v1317 = vld [vmem:[%s452 + $0xf28] sm:$0xff]
        %v1318 = vld [vmem:[%s452 + $0xf30] sm:$0xff]
        %v1319 = vld [vmem:[%s452 + $0xf38] sm:$0xff]
        %v1320 = vld [vmem:[%s452 + $0xf40] sm:$0xff]
        %v1321 = vld [vmem:[%s452 + $0xf48] sm:$0xff]
        %v1322 = vld [vmem:[%s452 + $0xf50] sm:$0xff]
        %v1323 = vld [vmem:[%s452 + $0xf58] sm:$0xff]
        %v1324 = vld [vmem:[%s452 + $0xf60] sm:$0xff]
        %v1325 = vld [vmem:[%s452 + $0xf68] sm:$0xff]
        %v1326 = vld [vmem:[%s452 + $0xf70] sm:$0xff]
        %v1327 = vld [vmem:[%s452 + $0xf78] sm:$0xff]
        %v1328 = vld [vmem:[%s452 + $0xf80] sm:$0xff]
        %v1329 = vld [vmem:[%s452 + $0xf88] sm:$0xff]
        %v1330 = vld [vmem:[%s452 + $0xf90] sm:$0xff]
        %v1331 = vld [vmem:[%s452 + $0xf98] sm:$0xff]
        %v1332 = vld [vmem:[%s452 + $0xfa0] sm:$0xff]
        %v1333 = vld [vmem:[%s452 + $0xfa8] sm:$0xff]
        %v1334 = vld [vmem:[%s452 + $0xfb0] sm:$0xff]
        %v1335 = vld [vmem:[%s452 + $0xfb8] sm:$0xff]
        %v1336 = vld [vmem:[%s452 + $0xfc0] sm:$0xff]
        %v1337 = vld [vmem:[%s452 + $0xfc8] sm:$0xff]
        %v1338 = vld [vmem:[%s452 + $0xfd0] sm:$0xff]
        %v1339 = vld [vmem:[%s452 + $0xfd8] sm:$0xff]
        %v1340 = vld [vmem:[%s452 + $0xfe0] sm:$0xff]
        %v1341 = vld [vmem:[%s452 + $0xfe8] sm:$0xff]
        %v1342 = vld [vmem:[%s452 + $0xff0] sm:$0xff]
        %v1343 = vld [vmem:[%s452 + $0xff8] sm:$0xff]
        %v1344 = vld [vmem:[%s452 + $0x1000] sm:$0xff]
        %v1345 = vld [vmem:[%s452 + $0x1008] sm:$0xff]
        %v1346 = vld [vmem:[%s452 + $0x1010] sm:$0xff]
        %v1347 = vld [vmem:[%s452 + $0x1018] sm:$0xff]
        %v1348 = vld [vmem:[%s452 + $0x1020] sm:$0xff]
        %v1349 = vld [vmem:[%s452 + $0x1028] sm:$0xff]
        %v1350 = vld [vmem:[%s452 + $0x1030] sm:$0xff]
        %v1351 = vld [vmem:[%s452 + $0x1038] sm:$0xff]
        %v1352 = vld [vmem:[%s452 + $0x1040] sm:$0xff]
        %v1353 = vld [vmem:[%s452 + $0x1048] sm:$0xff]
        %v1354 = vld [vmem:[%s452 + $0x1050] sm:$0xff]
        %v1355 = vld [vmem:[%s452 + $0x1058] sm:$0xff]
        %v1356 = vld [vmem:[%s452 + $0x1060] sm:$0xff]
        %v1357 = vld [vmem:[%s452 + $0x1068] sm:$0xff]
        %v1358 = vld [vmem:[%s452 + $0x1070] sm:$0xff]
        %v1359 = vld [vmem:[%s452 + $0x1078] sm:$0xff]
        %v1360 = vld [vmem:[%s452 + $0x1080] sm:$0xff]
        %v1361 = vld [vmem:[%s452 + $0x1088] sm:$0xff]
        %v1362 = vld [vmem:[%s452 + $0x1090] sm:$0xff]
        %v1363 = vld [vmem:[%s452 + $0x1098] sm:$0xff]
        %v1364 = vld [vmem:[%s452 + $0x10a0] sm:$0xff]
        %v1365 = vld [vmem:[%s452 + $0x10a8] sm:$0xff]
        %v1366 = vld [vmem:[%s452 + $0x10b0] sm:$0xff]
        %v1367 = vld [vmem:[%s452 + $0x10b8] sm:$0xff]
        %v1368 = vld [vmem:[%s452 + $0x10c0] sm:$0xff]
        %v1369 = vld [vmem:[%s452 + $0x10c8] sm:$0xff]
        %v1370 = vld [vmem:[%s452 + $0x10d0] sm:$0xff]
        %v1371 = vld [vmem:[%s452 + $0x10d8] sm:$0xff]
        %v1372 = vld [vmem:[%s452 + $0x10e0] sm:$0xff]
        %v1373 = vld [vmem:[%s452 + $0x10e8] sm:$0xff]
        %v1374 = vld [vmem:[%s452 + $0x10f0] sm:$0xff]
        %v1375 = vld [vmem:[%s452 + $0x10f8] sm:$0xff]
        %v1376 = vld [vmem:[%s452 + $0x1100] sm:$0xff]
        %v1377 = vld [vmem:[%s452 + $0x1108] sm:$0xff]
        %v1378 = vld [vmem:[%s452 + $0x1110] sm:$0xff]
        %v1379 = vld [vmem:[%s452 + $0x1118] sm:$0xff]
        %v1380 = vld [vmem:[%s452 + $0x1120] sm:$0xff]
        %v1381 = vld [vmem:[%s452 + $0x1128] sm:$0xff]
        %v1382 = vld [vmem:[%s452 + $0x1130] sm:$0xff]
        %v1383 = vld [vmem:[%s452 + $0x1138] sm:$0xff]
        %v1384 = vld [vmem:[%s452 + $0x1140] sm:$0xff]
        %v1385 = vld [vmem:[%s452 + $0x1148] sm:$0xff]
        %v1386 = vld [vmem:[%s452 + $0x1150] sm:$0xff]
        %v1387 = vld [vmem:[%s452 + $0x1158] sm:$0xff]
        %v1388 = vld [vmem:[%s452 + $0x1160] sm:$0xff]
        %v1389 = vld [vmem:[%s452 + $0x1168] sm:$0xff]
        %v1390 = vld [vmem:[%s452 + $0x1170] sm:$0xff]
        %v1391 = vld [vmem:[%s452 + $0x1178] sm:$0xff]
        %v1392 = vld [vmem:[%s452 + $0x1180] sm:$0xff]
        %v1393 = vld [vmem:[%s452 + $0x1188] sm:$0xff]
        %v1394 = vld [vmem:[%s452 + $0x1190] sm:$0xff]
        %v1395 = vld [vmem:[%s452 + $0x1198] sm:$0xff]
        %v1396 = vld [vmem:[%s452 + $0x11a0] sm:$0xff]
        %v1397 = vld [vmem:[%s452 + $0x11a8] sm:$0xff]
        %v1398 = vld [vmem:[%s452 + $0x11b0] sm:$0xff]
        %v1399 = vld [vmem:[%s452 + $0x11b8] sm:$0xff]
        %v1400 = vld [vmem:[%s452 + $0x11c0] sm:$0xff]
        %v1401 = vld [vmem:[%s452 + $0x11c8] sm:$0xff]
        %v1402 = vld [vmem:[%s452 + $0x11d0] sm:$0xff]
        %v1403 = vld [vmem:[%s452 + $0x11d8] sm:$0xff]
        %v1404 = vld [vmem:[%s452 + $0x11e0] sm:$0xff]
        %v1405 = vld [vmem:[%s452 + $0x11e8] sm:$0xff]
        %v1406 = vld [vmem:[%s452 + $0x11f0] sm:$0xff]
        %v1407 = vld [vmem:[%s452 + $0x11f8] sm:$0xff]
        %v1408 = vld [vmem:[%s452 + $0x1200] sm:$0xff]
        %v1409 = vld [vmem:[%s452 + $0x1208] sm:$0xff]
        %v1410 = vld [vmem:[%s452 + $0x1210] sm:$0xff]
        %v1411 = vld [vmem:[%s452 + $0x1218] sm:$0xff]
        %v1412 = vld [vmem:[%s452 + $0x1220] sm:$0xff]
        %v1413 = vld [vmem:[%s452 + $0x1228] sm:$0xff]
        %v1414 = vld [vmem:[%s452 + $0x1230] sm:$0xff]
        %v1415 = vld [vmem:[%s452 + $0x1238] sm:$0xff]
        %v1416 = vld [vmem:[%s452 + $0x1240] sm:$0xff]
        %v1417 = vld [vmem:[%s452 + $0x1248] sm:$0xff]
        %v1418 = vld [vmem:[%s452 + $0x1250] sm:$0xff]
        %v1419 = vld [vmem:[%s452 + $0x1258] sm:$0xff]
        %v1420 = vld [vmem:[%s452 + $0x1260] sm:$0xff]
        %v1421 = vld [vmem:[%s452 + $0x1268] sm:$0xff]
        %v1422 = vld [vmem:[%s452 + $0x1270] sm:$0xff]
        %v1423 = vld [vmem:[%s452 + $0x1278] sm:$0xff]
        %v1424 = vld [vmem:[%s452 + $0x1280] sm:$0xff]
        %v1425 = vld [vmem:[%s452 + $0x1288] sm:$0xff]
        %v1426 = vld [vmem:[%s452 + $0x1290] sm:$0xff]
        %v1427 = vld [vmem:[%s452 + $0x1298] sm:$0xff]
        %v1428 = vld [vmem:[%s452 + $0x12a0] sm:$0xff]
        %v1429 = vld [vmem:[%s452 + $0x12a8] sm:$0xff]
        %v1430 = vld [vmem:[%s452 + $0x12b0] sm:$0xff]
        %v1431 = vld [vmem:[%s452 + $0x12b8] sm:$0xff]
        %v1432 = vld [vmem:[%s452 + $0x12c0] sm:$0xff]
        %v1433 = vld [vmem:[%s452 + $0x12c8] sm:$0xff]
        %v1434 = vld [vmem:[%s452 + $0x12d0] sm:$0xff]
        %v1435 = vld [vmem:[%s452 + $0x12d8] sm:$0xff]
        %v1436 = vld [vmem:[%s452 + $0x12e0] sm:$0xff]
        %v1437 = vld [vmem:[%s452 + $0x12e8] sm:$0xff]
        %v1438 = vld [vmem:[%s452 + $0x12f0] sm:$0xff]
        %v1439 = vld [vmem:[%s452 + $0x12f8] sm:$0xff]
        %v1440 = vld [vmem:[%s452 + $0x1300] sm:$0xff]
        %v1441 = vld [vmem:[%s452 + $0x1308] sm:$0xff]
        %v1442 = vld [vmem:[%s452 + $0x1310] sm:$0xff]
        %v1443 = vld [vmem:[%s452 + $0x1318] sm:$0xff]
        %v1444 = vld [vmem:[%s452 + $0x1320] sm:$0xff]
        %v1445 = vld [vmem:[%s452 + $0x1328] sm:$0xff]
        %v1446 = vld [vmem:[%s452 + $0x1330] sm:$0xff]
        %v1447 = vld [vmem:[%s452 + $0x1338] sm:$0xff]
        %v1448 = vld [vmem:[%s452 + $0x1340] sm:$0xff]
        %v1449 = vld [vmem:[%s452 + $0x1348] sm:$0xff]
        %v1450 = vld [vmem:[%s452 + $0x1350] sm:$0xff]
        %v1451 = vld [vmem:[%s452 + $0x1358] sm:$0xff]
        %v1452 = vld [vmem:[%s452 + $0x1360] sm:$0xff]
        %v1453 = vld [vmem:[%s452 + $0x1368] sm:$0xff]
        %v1454 = vld [vmem:[%s452 + $0x1370] sm:$0xff]
        %v1455 = vld [vmem:[%s452 + $0x1378] sm:$0xff]
        %v1456 = vld [vmem:[%s452 + $0x1380] sm:$0xff]
        %v1457 = vld [vmem:[%s452 + $0x1388] sm:$0xff]
        %v1458 = vld [vmem:[%s452 + $0x1390] sm:$0xff]
        %v1459 = vld [vmem:[%s452 + $0x1398] sm:$0xff]
        %v1460 = vld [vmem:[%s452 + $0x13a0] sm:$0xff]
        %v1461 = vld [vmem:[%s452 + $0x13a8] sm:$0xff]
        %v1462 = vld [vmem:[%s452 + $0x13b0] sm:$0xff]
        %v1463 = vld [vmem:[%s452 + $0x13b8] sm:$0xff]
        %v1464 = vld [vmem:[%s452 + $0x13c0] sm:$0xff]
        %v1465 = vld [vmem:[%s452 + $0x13c8] sm:$0xff]
        %v1466 = vld [vmem:[%s452 + $0x13d0] sm:$0xff]
        %v1467 = vld [vmem:[%s452 + $0x13d8] sm:$0xff]
        %v1468 = vld [vmem:[%s452 + $0x13e0] sm:$0xff]
        %v1469 = vld [vmem:[%s452 + $0x13e8] sm:$0xff]
        %v1470 = vld [vmem:[%s452 + $0x13f0] sm:$0xff]
        %v1471 = vld [vmem:[%s452 + $0x13f8] sm:$0xff]
        %v1472 = vld [vmem:[%s452 + $0x1400] sm:$0xff]
        %v1473 = vld [vmem:[%s452 + $0x1408] sm:$0xff]
        %v1474 = vld [vmem:[%s452 + $0x1410] sm:$0xff]
        %v1475 = vld [vmem:[%s452 + $0x1418] sm:$0xff]
        %v1476 = vld [vmem:[%s452 + $0x1420] sm:$0xff]
        %v1477 = vld [vmem:[%s452 + $0x1428] sm:$0xff]
        %v1478 = vld [vmem:[%s452 + $0x1430] sm:$0xff]
        %v1479 = vld [vmem:[%s452 + $0x1438] sm:$0xff]
        %v1480 = vld [vmem:[%s452 + $0x1440] sm:$0xff]
        %v1481 = vld [vmem:[%s452 + $0x1448] sm:$0xff]
        %v1482 = vld [vmem:[%s452 + $0x1450] sm:$0xff]
        %v1483 = vld [vmem:[%s452 + $0x1458] sm:$0xff]
        %v1484 = vld [vmem:[%s452 + $0x1460] sm:$0xff]
        %v1485 = vld [vmem:[%s452 + $0x1468] sm:$0xff]
        %v1486 = vld [vmem:[%s452 + $0x1470] sm:$0xff]
        %v1487 = vld [vmem:[%s452 + $0x1478] sm:$0xff]
        %v1488 = vld [vmem:[%s452 + $0x1480] sm:$0xff]
        %v1489 = vld [vmem:[%s452 + $0x1488] sm:$0xff]
        %v1490 = vld [vmem:[%s452 + $0x1490] sm:$0xff]
        %v1491 = vld [vmem:[%s452 + $0x1498] sm:$0xff]
        %v1492 = vld [vmem:[%s452 + $0x14a0] sm:$0xff]
        %v1493 = vld [vmem:[%s452 + $0x14a8] sm:$0xff]
        %v1494 = vld [vmem:[%s452 + $0x14b0] sm:$0xff]
        %v1495 = vld [vmem:[%s452 + $0x14b8] sm:$0xff]
        %v1496 = vld [vmem:[%s452 + $0x14c0] sm:$0xff]
        %v1497 = vld [vmem:[%s452 + $0x14c8] sm:$0xff]
        %v1498 = vld [vmem:[%s452 + $0x14d0] sm:$0xff]
        %v1499 = vld [vmem:[%s452 + $0x14d8] sm:$0xff]
        %v1500 = vld [vmem:[%s452 + $0x14e0] sm:$0xff]
        %v1501 = vld [vmem:[%s452 + $0x14e8] sm:$0xff]
        %v1502 = vld [vmem:[%s452 + $0x14f0] sm:$0xff]
        %v1503 = vld [vmem:[%s452 + $0x14f8] sm:$0xff]
        %v1504 = vld [vmem:[%s452 + $0x1500] sm:$0xff]
        %v1505 = vld [vmem:[%s452 + $0x1508] sm:$0xff]
        %v1506 = vld [vmem:[%s452 + $0x1510] sm:$0xff]
        %v1507 = vld [vmem:[%s452 + $0x1518] sm:$0xff]
        %v1508 = vld [vmem:[%s452 + $0x1520] sm:$0xff]
        %v1509 = vld [vmem:[%s452 + $0x1528] sm:$0xff]
        %v1510 = vld [vmem:[%s452 + $0x1530] sm:$0xff]
        %v1511 = vld [vmem:[%s452 + $0x1538] sm:$0xff]
        %v1512 = vld [vmem:[%s452 + $0x1540] sm:$0xff]
        %v1513 = vld [vmem:[%s452 + $0x1548] sm:$0xff]
        %v1514 = vld [vmem:[%s452 + $0x1550] sm:$0xff]
        %v1515 = vld [vmem:[%s452 + $0x1558] sm:$0xff]
        %v1516 = vld [vmem:[%s452 + $0x1560] sm:$0xff]
        %v1517 = vld [vmem:[%s452 + $0x1568] sm:$0xff]
        %v1518 = vld [vmem:[%s452 + $0x1570] sm:$0xff]
        %v1519 = vld [vmem:[%s452 + $0x1578] sm:$0xff]
        %v1520 = vld [vmem:[%s452 + $0x1580] sm:$0xff]
        %v1521 = vld [vmem:[%s452 + $0x1588] sm:$0xff]
        %v1522 = vld [vmem:[%s452 + $0x1590] sm:$0xff]
        %v1523 = vld [vmem:[%s452 + $0x1598] sm:$0xff]
        %v1524 = vld [vmem:[%s452 + $0x15a0] sm:$0xff]
        %v1525 = vld [vmem:[%s452 + $0x15a8] sm:$0xff]
        %v1526 = vld [vmem:[%s452 + $0x15b0] sm:$0xff]
        %v1527 = vld [vmem:[%s452 + $0x15b8] sm:$0xff]
        %v1528 = vld [vmem:[%s452 + $0x15c0] sm:$0xff]
        %v1529 = vld [vmem:[%s452 + $0x15c8] sm:$0xff]
        %v1530 = vld [vmem:[%s452 + $0x15d0] sm:$0xff]
        %v1531 = vld [vmem:[%s452 + $0x15d8] sm:$0xff]
        %v1532 = vld [vmem:[%s452 + $0x15e0] sm:$0xff]
        %v1533 = vld [vmem:[%s452 + $0x15e8] sm:$0xff]
        %v1534 = vld [vmem:[%s452 + $0x15f0] sm:$0xff]
        %v1535 = vld [vmem:[%s452 + $0x15f8] sm:$0xff]
        %v1536 = vld [vmem:[%s452 + $0x1600] sm:$0xff]
        %v1537 = vld [vmem:[%s452 + $0x1608] sm:$0xff]
        %v1538 = vld [vmem:[%s452 + $0x1610] sm:$0xff]
        %v1539 = vld [vmem:[%s452 + $0x1618] sm:$0xff]
        %v1540 = vld [vmem:[%s452 + $0x1620] sm:$0xff]
        %v1541 = vld [vmem:[%s452 + $0x1628] sm:$0xff]
        %v1542 = vld [vmem:[%s452 + $0x1630] sm:$0xff]
        %v1543 = vld [vmem:[%s452 + $0x1638] sm:$0xff]
        %v1544 = vld [vmem:[%s452 + $0x1640] sm:$0xff]
        %v1545 = vld [vmem:[%s452 + $0x1648] sm:$0xff]
        %v1546 = vld [vmem:[%s452 + $0x1650] sm:$0xff]
        %v1547 = vld [vmem:[%s452 + $0x1658] sm:$0xff]
        %v1548 = vld [vmem:[%s452 + $0x1660] sm:$0xff]
        %v1549 = vld [vmem:[%s452 + $0x1668] sm:$0xff]
        %v1550 = vld [vmem:[%s452 + $0x1670] sm:$0xff]
        %v1551 = vld [vmem:[%s452 + $0x1678] sm:$0xff]
        %v1552 = vld [vmem:[%s452 + $0x1680] sm:$0xff]
        %v1553 = vld [vmem:[%s452 + $0x1688] sm:$0xff]
        %v1554 = vld [vmem:[%s452 + $0x1690] sm:$0xff]
        %v1555 = vld [vmem:[%s452 + $0x1698] sm:$0xff]
        %v1556 = vld [vmem:[%s452 + $0x16a0] sm:$0xff]
        %v1557 = vld [vmem:[%s452 + $0x16a8] sm:$0xff]
        %v1558 = vld [vmem:[%s452 + $0x16b0] sm:$0xff]
        %v1559 = vld [vmem:[%s452 + $0x16b8] sm:$0xff]
        %v1560 = vld [vmem:[%s452 + $0x16c0] sm:$0xff]
        %v1561 = vld [vmem:[%s452 + $0x16c8] sm:$0xff]
        %v1562 = vld [vmem:[%s452 + $0x16d0] sm:$0xff]
        %v1563 = vld [vmem:[%s452 + $0x16d8] sm:$0xff]
        %v1564 = vld [vmem:[%s452 + $0x16e0] sm:$0xff]
        %v1565 = vld [vmem:[%s452 + $0x16e8] sm:$0xff]
        %v1566 = vld [vmem:[%s452 + $0x16f0] sm:$0xff]
        %v1567 = vld [vmem:[%s452 + $0x16f8] sm:$0xff]
        %v1568 = vld [vmem:[%s452 + $0x1700] sm:$0xff]
        %v1569 = vld [vmem:[%s452 + $0x1708] sm:$0xff]
        %v1570 = vld [vmem:[%s452 + $0x1710] sm:$0xff]
        %v1571 = vld [vmem:[%s452 + $0x1718] sm:$0xff]
        %v1572 = vld [vmem:[%s452 + $0x1720] sm:$0xff]
        %v1573 = vld [vmem:[%s452 + $0x1728] sm:$0xff]
        %v1574 = vld [vmem:[%s452 + $0x1730] sm:$0xff]
        %v1575 = vld [vmem:[%s452 + $0x1738] sm:$0xff]
        %v1576 = vld [vmem:[%s452 + $0x1740] sm:$0xff]
        %v1577 = vld [vmem:[%s452 + $0x1748] sm:$0xff]
        %v1578 = vld [vmem:[%s452 + $0x1750] sm:$0xff]
        %v1579 = vld [vmem:[%s452 + $0x1758] sm:$0xff]
        %v1580 = vld [vmem:[%s452 + $0x1760] sm:$0xff]
        %v1581 = vld [vmem:[%s452 + $0x1768] sm:$0xff]
        %v1582 = vld [vmem:[%s452 + $0x1770] sm:$0xff]
        %v1583 = vld [vmem:[%s452 + $0x1778] sm:$0xff]
        %v1584 = vld [vmem:[%s452 + $0x1780] sm:$0xff]
        %v1585 = vld [vmem:[%s452 + $0x1788] sm:$0xff]
        %v1586 = vld [vmem:[%s452 + $0x1790] sm:$0xff]
        %v1587 = vld [vmem:[%s452 + $0x1798] sm:$0xff]
        %v1588 = vld [vmem:[%s452 + $0x17a0] sm:$0xff]
        %v1589 = vld [vmem:[%s452 + $0x17a8] sm:$0xff]
        %v1590 = vld [vmem:[%s452 + $0x17b0] sm:$0xff]
        %v1591 = vld [vmem:[%s452 + $0x17b8] sm:$0xff]
        %v1592 = vld [vmem:[%s452 + $0x17c0] sm:$0xff]
        %v1593 = vld [vmem:[%s452 + $0x17c8] sm:$0xff]
        %v1594 = vld [vmem:[%s452 + $0x17d0] sm:$0xff]
        %v1595 = vld [vmem:[%s452 + $0x17d8] sm:$0xff]
        %v1596 = vld [vmem:[%s452 + $0x17e0] sm:$0xff]
        %v1597 = vld [vmem:[%s452 + $0x17e8] sm:$0xff]
        %v1598 = vld [vmem:[%s452 + $0x17f0] sm:$0xff]
        %v1599 = vld [vmem:[%s452 + $0x17f8] sm:$0xff]
        %v1600 = vld [vmem:[%s452 + $0x1800] sm:$0xff]
        %v1601 = vld [vmem:[%s452 + $0x1808] sm:$0xff]
        %v1602 = vld [vmem:[%s452 + $0x1810] sm:$0xff]
        %v1603 = vld [vmem:[%s452 + $0x1818] sm:$0xff]
        %v1604 = vld [vmem:[%s452 + $0x1820] sm:$0xff]
        %v1605 = vld [vmem:[%s452 + $0x1828] sm:$0xff]
        %v1606 = vld [vmem:[%s452 + $0x1830] sm:$0xff]
        %v1607 = vld [vmem:[%s452 + $0x1838] sm:$0xff]
        %v1608 = vld [vmem:[%s452 + $0x1840] sm:$0xff]
        %v1609 = vld [vmem:[%s452 + $0x1848] sm:$0xff]
        %v1610 = vld [vmem:[%s452 + $0x1850] sm:$0xff]
        %v1611 = vld [vmem:[%s452 + $0x1858] sm:$0xff]
        %v1612 = vld [vmem:[%s452 + $0x1860] sm:$0xff]
        %v1613 = vld [vmem:[%s452 + $0x1868] sm:$0xff]
        %v1614 = vld [vmem:[%s452 + $0x1870] sm:$0xff]
        %v1615 = vld [vmem:[%s452 + $0x1878] sm:$0xff]
        %v1616 = vld [vmem:[%s452 + $0x1880] sm:$0xff]
        %v1617 = vld [vmem:[%s452 + $0x1888] sm:$0xff]
        %v1618 = vld [vmem:[%s452 + $0x1890] sm:$0xff]
        %v1619 = vld [vmem:[%s452 + $0x1898] sm:$0xff]
        %v1620 = vld [vmem:[%s452 + $0x18a0] sm:$0xff]
        %v1621 = vld [vmem:[%s452 + $0x18a8] sm:$0xff]
        %v1622 = vld [vmem:[%s452 + $0x18b0] sm:$0xff]
        %v1623 = vld [vmem:[%s452 + $0x18b8] sm:$0xff]
        %v1624 = vld [vmem:[%s452 + $0x18c0] sm:$0xff]
        %v1625 = vld [vmem:[%s452 + $0x18c8] sm:$0xff]
        %v1626 = vld [vmem:[%s452 + $0x18d0] sm:$0xff]
        %v1627 = vld [vmem:[%s452 + $0x18d8] sm:$0xff]
        %v1628 = vld [vmem:[%s452 + $0x18e0] sm:$0xff]
        %v1629 = vld [vmem:[%s452 + $0x18e8] sm:$0xff]
        %v1630 = vld [vmem:[%s452 + $0x18f0] sm:$0xff]
        %v1631 = vld [vmem:[%s452 + $0x18f8] sm:$0xff]
        %v1632 = vld [vmem:[%s452 + $0x1900] sm:$0xff]
        %v1633 = vld [vmem:[%s452 + $0x1908] sm:$0xff]
        %v1634 = vld [vmem:[%s452 + $0x1910] sm:$0xff]
        %v1635 = vld [vmem:[%s452 + $0x1918] sm:$0xff]
        %v1636 = vld [vmem:[%s452 + $0x1920] sm:$0xff]
        %v1637 = vld [vmem:[%s452 + $0x1928] sm:$0xff]
        %v1638 = vld [vmem:[%s452 + $0x1930] sm:$0xff]
        %v1639 = vld [vmem:[%s452 + $0x1938] sm:$0xff]
        %v1640 = vld [vmem:[%s452 + $0x1940] sm:$0xff]
        %v1641 = vld [vmem:[%s452 + $0x1948] sm:$0xff]
        %v1642 = vld [vmem:[%s452 + $0x1950] sm:$0xff]
        %v1643 = vld [vmem:[%s452 + $0x1958] sm:$0xff]
        %v1644 = vld [vmem:[%s452 + $0x1960] sm:$0xff]
        %v1645 = vld [vmem:[%s452 + $0x1968] sm:$0xff]
        %v1646 = vld [vmem:[%s452 + $0x1970] sm:$0xff]
        %v1647 = vld [vmem:[%s452 + $0x1978] sm:$0xff]
        %v1648 = vld [vmem:[%s452 + $0x1980] sm:$0xff]
        %v1649 = vld [vmem:[%s452 + $0x1988] sm:$0xff]
        %v1650 = vld [vmem:[%s452 + $0x1990] sm:$0xff]
        %v1651 = vld [vmem:[%s452 + $0x1998] sm:$0xff]
        %v1652 = vld [vmem:[%s452 + $0x19a0] sm:$0xff]
        %v1653 = vld [vmem:[%s452 + $0x19a8] sm:$0xff]
        %v1654 = vld [vmem:[%s452 + $0x19b0] sm:$0xff]
        %v1655 = vld [vmem:[%s452 + $0x19b8] sm:$0xff]
        %v1656 = vld [vmem:[%s452 + $0x19c0] sm:$0xff]
        %v1657 = vld [vmem:[%s452 + $0x19c8] sm:$0xff]
        %v1658 = vld [vmem:[%s452 + $0x19d0] sm:$0xff]
        %v1659 = vld [vmem:[%s452 + $0x19d8] sm:$0xff]
        %v1660 = vld [vmem:[%s452 + $0x19e0] sm:$0xff]
        %v1661 = vld [vmem:[%s452 + $0x19e8] sm:$0xff]
        %v1662 = vld [vmem:[%s452 + $0x19f0] sm:$0xff]
        %v1663 = vld [vmem:[%s452 + $0x19f8] sm:$0xff]
        %v1664 = vld [vmem:[%s452 + $0x1a00] sm:$0xff]
        %v1665 = vld [vmem:[%s452 + $0x1a08] sm:$0xff]
        %v1666 = vld [vmem:[%s452 + $0x1a10] sm:$0xff]
        %v1667 = vld [vmem:[%s452 + $0x1a18] sm:$0xff]
        %v1668 = vld [vmem:[%s452 + $0x1a20] sm:$0xff]
        %v1669 = vld [vmem:[%s452 + $0x1a28] sm:$0xff]
        %v1670 = vld [vmem:[%s452 + $0x1a30] sm:$0xff]
        %v1671 = vld [vmem:[%s452 + $0x1a38] sm:$0xff]
        %v1672 = vld [vmem:[%s452 + $0x1a40] sm:$0xff]
        %v1673 = vld [vmem:[%s452 + $0x1a48] sm:$0xff]
        %v1674 = vld [vmem:[%s452 + $0x1a50] sm:$0xff]
        %v1675 = vld [vmem:[%s452 + $0x1a58] sm:$0xff]
        %v1676 = vld [vmem:[%s452 + $0x1a60] sm:$0xff]
        %v1677 = vld [vmem:[%s452 + $0x1a68] sm:$0xff]
        %v1678 = vld [vmem:[%s452 + $0x1a70] sm:$0xff]
        %v1679 = vld [vmem:[%s452 + $0x1a78] sm:$0xff]
        %v1680 = vld [vmem:[%s452 + $0x1a80] sm:$0xff]
        %v1681 = vld [vmem:[%s452 + $0x1a88] sm:$0xff]
        %v1682 = vld [vmem:[%s452 + $0x1a90] sm:$0xff]
        %v1683 = vld [vmem:[%s452 + $0x1a98] sm:$0xff]
        %v1684 = vld [vmem:[%s452 + $0x1aa0] sm:$0xff]
        %v1685 = vld [vmem:[%s452 + $0x1aa8] sm:$0xff]
        %v1686 = vld [vmem:[%s452 + $0x1ab0] sm:$0xff]
        %v1687 = vld [vmem:[%s452 + $0x1ab8] sm:$0xff]
        %v1688 = vld [vmem:[%s452 + $0x1ac0] sm:$0xff]
        %v1689 = vld [vmem:[%s452 + $0x1ac8] sm:$0xff]
        %v1690 = vld [vmem:[%s452 + $0x1ad0] sm:$0xff]
        %v1691 = vld [vmem:[%s452 + $0x1ad8] sm:$0xff]
        %v1692 = vld [vmem:[%s452 + $0x1ae0] sm:$0xff]
        %v1693 = vld [vmem:[%s452 + $0x1ae8] sm:$0xff]
        %v1694 = vld [vmem:[%s452 + $0x1af0] sm:$0xff]
        %v1695 = vld [vmem:[%s452 + $0x1af8] sm:$0xff]
        %v1696 = vld [vmem:[%s452 + $0x1b00] sm:$0xff]
        %v1697 = vld [vmem:[%s452 + $0x1b08] sm:$0xff]
        %v1698 = vld [vmem:[%s452 + $0x1b10] sm:$0xff]
        %v1699 = vld [vmem:[%s452 + $0x1b18] sm:$0xff]
        %v1700 = vld [vmem:[%s452 + $0x1b20] sm:$0xff]
        %v1701 = vld [vmem:[%s452 + $0x1b28] sm:$0xff]
        %v1702 = vld [vmem:[%s452 + $0x1b30] sm:$0xff]
        %v1703 = vld [vmem:[%s452 + $0x1b38] sm:$0xff]
        %v1704 = vld [vmem:[%s452 + $0x1b40] sm:$0xff]
        %v1705 = vld [vmem:[%s452 + $0x1b48] sm:$0xff]
        %v1706 = vld [vmem:[%s452 + $0x1b50] sm:$0xff]
        %v1707 = vld [vmem:[%s452 + $0x1b58] sm:$0xff]
        %v1708 = vld [vmem:[%s452 + $0x1b60] sm:$0xff]
        %v1709 = vld [vmem:[%s452 + $0x1b68] sm:$0xff]
        %v1710 = vld [vmem:[%s452 + $0x1b70] sm:$0xff]
        %v1711 = vld [vmem:[%s452 + $0x1b78] sm:$0xff]
        %v1712 = vld [vmem:[%s452 + $0x1b80] sm:$0xff]
        %v1713 = vld [vmem:[%s452 + $0x1b88] sm:$0xff]
        %v1714 = vld [vmem:[%s452 + $0x1b90] sm:$0xff]
        %v1715 = vld [vmem:[%s452 + $0x1b98] sm:$0xff]
        %v1716 = vld [vmem:[%s452 + $0x1ba0] sm:$0xff]
        %v1717 = vld [vmem:[%s452 + $0x1ba8] sm:$0xff]
        %v1718 = vld [vmem:[%s452 + $0x1bb0] sm:$0xff]
        %v1719 = vld [vmem:[%s452 + $0x1bb8] sm:$0xff]
        %v1720 = vld [vmem:[%s452 + $0x1bc0] sm:$0xff]
        %v1721 = vld [vmem:[%s452 + $0x1bc8] sm:$0xff]
        %v1722 = vld [vmem:[%s452 + $0x1bd0] sm:$0xff]
        %v1723 = vld [vmem:[%s452 + $0x1bd8] sm:$0xff]
        %v1724 = vld [vmem:[%s452 + $0x1be0] sm:$0xff]
        %v1725 = vld [vmem:[%s452 + $0x1be8] sm:$0xff]
        %v1726 = vld [vmem:[%s452 + $0x1bf0] sm:$0xff]
        %v1727 = vld [vmem:[%s452 + $0x1bf8] sm:$0xff]
        %v1728 = vld [vmem:[%s452 + $0x1c00] sm:$0xff]
        %v1729 = vld [vmem:[%s452 + $0x1c08] sm:$0xff]
        %v1730 = vld [vmem:[%s452 + $0x1c10] sm:$0xff]
        %v1731 = vld [vmem:[%s452 + $0x1c18] sm:$0xff]
        %v1732 = vld [vmem:[%s452 + $0x1c20] sm:$0xff]
        %v1733 = vld [vmem:[%s452 + $0x1c28] sm:$0xff]
        %v1734 = vld [vmem:[%s452 + $0x1c30] sm:$0xff]
        %v1735 = vld [vmem:[%s452 + $0x1c38] sm:$0xff]
        %v1736 = vld [vmem:[%s452 + $0x1c40] sm:$0xff]
        %v1737 = vld [vmem:[%s452 + $0x1c48] sm:$0xff]
        %v1738 = vld [vmem:[%s452 + $0x1c50] sm:$0xff]
        %v1739 = vld [vmem:[%s452 + $0x1c58] sm:$0xff]
        %v1740 = vld [vmem:[%s452 + $0x1c60] sm:$0xff]
        %v1741 = vld [vmem:[%s452 + $0x1c68] sm:$0xff]
        %v1742 = vld [vmem:[%s452 + $0x1c70] sm:$0xff]
        %v1743 = vld [vmem:[%s452 + $0x1c78] sm:$0xff]
        %v1744 = vld [vmem:[%s452 + $0x1c80] sm:$0xff]
        %v1745 = vld [vmem:[%s452 + $0x1c88] sm:$0xff]
        %v1746 = vld [vmem:[%s452 + $0x1c90] sm:$0xff]
        %v1747 = vld [vmem:[%s452 + $0x1c98] sm:$0xff]
        %v1748 = vld [vmem:[%s452 + $0x1ca0] sm:$0xff]
        %v1749 = vld [vmem:[%s452 + $0x1ca8] sm:$0xff]
        %v1750 = vld [vmem:[%s452 + $0x1cb0] sm:$0xff]
        %v1751 = vld [vmem:[%s452 + $0x1cb8] sm:$0xff]
        %v1752 = vld [vmem:[%s452 + $0x1cc0] sm:$0xff]
        %v1753 = vld [vmem:[%s452 + $0x1cc8] sm:$0xff]
        %v1754 = vld [vmem:[%s452 + $0x1cd0] sm:$0xff]
        %v1755 = vld [vmem:[%s452 + $0x1cd8] sm:$0xff]
        %v1756 = vld [vmem:[%s452 + $0x1ce0] sm:$0xff]
        %v1757 = vld [vmem:[%s452 + $0x1ce8] sm:$0xff]
        %v1758 = vld [vmem:[%s452 + $0x1cf0] sm:$0xff]
        %v1759 = vld [vmem:[%s452 + $0x1cf8] sm:$0xff]
        %v1760 = vld [vmem:[%s452 + $0x1d00] sm:$0xff]
        %v1761 = vld [vmem:[%s452 + $0x1d08] sm:$0xff]
        %v1762 = vld [vmem:[%s452 + $0x1d10] sm:$0xff]
        %v1763 = vld [vmem:[%s452 + $0x1d18] sm:$0xff]
        %v1764 = vld [vmem:[%s452 + $0x1d20] sm:$0xff]
        %v1765 = vld [vmem:[%s452 + $0x1d28] sm:$0xff]
        %v1766 = vld [vmem:[%s452 + $0x1d30] sm:$0xff]
        %v1767 = vld [vmem:[%s452 + $0x1d38] sm:$0xff]
        %v1768 = vld [vmem:[%s452 + $0x1d40] sm:$0xff]
        %v1769 = vld [vmem:[%s452 + $0x1d48] sm:$0xff]
        %v1770 = vld [vmem:[%s452 + $0x1d50] sm:$0xff]
        %v1771 = vld [vmem:[%s452 + $0x1d58] sm:$0xff]
        %v1772 = vld [vmem:[%s452 + $0x1d60] sm:$0xff]
        %v1773 = vld [vmem:[%s452 + $0x1d68] sm:$0xff]
        %v1774 = vld [vmem:[%s452 + $0x1d70] sm:$0xff]
        %v1775 = vld [vmem:[%s452 + $0x1d78] sm:$0xff]
        %v1776 = vld [vmem:[%s452 + $0x1d80] sm:$0xff]
        %v1777 = vld [vmem:[%s452 + $0x1d88] sm:$0xff]
        %v1778 = vld [vmem:[%s452 + $0x1d90] sm:$0xff]
        %v1779 = vld [vmem:[%s452 + $0x1d98] sm:$0xff]
        %v1780 = vld [vmem:[%s452 + $0x1da0] sm:$0xff]
        %v1781 = vld [vmem:[%s452 + $0x1da8] sm:$0xff]
        %v1782 = vld [vmem:[%s452 + $0x1db0] sm:$0xff]
        %v1783 = vld [vmem:[%s452 + $0x1db8] sm:$0xff]
        %v1784 = vld [vmem:[%s452 + $0x1dc0] sm:$0xff]
        %v1785 = vld [vmem:[%s452 + $0x1dc8] sm:$0xff]
        %v1786 = vld [vmem:[%s452 + $0x1dd0] sm:$0xff]
        %v1787 = vld [vmem:[%s452 + $0x1dd8] sm:$0xff]
        %v1788 = vld [vmem:[%s452 + $0x1de0] sm:$0xff]
        %v1789 = vld [vmem:[%s452 + $0x1de8] sm:$0xff]
        %v1790 = vld [vmem:[%s452 + $0x1df0] sm:$0xff]
        %v1791 = vld [vmem:[%s452 + $0x1df8] sm:$0xff]
        %v1792 = vld [vmem:[%s452 + $0x1e00] sm:$0xff]
        %v1793 = vld [vmem:[%s452 + $0x1e08] sm:$0xff]
        %v1794 = vld [vmem:[%s452 + $0x1e10] sm:$0xff]
        %v1795 = vld [vmem:[%s452 + $0x1e18] sm:$0xff]
        %v1796 = vld [vmem:[%s452 + $0x1e20] sm:$0xff]
        %v1797 = vld [vmem:[%s452 + $0x1e28] sm:$0xff]
        %v1798 = vld [vmem:[%s452 + $0x1e30] sm:$0xff]
        %v1799 = vld [vmem:[%s452 + $0x1e38] sm:$0xff]
        %v1800 = vld [vmem:[%s452 + $0x1e40] sm:$0xff]
        %v1801 = vld [vmem:[%s452 + $0x1e48] sm:$0xff]
        %v1802 = vld [vmem:[%s452 + $0x1e50] sm:$0xff]
        %v1803 = vld [vmem:[%s452 + $0x1e58] sm:$0xff]
        %v1804 = vld [vmem:[%s452 + $0x1e60] sm:$0xff]
        %v1805 = vld [vmem:[%s452 + $0x1e68] sm:$0xff]
        %v1806 = vld [vmem:[%s452 + $0x1e70] sm:$0xff]
        %v1807 = vld [vmem:[%s452 + $0x1e78] sm:$0xff]
        %v1808 = vld [vmem:[%s452 + $0x1e80] sm:$0xff]
        %v1809 = vld [vmem:[%s452 + $0x1e88] sm:$0xff]
        %v1810 = vld [vmem:[%s452 + $0x1e90] sm:$0xff]
        %v1811 = vld [vmem:[%s452 + $0x1e98] sm:$0xff]
        %v1812 = vld [vmem:[%s452 + $0x1ea0] sm:$0xff]
        %v1813 = vld [vmem:[%s452 + $0x1ea8] sm:$0xff]
        %v1814 = vld [vmem:[%s452 + $0x1eb0] sm:$0xff]
        %v1815 = vld [vmem:[%s452 + $0x1eb8] sm:$0xff]
        %v1816 = vld [vmem:[%s452 + $0x1ec0] sm:$0xff]
        %v1817 = vld [vmem:[%s452 + $0x1ec8] sm:$0xff]
        %v1818 = vld [vmem:[%s452 + $0x1ed0] sm:$0xff]
        %v1819 = vld [vmem:[%s452 + $0x1ed8] sm:$0xff]
        %v1820 = vld [vmem:[%s452 + $0x1ee0] sm:$0xff]
        %v1821 = vld [vmem:[%s452 + $0x1ee8] sm:$0xff]
        %v1822 = vld [vmem:[%s452 + $0x1ef0] sm:$0xff]
        %v1823 = vld [vmem:[%s452 + $0x1ef8] sm:$0xff]
        %v1824 = vld [vmem:[%s452 + $0x1f00] sm:$0xff]
        %v1825 = vld [vmem:[%s452 + $0x1f08] sm:$0xff]
        %v1826 = vld [vmem:[%s452 + $0x1f10] sm:$0xff]
        %v1827 = vld [vmem:[%s452 + $0x1f18] sm:$0xff]
        %v1828 = vld [vmem:[%s452 + $0x1f20] sm:$0xff]
        %v1829 = vld [vmem:[%s452 + $0x1f28] sm:$0xff]
        %v1830 = vld [vmem:[%s452 + $0x1f30] sm:$0xff]
        %v1831 = vld [vmem:[%s452 + $0x1f38] sm:$0xff]
        %v1832 = vld [vmem:[%s452 + $0x1f40] sm:$0xff]
        %v1833 = vld [vmem:[%s452 + $0x1f48] sm:$0xff]
        %v1834 = vld [vmem:[%s452 + $0x1f50] sm:$0xff]
        %v1835 = vld [vmem:[%s452 + $0x1f58] sm:$0xff]
        %v1836 = vld [vmem:[%s452 + $0x1f60] sm:$0xff]
        %v1837 = vld [vmem:[%s452 + $0x1f68] sm:$0xff]
        %v1838 = vld [vmem:[%s452 + $0x1f70] sm:$0xff]
        %v1839 = vld [vmem:[%s452 + $0x1f78] sm:$0xff]
        %v1840 = vld [vmem:[%s452 + $0x1f80] sm:$0xff]
        %v1841 = vld [vmem:[%s452 + $0x1f88] sm:$0xff]
        %v1842 = vld [vmem:[%s452 + $0x1f90] sm:$0xff]
        %v1843 = vld [vmem:[%s452 + $0x1f98] sm:$0xff]
        %v1844 = vld [vmem:[%s452 + $0x1fa0] sm:$0xff]
        %v1845 = vld [vmem:[%s452 + $0x1fa8] sm:$0xff]
        %v1846 = vld [vmem:[%s452 + $0x1fb0] sm:$0xff]
        %v1847 = vld [vmem:[%s452 + $0x1fb8] sm:$0xff]
        %v1848 = vld [vmem:[%s452 + $0x1fc0] sm:$0xff]
        %v1849 = vld [vmem:[%s452 + $0x1fc8] sm:$0xff]
        %v1850 = vld [vmem:[%s452 + $0x1fd0] sm:$0xff]
        %v1851 = vld [vmem:[%s452 + $0x1fd8] sm:$0xff]
        %v1852 = vld [vmem:[%s452 + $0x1fe0] sm:$0xff]
        %v1853 = vld [vmem:[%s452 + $0x1fe8] sm:$0xff]
        %v1854 = vld [vmem:[%s452 + $0x1ff0] sm:$0xff]
        %v1855 = vld [vmem:[%s452 + $0x1ff8] sm:$0xff]
        %v2880 = vunpack.c.l.b16 %v832
        %v2881 = vunpack.c.h.b16 %v832
        %v2882 = vunpack.c.l.b16 %v833
        %v2883 = vunpack.c.h.b16 %v833
        %v2884 = vunpack.c.l.b16 %v834
        %v2885 = vunpack.c.h.b16 %v834
        %v2886 = vunpack.c.l.b16 %v835
        %v2887 = vunpack.c.h.b16 %v835
        %v2888 = vunpack.c.l.b16 %v836
        %v2889 = vunpack.c.h.b16 %v836
        %v2890 = vunpack.c.l.b16 %v837
        %v2891 = vunpack.c.h.b16 %v837
        %v2892 = vunpack.c.l.b16 %v838
        %v2893 = vunpack.c.h.b16 %v838
        %v2894 = vunpack.c.l.b16 %v839
        %v2895 = vunpack.c.h.b16 %v839
        %v2896 = vunpack.c.l.b16 %v840
        %v2897 = vunpack.c.h.b16 %v840
        %v2898 = vunpack.c.l.b16 %v841
        %v2899 = vunpack.c.h.b16 %v841
        %v2900 = vunpack.c.l.b16 %v842
        %v2901 = vunpack.c.h.b16 %v842
        %v2902 = vunpack.c.l.b16 %v843
        %v2903 = vunpack.c.h.b16 %v843
        %v2904 = vunpack.c.l.b16 %v844
        %v2905 = vunpack.c.h.b16 %v844
        %v2906 = vunpack.c.l.b16 %v845
        %v2907 = vunpack.c.h.b16 %v845
        %v2908 = vunpack.c.l.b16 %v846
        %v2909 = vunpack.c.h.b16 %v846
        %v2910 = vunpack.c.l.b16 %v847
        %v2911 = vunpack.c.h.b16 %v847
        %v2912 = vunpack.c.l.b16 %v848
        %v2913 = vunpack.c.h.b16 %v848
        %v2914 = vunpack.c.l.b16 %v849
        %v2915 = vunpack.c.h.b16 %v849
        %v2916 = vunpack.c.l.b16 %v850
        %v2917 = vunpack.c.h.b16 %v850
        %v2918 = vunpack.c.l.b16 %v851
        %v2919 = vunpack.c.h.b16 %v851
        %v2920 = vunpack.c.l.b16 %v852
        %v2921 = vunpack.c.h.b16 %v852
        %v2922 = vunpack.c.l.b16 %v853
        %v2923 = vunpack.c.h.b16 %v853
        %v2924 = vunpack.c.l.b16 %v854
        %v2925 = vunpack.c.h.b16 %v854
        %v2926 = vunpack.c.l.b16 %v855
        %v2927 = vunpack.c.h.b16 %v855
        %v2928 = vunpack.c.l.b16 %v856
        %v2929 = vunpack.c.h.b16 %v856
        %v2930 = vunpack.c.l.b16 %v857
        %v2931 = vunpack.c.h.b16 %v857
        %v2932 = vunpack.c.l.b16 %v858
        %v2933 = vunpack.c.h.b16 %v858
        %v2934 = vunpack.c.l.b16 %v859
        %v2935 = vunpack.c.h.b16 %v859
        %v2936 = vunpack.c.l.b16 %v860
        %v2937 = vunpack.c.h.b16 %v860
        %v2938 = vunpack.c.l.b16 %v861
        %v2939 = vunpack.c.h.b16 %v861
        %v2940 = vunpack.c.l.b16 %v862
        %v2941 = vunpack.c.h.b16 %v862
        %v2942 = vunpack.c.l.b16 %v863
        %v2943 = vunpack.c.h.b16 %v863
        %v2944 = vunpack.c.l.b16 %v864
        %v2945 = vunpack.c.h.b16 %v864
        %v2946 = vunpack.c.l.b16 %v865
        %v2947 = vunpack.c.h.b16 %v865
        %v2948 = vunpack.c.l.b16 %v866
        %v2949 = vunpack.c.h.b16 %v866
        %v2950 = vunpack.c.l.b16 %v867
        %v2951 = vunpack.c.h.b16 %v867
        %v2952 = vunpack.c.l.b16 %v868
        %v2953 = vunpack.c.h.b16 %v868
        %v2954 = vunpack.c.l.b16 %v869
        %v2955 = vunpack.c.h.b16 %v869
        %v2956 = vunpack.c.l.b16 %v870
        %v2957 = vunpack.c.h.b16 %v870
        %v2958 = vunpack.c.l.b16 %v871
        %v2959 = vunpack.c.h.b16 %v871
        %v2960 = vunpack.c.l.b16 %v872
        %v2961 = vunpack.c.h.b16 %v872
        %v2962 = vunpack.c.l.b16 %v873
        %v2963 = vunpack.c.h.b16 %v873
        %v2964 = vunpack.c.l.b16 %v874
        %v2965 = vunpack.c.h.b16 %v874
        %v2966 = vunpack.c.l.b16 %v875
        %v2967 = vunpack.c.h.b16 %v875
        %v2968 = vunpack.c.l.b16 %v876
        %v2969 = vunpack.c.h.b16 %v876
        %v2970 = vunpack.c.l.b16 %v877
        %v2971 = vunpack.c.h.b16 %v877
        %v2972 = vunpack.c.l.b16 %v878
        %v2973 = vunpack.c.h.b16 %v878
        %v2974 = vunpack.c.l.b16 %v879
        %v2975 = vunpack.c.h.b16 %v879
        %v2976 = vunpack.c.l.b16 %v880
        %v2977 = vunpack.c.h.b16 %v880
        %v2978 = vunpack.c.l.b16 %v881
        %v2979 = vunpack.c.h.b16 %v881
        %v2980 = vunpack.c.l.b16 %v882
        %v2981 = vunpack.c.h.b16 %v882
        %v2982 = vunpack.c.l.b16 %v883
        %v2983 = vunpack.c.h.b16 %v883
        %v2984 = vunpack.c.l.b16 %v884
        %v2985 = vunpack.c.h.b16 %v884
        %v2986 = vunpack.c.l.b16 %v885
        %v2987 = vunpack.c.h.b16 %v885
        %v2988 = vunpack.c.l.b16 %v886
        %v2989 = vunpack.c.h.b16 %v886
        %v2990 = vunpack.c.l.b16 %v887
        %v2991 = vunpack.c.h.b16 %v887
        %v2992 = vunpack.c.l.b16 %v888
        %v2993 = vunpack.c.h.b16 %v888
        %v2994 = vunpack.c.l.b16 %v889
        %v2995 = vunpack.c.h.b16 %v889
        %v2996 = vunpack.c.l.b16 %v890
        %v2997 = vunpack.c.h.b16 %v890
        %v2998 = vunpack.c.l.b16 %v891
        %v2999 = vunpack.c.h.b16 %v891
        %v3000 = vunpack.c.l.b16 %v892
        %v3001 = vunpack.c.h.b16 %v892
        %v3002 = vunpack.c.l.b16 %v893
        %v3003 = vunpack.c.h.b16 %v893
        %v3004 = vunpack.c.l.b16 %v894
        %v3005 = vunpack.c.h.b16 %v894
        %v3006 = vunpack.c.l.b16 %v895
        %v3007 = vunpack.c.h.b16 %v895
        %v3008 = vunpack.c.l.b16 %v896
        %v3009 = vunpack.c.h.b16 %v896
        %v3010 = vunpack.c.l.b16 %v897
        %v3011 = vunpack.c.h.b16 %v897
        %v3012 = vunpack.c.l.b16 %v898
        %v3013 = vunpack.c.h.b16 %v898
        %v3014 = vunpack.c.l.b16 %v899
        %v3015 = vunpack.c.h.b16 %v899
        %v3016 = vunpack.c.l.b16 %v900
        %v3017 = vunpack.c.h.b16 %v900
        %v3018 = vunpack.c.l.b16 %v901
        %v3019 = vunpack.c.h.b16 %v901
        %v3020 = vunpack.c.l.b16 %v902
        %v3021 = vunpack.c.h.b16 %v902
        %v3022 = vunpack.c.l.b16 %v903
        %v3023 = vunpack.c.h.b16 %v903
        %v3024 = vunpack.c.l.b16 %v904
        %v3025 = vunpack.c.h.b16 %v904
        %v3026 = vunpack.c.l.b16 %v905
        %v3027 = vunpack.c.h.b16 %v905
        %v3028 = vunpack.c.l.b16 %v906
        %v3029 = vunpack.c.h.b16 %v906
        %v3030 = vunpack.c.l.b16 %v907
        %v3031 = vunpack.c.h.b16 %v907
        %v3032 = vunpack.c.l.b16 %v908
        %v3033 = vunpack.c.h.b16 %v908
        %v3034 = vunpack.c.l.b16 %v909
        %v3035 = vunpack.c.h.b16 %v909
        %v3036 = vunpack.c.l.b16 %v910
        %v3037 = vunpack.c.h.b16 %v910
        %v3038 = vunpack.c.l.b16 %v911
        %v3039 = vunpack.c.h.b16 %v911
        %v3040 = vunpack.c.l.b16 %v912
        %v3041 = vunpack.c.h.b16 %v912
        %v3042 = vunpack.c.l.b16 %v913
        %v3043 = vunpack.c.h.b16 %v913
        %v3044 = vunpack.c.l.b16 %v914
        %v3045 = vunpack.c.h.b16 %v914
        %v3046 = vunpack.c.l.b16 %v915
        %v3047 = vunpack.c.h.b16 %v915
        %v3048 = vunpack.c.l.b16 %v916
        %v3049 = vunpack.c.h.b16 %v916
        %v3050 = vunpack.c.l.b16 %v917
        %v3051 = vunpack.c.h.b16 %v917
        %v3052 = vunpack.c.l.b16 %v918
        %v3053 = vunpack.c.h.b16 %v918
        %v3054 = vunpack.c.l.b16 %v919
        %v3055 = vunpack.c.h.b16 %v919
        %v3056 = vunpack.c.l.b16 %v920
        %v3057 = vunpack.c.h.b16 %v920
        %v3058 = vunpack.c.l.b16 %v921
        %v3059 = vunpack.c.h.b16 %v921
        %v3060 = vunpack.c.l.b16 %v922
        %v3061 = vunpack.c.h.b16 %v922
        %v3062 = vunpack.c.l.b16 %v923
        %v3063 = vunpack.c.h.b16 %v923
        %v3064 = vunpack.c.l.b16 %v924
        %v3065 = vunpack.c.h.b16 %v924
        %v3066 = vunpack.c.l.b16 %v925
        %v3067 = vunpack.c.h.b16 %v925
        %v3068 = vunpack.c.l.b16 %v926
        %v3069 = vunpack.c.h.b16 %v926
        %v3070 = vunpack.c.l.b16 %v927
        %v3071 = vunpack.c.h.b16 %v927
        %v3072 = vunpack.c.l.b16 %v928
        %v3073 = vunpack.c.h.b16 %v928
        %v3074 = vunpack.c.l.b16 %v929
        %v3075 = vunpack.c.h.b16 %v929
        %v3076 = vunpack.c.l.b16 %v930
        %v3077 = vunpack.c.h.b16 %v930
        %v3078 = vunpack.c.l.b16 %v931
        %v3079 = vunpack.c.h.b16 %v931
        %v3080 = vunpack.c.l.b16 %v932
        %v3081 = vunpack.c.h.b16 %v932
        %v3082 = vunpack.c.l.b16 %v933
        %v3083 = vunpack.c.h.b16 %v933
        %v3084 = vunpack.c.l.b16 %v934
        %v3085 = vunpack.c.h.b16 %v934
        %v3086 = vunpack.c.l.b16 %v935
        %v3087 = vunpack.c.h.b16 %v935
        %v3088 = vunpack.c.l.b16 %v936
        %v3089 = vunpack.c.h.b16 %v936
        %v3090 = vunpack.c.l.b16 %v937
        %v3091 = vunpack.c.h.b16 %v937
        %v3092 = vunpack.c.l.b16 %v938
        %v3093 = vunpack.c.h.b16 %v938
        %v3094 = vunpack.c.l.b16 %v939
        %v3095 = vunpack.c.h.b16 %v939
        %v3096 = vunpack.c.l.b16 %v940
        %v3097 = vunpack.c.h.b16 %v940
        %v3098 = vunpack.c.l.b16 %v941
        %v3099 = vunpack.c.h.b16 %v941
        %v3100 = vunpack.c.l.b16 %v942
        %v3101 = vunpack.c.h.b16 %v942
        %v3102 = vunpack.c.l.b16 %v943
        %v3103 = vunpack.c.h.b16 %v943
        %v3104 = vunpack.c.l.b16 %v944
        %v3105 = vunpack.c.h.b16 %v944
        %v3106 = vunpack.c.l.b16 %v945
        %v3107 = vunpack.c.h.b16 %v945
        %v3108 = vunpack.c.l.b16 %v946
        %v3109 = vunpack.c.h.b16 %v946
        %v3110 = vunpack.c.l.b16 %v947
        %v3111 = vunpack.c.h.b16 %v947
        %v3112 = vunpack.c.l.b16 %v948
        %v3113 = vunpack.c.h.b16 %v948
        %v3114 = vunpack.c.l.b16 %v949
        %v3115 = vunpack.c.h.b16 %v949
        %v3116 = vunpack.c.l.b16 %v950
        %v3117 = vunpack.c.h.b16 %v950
        %v3118 = vunpack.c.l.b16 %v951
        %v3119 = vunpack.c.h.b16 %v951
        %v3120 = vunpack.c.l.b16 %v952
        %v3121 = vunpack.c.h.b16 %v952
        %v3122 = vunpack.c.l.b16 %v953
        %v3123 = vunpack.c.h.b16 %v953
        %v3124 = vunpack.c.l.b16 %v954
        %v3125 = vunpack.c.h.b16 %v954
        %v3126 = vunpack.c.l.b16 %v955
        %v3127 = vunpack.c.h.b16 %v955
        %v3128 = vunpack.c.l.b16 %v956
        %v3129 = vunpack.c.h.b16 %v956
        %v3130 = vunpack.c.l.b16 %v957
        %v3131 = vunpack.c.h.b16 %v957
        %v3132 = vunpack.c.l.b16 %v958
        %v3133 = vunpack.c.h.b16 %v958
        %v3134 = vunpack.c.l.b16 %v959
        %v3135 = vunpack.c.h.b16 %v959
        %v3136 = vunpack.c.l.b16 %v960
        %v3137 = vunpack.c.h.b16 %v960
        %v3138 = vunpack.c.l.b16 %v961
        %v3139 = vunpack.c.h.b16 %v961
        %v3140 = vunpack.c.l.b16 %v962
        %v3141 = vunpack.c.h.b16 %v962
        %v3142 = vunpack.c.l.b16 %v963
        %v3143 = vunpack.c.h.b16 %v963
        %v3144 = vunpack.c.l.b16 %v964
        %v3145 = vunpack.c.h.b16 %v964
        %v3146 = vunpack.c.l.b16 %v965
        %v3147 = vunpack.c.h.b16 %v965
        %v3148 = vunpack.c.l.b16 %v966
        %v3149 = vunpack.c.h.b16 %v966
        %v3150 = vunpack.c.l.b16 %v967
        %v3151 = vunpack.c.h.b16 %v967
        %v3152 = vunpack.c.l.b16 %v968
        %v3153 = vunpack.c.h.b16 %v968
        %v3154 = vunpack.c.l.b16 %v969
        %v3155 = vunpack.c.h.b16 %v969
        %v3156 = vunpack.c.l.b16 %v970
        %v3157 = vunpack.c.h.b16 %v970
        %v3158 = vunpack.c.l.b16 %v971
        %v3159 = vunpack.c.h.b16 %v971
        %v3160 = vunpack.c.l.b16 %v972
        %v3161 = vunpack.c.h.b16 %v972
        %v3162 = vunpack.c.l.b16 %v973
        %v3163 = vunpack.c.h.b16 %v973
        %v3164 = vunpack.c.l.b16 %v974
        %v3165 = vunpack.c.h.b16 %v974
        %v3166 = vunpack.c.l.b16 %v975
        %v3167 = vunpack.c.h.b16 %v975
        %v3168 = vunpack.c.l.b16 %v976
        %v3169 = vunpack.c.h.b16 %v976
        %v3170 = vunpack.c.l.b16 %v977
        %v3171 = vunpack.c.h.b16 %v977
        %v3172 = vunpack.c.l.b16 %v978
        %v3173 = vunpack.c.h.b16 %v978
        %v3174 = vunpack.c.l.b16 %v979
        %v3175 = vunpack.c.h.b16 %v979
        %v3176 = vunpack.c.l.b16 %v980
        %v3177 = vunpack.c.h.b16 %v980
        %v3178 = vunpack.c.l.b16 %v981
        %v3179 = vunpack.c.h.b16 %v981
        %v3180 = vunpack.c.l.b16 %v982
        %v3181 = vunpack.c.h.b16 %v982
        %v3182 = vunpack.c.l.b16 %v983
        %v3183 = vunpack.c.h.b16 %v983
        %v3184 = vunpack.c.l.b16 %v984
        %v3185 = vunpack.c.h.b16 %v984
        %v3186 = vunpack.c.l.b16 %v985
        %v3187 = vunpack.c.h.b16 %v985
        %v3188 = vunpack.c.l.b16 %v986
        %v3189 = vunpack.c.h.b16 %v986
        %v3190 = vunpack.c.l.b16 %v987
        %v3191 = vunpack.c.h.b16 %v987
        %v3192 = vunpack.c.l.b16 %v988
        %v3193 = vunpack.c.h.b16 %v988
        %v3194 = vunpack.c.l.b16 %v989
        %v3195 = vunpack.c.h.b16 %v989
        %v3196 = vunpack.c.l.b16 %v990
        %v3197 = vunpack.c.h.b16 %v990
        %v3198 = vunpack.c.l.b16 %v991
        %v3199 = vunpack.c.h.b16 %v991
        %v3200 = vunpack.c.l.b16 %v992
        %v3201 = vunpack.c.h.b16 %v992
        %v3202 = vunpack.c.l.b16 %v993
        %v3203 = vunpack.c.h.b16 %v993
        %v3204 = vunpack.c.l.b16 %v994
        %v3205 = vunpack.c.h.b16 %v994
        %v3206 = vunpack.c.l.b16 %v995
        %v3207 = vunpack.c.h.b16 %v995
        %v3208 = vunpack.c.l.b16 %v996
        %v3209 = vunpack.c.h.b16 %v996
        %v3210 = vunpack.c.l.b16 %v997
        %v3211 = vunpack.c.h.b16 %v997
        %v3212 = vunpack.c.l.b16 %v998
        %v3213 = vunpack.c.h.b16 %v998
        %v3214 = vunpack.c.l.b16 %v999
        %v3215 = vunpack.c.h.b16 %v999
        %v3216 = vunpack.c.l.b16 %v1000
        %v3217 = vunpack.c.h.b16 %v1000
        %v3218 = vunpack.c.l.b16 %v1001
        %v3219 = vunpack.c.h.b16 %v1001
        %v3220 = vunpack.c.l.b16 %v1002
        %v3221 = vunpack.c.h.b16 %v1002
        %v3222 = vunpack.c.l.b16 %v1003
        %v3223 = vunpack.c.h.b16 %v1003
        %v3224 = vunpack.c.l.b16 %v1004
        %v3225 = vunpack.c.h.b16 %v1004
        %v3226 = vunpack.c.l.b16 %v1005
        %v3227 = vunpack.c.h.b16 %v1005
        %v3228 = vunpack.c.l.b16 %v1006
        %v3229 = vunpack.c.h.b16 %v1006
        %v3230 = vunpack.c.l.b16 %v1007
        %v3231 = vunpack.c.h.b16 %v1007
        %v3232 = vunpack.c.l.b16 %v1008
        %v3233 = vunpack.c.h.b16 %v1008
        %v3234 = vunpack.c.l.b16 %v1009
        %v3235 = vunpack.c.h.b16 %v1009
        %v3236 = vunpack.c.l.b16 %v1010
        %v3237 = vunpack.c.h.b16 %v1010
        %v3238 = vunpack.c.l.b16 %v1011
        %v3239 = vunpack.c.h.b16 %v1011
        %v3240 = vunpack.c.l.b16 %v1012
        %v3241 = vunpack.c.h.b16 %v1012
        %v3242 = vunpack.c.l.b16 %v1013
        %v3243 = vunpack.c.h.b16 %v1013
        %v3244 = vunpack.c.l.b16 %v1014
        %v3245 = vunpack.c.h.b16 %v1014
        %v3246 = vunpack.c.l.b16 %v1015
        %v3247 = vunpack.c.h.b16 %v1015
        %v3248 = vunpack.c.l.b16 %v1016
        %v3249 = vunpack.c.h.b16 %v1016
        %v3250 = vunpack.c.l.b16 %v1017
        %v3251 = vunpack.c.h.b16 %v1017
        %v3252 = vunpack.c.l.b16 %v1018
        %v3253 = vunpack.c.h.b16 %v1018
        %v3254 = vunpack.c.l.b16 %v1019
        %v3255 = vunpack.c.h.b16 %v1019
        %v3256 = vunpack.c.l.b16 %v1020
        %v3257 = vunpack.c.h.b16 %v1020
        %v3258 = vunpack.c.l.b16 %v1021
        %v3259 = vunpack.c.h.b16 %v1021
        %v3260 = vunpack.c.l.b16 %v1022
        %v3261 = vunpack.c.h.b16 %v1022
        %v3262 = vunpack.c.l.b16 %v1023
        %v3263 = vunpack.c.h.b16 %v1023
        %v3264 = vunpack.c.l.b16 %v1024
        %v3265 = vunpack.c.h.b16 %v1024
        %v3266 = vunpack.c.l.b16 %v1025
        %v3267 = vunpack.c.h.b16 %v1025
        %v3268 = vunpack.c.l.b16 %v1026
        %v3269 = vunpack.c.h.b16 %v1026
        %v3270 = vunpack.c.l.b16 %v1027
        %v3271 = vunpack.c.h.b16 %v1027
        %v3272 = vunpack.c.l.b16 %v1028
        %v3273 = vunpack.c.h.b16 %v1028
        %v3274 = vunpack.c.l.b16 %v1029
        %v3275 = vunpack.c.h.b16 %v1029
        %v3276 = vunpack.c.l.b16 %v1030
        %v3277 = vunpack.c.h.b16 %v1030
        %v3278 = vunpack.c.l.b16 %v1031
        %v3279 = vunpack.c.h.b16 %v1031
        %v3280 = vunpack.c.l.b16 %v1032
        %v3281 = vunpack.c.h.b16 %v1032
        %v3282 = vunpack.c.l.b16 %v1033
        %v3283 = vunpack.c.h.b16 %v1033
        %v3284 = vunpack.c.l.b16 %v1034
        %v3285 = vunpack.c.h.b16 %v1034
        %v3286 = vunpack.c.l.b16 %v1035
        %v3287 = vunpack.c.h.b16 %v1035
        %v3288 = vunpack.c.l.b16 %v1036
        %v3289 = vunpack.c.h.b16 %v1036
        %v3290 = vunpack.c.l.b16 %v1037
        %v3291 = vunpack.c.h.b16 %v1037
        %v3292 = vunpack.c.l.b16 %v1038
        %v3293 = vunpack.c.h.b16 %v1038
        %v3294 = vunpack.c.l.b16 %v1039
        %v3295 = vunpack.c.h.b16 %v1039
        %v3296 = vunpack.c.l.b16 %v1040
        %v3297 = vunpack.c.h.b16 %v1040
        %v3298 = vunpack.c.l.b16 %v1041
        %v3299 = vunpack.c.h.b16 %v1041
        %v3300 = vunpack.c.l.b16 %v1042
        %v3301 = vunpack.c.h.b16 %v1042
        %v3302 = vunpack.c.l.b16 %v1043
        %v3303 = vunpack.c.h.b16 %v1043
        %v3304 = vunpack.c.l.b16 %v1044
        %v3305 = vunpack.c.h.b16 %v1044
        %v3306 = vunpack.c.l.b16 %v1045
        %v3307 = vunpack.c.h.b16 %v1045
        %v3308 = vunpack.c.l.b16 %v1046
        %v3309 = vunpack.c.h.b16 %v1046
        %v3310 = vunpack.c.l.b16 %v1047
        %v3311 = vunpack.c.h.b16 %v1047
        %v3312 = vunpack.c.l.b16 %v1048
        %v3313 = vunpack.c.h.b16 %v1048
        %v3314 = vunpack.c.l.b16 %v1049
        %v3315 = vunpack.c.h.b16 %v1049
        %v3316 = vunpack.c.l.b16 %v1050
        %v3317 = vunpack.c.h.b16 %v1050
        %v3318 = vunpack.c.l.b16 %v1051
        %v3319 = vunpack.c.h.b16 %v1051
        %v3320 = vunpack.c.l.b16 %v1052
        %v3321 = vunpack.c.h.b16 %v1052
        %v3322 = vunpack.c.l.b16 %v1053
        %v3323 = vunpack.c.h.b16 %v1053
        %v3324 = vunpack.c.l.b16 %v1054
        %v3325 = vunpack.c.h.b16 %v1054
        %v3326 = vunpack.c.l.b16 %v1055
        %v3327 = vunpack.c.h.b16 %v1055
        %v3328 = vunpack.c.l.b16 %v1056
        %v3329 = vunpack.c.h.b16 %v1056
        %v3330 = vunpack.c.l.b16 %v1057
        %v3331 = vunpack.c.h.b16 %v1057
        %v3332 = vunpack.c.l.b16 %v1058
        %v3333 = vunpack.c.h.b16 %v1058
        %v3334 = vunpack.c.l.b16 %v1059
        %v3335 = vunpack.c.h.b16 %v1059
        %v3336 = vunpack.c.l.b16 %v1060
        %v3337 = vunpack.c.h.b16 %v1060
        %v3338 = vunpack.c.l.b16 %v1061
        %v3339 = vunpack.c.h.b16 %v1061
        %v3340 = vunpack.c.l.b16 %v1062
        %v3341 = vunpack.c.h.b16 %v1062
        %v3342 = vunpack.c.l.b16 %v1063
        %v3343 = vunpack.c.h.b16 %v1063
        %v3344 = vunpack.c.l.b16 %v1064
        %v3345 = vunpack.c.h.b16 %v1064
        %v3346 = vunpack.c.l.b16 %v1065
        %v3347 = vunpack.c.h.b16 %v1065
        %v3348 = vunpack.c.l.b16 %v1066
        %v3349 = vunpack.c.h.b16 %v1066
        %v3350 = vunpack.c.l.b16 %v1067
        %v3351 = vunpack.c.h.b16 %v1067
        %v3352 = vunpack.c.l.b16 %v1068
        %v3353 = vunpack.c.h.b16 %v1068
        %v3354 = vunpack.c.l.b16 %v1069
        %v3355 = vunpack.c.h.b16 %v1069
        %v3356 = vunpack.c.l.b16 %v1070
        %v3357 = vunpack.c.h.b16 %v1070
        %v3358 = vunpack.c.l.b16 %v1071
        %v3359 = vunpack.c.h.b16 %v1071
        %v3360 = vunpack.c.l.b16 %v1072
        %v3361 = vunpack.c.h.b16 %v1072
        %v3362 = vunpack.c.l.b16 %v1073
        %v3363 = vunpack.c.h.b16 %v1073
        %v3364 = vunpack.c.l.b16 %v1074
        %v3365 = vunpack.c.h.b16 %v1074
        %v3366 = vunpack.c.l.b16 %v1075
        %v3367 = vunpack.c.h.b16 %v1075
        %v3368 = vunpack.c.l.b16 %v1076
        %v3369 = vunpack.c.h.b16 %v1076
        %v3370 = vunpack.c.l.b16 %v1077
        %v3371 = vunpack.c.h.b16 %v1077
        %v3372 = vunpack.c.l.b16 %v1078
        %v3373 = vunpack.c.h.b16 %v1078
        %v3374 = vunpack.c.l.b16 %v1079
        %v3375 = vunpack.c.h.b16 %v1079
        %v3376 = vunpack.c.l.b16 %v1080
        %v3377 = vunpack.c.h.b16 %v1080
        %v3378 = vunpack.c.l.b16 %v1081
        %v3379 = vunpack.c.h.b16 %v1081
        %v3380 = vunpack.c.l.b16 %v1082
        %v3381 = vunpack.c.h.b16 %v1082
        %v3382 = vunpack.c.l.b16 %v1083
        %v3383 = vunpack.c.h.b16 %v1083
        %v3384 = vunpack.c.l.b16 %v1084
        %v3385 = vunpack.c.h.b16 %v1084
        %v3386 = vunpack.c.l.b16 %v1085
        %v3387 = vunpack.c.h.b16 %v1085
        %v3388 = vunpack.c.l.b16 %v1086
        %v3389 = vunpack.c.h.b16 %v1086
        %v3390 = vunpack.c.l.b16 %v1087
        %v3391 = vunpack.c.h.b16 %v1087
        %v3392 = vunpack.c.l.b16 %v1088
        %v3393 = vunpack.c.h.b16 %v1088
        %v3394 = vunpack.c.l.b16 %v1089
        %v3395 = vunpack.c.h.b16 %v1089
        %v3396 = vunpack.c.l.b16 %v1090
        %v3397 = vunpack.c.h.b16 %v1090
        %v3398 = vunpack.c.l.b16 %v1091
        %v3399 = vunpack.c.h.b16 %v1091
        %v3400 = vunpack.c.l.b16 %v1092
        %v3401 = vunpack.c.h.b16 %v1092
        %v3402 = vunpack.c.l.b16 %v1093
        %v3403 = vunpack.c.h.b16 %v1093
        %v3404 = vunpack.c.l.b16 %v1094
        %v3405 = vunpack.c.h.b16 %v1094
        %v3406 = vunpack.c.l.b16 %v1095
        %v3407 = vunpack.c.h.b16 %v1095
        %v3408 = vunpack.c.l.b16 %v1096
        %v3409 = vunpack.c.h.b16 %v1096
        %v3410 = vunpack.c.l.b16 %v1097
        %v3411 = vunpack.c.h.b16 %v1097
        %v3412 = vunpack.c.l.b16 %v1098
        %v3413 = vunpack.c.h.b16 %v1098
        %v3414 = vunpack.c.l.b16 %v1099
        %v3415 = vunpack.c.h.b16 %v1099
        %v3416 = vunpack.c.l.b16 %v1100
        %v3417 = vunpack.c.h.b16 %v1100
        %v3418 = vunpack.c.l.b16 %v1101
        %v3419 = vunpack.c.h.b16 %v1101
        %v3420 = vunpack.c.l.b16 %v1102
        %v3421 = vunpack.c.h.b16 %v1102
        %v3422 = vunpack.c.l.b16 %v1103
        %v3423 = vunpack.c.h.b16 %v1103
        %v3424 = vunpack.c.l.b16 %v1104
        %v3425 = vunpack.c.h.b16 %v1104
        %v3426 = vunpack.c.l.b16 %v1105
        %v3427 = vunpack.c.h.b16 %v1105
        %v3428 = vunpack.c.l.b16 %v1106
        %v3429 = vunpack.c.h.b16 %v1106
        %v3430 = vunpack.c.l.b16 %v1107
        %v3431 = vunpack.c.h.b16 %v1107
        %v3432 = vunpack.c.l.b16 %v1108
        %v3433 = vunpack.c.h.b16 %v1108
        %v3434 = vunpack.c.l.b16 %v1109
        %v3435 = vunpack.c.h.b16 %v1109
        %v3436 = vunpack.c.l.b16 %v1110
        %v3437 = vunpack.c.h.b16 %v1110
        %v3438 = vunpack.c.l.b16 %v1111
        %v3439 = vunpack.c.h.b16 %v1111
        %v3440 = vunpack.c.l.b16 %v1112
        %v3441 = vunpack.c.h.b16 %v1112
        %v3442 = vunpack.c.l.b16 %v1113
        %v3443 = vunpack.c.h.b16 %v1113
        %v3444 = vunpack.c.l.b16 %v1114
        %v3445 = vunpack.c.h.b16 %v1114
        %v3446 = vunpack.c.l.b16 %v1115
        %v3447 = vunpack.c.h.b16 %v1115
        %v3448 = vunpack.c.l.b16 %v1116
        %v3449 = vunpack.c.h.b16 %v1116
        %v3450 = vunpack.c.l.b16 %v1117
        %v3451 = vunpack.c.h.b16 %v1117
        %v3452 = vunpack.c.l.b16 %v1118
        %v3453 = vunpack.c.h.b16 %v1118
        %v3454 = vunpack.c.l.b16 %v1119
        %v3455 = vunpack.c.h.b16 %v1119
        %v3456 = vunpack.c.l.b16 %v1120
        %v3457 = vunpack.c.h.b16 %v1120
        %v3458 = vunpack.c.l.b16 %v1121
        %v3459 = vunpack.c.h.b16 %v1121
        %v3460 = vunpack.c.l.b16 %v1122
        %v3461 = vunpack.c.h.b16 %v1122
        %v3462 = vunpack.c.l.b16 %v1123
        %v3463 = vunpack.c.h.b16 %v1123
        %v3464 = vunpack.c.l.b16 %v1124
        %v3465 = vunpack.c.h.b16 %v1124
        %v3466 = vunpack.c.l.b16 %v1125
        %v3467 = vunpack.c.h.b16 %v1125
        %v3468 = vunpack.c.l.b16 %v1126
        %v3469 = vunpack.c.h.b16 %v1126
        %v3470 = vunpack.c.l.b16 %v1127
        %v3471 = vunpack.c.h.b16 %v1127
        %v3472 = vunpack.c.l.b16 %v1128
        %v3473 = vunpack.c.h.b16 %v1128
        %v3474 = vunpack.c.l.b16 %v1129
        %v3475 = vunpack.c.h.b16 %v1129
        %v3476 = vunpack.c.l.b16 %v1130
        %v3477 = vunpack.c.h.b16 %v1130
        %v3478 = vunpack.c.l.b16 %v1131
        %v3479 = vunpack.c.h.b16 %v1131
        %v3480 = vunpack.c.l.b16 %v1132
        %v3481 = vunpack.c.h.b16 %v1132
        %v3482 = vunpack.c.l.b16 %v1133
        %v3483 = vunpack.c.h.b16 %v1133
        %v3484 = vunpack.c.l.b16 %v1134
        %v3485 = vunpack.c.h.b16 %v1134
        %v3486 = vunpack.c.l.b16 %v1135
        %v3487 = vunpack.c.h.b16 %v1135
        %v3488 = vunpack.c.l.b16 %v1136
        %v3489 = vunpack.c.h.b16 %v1136
        %v3490 = vunpack.c.l.b16 %v1137
        %v3491 = vunpack.c.h.b16 %v1137
        %v3492 = vunpack.c.l.b16 %v1138
        %v3493 = vunpack.c.h.b16 %v1138
        %v3494 = vunpack.c.l.b16 %v1139
        %v3495 = vunpack.c.h.b16 %v1139
        %v3496 = vunpack.c.l.b16 %v1140
        %v3497 = vunpack.c.h.b16 %v1140
        %v3498 = vunpack.c.l.b16 %v1141
        %v3499 = vunpack.c.h.b16 %v1141
        %v3500 = vunpack.c.l.b16 %v1142
        %v3501 = vunpack.c.h.b16 %v1142
        %v3502 = vunpack.c.l.b16 %v1143
        %v3503 = vunpack.c.h.b16 %v1143
        %v3504 = vunpack.c.l.b16 %v1144
        %v3505 = vunpack.c.h.b16 %v1144
        %v3506 = vunpack.c.l.b16 %v1145
        %v3507 = vunpack.c.h.b16 %v1145
        %v3508 = vunpack.c.l.b16 %v1146
        %v3509 = vunpack.c.h.b16 %v1146
        %v3510 = vunpack.c.l.b16 %v1147
        %v3511 = vunpack.c.h.b16 %v1147
        %v3512 = vunpack.c.l.b16 %v1148
        %v3513 = vunpack.c.h.b16 %v1148
        %v3514 = vunpack.c.l.b16 %v1149
        %v3515 = vunpack.c.h.b16 %v1149
        %v3516 = vunpack.c.l.b16 %v1150
        %v3517 = vunpack.c.h.b16 %v1150
        %v3518 = vunpack.c.l.b16 %v1151
        %v3519 = vunpack.c.h.b16 %v1151
        %v3520 = vunpack.c.l.b16 %v1152
        %v3521 = vunpack.c.h.b16 %v1152
        %v3522 = vunpack.c.l.b16 %v1153
        %v3523 = vunpack.c.h.b16 %v1153
        %v3524 = vunpack.c.l.b16 %v1154
        %v3525 = vunpack.c.h.b16 %v1154
        %v3526 = vunpack.c.l.b16 %v1155
        %v3527 = vunpack.c.h.b16 %v1155
        %v3528 = vunpack.c.l.b16 %v1156
        %v3529 = vunpack.c.h.b16 %v1156
        %v3530 = vunpack.c.l.b16 %v1157
        %v3531 = vunpack.c.h.b16 %v1157
        %v3532 = vunpack.c.l.b16 %v1158
        %v3533 = vunpack.c.h.b16 %v1158
        %v3534 = vunpack.c.l.b16 %v1159
        %v3535 = vunpack.c.h.b16 %v1159
        %v3536 = vunpack.c.l.b16 %v1160
        %v3537 = vunpack.c.h.b16 %v1160
        %v3538 = vunpack.c.l.b16 %v1161
        %v3539 = vunpack.c.h.b16 %v1161
        %v3540 = vunpack.c.l.b16 %v1162
        %v3541 = vunpack.c.h.b16 %v1162
        %v3542 = vunpack.c.l.b16 %v1163
        %v3543 = vunpack.c.h.b16 %v1163
        %v3544 = vunpack.c.l.b16 %v1164
        %v3545 = vunpack.c.h.b16 %v1164
        %v3546 = vunpack.c.l.b16 %v1165
        %v3547 = vunpack.c.h.b16 %v1165
        %v3548 = vunpack.c.l.b16 %v1166
        %v3549 = vunpack.c.h.b16 %v1166
        %v3550 = vunpack.c.l.b16 %v1167
        %v3551 = vunpack.c.h.b16 %v1167
        %v3552 = vunpack.c.l.b16 %v1168
        %v3553 = vunpack.c.h.b16 %v1168
        %v3554 = vunpack.c.l.b16 %v1169
        %v3555 = vunpack.c.h.b16 %v1169
        %v3556 = vunpack.c.l.b16 %v1170
        %v3557 = vunpack.c.h.b16 %v1170
        %v3558 = vunpack.c.l.b16 %v1171
        %v3559 = vunpack.c.h.b16 %v1171
        %v3560 = vunpack.c.l.b16 %v1172
        %v3561 = vunpack.c.h.b16 %v1172
        %v3562 = vunpack.c.l.b16 %v1173
        %v3563 = vunpack.c.h.b16 %v1173
        %v3564 = vunpack.c.l.b16 %v1174
        %v3565 = vunpack.c.h.b16 %v1174
        %v3566 = vunpack.c.l.b16 %v1175
        %v3567 = vunpack.c.h.b16 %v1175
        %v3568 = vunpack.c.l.b16 %v1176
        %v3569 = vunpack.c.h.b16 %v1176
        %v3570 = vunpack.c.l.b16 %v1177
        %v3571 = vunpack.c.h.b16 %v1177
        %v3572 = vunpack.c.l.b16 %v1178
        %v3573 = vunpack.c.h.b16 %v1178
        %v3574 = vunpack.c.l.b16 %v1179
        %v3575 = vunpack.c.h.b16 %v1179
        %v3576 = vunpack.c.l.b16 %v1180
        %v3577 = vunpack.c.h.b16 %v1180
        %v3578 = vunpack.c.l.b16 %v1181
        %v3579 = vunpack.c.h.b16 %v1181
        %v3580 = vunpack.c.l.b16 %v1182
        %v3581 = vunpack.c.h.b16 %v1182
        %v3582 = vunpack.c.l.b16 %v1183
        %v3583 = vunpack.c.h.b16 %v1183
        %v3584 = vunpack.c.l.b16 %v1184
        %v3585 = vunpack.c.h.b16 %v1184
        %v3586 = vunpack.c.l.b16 %v1185
        %v3587 = vunpack.c.h.b16 %v1185
        %v3588 = vunpack.c.l.b16 %v1186
        %v3589 = vunpack.c.h.b16 %v1186
        %v3590 = vunpack.c.l.b16 %v1187
        %v3591 = vunpack.c.h.b16 %v1187
        %v3592 = vunpack.c.l.b16 %v1188
        %v3593 = vunpack.c.h.b16 %v1188
        %v3594 = vunpack.c.l.b16 %v1189
        %v3595 = vunpack.c.h.b16 %v1189
        %v3596 = vunpack.c.l.b16 %v1190
        %v3597 = vunpack.c.h.b16 %v1190
        %v3598 = vunpack.c.l.b16 %v1191
        %v3599 = vunpack.c.h.b16 %v1191
        %v3600 = vunpack.c.l.b16 %v1192
        %v3601 = vunpack.c.h.b16 %v1192
        %v3602 = vunpack.c.l.b16 %v1193
        %v3603 = vunpack.c.h.b16 %v1193
        %v3604 = vunpack.c.l.b16 %v1194
        %v3605 = vunpack.c.h.b16 %v1194
        %v3606 = vunpack.c.l.b16 %v1195
        %v3607 = vunpack.c.h.b16 %v1195
        %v3608 = vunpack.c.l.b16 %v1196
        %v3609 = vunpack.c.h.b16 %v1196
        %v3610 = vunpack.c.l.b16 %v1197
        %v3611 = vunpack.c.h.b16 %v1197
        %v3612 = vunpack.c.l.b16 %v1198
        %v3613 = vunpack.c.h.b16 %v1198
        %v3614 = vunpack.c.l.b16 %v1199
        %v3615 = vunpack.c.h.b16 %v1199
        %v3616 = vunpack.c.l.b16 %v1200
        %v3617 = vunpack.c.h.b16 %v1200
        %v3618 = vunpack.c.l.b16 %v1201
        %v3619 = vunpack.c.h.b16 %v1201
        %v3620 = vunpack.c.l.b16 %v1202
        %v3621 = vunpack.c.h.b16 %v1202
        %v3622 = vunpack.c.l.b16 %v1203
        %v3623 = vunpack.c.h.b16 %v1203
        %v3624 = vunpack.c.l.b16 %v1204
        %v3625 = vunpack.c.h.b16 %v1204
        %v3626 = vunpack.c.l.b16 %v1205
        %v3627 = vunpack.c.h.b16 %v1205
        %v3628 = vunpack.c.l.b16 %v1206
        %v3629 = vunpack.c.h.b16 %v1206
        %v3630 = vunpack.c.l.b16 %v1207
        %v3631 = vunpack.c.h.b16 %v1207
        %v3632 = vunpack.c.l.b16 %v1208
        %v3633 = vunpack.c.h.b16 %v1208
        %v3634 = vunpack.c.l.b16 %v1209
        %v3635 = vunpack.c.h.b16 %v1209
        %v3636 = vunpack.c.l.b16 %v1210
        %v3637 = vunpack.c.h.b16 %v1210
        %v3638 = vunpack.c.l.b16 %v1211
        %v3639 = vunpack.c.h.b16 %v1211
        %v3640 = vunpack.c.l.b16 %v1212
        %v3641 = vunpack.c.h.b16 %v1212
        %v3642 = vunpack.c.l.b16 %v1213
        %v3643 = vunpack.c.h.b16 %v1213
        %v3644 = vunpack.c.l.b16 %v1214
        %v3645 = vunpack.c.h.b16 %v1214
        %v3646 = vunpack.c.l.b16 %v1215
        %v3647 = vunpack.c.h.b16 %v1215
        %v3648 = vunpack.c.l.b16 %v1216
        %v3649 = vunpack.c.h.b16 %v1216
        %v3650 = vunpack.c.l.b16 %v1217
        %v3651 = vunpack.c.h.b16 %v1217
        %v3652 = vunpack.c.l.b16 %v1218
        %v3653 = vunpack.c.h.b16 %v1218
        %v3654 = vunpack.c.l.b16 %v1219
        %v3655 = vunpack.c.h.b16 %v1219
        %v3656 = vunpack.c.l.b16 %v1220
        %v3657 = vunpack.c.h.b16 %v1220
        %v3658 = vunpack.c.l.b16 %v1221
        %v3659 = vunpack.c.h.b16 %v1221
        %v3660 = vunpack.c.l.b16 %v1222
        %v3661 = vunpack.c.h.b16 %v1222
        %v3662 = vunpack.c.l.b16 %v1223
        %v3663 = vunpack.c.h.b16 %v1223
        %v3664 = vunpack.c.l.b16 %v1224
        %v3665 = vunpack.c.h.b16 %v1224
        %v3666 = vunpack.c.l.b16 %v1225
        %v3667 = vunpack.c.h.b16 %v1225
        %v3668 = vunpack.c.l.b16 %v1226
        %v3669 = vunpack.c.h.b16 %v1226
        %v3670 = vunpack.c.l.b16 %v1227
        %v3671 = vunpack.c.h.b16 %v1227
        %v3672 = vunpack.c.l.b16 %v1228
        %v3673 = vunpack.c.h.b16 %v1228
        %v3674 = vunpack.c.l.b16 %v1229
        %v3675 = vunpack.c.h.b16 %v1229
        %v3676 = vunpack.c.l.b16 %v1230
        %v3677 = vunpack.c.h.b16 %v1230
        %v3678 = vunpack.c.l.b16 %v1231
        %v3679 = vunpack.c.h.b16 %v1231
        %v3680 = vunpack.c.l.b16 %v1232
        %v3681 = vunpack.c.h.b16 %v1232
        %v3682 = vunpack.c.l.b16 %v1233
        %v3683 = vunpack.c.h.b16 %v1233
        %v3684 = vunpack.c.l.b16 %v1234
        %v3685 = vunpack.c.h.b16 %v1234
        %v3686 = vunpack.c.l.b16 %v1235
        %v3687 = vunpack.c.h.b16 %v1235
        %v3688 = vunpack.c.l.b16 %v1236
        %v3689 = vunpack.c.h.b16 %v1236
        %v3690 = vunpack.c.l.b16 %v1237
        %v3691 = vunpack.c.h.b16 %v1237
        %v3692 = vunpack.c.l.b16 %v1238
        %v3693 = vunpack.c.h.b16 %v1238
        %v3694 = vunpack.c.l.b16 %v1239
        %v3695 = vunpack.c.h.b16 %v1239
        %v3696 = vunpack.c.l.b16 %v1240
        %v3697 = vunpack.c.h.b16 %v1240
        %v3698 = vunpack.c.l.b16 %v1241
        %v3699 = vunpack.c.h.b16 %v1241
        %v3700 = vunpack.c.l.b16 %v1242
        %v3701 = vunpack.c.h.b16 %v1242
        %v3702 = vunpack.c.l.b16 %v1243
        %v3703 = vunpack.c.h.b16 %v1243
        %v3704 = vunpack.c.l.b16 %v1244
        %v3705 = vunpack.c.h.b16 %v1244
        %v3706 = vunpack.c.l.b16 %v1245
        %v3707 = vunpack.c.h.b16 %v1245
        %v3708 = vunpack.c.l.b16 %v1246
        %v3709 = vunpack.c.h.b16 %v1246
        %v3710 = vunpack.c.l.b16 %v1247
        %v3711 = vunpack.c.h.b16 %v1247
        %v3712 = vunpack.c.l.b16 %v1248
        %v3713 = vunpack.c.h.b16 %v1248
        %v3714 = vunpack.c.l.b16 %v1249
        %v3715 = vunpack.c.h.b16 %v1249
        %v3716 = vunpack.c.l.b16 %v1250
        %v3717 = vunpack.c.h.b16 %v1250
        %v3718 = vunpack.c.l.b16 %v1251
        %v3719 = vunpack.c.h.b16 %v1251
        %v3720 = vunpack.c.l.b16 %v1252
        %v3721 = vunpack.c.h.b16 %v1252
        %v3722 = vunpack.c.l.b16 %v1253
        %v3723 = vunpack.c.h.b16 %v1253
        %v3724 = vunpack.c.l.b16 %v1254
        %v3725 = vunpack.c.h.b16 %v1254
        %v3726 = vunpack.c.l.b16 %v1255
        %v3727 = vunpack.c.h.b16 %v1255
        %v3728 = vunpack.c.l.b16 %v1256
        %v3729 = vunpack.c.h.b16 %v1256
        %v3730 = vunpack.c.l.b16 %v1257
        %v3731 = vunpack.c.h.b16 %v1257
        %v3732 = vunpack.c.l.b16 %v1258
        %v3733 = vunpack.c.h.b16 %v1258
        %v3734 = vunpack.c.l.b16 %v1259
        %v3735 = vunpack.c.h.b16 %v1259
        %v3736 = vunpack.c.l.b16 %v1260
        %v3737 = vunpack.c.h.b16 %v1260
        %v3738 = vunpack.c.l.b16 %v1261
        %v3739 = vunpack.c.h.b16 %v1261
        %v3740 = vunpack.c.l.b16 %v1262
        %v3741 = vunpack.c.h.b16 %v1262
        %v3742 = vunpack.c.l.b16 %v1263
        %v3743 = vunpack.c.h.b16 %v1263
        %v3744 = vunpack.c.l.b16 %v1264
        %v3745 = vunpack.c.h.b16 %v1264
        %v3746 = vunpack.c.l.b16 %v1265
        %v3747 = vunpack.c.h.b16 %v1265
        %v3748 = vunpack.c.l.b16 %v1266
        %v3749 = vunpack.c.h.b16 %v1266
        %v3750 = vunpack.c.l.b16 %v1267
        %v3751 = vunpack.c.h.b16 %v1267
        %v3752 = vunpack.c.l.b16 %v1268
        %v3753 = vunpack.c.h.b16 %v1268
        %v3754 = vunpack.c.l.b16 %v1269
        %v3755 = vunpack.c.h.b16 %v1269
        %v3756 = vunpack.c.l.b16 %v1270
        %v3757 = vunpack.c.h.b16 %v1270
        %v3758 = vunpack.c.l.b16 %v1271
        %v3759 = vunpack.c.h.b16 %v1271
        %v3760 = vunpack.c.l.b16 %v1272
        %v3761 = vunpack.c.h.b16 %v1272
        %v3762 = vunpack.c.l.b16 %v1273
        %v3763 = vunpack.c.h.b16 %v1273
        %v3764 = vunpack.c.l.b16 %v1274
        %v3765 = vunpack.c.h.b16 %v1274
        %v3766 = vunpack.c.l.b16 %v1275
        %v3767 = vunpack.c.h.b16 %v1275
        %v3768 = vunpack.c.l.b16 %v1276
        %v3769 = vunpack.c.h.b16 %v1276
        %v3770 = vunpack.c.l.b16 %v1277
        %v3771 = vunpack.c.h.b16 %v1277
        %v3772 = vunpack.c.l.b16 %v1278
        %v3773 = vunpack.c.h.b16 %v1278
        %v3774 = vunpack.c.l.b16 %v1279
        %v3775 = vunpack.c.h.b16 %v1279
        %v3776 = vunpack.c.l.b16 %v1280
        %v3777 = vunpack.c.h.b16 %v1280
        %v3778 = vunpack.c.l.b16 %v1281
        %v3779 = vunpack.c.h.b16 %v1281
        %v3780 = vunpack.c.l.b16 %v1282
        %v3781 = vunpack.c.h.b16 %v1282
        %v3782 = vunpack.c.l.b16 %v1283
        %v3783 = vunpack.c.h.b16 %v1283
        %v3784 = vunpack.c.l.b16 %v1284
        %v3785 = vunpack.c.h.b16 %v1284
        %v3786 = vunpack.c.l.b16 %v1285
        %v3787 = vunpack.c.h.b16 %v1285
        %v3788 = vunpack.c.l.b16 %v1286
        %v3789 = vunpack.c.h.b16 %v1286
        %v3790 = vunpack.c.l.b16 %v1287
        %v3791 = vunpack.c.h.b16 %v1287
        %v3792 = vunpack.c.l.b16 %v1288
        %v3793 = vunpack.c.h.b16 %v1288
        %v3794 = vunpack.c.l.b16 %v1289
        %v3795 = vunpack.c.h.b16 %v1289
        %v3796 = vunpack.c.l.b16 %v1290
        %v3797 = vunpack.c.h.b16 %v1290
        %v3798 = vunpack.c.l.b16 %v1291
        %v3799 = vunpack.c.h.b16 %v1291
        %v3800 = vunpack.c.l.b16 %v1292
        %v3801 = vunpack.c.h.b16 %v1292
        %v3802 = vunpack.c.l.b16 %v1293
        %v3803 = vunpack.c.h.b16 %v1293
        %v3804 = vunpack.c.l.b16 %v1294
        %v3805 = vunpack.c.h.b16 %v1294
        %v3806 = vunpack.c.l.b16 %v1295
        %v3807 = vunpack.c.h.b16 %v1295
        %v3808 = vunpack.c.l.b16 %v1296
        %v3809 = vunpack.c.h.b16 %v1296
        %v3810 = vunpack.c.l.b16 %v1297
        %v3811 = vunpack.c.h.b16 %v1297
        %v3812 = vunpack.c.l.b16 %v1298
        %v3813 = vunpack.c.h.b16 %v1298
        %v3814 = vunpack.c.l.b16 %v1299
        %v3815 = vunpack.c.h.b16 %v1299
        %v3816 = vunpack.c.l.b16 %v1300
        %v3817 = vunpack.c.h.b16 %v1300
        %v3818 = vunpack.c.l.b16 %v1301
        %v3819 = vunpack.c.h.b16 %v1301
        %v3820 = vunpack.c.l.b16 %v1302
        %v3821 = vunpack.c.h.b16 %v1302
        %v3822 = vunpack.c.l.b16 %v1303
        %v3823 = vunpack.c.h.b16 %v1303
        %v3824 = vunpack.c.l.b16 %v1304
        %v3825 = vunpack.c.h.b16 %v1304
        %v3826 = vunpack.c.l.b16 %v1305
        %v3827 = vunpack.c.h.b16 %v1305
        %v3828 = vunpack.c.l.b16 %v1306
        %v3829 = vunpack.c.h.b16 %v1306
        %v3830 = vunpack.c.l.b16 %v1307
        %v3831 = vunpack.c.h.b16 %v1307
        %v3832 = vunpack.c.l.b16 %v1308
        %v3833 = vunpack.c.h.b16 %v1308
        %v3834 = vunpack.c.l.b16 %v1309
        %v3835 = vunpack.c.h.b16 %v1309
        %v3836 = vunpack.c.l.b16 %v1310
        %v3837 = vunpack.c.h.b16 %v1310
        %v3838 = vunpack.c.l.b16 %v1311
        %v3839 = vunpack.c.h.b16 %v1311
        %v3840 = vunpack.c.l.b16 %v1312
        %v3841 = vunpack.c.h.b16 %v1312
        %v3842 = vunpack.c.l.b16 %v1313
        %v3843 = vunpack.c.h.b16 %v1313
        %v3844 = vunpack.c.l.b16 %v1314
        %v3845 = vunpack.c.h.b16 %v1314
        %v3846 = vunpack.c.l.b16 %v1315
        %v3847 = vunpack.c.h.b16 %v1315
        %v3848 = vunpack.c.l.b16 %v1316
        %v3849 = vunpack.c.h.b16 %v1316
        %v3850 = vunpack.c.l.b16 %v1317
        %v3851 = vunpack.c.h.b16 %v1317
        %v3852 = vunpack.c.l.b16 %v1318
        %v3853 = vunpack.c.h.b16 %v1318
        %v3854 = vunpack.c.l.b16 %v1319
        %v3855 = vunpack.c.h.b16 %v1319
        %v3856 = vunpack.c.l.b16 %v1320
        %v3857 = vunpack.c.h.b16 %v1320
        %v3858 = vunpack.c.l.b16 %v1321
        %v3859 = vunpack.c.h.b16 %v1321
        %v3860 = vunpack.c.l.b16 %v1322
        %v3861 = vunpack.c.h.b16 %v1322
        %v3862 = vunpack.c.l.b16 %v1323
        %v3863 = vunpack.c.h.b16 %v1323
        %v3864 = vunpack.c.l.b16 %v1324
        %v3865 = vunpack.c.h.b16 %v1324
        %v3866 = vunpack.c.l.b16 %v1325
        %v3867 = vunpack.c.h.b16 %v1325
        %v3868 = vunpack.c.l.b16 %v1326
        %v3869 = vunpack.c.h.b16 %v1326
        %v3870 = vunpack.c.l.b16 %v1327
        %v3871 = vunpack.c.h.b16 %v1327
        %v3872 = vunpack.c.l.b16 %v1328
        %v3873 = vunpack.c.h.b16 %v1328
        %v3874 = vunpack.c.l.b16 %v1329
        %v3875 = vunpack.c.h.b16 %v1329
        %v3876 = vunpack.c.l.b16 %v1330
        %v3877 = vunpack.c.h.b16 %v1330
        %v3878 = vunpack.c.l.b16 %v1331
        %v3879 = vunpack.c.h.b16 %v1331
        %v3880 = vunpack.c.l.b16 %v1332
        %v3881 = vunpack.c.h.b16 %v1332
        %v3882 = vunpack.c.l.b16 %v1333
        %v3883 = vunpack.c.h.b16 %v1333
        %v3884 = vunpack.c.l.b16 %v1334
        %v3885 = vunpack.c.h.b16 %v1334
        %v3886 = vunpack.c.l.b16 %v1335
        %v3887 = vunpack.c.h.b16 %v1335
        %v3888 = vunpack.c.l.b16 %v1336
        %v3889 = vunpack.c.h.b16 %v1336
        %v3890 = vunpack.c.l.b16 %v1337
        %v3891 = vunpack.c.h.b16 %v1337
        %v3892 = vunpack.c.l.b16 %v1338
        %v3893 = vunpack.c.h.b16 %v1338
        %v3894 = vunpack.c.l.b16 %v1339
        %v3895 = vunpack.c.h.b16 %v1339
        %v3896 = vunpack.c.l.b16 %v1340
        %v3897 = vunpack.c.h.b16 %v1340
        %v3898 = vunpack.c.l.b16 %v1341
        %v3899 = vunpack.c.h.b16 %v1341
        %v3900 = vunpack.c.l.b16 %v1342
        %v3901 = vunpack.c.h.b16 %v1342
        %v3902 = vunpack.c.l.b16 %v1343
        %v3903 = vunpack.c.h.b16 %v1343
        %v3904 = vunpack.c.l.b16 %v1344
        %v3905 = vunpack.c.h.b16 %v1344
        %v3906 = vunpack.c.l.b16 %v1345
        %v3907 = vunpack.c.h.b16 %v1345
        %v3908 = vunpack.c.l.b16 %v1346
        %v3909 = vunpack.c.h.b16 %v1346
        %v3910 = vunpack.c.l.b16 %v1347
        %v3911 = vunpack.c.h.b16 %v1347
        %v3912 = vunpack.c.l.b16 %v1348
        %v3913 = vunpack.c.h.b16 %v1348
        %v3914 = vunpack.c.l.b16 %v1349
        %v3915 = vunpack.c.h.b16 %v1349
        %v3916 = vunpack.c.l.b16 %v1350
        %v3917 = vunpack.c.h.b16 %v1350
        %v3918 = vunpack.c.l.b16 %v1351
        %v3919 = vunpack.c.h.b16 %v1351
        %v3920 = vunpack.c.l.b16 %v1352
        %v3921 = vunpack.c.h.b16 %v1352
        %v3922 = vunpack.c.l.b16 %v1353
        %v3923 = vunpack.c.h.b16 %v1353
        %v3924 = vunpack.c.l.b16 %v1354
        %v3925 = vunpack.c.h.b16 %v1354
        %v3926 = vunpack.c.l.b16 %v1355
        %v3927 = vunpack.c.h.b16 %v1355
        %v3928 = vunpack.c.l.b16 %v1356
        %v3929 = vunpack.c.h.b16 %v1356
        %v3930 = vunpack.c.l.b16 %v1357
        %v3931 = vunpack.c.h.b16 %v1357
        %v3932 = vunpack.c.l.b16 %v1358
        %v3933 = vunpack.c.h.b16 %v1358
        %v3934 = vunpack.c.l.b16 %v1359
        %v3935 = vunpack.c.h.b16 %v1359
        %v3936 = vunpack.c.l.b16 %v1360
        %v3937 = vunpack.c.h.b16 %v1360
        %v3938 = vunpack.c.l.b16 %v1361
        %v3939 = vunpack.c.h.b16 %v1361
        %v3940 = vunpack.c.l.b16 %v1362
        %v3941 = vunpack.c.h.b16 %v1362
        %v3942 = vunpack.c.l.b16 %v1363
        %v3943 = vunpack.c.h.b16 %v1363
        %v3944 = vunpack.c.l.b16 %v1364
        %v3945 = vunpack.c.h.b16 %v1364
        %v3946 = vunpack.c.l.b16 %v1365
        %v3947 = vunpack.c.h.b16 %v1365
        %v3948 = vunpack.c.l.b16 %v1366
        %v3949 = vunpack.c.h.b16 %v1366
        %v3950 = vunpack.c.l.b16 %v1367
        %v3951 = vunpack.c.h.b16 %v1367
        %v3952 = vunpack.c.l.b16 %v1368
        %v3953 = vunpack.c.h.b16 %v1368
        %v3954 = vunpack.c.l.b16 %v1369
        %v3955 = vunpack.c.h.b16 %v1369
        %v3956 = vunpack.c.l.b16 %v1370
        %v3957 = vunpack.c.h.b16 %v1370
        %v3958 = vunpack.c.l.b16 %v1371
        %v3959 = vunpack.c.h.b16 %v1371
        %v3960 = vunpack.c.l.b16 %v1372
        %v3961 = vunpack.c.h.b16 %v1372
        %v3962 = vunpack.c.l.b16 %v1373
        %v3963 = vunpack.c.h.b16 %v1373
        %v3964 = vunpack.c.l.b16 %v1374
        %v3965 = vunpack.c.h.b16 %v1374
        %v3966 = vunpack.c.l.b16 %v1375
        %v3967 = vunpack.c.h.b16 %v1375
        %v3968 = vunpack.c.l.b16 %v1376
        %v3969 = vunpack.c.h.b16 %v1376
        %v3970 = vunpack.c.l.b16 %v1377
        %v3971 = vunpack.c.h.b16 %v1377
        %v3972 = vunpack.c.l.b16 %v1378
        %v3973 = vunpack.c.h.b16 %v1378
        %v3974 = vunpack.c.l.b16 %v1379
        %v3975 = vunpack.c.h.b16 %v1379
        %v3976 = vunpack.c.l.b16 %v1380
        %v3977 = vunpack.c.h.b16 %v1380
        %v3978 = vunpack.c.l.b16 %v1381
        %v3979 = vunpack.c.h.b16 %v1381
        %v3980 = vunpack.c.l.b16 %v1382
        %v3981 = vunpack.c.h.b16 %v1382
        %v3982 = vunpack.c.l.b16 %v1383
        %v3983 = vunpack.c.h.b16 %v1383
        %v3984 = vunpack.c.l.b16 %v1384
        %v3985 = vunpack.c.h.b16 %v1384
        %v3986 = vunpack.c.l.b16 %v1385
        %v3987 = vunpack.c.h.b16 %v1385
        %v3988 = vunpack.c.l.b16 %v1386
        %v3989 = vunpack.c.h.b16 %v1386
        %v3990 = vunpack.c.l.b16 %v1387
        %v3991 = vunpack.c.h.b16 %v1387
        %v3992 = vunpack.c.l.b16 %v1388
        %v3993 = vunpack.c.h.b16 %v1388
        %v3994 = vunpack.c.l.b16 %v1389
        %v3995 = vunpack.c.h.b16 %v1389
        %v3996 = vunpack.c.l.b16 %v1390
        %v3997 = vunpack.c.h.b16 %v1390
        %v3998 = vunpack.c.l.b16 %v1391
        %v3999 = vunpack.c.h.b16 %v1391
        %v4000 = vunpack.c.l.b16 %v1392
        %v4001 = vunpack.c.h.b16 %v1392
        %v4002 = vunpack.c.l.b16 %v1393
        %v4003 = vunpack.c.h.b16 %v1393
        %v4004 = vunpack.c.l.b16 %v1394
        %v4005 = vunpack.c.h.b16 %v1394
        %v4006 = vunpack.c.l.b16 %v1395
        %v4007 = vunpack.c.h.b16 %v1395
        %v4008 = vunpack.c.l.b16 %v1396
        %v4009 = vunpack.c.h.b16 %v1396
        %v4010 = vunpack.c.l.b16 %v1397
        %v4011 = vunpack.c.h.b16 %v1397
        %v4012 = vunpack.c.l.b16 %v1398
        %v4013 = vunpack.c.h.b16 %v1398
        %v4014 = vunpack.c.l.b16 %v1399
        %v4015 = vunpack.c.h.b16 %v1399
        %v4016 = vunpack.c.l.b16 %v1400
        %v4017 = vunpack.c.h.b16 %v1400
        %v4018 = vunpack.c.l.b16 %v1401
        %v4019 = vunpack.c.h.b16 %v1401
        %v4020 = vunpack.c.l.b16 %v1402
        %v4021 = vunpack.c.h.b16 %v1402
        %v4022 = vunpack.c.l.b16 %v1403
        %v4023 = vunpack.c.h.b16 %v1403
        %v4024 = vunpack.c.l.b16 %v1404
        %v4025 = vunpack.c.h.b16 %v1404
        %v4026 = vunpack.c.l.b16 %v1405
        %v4027 = vunpack.c.h.b16 %v1405
        %v4028 = vunpack.c.l.b16 %v1406
        %v4029 = vunpack.c.h.b16 %v1406
        %v4030 = vunpack.c.l.b16 %v1407
        %v4031 = vunpack.c.h.b16 %v1407
        %v4032 = vunpack.c.l.b16 %v1408
        %v4033 = vunpack.c.h.b16 %v1408
        %v4034 = vunpack.c.l.b16 %v1409
        %v4035 = vunpack.c.h.b16 %v1409
        %v4036 = vunpack.c.l.b16 %v1410
        %v4037 = vunpack.c.h.b16 %v1410
        %v4038 = vunpack.c.l.b16 %v1411
        %v4039 = vunpack.c.h.b16 %v1411
        %v4040 = vunpack.c.l.b16 %v1412
        %v4041 = vunpack.c.h.b16 %v1412
        %v4042 = vunpack.c.l.b16 %v1413
        %v4043 = vunpack.c.h.b16 %v1413
        %v4044 = vunpack.c.l.b16 %v1414
        %v4045 = vunpack.c.h.b16 %v1414
        %v4046 = vunpack.c.l.b16 %v1415
        %v4047 = vunpack.c.h.b16 %v1415
        %v4048 = vunpack.c.l.b16 %v1416
        %v4049 = vunpack.c.h.b16 %v1416
        %v4050 = vunpack.c.l.b16 %v1417
        %v4051 = vunpack.c.h.b16 %v1417
        %v4052 = vunpack.c.l.b16 %v1418
        %v4053 = vunpack.c.h.b16 %v1418
        %v4054 = vunpack.c.l.b16 %v1419
        %v4055 = vunpack.c.h.b16 %v1419
        %v4056 = vunpack.c.l.b16 %v1420
        %v4057 = vunpack.c.h.b16 %v1420
        %v4058 = vunpack.c.l.b16 %v1421
        %v4059 = vunpack.c.h.b16 %v1421
        %v4060 = vunpack.c.l.b16 %v1422
        %v4061 = vunpack.c.h.b16 %v1422
        %v4062 = vunpack.c.l.b16 %v1423
        %v4063 = vunpack.c.h.b16 %v1423
        %v4064 = vunpack.c.l.b16 %v1424
        %v4065 = vunpack.c.h.b16 %v1424
        %v4066 = vunpack.c.l.b16 %v1425
        %v4067 = vunpack.c.h.b16 %v1425
        %v4068 = vunpack.c.l.b16 %v1426
        %v4069 = vunpack.c.h.b16 %v1426
        %v4070 = vunpack.c.l.b16 %v1427
        %v4071 = vunpack.c.h.b16 %v1427
        %v4072 = vunpack.c.l.b16 %v1428
        %v4073 = vunpack.c.h.b16 %v1428
        %v4074 = vunpack.c.l.b16 %v1429
        %v4075 = vunpack.c.h.b16 %v1429
        %v4076 = vunpack.c.l.b16 %v1430
        %v4077 = vunpack.c.h.b16 %v1430
        %v4078 = vunpack.c.l.b16 %v1431
        %v4079 = vunpack.c.h.b16 %v1431
        %v4080 = vunpack.c.l.b16 %v1432
        %v4081 = vunpack.c.h.b16 %v1432
        %v4082 = vunpack.c.l.b16 %v1433
        %v4083 = vunpack.c.h.b16 %v1433
        %v4084 = vunpack.c.l.b16 %v1434
        %v4085 = vunpack.c.h.b16 %v1434
        %v4086 = vunpack.c.l.b16 %v1435
        %v4087 = vunpack.c.h.b16 %v1435
        %v4088 = vunpack.c.l.b16 %v1436
        %v4089 = vunpack.c.h.b16 %v1436
        %v4090 = vunpack.c.l.b16 %v1437
        %v4091 = vunpack.c.h.b16 %v1437
        %v4092 = vunpack.c.l.b16 %v1438
        %v4093 = vunpack.c.h.b16 %v1438
        %v4094 = vunpack.c.l.b16 %v1439
        %v4095 = vunpack.c.h.b16 %v1439
        %v4096 = vunpack.c.l.b16 %v1440
        %v4097 = vunpack.c.h.b16 %v1440
        %v4098 = vunpack.c.l.b16 %v1441
        %v4099 = vunpack.c.h.b16 %v1441
        %v4100 = vunpack.c.l.b16 %v1442
        %v4101 = vunpack.c.h.b16 %v1442
        %v4102 = vunpack.c.l.b16 %v1443
        %v4103 = vunpack.c.h.b16 %v1443
        %v4104 = vunpack.c.l.b16 %v1444
        %v4105 = vunpack.c.h.b16 %v1444
        %v4106 = vunpack.c.l.b16 %v1445
        %v4107 = vunpack.c.h.b16 %v1445
        %v4108 = vunpack.c.l.b16 %v1446
        %v4109 = vunpack.c.h.b16 %v1446
        %v4110 = vunpack.c.l.b16 %v1447
        %v4111 = vunpack.c.h.b16 %v1447
        %v4112 = vunpack.c.l.b16 %v1448
        %v4113 = vunpack.c.h.b16 %v1448
        %v4114 = vunpack.c.l.b16 %v1449
        %v4115 = vunpack.c.h.b16 %v1449
        %v4116 = vunpack.c.l.b16 %v1450
        %v4117 = vunpack.c.h.b16 %v1450
        %v4118 = vunpack.c.l.b16 %v1451
        %v4119 = vunpack.c.h.b16 %v1451
        %v4120 = vunpack.c.l.b16 %v1452
        %v4121 = vunpack.c.h.b16 %v1452
        %v4122 = vunpack.c.l.b16 %v1453
        %v4123 = vunpack.c.h.b16 %v1453
        %v4124 = vunpack.c.l.b16 %v1454
        %v4125 = vunpack.c.h.b16 %v1454
        %v4126 = vunpack.c.l.b16 %v1455
        %v4127 = vunpack.c.h.b16 %v1455
        %v4128 = vunpack.c.l.b16 %v1456
        %v4129 = vunpack.c.h.b16 %v1456
        %v4130 = vunpack.c.l.b16 %v1457
        %v4131 = vunpack.c.h.b16 %v1457
        %v4132 = vunpack.c.l.b16 %v1458
        %v4133 = vunpack.c.h.b16 %v1458
        %v4134 = vunpack.c.l.b16 %v1459
        %v4135 = vunpack.c.h.b16 %v1459
        %v4136 = vunpack.c.l.b16 %v1460
        %v4137 = vunpack.c.h.b16 %v1460
        %v4138 = vunpack.c.l.b16 %v1461
        %v4139 = vunpack.c.h.b16 %v1461
        %v4140 = vunpack.c.l.b16 %v1462
        %v4141 = vunpack.c.h.b16 %v1462
        %v4142 = vunpack.c.l.b16 %v1463
        %v4143 = vunpack.c.h.b16 %v1463
        %v4144 = vunpack.c.l.b16 %v1464
        %v4145 = vunpack.c.h.b16 %v1464
        %v4146 = vunpack.c.l.b16 %v1465
        %v4147 = vunpack.c.h.b16 %v1465
        %v4148 = vunpack.c.l.b16 %v1466
        %v4149 = vunpack.c.h.b16 %v1466
        %v4150 = vunpack.c.l.b16 %v1467
        %v4151 = vunpack.c.h.b16 %v1467
        %v4152 = vunpack.c.l.b16 %v1468
        %v4153 = vunpack.c.h.b16 %v1468
        %v4154 = vunpack.c.l.b16 %v1469
        %v4155 = vunpack.c.h.b16 %v1469
        %v4156 = vunpack.c.l.b16 %v1470
        %v4157 = vunpack.c.h.b16 %v1470
        %v4158 = vunpack.c.l.b16 %v1471
        %v4159 = vunpack.c.h.b16 %v1471
        %v4160 = vunpack.c.l.b16 %v1472
        %v4161 = vunpack.c.h.b16 %v1472
        %v4162 = vunpack.c.l.b16 %v1473
        %v4163 = vunpack.c.h.b16 %v1473
        %v4164 = vunpack.c.l.b16 %v1474
        %v4165 = vunpack.c.h.b16 %v1474
        %v4166 = vunpack.c.l.b16 %v1475
        %v4167 = vunpack.c.h.b16 %v1475
        %v4168 = vunpack.c.l.b16 %v1476
        %v4169 = vunpack.c.h.b16 %v1476
        %v4170 = vunpack.c.l.b16 %v1477
        %v4171 = vunpack.c.h.b16 %v1477
        %v4172 = vunpack.c.l.b16 %v1478
        %v4173 = vunpack.c.h.b16 %v1478
        %v4174 = vunpack.c.l.b16 %v1479
        %v4175 = vunpack.c.h.b16 %v1479
        %v4176 = vunpack.c.l.b16 %v1480
        %v4177 = vunpack.c.h.b16 %v1480
        %v4178 = vunpack.c.l.b16 %v1481
        %v4179 = vunpack.c.h.b16 %v1481
        %v4180 = vunpack.c.l.b16 %v1482
        %v4181 = vunpack.c.h.b16 %v1482
        %v4182 = vunpack.c.l.b16 %v1483
        %v4183 = vunpack.c.h.b16 %v1483
        %v4184 = vunpack.c.l.b16 %v1484
        %v4185 = vunpack.c.h.b16 %v1484
        %v4186 = vunpack.c.l.b16 %v1485
        %v4187 = vunpack.c.h.b16 %v1485
        %v4188 = vunpack.c.l.b16 %v1486
        %v4189 = vunpack.c.h.b16 %v1486
        %v4190 = vunpack.c.l.b16 %v1487
        %v4191 = vunpack.c.h.b16 %v1487
        %v4192 = vunpack.c.l.b16 %v1488
        %v4193 = vunpack.c.h.b16 %v1488
        %v4194 = vunpack.c.l.b16 %v1489
        %v4195 = vunpack.c.h.b16 %v1489
        %v4196 = vunpack.c.l.b16 %v1490
        %v4197 = vunpack.c.h.b16 %v1490
        %v4198 = vunpack.c.l.b16 %v1491
        %v4199 = vunpack.c.h.b16 %v1491
        %v4200 = vunpack.c.l.b16 %v1492
        %v4201 = vunpack.c.h.b16 %v1492
        %v4202 = vunpack.c.l.b16 %v1493
        %v4203 = vunpack.c.h.b16 %v1493
        %v4204 = vunpack.c.l.b16 %v1494
        %v4205 = vunpack.c.h.b16 %v1494
        %v4206 = vunpack.c.l.b16 %v1495
        %v4207 = vunpack.c.h.b16 %v1495
        %v4208 = vunpack.c.l.b16 %v1496
        %v4209 = vunpack.c.h.b16 %v1496
        %v4210 = vunpack.c.l.b16 %v1497
        %v4211 = vunpack.c.h.b16 %v1497
        %v4212 = vunpack.c.l.b16 %v1498
        %v4213 = vunpack.c.h.b16 %v1498
        %v4214 = vunpack.c.l.b16 %v1499
        %v4215 = vunpack.c.h.b16 %v1499
        %v4216 = vunpack.c.l.b16 %v1500
        %v4217 = vunpack.c.h.b16 %v1500
        %v4218 = vunpack.c.l.b16 %v1501
        %v4219 = vunpack.c.h.b16 %v1501
        %v4220 = vunpack.c.l.b16 %v1502
        %v4221 = vunpack.c.h.b16 %v1502
        %v4222 = vunpack.c.l.b16 %v1503
        %v4223 = vunpack.c.h.b16 %v1503
        %v4224 = vunpack.c.l.b16 %v1504
        %v4225 = vunpack.c.h.b16 %v1504
        %v4226 = vunpack.c.l.b16 %v1505
        %v4227 = vunpack.c.h.b16 %v1505
        %v4228 = vunpack.c.l.b16 %v1506
        %v4229 = vunpack.c.h.b16 %v1506
        %v4230 = vunpack.c.l.b16 %v1507
        %v4231 = vunpack.c.h.b16 %v1507
        %v4232 = vunpack.c.l.b16 %v1508
        %v4233 = vunpack.c.h.b16 %v1508
        %v4234 = vunpack.c.l.b16 %v1509
        %v4235 = vunpack.c.h.b16 %v1509
        %v4236 = vunpack.c.l.b16 %v1510
        %v4237 = vunpack.c.h.b16 %v1510
        %v4238 = vunpack.c.l.b16 %v1511
        %v4239 = vunpack.c.h.b16 %v1511
        %v4240 = vunpack.c.l.b16 %v1512
        %v4241 = vunpack.c.h.b16 %v1512
        %v4242 = vunpack.c.l.b16 %v1513
        %v4243 = vunpack.c.h.b16 %v1513
        %v4244 = vunpack.c.l.b16 %v1514
        %v4245 = vunpack.c.h.b16 %v1514
        %v4246 = vunpack.c.l.b16 %v1515
        %v4247 = vunpack.c.h.b16 %v1515
        %v4248 = vunpack.c.l.b16 %v1516
        %v4249 = vunpack.c.h.b16 %v1516
        %v4250 = vunpack.c.l.b16 %v1517
        %v4251 = vunpack.c.h.b16 %v1517
        %v4252 = vunpack.c.l.b16 %v1518
        %v4253 = vunpack.c.h.b16 %v1518
        %v4254 = vunpack.c.l.b16 %v1519
        %v4255 = vunpack.c.h.b16 %v1519
        %v4256 = vunpack.c.l.b16 %v1520
        %v4257 = vunpack.c.h.b16 %v1520
        %v4258 = vunpack.c.l.b16 %v1521
        %v4259 = vunpack.c.h.b16 %v1521
        %v4260 = vunpack.c.l.b16 %v1522
        %v4261 = vunpack.c.h.b16 %v1522
        %v4262 = vunpack.c.l.b16 %v1523
        %v4263 = vunpack.c.h.b16 %v1523
        %v4264 = vunpack.c.l.b16 %v1524
        %v4265 = vunpack.c.h.b16 %v1524
        %v4266 = vunpack.c.l.b16 %v1525
        %v4267 = vunpack.c.h.b16 %v1525
        %v4268 = vunpack.c.l.b16 %v1526
        %v4269 = vunpack.c.h.b16 %v1526
        %v4270 = vunpack.c.l.b16 %v1527
        %v4271 = vunpack.c.h.b16 %v1527
        %v4272 = vunpack.c.l.b16 %v1528
        %v4273 = vunpack.c.h.b16 %v1528
        %v4274 = vunpack.c.l.b16 %v1529
        %v4275 = vunpack.c.h.b16 %v1529
        %v4276 = vunpack.c.l.b16 %v1530
        %v4277 = vunpack.c.h.b16 %v1530
        %v4278 = vunpack.c.l.b16 %v1531
        %v4279 = vunpack.c.h.b16 %v1531
        %v4280 = vunpack.c.l.b16 %v1532
        %v4281 = vunpack.c.h.b16 %v1532
        %v4282 = vunpack.c.l.b16 %v1533
        %v4283 = vunpack.c.h.b16 %v1533
        %v4284 = vunpack.c.l.b16 %v1534
        %v4285 = vunpack.c.h.b16 %v1534
        %v4286 = vunpack.c.l.b16 %v1535
        %v4287 = vunpack.c.h.b16 %v1535
        %v4288 = vunpack.c.l.b16 %v1536
        %v4289 = vunpack.c.h.b16 %v1536
        %v4290 = vunpack.c.l.b16 %v1537
        %v4291 = vunpack.c.h.b16 %v1537
        %v4292 = vunpack.c.l.b16 %v1538
        %v4293 = vunpack.c.h.b16 %v1538
        %v4294 = vunpack.c.l.b16 %v1539
        %v4295 = vunpack.c.h.b16 %v1539
        %v4296 = vunpack.c.l.b16 %v1540
        %v4297 = vunpack.c.h.b16 %v1540
        %v4298 = vunpack.c.l.b16 %v1541
        %v4299 = vunpack.c.h.b16 %v1541
        %v4300 = vunpack.c.l.b16 %v1542
        %v4301 = vunpack.c.h.b16 %v1542
        %v4302 = vunpack.c.l.b16 %v1543
        %v4303 = vunpack.c.h.b16 %v1543
        %v4304 = vunpack.c.l.b16 %v1544
        %v4305 = vunpack.c.h.b16 %v1544
        %v4306 = vunpack.c.l.b16 %v1545
        %v4307 = vunpack.c.h.b16 %v1545
        %v4308 = vunpack.c.l.b16 %v1546
        %v4309 = vunpack.c.h.b16 %v1546
        %v4310 = vunpack.c.l.b16 %v1547
        %v4311 = vunpack.c.h.b16 %v1547
        %v4312 = vunpack.c.l.b16 %v1548
        %v4313 = vunpack.c.h.b16 %v1548
        %v4314 = vunpack.c.l.b16 %v1549
        %v4315 = vunpack.c.h.b16 %v1549
        %v4316 = vunpack.c.l.b16 %v1550
        %v4317 = vunpack.c.h.b16 %v1550
        %v4318 = vunpack.c.l.b16 %v1551
        %v4319 = vunpack.c.h.b16 %v1551
        %v4320 = vunpack.c.l.b16 %v1552
        %v4321 = vunpack.c.h.b16 %v1552
        %v4322 = vunpack.c.l.b16 %v1553
        %v4323 = vunpack.c.h.b16 %v1553
        %v4324 = vunpack.c.l.b16 %v1554
        %v4325 = vunpack.c.h.b16 %v1554
        %v4326 = vunpack.c.l.b16 %v1555
        %v4327 = vunpack.c.h.b16 %v1555
        %v4328 = vunpack.c.l.b16 %v1556
        %v4329 = vunpack.c.h.b16 %v1556
        %v4330 = vunpack.c.l.b16 %v1557
        %v4331 = vunpack.c.h.b16 %v1557
        %v4332 = vunpack.c.l.b16 %v1558
        %v4333 = vunpack.c.h.b16 %v1558
        %v4334 = vunpack.c.l.b16 %v1559
        %v4335 = vunpack.c.h.b16 %v1559
        %v4336 = vunpack.c.l.b16 %v1560
        %v4337 = vunpack.c.h.b16 %v1560
        %v4338 = vunpack.c.l.b16 %v1561
        %v4339 = vunpack.c.h.b16 %v1561
        %v4340 = vunpack.c.l.b16 %v1562
        %v4341 = vunpack.c.h.b16 %v1562
        %v4342 = vunpack.c.l.b16 %v1563
        %v4343 = vunpack.c.h.b16 %v1563
        %v4344 = vunpack.c.l.b16 %v1564
        %v4345 = vunpack.c.h.b16 %v1564
        %v4346 = vunpack.c.l.b16 %v1565
        %v4347 = vunpack.c.h.b16 %v1565
        %v4348 = vunpack.c.l.b16 %v1566
        %v4349 = vunpack.c.h.b16 %v1566
        %v4350 = vunpack.c.l.b16 %v1567
        %v4351 = vunpack.c.h.b16 %v1567
        %v4352 = vunpack.c.l.b16 %v1568
        %v4353 = vunpack.c.h.b16 %v1568
        %v4354 = vunpack.c.l.b16 %v1569
        %v4355 = vunpack.c.h.b16 %v1569
        %v4356 = vunpack.c.l.b16 %v1570
        %v4357 = vunpack.c.h.b16 %v1570
        %v4358 = vunpack.c.l.b16 %v1571
        %v4359 = vunpack.c.h.b16 %v1571
        %v4360 = vunpack.c.l.b16 %v1572
        %v4361 = vunpack.c.h.b16 %v1572
        %v4362 = vunpack.c.l.b16 %v1573
        %v4363 = vunpack.c.h.b16 %v1573
        %v4364 = vunpack.c.l.b16 %v1574
        %v4365 = vunpack.c.h.b16 %v1574
        %v4366 = vunpack.c.l.b16 %v1575
        %v4367 = vunpack.c.h.b16 %v1575
        %v4368 = vunpack.c.l.b16 %v1576
        %v4369 = vunpack.c.h.b16 %v1576
        %v4370 = vunpack.c.l.b16 %v1577
        %v4371 = vunpack.c.h.b16 %v1577
        %v4372 = vunpack.c.l.b16 %v1578
        %v4373 = vunpack.c.h.b16 %v1578
        %v4374 = vunpack.c.l.b16 %v1579
        %v4375 = vunpack.c.h.b16 %v1579
        %v4376 = vunpack.c.l.b16 %v1580
        %v4377 = vunpack.c.h.b16 %v1580
        %v4378 = vunpack.c.l.b16 %v1581
        %v4379 = vunpack.c.h.b16 %v1581
        %v4380 = vunpack.c.l.b16 %v1582
        %v4381 = vunpack.c.h.b16 %v1582
        %v4382 = vunpack.c.l.b16 %v1583
        %v4383 = vunpack.c.h.b16 %v1583
        %v4384 = vunpack.c.l.b16 %v1584
        %v4385 = vunpack.c.h.b16 %v1584
        %v4386 = vunpack.c.l.b16 %v1585
        %v4387 = vunpack.c.h.b16 %v1585
        %v4388 = vunpack.c.l.b16 %v1586
        %v4389 = vunpack.c.h.b16 %v1586
        %v4390 = vunpack.c.l.b16 %v1587
        %v4391 = vunpack.c.h.b16 %v1587
        %v4392 = vunpack.c.l.b16 %v1588
        %v4393 = vunpack.c.h.b16 %v1588
        %v4394 = vunpack.c.l.b16 %v1589
        %v4395 = vunpack.c.h.b16 %v1589
        %v4396 = vunpack.c.l.b16 %v1590
        %v4397 = vunpack.c.h.b16 %v1590
        %v4398 = vunpack.c.l.b16 %v1591
        %v4399 = vunpack.c.h.b16 %v1591
        %v4400 = vunpack.c.l.b16 %v1592
        %v4401 = vunpack.c.h.b16 %v1592
        %v4402 = vunpack.c.l.b16 %v1593
        %v4403 = vunpack.c.h.b16 %v1593
        %v4404 = vunpack.c.l.b16 %v1594
        %v4405 = vunpack.c.h.b16 %v1594
        %v4406 = vunpack.c.l.b16 %v1595
        %v4407 = vunpack.c.h.b16 %v1595
        %v4408 = vunpack.c.l.b16 %v1596
        %v4409 = vunpack.c.h.b16 %v1596
        %v4410 = vunpack.c.l.b16 %v1597
        %v4411 = vunpack.c.h.b16 %v1597
        %v4412 = vunpack.c.l.b16 %v1598
        %v4413 = vunpack.c.h.b16 %v1598
        %v4414 = vunpack.c.l.b16 %v1599
        %v4415 = vunpack.c.h.b16 %v1599
        %v4416 = vunpack.c.l.b16 %v1600
        %v4417 = vunpack.c.h.b16 %v1600
        %v4418 = vunpack.c.l.b16 %v1601
        %v4419 = vunpack.c.h.b16 %v1601
        %v4420 = vunpack.c.l.b16 %v1602
        %v4421 = vunpack.c.h.b16 %v1602
        %v4422 = vunpack.c.l.b16 %v1603
        %v4423 = vunpack.c.h.b16 %v1603
        %v4424 = vunpack.c.l.b16 %v1604
        %v4425 = vunpack.c.h.b16 %v1604
        %v4426 = vunpack.c.l.b16 %v1605
        %v4427 = vunpack.c.h.b16 %v1605
        %v4428 = vunpack.c.l.b16 %v1606
        %v4429 = vunpack.c.h.b16 %v1606
        %v4430 = vunpack.c.l.b16 %v1607
        %v4431 = vunpack.c.h.b16 %v1607
        %v4432 = vunpack.c.l.b16 %v1608
        %v4433 = vunpack.c.h.b16 %v1608
        %v4434 = vunpack.c.l.b16 %v1609
        %v4435 = vunpack.c.h.b16 %v1609
        %v4436 = vunpack.c.l.b16 %v1610
        %v4437 = vunpack.c.h.b16 %v1610
        %v4438 = vunpack.c.l.b16 %v1611
        %v4439 = vunpack.c.h.b16 %v1611
        %v4440 = vunpack.c.l.b16 %v1612
        %v4441 = vunpack.c.h.b16 %v1612
        %v4442 = vunpack.c.l.b16 %v1613
        %v4443 = vunpack.c.h.b16 %v1613
        %v4444 = vunpack.c.l.b16 %v1614
        %v4445 = vunpack.c.h.b16 %v1614
        %v4446 = vunpack.c.l.b16 %v1615
        %v4447 = vunpack.c.h.b16 %v1615
        %v4448 = vunpack.c.l.b16 %v1616
        %v4449 = vunpack.c.h.b16 %v1616
        %v4450 = vunpack.c.l.b16 %v1617
        %v4451 = vunpack.c.h.b16 %v1617
        %v4452 = vunpack.c.l.b16 %v1618
        %v4453 = vunpack.c.h.b16 %v1618
        %v4454 = vunpack.c.l.b16 %v1619
        %v4455 = vunpack.c.h.b16 %v1619
        %v4456 = vunpack.c.l.b16 %v1620
        %v4457 = vunpack.c.h.b16 %v1620
        %v4458 = vunpack.c.l.b16 %v1621
        %v4459 = vunpack.c.h.b16 %v1621
        %v4460 = vunpack.c.l.b16 %v1622
        %v4461 = vunpack.c.h.b16 %v1622
        %v4462 = vunpack.c.l.b16 %v1623
        %v4463 = vunpack.c.h.b16 %v1623
        %v4464 = vunpack.c.l.b16 %v1624
        %v4465 = vunpack.c.h.b16 %v1624
        %v4466 = vunpack.c.l.b16 %v1625
        %v4467 = vunpack.c.h.b16 %v1625
        %v4468 = vunpack.c.l.b16 %v1626
        %v4469 = vunpack.c.h.b16 %v1626
        %v4470 = vunpack.c.l.b16 %v1627
        %v4471 = vunpack.c.h.b16 %v1627
        %v4472 = vunpack.c.l.b16 %v1628
        %v4473 = vunpack.c.h.b16 %v1628
        %v4474 = vunpack.c.l.b16 %v1629
        %v4475 = vunpack.c.h.b16 %v1629
        %v4476 = vunpack.c.l.b16 %v1630
        %v4477 = vunpack.c.h.b16 %v1630
        %v4478 = vunpack.c.l.b16 %v1631
        %v4479 = vunpack.c.h.b16 %v1631
        %v4480 = vunpack.c.l.b16 %v1632
        %v4481 = vunpack.c.h.b16 %v1632
        %v4482 = vunpack.c.l.b16 %v1633
        %v4483 = vunpack.c.h.b16 %v1633
        %v4484 = vunpack.c.l.b16 %v1634
        %v4485 = vunpack.c.h.b16 %v1634
        %v4486 = vunpack.c.l.b16 %v1635
        %v4487 = vunpack.c.h.b16 %v1635
        %v4488 = vunpack.c.l.b16 %v1636
        %v4489 = vunpack.c.h.b16 %v1636
        %v4490 = vunpack.c.l.b16 %v1637
        %v4491 = vunpack.c.h.b16 %v1637
        %v4492 = vunpack.c.l.b16 %v1638
        %v4493 = vunpack.c.h.b16 %v1638
        %v4494 = vunpack.c.l.b16 %v1639
        %v4495 = vunpack.c.h.b16 %v1639
        %v4496 = vunpack.c.l.b16 %v1640
        %v4497 = vunpack.c.h.b16 %v1640
        %v4498 = vunpack.c.l.b16 %v1641
        %v4499 = vunpack.c.h.b16 %v1641
        %v4500 = vunpack.c.l.b16 %v1642
        %v4501 = vunpack.c.h.b16 %v1642
        %v4502 = vunpack.c.l.b16 %v1643
        %v4503 = vunpack.c.h.b16 %v1643
        %v4504 = vunpack.c.l.b16 %v1644
        %v4505 = vunpack.c.h.b16 %v1644
        %v4506 = vunpack.c.l.b16 %v1645
        %v4507 = vunpack.c.h.b16 %v1645
        %v4508 = vunpack.c.l.b16 %v1646
        %v4509 = vunpack.c.h.b16 %v1646
        %v4510 = vunpack.c.l.b16 %v1647
        %v4511 = vunpack.c.h.b16 %v1647
        %v4512 = vunpack.c.l.b16 %v1648
        %v4513 = vunpack.c.h.b16 %v1648
        %v4514 = vunpack.c.l.b16 %v1649
        %v4515 = vunpack.c.h.b16 %v1649
        %v4516 = vunpack.c.l.b16 %v1650
        %v4517 = vunpack.c.h.b16 %v1650
        %v4518 = vunpack.c.l.b16 %v1651
        %v4519 = vunpack.c.h.b16 %v1651
        %v4520 = vunpack.c.l.b16 %v1652
        %v4521 = vunpack.c.h.b16 %v1652
        %v4522 = vunpack.c.l.b16 %v1653
        %v4523 = vunpack.c.h.b16 %v1653
        %v4524 = vunpack.c.l.b16 %v1654
        %v4525 = vunpack.c.h.b16 %v1654
        %v4526 = vunpack.c.l.b16 %v1655
        %v4527 = vunpack.c.h.b16 %v1655
        %v4528 = vunpack.c.l.b16 %v1656
        %v4529 = vunpack.c.h.b16 %v1656
        %v4530 = vunpack.c.l.b16 %v1657
        %v4531 = vunpack.c.h.b16 %v1657
        %v4532 = vunpack.c.l.b16 %v1658
        %v4533 = vunpack.c.h.b16 %v1658
        %v4534 = vunpack.c.l.b16 %v1659
        %v4535 = vunpack.c.h.b16 %v1659
        %v4536 = vunpack.c.l.b16 %v1660
        %v4537 = vunpack.c.h.b16 %v1660
        %v4538 = vunpack.c.l.b16 %v1661
        %v4539 = vunpack.c.h.b16 %v1661
        %v4540 = vunpack.c.l.b16 %v1662
        %v4541 = vunpack.c.h.b16 %v1662
        %v4542 = vunpack.c.l.b16 %v1663
        %v4543 = vunpack.c.h.b16 %v1663
        %v4544 = vunpack.c.l.b16 %v1664
        %v4545 = vunpack.c.h.b16 %v1664
        %v4546 = vunpack.c.l.b16 %v1665
        %v4547 = vunpack.c.h.b16 %v1665
        %v4548 = vunpack.c.l.b16 %v1666
        %v4549 = vunpack.c.h.b16 %v1666
        %v4550 = vunpack.c.l.b16 %v1667
        %v4551 = vunpack.c.h.b16 %v1667
        %v4552 = vunpack.c.l.b16 %v1668
        %v4553 = vunpack.c.h.b16 %v1668
        %v4554 = vunpack.c.l.b16 %v1669
        %v4555 = vunpack.c.h.b16 %v1669
        %v4556 = vunpack.c.l.b16 %v1670
        %v4557 = vunpack.c.h.b16 %v1670
        %v4558 = vunpack.c.l.b16 %v1671
        %v4559 = vunpack.c.h.b16 %v1671
        %v4560 = vunpack.c.l.b16 %v1672
        %v4561 = vunpack.c.h.b16 %v1672
        %v4562 = vunpack.c.l.b16 %v1673
        %v4563 = vunpack.c.h.b16 %v1673
        %v4564 = vunpack.c.l.b16 %v1674
        %v4565 = vunpack.c.h.b16 %v1674
        %v4566 = vunpack.c.l.b16 %v1675
        %v4567 = vunpack.c.h.b16 %v1675
        %v4568 = vunpack.c.l.b16 %v1676
        %v4569 = vunpack.c.h.b16 %v1676
        %v4570 = vunpack.c.l.b16 %v1677
        %v4571 = vunpack.c.h.b16 %v1677
        %v4572 = vunpack.c.l.b16 %v1678
        %v4573 = vunpack.c.h.b16 %v1678
        %v4574 = vunpack.c.l.b16 %v1679
        %v4575 = vunpack.c.h.b16 %v1679
        %v4576 = vunpack.c.l.b16 %v1680
        %v4577 = vunpack.c.h.b16 %v1680
        %v4578 = vunpack.c.l.b16 %v1681
        %v4579 = vunpack.c.h.b16 %v1681
        %v4580 = vunpack.c.l.b16 %v1682
        %v4581 = vunpack.c.h.b16 %v1682
        %v4582 = vunpack.c.l.b16 %v1683
        %v4583 = vunpack.c.h.b16 %v1683
        %v4584 = vunpack.c.l.b16 %v1684
        %v4585 = vunpack.c.h.b16 %v1684
        %v4586 = vunpack.c.l.b16 %v1685
        %v4587 = vunpack.c.h.b16 %v1685
        %v4588 = vunpack.c.l.b16 %v1686
        %v4589 = vunpack.c.h.b16 %v1686
        %v4590 = vunpack.c.l.b16 %v1687
        %v4591 = vunpack.c.h.b16 %v1687
        %v4592 = vunpack.c.l.b16 %v1688
        %v4593 = vunpack.c.h.b16 %v1688
        %v4594 = vunpack.c.l.b16 %v1689
        %v4595 = vunpack.c.h.b16 %v1689
        %v4596 = vunpack.c.l.b16 %v1690
        %v4597 = vunpack.c.h.b16 %v1690
        %v4598 = vunpack.c.l.b16 %v1691
        %v4599 = vunpack.c.h.b16 %v1691
        %v4600 = vunpack.c.l.b16 %v1692
        %v4601 = vunpack.c.h.b16 %v1692
        %v4602 = vunpack.c.l.b16 %v1693
        %v4603 = vunpack.c.h.b16 %v1693
        %v4604 = vunpack.c.l.b16 %v1694
        %v4605 = vunpack.c.h.b16 %v1694
        %v4606 = vunpack.c.l.b16 %v1695
        %v4607 = vunpack.c.h.b16 %v1695
        %v4608 = vunpack.c.l.b16 %v1696
        %v4609 = vunpack.c.h.b16 %v1696
        %v4610 = vunpack.c.l.b16 %v1697
        %v4611 = vunpack.c.h.b16 %v1697
        %v4612 = vunpack.c.l.b16 %v1698
        %v4613 = vunpack.c.h.b16 %v1698
        %v4614 = vunpack.c.l.b16 %v1699
        %v4615 = vunpack.c.h.b16 %v1699
        %v4616 = vunpack.c.l.b16 %v1700
        %v4617 = vunpack.c.h.b16 %v1700
        %v4618 = vunpack.c.l.b16 %v1701
        %v4619 = vunpack.c.h.b16 %v1701
        %v4620 = vunpack.c.l.b16 %v1702
        %v4621 = vunpack.c.h.b16 %v1702
        %v4622 = vunpack.c.l.b16 %v1703
        %v4623 = vunpack.c.h.b16 %v1703
        %v4624 = vunpack.c.l.b16 %v1704
        %v4625 = vunpack.c.h.b16 %v1704
        %v4626 = vunpack.c.l.b16 %v1705
        %v4627 = vunpack.c.h.b16 %v1705
        %v4628 = vunpack.c.l.b16 %v1706
        %v4629 = vunpack.c.h.b16 %v1706
        %v4630 = vunpack.c.l.b16 %v1707
        %v4631 = vunpack.c.h.b16 %v1707
        %v4632 = vunpack.c.l.b16 %v1708
        %v4633 = vunpack.c.h.b16 %v1708
        %v4634 = vunpack.c.l.b16 %v1709
        %v4635 = vunpack.c.h.b16 %v1709
        %v4636 = vunpack.c.l.b16 %v1710
        %v4637 = vunpack.c.h.b16 %v1710
        %v4638 = vunpack.c.l.b16 %v1711
        %v4639 = vunpack.c.h.b16 %v1711
        %v4640 = vunpack.c.l.b16 %v1712
        %v4641 = vunpack.c.h.b16 %v1712
        %v4642 = vunpack.c.l.b16 %v1713
        %v4643 = vunpack.c.h.b16 %v1713
        %v4644 = vunpack.c.l.b16 %v1714
        %v4645 = vunpack.c.h.b16 %v1714
        %v4646 = vunpack.c.l.b16 %v1715
        %v4647 = vunpack.c.h.b16 %v1715
        %v4648 = vunpack.c.l.b16 %v1716
        %v4649 = vunpack.c.h.b16 %v1716
        %v4650 = vunpack.c.l.b16 %v1717
        %v4651 = vunpack.c.h.b16 %v1717
        %v4652 = vunpack.c.l.b16 %v1718
        %v4653 = vunpack.c.h.b16 %v1718
        %v4654 = vunpack.c.l.b16 %v1719
        %v4655 = vunpack.c.h.b16 %v1719
        %v4656 = vunpack.c.l.b16 %v1720
        %v4657 = vunpack.c.h.b16 %v1720
        %v4658 = vunpack.c.l.b16 %v1721
        %v4659 = vunpack.c.h.b16 %v1721
        %v4660 = vunpack.c.l.b16 %v1722
        %v4661 = vunpack.c.h.b16 %v1722
        %v4662 = vunpack.c.l.b16 %v1723
        %v4663 = vunpack.c.h.b16 %v1723
        %v4664 = vunpack.c.l.b16 %v1724
        %v4665 = vunpack.c.h.b16 %v1724
        %v4666 = vunpack.c.l.b16 %v1725
        %v4667 = vunpack.c.h.b16 %v1725
        %v4668 = vunpack.c.l.b16 %v1726
        %v4669 = vunpack.c.h.b16 %v1726
        %v4670 = vunpack.c.l.b16 %v1727
        %v4671 = vunpack.c.h.b16 %v1727
        %v4672 = vunpack.c.l.b16 %v1728
        %v4673 = vunpack.c.h.b16 %v1728
        %v4674 = vunpack.c.l.b16 %v1729
        %v4675 = vunpack.c.h.b16 %v1729
        %v4676 = vunpack.c.l.b16 %v1730
        %v4677 = vunpack.c.h.b16 %v1730
        %v4678 = vunpack.c.l.b16 %v1731
        %v4679 = vunpack.c.h.b16 %v1731
        %v4680 = vunpack.c.l.b16 %v1732
        %v4681 = vunpack.c.h.b16 %v1732
        %v4682 = vunpack.c.l.b16 %v1733
        %v4683 = vunpack.c.h.b16 %v1733
        %v4684 = vunpack.c.l.b16 %v1734
        %v4685 = vunpack.c.h.b16 %v1734
        %v4686 = vunpack.c.l.b16 %v1735
        %v4687 = vunpack.c.h.b16 %v1735
        %v4688 = vunpack.c.l.b16 %v1736
        %v4689 = vunpack.c.h.b16 %v1736
        %v4690 = vunpack.c.l.b16 %v1737
        %v4691 = vunpack.c.h.b16 %v1737
        %v4692 = vunpack.c.l.b16 %v1738
        %v4693 = vunpack.c.h.b16 %v1738
        %v4694 = vunpack.c.l.b16 %v1739
        %v4695 = vunpack.c.h.b16 %v1739
        %v4696 = vunpack.c.l.b16 %v1740
        %v4697 = vunpack.c.h.b16 %v1740
        %v4698 = vunpack.c.l.b16 %v1741
        %v4699 = vunpack.c.h.b16 %v1741
        %v4700 = vunpack.c.l.b16 %v1742
        %v4701 = vunpack.c.h.b16 %v1742
        %v4702 = vunpack.c.l.b16 %v1743
        %v4703 = vunpack.c.h.b16 %v1743
        %v4704 = vunpack.c.l.b16 %v1744
        %v4705 = vunpack.c.h.b16 %v1744
        %v4706 = vunpack.c.l.b16 %v1745
        %v4707 = vunpack.c.h.b16 %v1745
        %v4708 = vunpack.c.l.b16 %v1746
        %v4709 = vunpack.c.h.b16 %v1746
        %v4710 = vunpack.c.l.b16 %v1747
        %v4711 = vunpack.c.h.b16 %v1747
        %v4712 = vunpack.c.l.b16 %v1748
        %v4713 = vunpack.c.h.b16 %v1748
        %v4714 = vunpack.c.l.b16 %v1749
        %v4715 = vunpack.c.h.b16 %v1749
        %v4716 = vunpack.c.l.b16 %v1750
        %v4717 = vunpack.c.h.b16 %v1750
        %v4718 = vunpack.c.l.b16 %v1751
        %v4719 = vunpack.c.h.b16 %v1751
        %v4720 = vunpack.c.l.b16 %v1752
        %v4721 = vunpack.c.h.b16 %v1752
        %v4722 = vunpack.c.l.b16 %v1753
        %v4723 = vunpack.c.h.b16 %v1753
        %v4724 = vunpack.c.l.b16 %v1754
        %v4725 = vunpack.c.h.b16 %v1754
        %v4726 = vunpack.c.l.b16 %v1755
        %v4727 = vunpack.c.h.b16 %v1755
        %v4728 = vunpack.c.l.b16 %v1756
        %v4729 = vunpack.c.h.b16 %v1756
        %v4730 = vunpack.c.l.b16 %v1757
        %v4731 = vunpack.c.h.b16 %v1757
        %v4732 = vunpack.c.l.b16 %v1758
        %v4733 = vunpack.c.h.b16 %v1758
        %v4734 = vunpack.c.l.b16 %v1759
        %v4735 = vunpack.c.h.b16 %v1759
        %v4736 = vunpack.c.l.b16 %v1760
        %v4737 = vunpack.c.h.b16 %v1760
        %v4738 = vunpack.c.l.b16 %v1761
        %v4739 = vunpack.c.h.b16 %v1761
        %v4740 = vunpack.c.l.b16 %v1762
        %v4741 = vunpack.c.h.b16 %v1762
        %v4742 = vunpack.c.l.b16 %v1763
        %v4743 = vunpack.c.h.b16 %v1763
        %v4744 = vunpack.c.l.b16 %v1764
        %v4745 = vunpack.c.h.b16 %v1764
        %v4746 = vunpack.c.l.b16 %v1765
        %v4747 = vunpack.c.h.b16 %v1765
        %v4748 = vunpack.c.l.b16 %v1766
        %v4749 = vunpack.c.h.b16 %v1766
        %v4750 = vunpack.c.l.b16 %v1767
        %v4751 = vunpack.c.h.b16 %v1767
        %v4752 = vunpack.c.l.b16 %v1768
        %v4753 = vunpack.c.h.b16 %v1768
        %v4754 = vunpack.c.l.b16 %v1769
        %v4755 = vunpack.c.h.b16 %v1769
        %v4756 = vunpack.c.l.b16 %v1770
        %v4757 = vunpack.c.h.b16 %v1770
        %v4758 = vunpack.c.l.b16 %v1771
        %v4759 = vunpack.c.h.b16 %v1771
        %v4760 = vunpack.c.l.b16 %v1772
        %v4761 = vunpack.c.h.b16 %v1772
        %v4762 = vunpack.c.l.b16 %v1773
        %v4763 = vunpack.c.h.b16 %v1773
        %v4764 = vunpack.c.l.b16 %v1774
        %v4765 = vunpack.c.h.b16 %v1774
        %v4766 = vunpack.c.l.b16 %v1775
        %v4767 = vunpack.c.h.b16 %v1775
        %v4768 = vunpack.c.l.b16 %v1776
        %v4769 = vunpack.c.h.b16 %v1776
        %v4770 = vunpack.c.l.b16 %v1777
        %v4771 = vunpack.c.h.b16 %v1777
        %v4772 = vunpack.c.l.b16 %v1778
        %v4773 = vunpack.c.h.b16 %v1778
        %v4774 = vunpack.c.l.b16 %v1779
        %v4775 = vunpack.c.h.b16 %v1779
        %v4776 = vunpack.c.l.b16 %v1780
        %v4777 = vunpack.c.h.b16 %v1780
        %v4778 = vunpack.c.l.b16 %v1781
        %v4779 = vunpack.c.h.b16 %v1781
        %v4780 = vunpack.c.l.b16 %v1782
        %v4781 = vunpack.c.h.b16 %v1782
        %v4782 = vunpack.c.l.b16 %v1783
        %v4783 = vunpack.c.h.b16 %v1783
        %v4784 = vunpack.c.l.b16 %v1784
        %v4785 = vunpack.c.h.b16 %v1784
        %v4786 = vunpack.c.l.b16 %v1785
        %v4787 = vunpack.c.h.b16 %v1785
        %v4788 = vunpack.c.l.b16 %v1786
        %v4789 = vunpack.c.h.b16 %v1786
        %v4790 = vunpack.c.l.b16 %v1787
        %v4791 = vunpack.c.h.b16 %v1787
        %v4792 = vunpack.c.l.b16 %v1788
        %v4793 = vunpack.c.h.b16 %v1788
        %v4794 = vunpack.c.l.b16 %v1789
        %v4795 = vunpack.c.h.b16 %v1789
        %v4796 = vunpack.c.l.b16 %v1790
        %v4797 = vunpack.c.h.b16 %v1790
        %v4798 = vunpack.c.l.b16 %v1791
        %v4799 = vunpack.c.h.b16 %v1791
        %v4800 = vunpack.c.l.b16 %v1792
        %v4801 = vunpack.c.h.b16 %v1792
        %v4802 = vunpack.c.l.b16 %v1793
        %v4803 = vunpack.c.h.b16 %v1793
        %v4804 = vunpack.c.l.b16 %v1794
        %v4805 = vunpack.c.h.b16 %v1794
        %v4806 = vunpack.c.l.b16 %v1795
        %v4807 = vunpack.c.h.b16 %v1795
        %v4808 = vunpack.c.l.b16 %v1796
        %v4809 = vunpack.c.h.b16 %v1796
        %v4810 = vunpack.c.l.b16 %v1797
        %v4811 = vunpack.c.h.b16 %v1797
        %v4812 = vunpack.c.l.b16 %v1798
        %v4813 = vunpack.c.h.b16 %v1798
        %v4814 = vunpack.c.l.b16 %v1799
        %v4815 = vunpack.c.h.b16 %v1799
        %v4816 = vunpack.c.l.b16 %v1800
        %v4817 = vunpack.c.h.b16 %v1800
        %v4818 = vunpack.c.l.b16 %v1801
        %v4819 = vunpack.c.h.b16 %v1801
        %v4820 = vunpack.c.l.b16 %v1802
        %v4821 = vunpack.c.h.b16 %v1802
        %v4822 = vunpack.c.l.b16 %v1803
        %v4823 = vunpack.c.h.b16 %v1803
        %v4824 = vunpack.c.l.b16 %v1804
        %v4825 = vunpack.c.h.b16 %v1804
        %v4826 = vunpack.c.l.b16 %v1805
        %v4827 = vunpack.c.h.b16 %v1805
        %v4828 = vunpack.c.l.b16 %v1806
        %v4829 = vunpack.c.h.b16 %v1806
        %v4830 = vunpack.c.l.b16 %v1807
        %v4831 = vunpack.c.h.b16 %v1807
        %v4832 = vunpack.c.l.b16 %v1808
        %v4833 = vunpack.c.h.b16 %v1808
        %v4834 = vunpack.c.l.b16 %v1809
        %v4835 = vunpack.c.h.b16 %v1809
        %v4836 = vunpack.c.l.b16 %v1810
        %v4837 = vunpack.c.h.b16 %v1810
        %v4838 = vunpack.c.l.b16 %v1811
        %v4839 = vunpack.c.h.b16 %v1811
        %v4840 = vunpack.c.l.b16 %v1812
        %v4841 = vunpack.c.h.b16 %v1812
        %v4842 = vunpack.c.l.b16 %v1813
        %v4843 = vunpack.c.h.b16 %v1813
        %v4844 = vunpack.c.l.b16 %v1814
        %v4845 = vunpack.c.h.b16 %v1814
        %v4846 = vunpack.c.l.b16 %v1815
        %v4847 = vunpack.c.h.b16 %v1815
        %v4848 = vunpack.c.l.b16 %v1816
        %v4849 = vunpack.c.h.b16 %v1816
        %v4850 = vunpack.c.l.b16 %v1817
        %v4851 = vunpack.c.h.b16 %v1817
        %v4852 = vunpack.c.l.b16 %v1818
        %v4853 = vunpack.c.h.b16 %v1818
        %v4854 = vunpack.c.l.b16 %v1819
        %v4855 = vunpack.c.h.b16 %v1819
        %v4856 = vunpack.c.l.b16 %v1820
        %v4857 = vunpack.c.h.b16 %v1820
        %v4858 = vunpack.c.l.b16 %v1821
        %v4859 = vunpack.c.h.b16 %v1821
        %v4860 = vunpack.c.l.b16 %v1822
        %v4861 = vunpack.c.h.b16 %v1822
        %v4862 = vunpack.c.l.b16 %v1823
        %v4863 = vunpack.c.h.b16 %v1823
        %v4864 = vunpack.c.l.b16 %v1824
        %v4865 = vunpack.c.h.b16 %v1824
        %v4866 = vunpack.c.l.b16 %v1825
        %v4867 = vunpack.c.h.b16 %v1825
        %v4868 = vunpack.c.l.b16 %v1826
        %v4869 = vunpack.c.h.b16 %v1826
        %v4870 = vunpack.c.l.b16 %v1827
        %v4871 = vunpack.c.h.b16 %v1827
        %v4872 = vunpack.c.l.b16 %v1828
        %v4873 = vunpack.c.h.b16 %v1828
        %v4874 = vunpack.c.l.b16 %v1829
        %v4875 = vunpack.c.h.b16 %v1829
        %v4876 = vunpack.c.l.b16 %v1830
        %v4877 = vunpack.c.h.b16 %v1830
        %v4878 = vunpack.c.l.b16 %v1831
        %v4879 = vunpack.c.h.b16 %v1831
        %v4880 = vunpack.c.l.b16 %v1832
        %v4881 = vunpack.c.h.b16 %v1832
        %v4882 = vunpack.c.l.b16 %v1833
        %v4883 = vunpack.c.h.b16 %v1833
        %v4884 = vunpack.c.l.b16 %v1834
        %v4885 = vunpack.c.h.b16 %v1834
        %v4886 = vunpack.c.l.b16 %v1835
        %v4887 = vunpack.c.h.b16 %v1835
        %v4888 = vunpack.c.l.b16 %v1836
        %v4889 = vunpack.c.h.b16 %v1836
        %v4890 = vunpack.c.l.b16 %v1837
        %v4891 = vunpack.c.h.b16 %v1837
        %v4892 = vunpack.c.l.b16 %v1838
        %v4893 = vunpack.c.h.b16 %v1838
        %v4894 = vunpack.c.l.b16 %v1839
        %v4895 = vunpack.c.h.b16 %v1839
        %v4896 = vunpack.c.l.b16 %v1840
        %v4897 = vunpack.c.h.b16 %v1840
        %v4898 = vunpack.c.l.b16 %v1841
        %v4899 = vunpack.c.h.b16 %v1841
        %v4900 = vunpack.c.l.b16 %v1842
        %v4901 = vunpack.c.h.b16 %v1842
        %v4902 = vunpack.c.l.b16 %v1843
        %v4903 = vunpack.c.h.b16 %v1843
        %v4904 = vunpack.c.l.b16 %v1844
        %v4905 = vunpack.c.h.b16 %v1844
        %v4906 = vunpack.c.l.b16 %v1845
        %v4907 = vunpack.c.h.b16 %v1845
        %v4908 = vunpack.c.l.b16 %v1846
        %v4909 = vunpack.c.h.b16 %v1846
        %v4910 = vunpack.c.l.b16 %v1847
        %v4911 = vunpack.c.h.b16 %v1847
        %v4912 = vunpack.c.l.b16 %v1848
        %v4913 = vunpack.c.h.b16 %v1848
        %v4914 = vunpack.c.l.b16 %v1849
        %v4915 = vunpack.c.h.b16 %v1849
        %v4916 = vunpack.c.l.b16 %v1850
        %v4917 = vunpack.c.h.b16 %v1850
        %v4918 = vunpack.c.l.b16 %v1851
        %v4919 = vunpack.c.h.b16 %v1851
        %v4920 = vunpack.c.l.b16 %v1852
        %v4921 = vunpack.c.h.b16 %v1852
        %v4922 = vunpack.c.l.b16 %v1853
        %v4923 = vunpack.c.h.b16 %v1853
        %v4924 = vunpack.c.l.b16 %v1854
        %v4925 = vunpack.c.h.b16 %v1854
        %v4926 = vunpack.c.l.b16 %v1855
        %v4927 = vunpack.c.h.b16 %v1855
        %v4928 = vpack.c.b16 %v2888, %v2880
        %v4929 = vpack.c.b16 %v2889, %v2881
        %v4930 = vpack.c.b16 %v2890, %v2882
        %v4931 = vpack.c.b16 %v2891, %v2883
        %v4932 = vpack.c.b16 %v2892, %v2884
        %v4933 = vpack.c.b16 %v2893, %v2885
        %v4934 = vpack.c.b16 %v2894, %v2886
        %v4935 = vpack.c.b16 %v2895, %v2887
        %v4936 = vpack.c.b16 %v2904, %v2896
        %v4937 = vpack.c.b16 %v2905, %v2897
        %v4938 = vpack.c.b16 %v2906, %v2898
        %v4939 = vpack.c.b16 %v2907, %v2899
        %v4940 = vpack.c.b16 %v2908, %v2900
        %v4941 = vpack.c.b16 %v2909, %v2901
        %v4942 = vpack.c.b16 %v2910, %v2902
        %v4943 = vpack.c.b16 %v2911, %v2903
        %v4944 = vpack.c.b16 %v2920, %v2912
        %v4945 = vpack.c.b16 %v2921, %v2913
        %v4946 = vpack.c.b16 %v2922, %v2914
        %v4947 = vpack.c.b16 %v2923, %v2915
        %v4948 = vpack.c.b16 %v2924, %v2916
        %v4949 = vpack.c.b16 %v2925, %v2917
        %v4950 = vpack.c.b16 %v2926, %v2918
        %v4951 = vpack.c.b16 %v2927, %v2919
        %v4952 = vpack.c.b16 %v2936, %v2928
        %v4953 = vpack.c.b16 %v2937, %v2929
        %v4954 = vpack.c.b16 %v2938, %v2930
        %v4955 = vpack.c.b16 %v2939, %v2931
        %v4956 = vpack.c.b16 %v2940, %v2932
        %v4957 = vpack.c.b16 %v2941, %v2933
        %v4958 = vpack.c.b16 %v2942, %v2934
        %v4959 = vpack.c.b16 %v2943, %v2935
        %v4960 = vpack.c.b16 %v2952, %v2944
        %v4961 = vpack.c.b16 %v2953, %v2945
        %v4962 = vpack.c.b16 %v2954, %v2946
        %v4963 = vpack.c.b16 %v2955, %v2947
        %v4964 = vpack.c.b16 %v2956, %v2948
        %v4965 = vpack.c.b16 %v2957, %v2949
        %v4966 = vpack.c.b16 %v2958, %v2950
        %v4967 = vpack.c.b16 %v2959, %v2951
        %v4968 = vpack.c.b16 %v2968, %v2960
        %v4969 = vpack.c.b16 %v2969, %v2961
        %v4970 = vpack.c.b16 %v2970, %v2962
        %v4971 = vpack.c.b16 %v2971, %v2963
        %v4972 = vpack.c.b16 %v2972, %v2964
        %v4973 = vpack.c.b16 %v2973, %v2965
        %v4974 = vpack.c.b16 %v2974, %v2966
        %v4975 = vpack.c.b16 %v2975, %v2967
        %v4976 = vpack.c.b16 %v2984, %v2976
        %v4977 = vpack.c.b16 %v2985, %v2977
        %v4978 = vpack.c.b16 %v2986, %v2978
        %v4979 = vpack.c.b16 %v2987, %v2979
        %v4980 = vpack.c.b16 %v2988, %v2980
        %v4981 = vpack.c.b16 %v2989, %v2981
        %v4982 = vpack.c.b16 %v2990, %v2982
        %v4983 = vpack.c.b16 %v2991, %v2983
        %v4984 = vpack.c.b16 %v3000, %v2992
        %v4985 = vpack.c.b16 %v3001, %v2993
        %v4986 = vpack.c.b16 %v3002, %v2994
        %v4987 = vpack.c.b16 %v3003, %v2995
        %v4988 = vpack.c.b16 %v3004, %v2996
        %v4989 = vpack.c.b16 %v3005, %v2997
        %v4990 = vpack.c.b16 %v3006, %v2998
        %v4991 = vpack.c.b16 %v3007, %v2999
        %v4992 = vpack.c.b16 %v3016, %v3008
        %v4993 = vpack.c.b16 %v3017, %v3009
        %v4994 = vpack.c.b16 %v3018, %v3010
        %v4995 = vpack.c.b16 %v3019, %v3011
        %v4996 = vpack.c.b16 %v3020, %v3012
        %v4997 = vpack.c.b16 %v3021, %v3013
        %v4998 = vpack.c.b16 %v3022, %v3014
        %v4999 = vpack.c.b16 %v3023, %v3015
        %v5000 = vpack.c.b16 %v3032, %v3024
        %v5001 = vpack.c.b16 %v3033, %v3025
        %v5002 = vpack.c.b16 %v3034, %v3026
        %v5003 = vpack.c.b16 %v3035, %v3027
        %v5004 = vpack.c.b16 %v3036, %v3028
        %v5005 = vpack.c.b16 %v3037, %v3029
        %v5006 = vpack.c.b16 %v3038, %v3030
        %v5007 = vpack.c.b16 %v3039, %v3031
        %v5008 = vpack.c.b16 %v3048, %v3040
        %v5009 = vpack.c.b16 %v3049, %v3041
        %v5010 = vpack.c.b16 %v3050, %v3042
        %v5011 = vpack.c.b16 %v3051, %v3043
        %v5012 = vpack.c.b16 %v3052, %v3044
        %v5013 = vpack.c.b16 %v3053, %v3045
        %v5014 = vpack.c.b16 %v3054, %v3046
        %v5015 = vpack.c.b16 %v3055, %v3047
        %v5016 = vpack.c.b16 %v3064, %v3056
        %v5017 = vpack.c.b16 %v3065, %v3057
        %v5018 = vpack.c.b16 %v3066, %v3058
        %v5019 = vpack.c.b16 %v3067, %v3059
        %v5020 = vpack.c.b16 %v3068, %v3060
        %v5021 = vpack.c.b16 %v3069, %v3061
        %v5022 = vpack.c.b16 %v3070, %v3062
        %v5023 = vpack.c.b16 %v3071, %v3063
        %v5024 = vpack.c.b16 %v3080, %v3072
        %v5025 = vpack.c.b16 %v3081, %v3073
        %v5026 = vpack.c.b16 %v3082, %v3074
        %v5027 = vpack.c.b16 %v3083, %v3075
        %v5028 = vpack.c.b16 %v3084, %v3076
        %v5029 = vpack.c.b16 %v3085, %v3077
        %v5030 = vpack.c.b16 %v3086, %v3078
        %v5031 = vpack.c.b16 %v3087, %v3079
        %v5032 = vpack.c.b16 %v3096, %v3088
        %v5033 = vpack.c.b16 %v3097, %v3089
        %v5034 = vpack.c.b16 %v3098, %v3090
        %v5035 = vpack.c.b16 %v3099, %v3091
        %v5036 = vpack.c.b16 %v3100, %v3092
        %v5037 = vpack.c.b16 %v3101, %v3093
        %v5038 = vpack.c.b16 %v3102, %v3094
        %v5039 = vpack.c.b16 %v3103, %v3095
        %v5040 = vpack.c.b16 %v3112, %v3104
        %v5041 = vpack.c.b16 %v3113, %v3105
        %v5042 = vpack.c.b16 %v3114, %v3106
        %v5043 = vpack.c.b16 %v3115, %v3107
        %v5044 = vpack.c.b16 %v3116, %v3108
        %v5045 = vpack.c.b16 %v3117, %v3109
        %v5046 = vpack.c.b16 %v3118, %v3110
        %v5047 = vpack.c.b16 %v3119, %v3111
        %v5048 = vpack.c.b16 %v3128, %v3120
        %v5049 = vpack.c.b16 %v3129, %v3121
        %v5050 = vpack.c.b16 %v3130, %v3122
        %v5051 = vpack.c.b16 %v3131, %v3123
        %v5052 = vpack.c.b16 %v3132, %v3124
        %v5053 = vpack.c.b16 %v3133, %v3125
        %v5054 = vpack.c.b16 %v3134, %v3126
        %v5055 = vpack.c.b16 %v3135, %v3127
        %v5056 = vpack.c.b16 %v3144, %v3136
        %v5057 = vpack.c.b16 %v3145, %v3137
        %v5058 = vpack.c.b16 %v3146, %v3138
        %v5059 = vpack.c.b16 %v3147, %v3139
        %v5060 = vpack.c.b16 %v3148, %v3140
        %v5061 = vpack.c.b16 %v3149, %v3141
        %v5062 = vpack.c.b16 %v3150, %v3142
        %v5063 = vpack.c.b16 %v3151, %v3143
        %v5064 = vpack.c.b16 %v3160, %v3152
        %v5065 = vpack.c.b16 %v3161, %v3153
        %v5066 = vpack.c.b16 %v3162, %v3154
        %v5067 = vpack.c.b16 %v3163, %v3155
        %v5068 = vpack.c.b16 %v3164, %v3156
        %v5069 = vpack.c.b16 %v3165, %v3157
        %v5070 = vpack.c.b16 %v3166, %v3158
        %v5071 = vpack.c.b16 %v3167, %v3159
        %v5072 = vpack.c.b16 %v3176, %v3168
        %v5073 = vpack.c.b16 %v3177, %v3169
        %v5074 = vpack.c.b16 %v3178, %v3170
        %v5075 = vpack.c.b16 %v3179, %v3171
        %v5076 = vpack.c.b16 %v3180, %v3172
        %v5077 = vpack.c.b16 %v3181, %v3173
        %v5078 = vpack.c.b16 %v3182, %v3174
        %v5079 = vpack.c.b16 %v3183, %v3175
        %v5080 = vpack.c.b16 %v3192, %v3184
        %v5081 = vpack.c.b16 %v3193, %v3185
        %v5082 = vpack.c.b16 %v3194, %v3186
        %v5083 = vpack.c.b16 %v3195, %v3187
        %v5084 = vpack.c.b16 %v3196, %v3188
        %v5085 = vpack.c.b16 %v3197, %v3189
        %v5086 = vpack.c.b16 %v3198, %v3190
        %v5087 = vpack.c.b16 %v3199, %v3191
        %v5088 = vpack.c.b16 %v3208, %v3200
        %v5089 = vpack.c.b16 %v3209, %v3201
        %v5090 = vpack.c.b16 %v3210, %v3202
        %v5091 = vpack.c.b16 %v3211, %v3203
        %v5092 = vpack.c.b16 %v3212, %v3204
        %v5093 = vpack.c.b16 %v3213, %v3205
        %v5094 = vpack.c.b16 %v3214, %v3206
        %v5095 = vpack.c.b16 %v3215, %v3207
        %v5096 = vpack.c.b16 %v3224, %v3216
        %v5097 = vpack.c.b16 %v3225, %v3217
        %v5098 = vpack.c.b16 %v3226, %v3218
        %v5099 = vpack.c.b16 %v3227, %v3219
        %v5100 = vpack.c.b16 %v3228, %v3220
        %v5101 = vpack.c.b16 %v3229, %v3221
        %v5102 = vpack.c.b16 %v3230, %v3222
        %v5103 = vpack.c.b16 %v3231, %v3223
        %v5104 = vpack.c.b16 %v3240, %v3232
        %v5105 = vpack.c.b16 %v3241, %v3233
        %v5106 = vpack.c.b16 %v3242, %v3234
        %v5107 = vpack.c.b16 %v3243, %v3235
        %v5108 = vpack.c.b16 %v3244, %v3236
        %v5109 = vpack.c.b16 %v3245, %v3237
        %v5110 = vpack.c.b16 %v3246, %v3238
        %v5111 = vpack.c.b16 %v3247, %v3239
        %v5112 = vpack.c.b16 %v3256, %v3248
        %v5113 = vpack.c.b16 %v3257, %v3249
        %v5114 = vpack.c.b16 %v3258, %v3250
        %v5115 = vpack.c.b16 %v3259, %v3251
        %v5116 = vpack.c.b16 %v3260, %v3252
        %v5117 = vpack.c.b16 %v3261, %v3253
        %v5118 = vpack.c.b16 %v3262, %v3254
        %v5119 = vpack.c.b16 %v3263, %v3255
        %v5120 = vpack.c.b16 %v3272, %v3264
        %v5121 = vpack.c.b16 %v3273, %v3265
        %v5122 = vpack.c.b16 %v3274, %v3266
        %v5123 = vpack.c.b16 %v3275, %v3267
        %v5124 = vpack.c.b16 %v3276, %v3268
        %v5125 = vpack.c.b16 %v3277, %v3269
        %v5126 = vpack.c.b16 %v3278, %v3270
        %v5127 = vpack.c.b16 %v3279, %v3271
        %v5128 = vpack.c.b16 %v3288, %v3280
        %v5129 = vpack.c.b16 %v3289, %v3281
        %v5130 = vpack.c.b16 %v3290, %v3282
        %v5131 = vpack.c.b16 %v3291, %v3283
        %v5132 = vpack.c.b16 %v3292, %v3284
        %v5133 = vpack.c.b16 %v3293, %v3285
        %v5134 = vpack.c.b16 %v3294, %v3286
        %v5135 = vpack.c.b16 %v3295, %v3287
        %v5136 = vpack.c.b16 %v3304, %v3296
        %v5137 = vpack.c.b16 %v3305, %v3297
        %v5138 = vpack.c.b16 %v3306, %v3298
        %v5139 = vpack.c.b16 %v3307, %v3299
        %v5140 = vpack.c.b16 %v3308, %v3300
        %v5141 = vpack.c.b16 %v3309, %v3301
        %v5142 = vpack.c.b16 %v3310, %v3302
        %v5143 = vpack.c.b16 %v3311, %v3303
        %v5144 = vpack.c.b16 %v3320, %v3312
        %v5145 = vpack.c.b16 %v3321, %v3313
        %v5146 = vpack.c.b16 %v3322, %v3314
        %v5147 = vpack.c.b16 %v3323, %v3315
        %v5148 = vpack.c.b16 %v3324, %v3316
        %v5149 = vpack.c.b16 %v3325, %v3317
        %v5150 = vpack.c.b16 %v3326, %v3318
        %v5151 = vpack.c.b16 %v3327, %v3319
        %v5152 = vpack.c.b16 %v3336, %v3328
        %v5153 = vpack.c.b16 %v3337, %v3329
        %v5154 = vpack.c.b16 %v3338, %v3330
        %v5155 = vpack.c.b16 %v3339, %v3331
        %v5156 = vpack.c.b16 %v3340, %v3332
        %v5157 = vpack.c.b16 %v3341, %v3333
        %v5158 = vpack.c.b16 %v3342, %v3334
        %v5159 = vpack.c.b16 %v3343, %v3335
        %v5160 = vpack.c.b16 %v3352, %v3344
        %v5161 = vpack.c.b16 %v3353, %v3345
        %v5162 = vpack.c.b16 %v3354, %v3346
        %v5163 = vpack.c.b16 %v3355, %v3347
        %v5164 = vpack.c.b16 %v3356, %v3348
        %v5165 = vpack.c.b16 %v3357, %v3349
        %v5166 = vpack.c.b16 %v3358, %v3350
        %v5167 = vpack.c.b16 %v3359, %v3351
        %v5168 = vpack.c.b16 %v3368, %v3360
        %v5169 = vpack.c.b16 %v3369, %v3361
        %v5170 = vpack.c.b16 %v3370, %v3362
        %v5171 = vpack.c.b16 %v3371, %v3363
        %v5172 = vpack.c.b16 %v3372, %v3364
        %v5173 = vpack.c.b16 %v3373, %v3365
        %v5174 = vpack.c.b16 %v3374, %v3366
        %v5175 = vpack.c.b16 %v3375, %v3367
        %v5176 = vpack.c.b16 %v3384, %v3376
        %v5177 = vpack.c.b16 %v3385, %v3377
        %v5178 = vpack.c.b16 %v3386, %v3378
        %v5179 = vpack.c.b16 %v3387, %v3379
        %v5180 = vpack.c.b16 %v3388, %v3380
        %v5181 = vpack.c.b16 %v3389, %v3381
        %v5182 = vpack.c.b16 %v3390, %v3382
        %v5183 = vpack.c.b16 %v3391, %v3383
        %v5184 = vpack.c.b16 %v3400, %v3392
        %v5185 = vpack.c.b16 %v3401, %v3393
        %v5186 = vpack.c.b16 %v3402, %v3394
        %v5187 = vpack.c.b16 %v3403, %v3395
        %v5188 = vpack.c.b16 %v3404, %v3396
        %v5189 = vpack.c.b16 %v3405, %v3397
        %v5190 = vpack.c.b16 %v3406, %v3398
        %v5191 = vpack.c.b16 %v3407, %v3399
        %v5192 = vpack.c.b16 %v3416, %v3408
        %v5193 = vpack.c.b16 %v3417, %v3409
        %v5194 = vpack.c.b16 %v3418, %v3410
        %v5195 = vpack.c.b16 %v3419, %v3411
        %v5196 = vpack.c.b16 %v3420, %v3412
        %v5197 = vpack.c.b16 %v3421, %v3413
        %v5198 = vpack.c.b16 %v3422, %v3414
        %v5199 = vpack.c.b16 %v3423, %v3415
        %v5200 = vpack.c.b16 %v3432, %v3424
        %v5201 = vpack.c.b16 %v3433, %v3425
        %v5202 = vpack.c.b16 %v3434, %v3426
        %v5203 = vpack.c.b16 %v3435, %v3427
        %v5204 = vpack.c.b16 %v3436, %v3428
        %v5205 = vpack.c.b16 %v3437, %v3429
        %v5206 = vpack.c.b16 %v3438, %v3430
        %v5207 = vpack.c.b16 %v3439, %v3431
        %v5208 = vpack.c.b16 %v3448, %v3440
        %v5209 = vpack.c.b16 %v3449, %v3441
        %v5210 = vpack.c.b16 %v3450, %v3442
        %v5211 = vpack.c.b16 %v3451, %v3443
        %v5212 = vpack.c.b16 %v3452, %v3444
        %v5213 = vpack.c.b16 %v3453, %v3445
        %v5214 = vpack.c.b16 %v3454, %v3446
        %v5215 = vpack.c.b16 %v3455, %v3447
        %v5216 = vpack.c.b16 %v3464, %v3456
        %v5217 = vpack.c.b16 %v3465, %v3457
        %v5218 = vpack.c.b16 %v3466, %v3458
        %v5219 = vpack.c.b16 %v3467, %v3459
        %v5220 = vpack.c.b16 %v3468, %v3460
        %v5221 = vpack.c.b16 %v3469, %v3461
        %v5222 = vpack.c.b16 %v3470, %v3462
        %v5223 = vpack.c.b16 %v3471, %v3463
        %v5224 = vpack.c.b16 %v3480, %v3472
        %v5225 = vpack.c.b16 %v3481, %v3473
        %v5226 = vpack.c.b16 %v3482, %v3474
        %v5227 = vpack.c.b16 %v3483, %v3475
        %v5228 = vpack.c.b16 %v3484, %v3476
        %v5229 = vpack.c.b16 %v3485, %v3477
        %v5230 = vpack.c.b16 %v3486, %v3478
        %v5231 = vpack.c.b16 %v3487, %v3479
        %v5232 = vpack.c.b16 %v3496, %v3488
        %v5233 = vpack.c.b16 %v3497, %v3489
        %v5234 = vpack.c.b16 %v3498, %v3490
        %v5235 = vpack.c.b16 %v3499, %v3491
        %v5236 = vpack.c.b16 %v3500, %v3492
        %v5237 = vpack.c.b16 %v3501, %v3493
        %v5238 = vpack.c.b16 %v3502, %v3494
        %v5239 = vpack.c.b16 %v3503, %v3495
        %v5240 = vpack.c.b16 %v3512, %v3504
        %v5241 = vpack.c.b16 %v3513, %v3505
        %v5242 = vpack.c.b16 %v3514, %v3506
        %v5243 = vpack.c.b16 %v3515, %v3507
        %v5244 = vpack.c.b16 %v3516, %v3508
        %v5245 = vpack.c.b16 %v3517, %v3509
        %v5246 = vpack.c.b16 %v3518, %v3510
        %v5247 = vpack.c.b16 %v3519, %v3511
        %v5248 = vpack.c.b16 %v3528, %v3520
        %v5249 = vpack.c.b16 %v3529, %v3521
        %v5250 = vpack.c.b16 %v3530, %v3522
        %v5251 = vpack.c.b16 %v3531, %v3523
        %v5252 = vpack.c.b16 %v3532, %v3524
        %v5253 = vpack.c.b16 %v3533, %v3525
        %v5254 = vpack.c.b16 %v3534, %v3526
        %v5255 = vpack.c.b16 %v3535, %v3527
        %v5256 = vpack.c.b16 %v3544, %v3536
        %v5257 = vpack.c.b16 %v3545, %v3537
        %v5258 = vpack.c.b16 %v3546, %v3538
        %v5259 = vpack.c.b16 %v3547, %v3539
        %v5260 = vpack.c.b16 %v3548, %v3540
        %v5261 = vpack.c.b16 %v3549, %v3541
        %v5262 = vpack.c.b16 %v3550, %v3542
        %v5263 = vpack.c.b16 %v3551, %v3543
        %v5264 = vpack.c.b16 %v3560, %v3552
        %v5265 = vpack.c.b16 %v3561, %v3553
        %v5266 = vpack.c.b16 %v3562, %v3554
        %v5267 = vpack.c.b16 %v3563, %v3555
        %v5268 = vpack.c.b16 %v3564, %v3556
        %v5269 = vpack.c.b16 %v3565, %v3557
        %v5270 = vpack.c.b16 %v3566, %v3558
        %v5271 = vpack.c.b16 %v3567, %v3559
        %v5272 = vpack.c.b16 %v3576, %v3568
        %v5273 = vpack.c.b16 %v3577, %v3569
        %v5274 = vpack.c.b16 %v3578, %v3570
        %v5275 = vpack.c.b16 %v3579, %v3571
        %v5276 = vpack.c.b16 %v3580, %v3572
        %v5277 = vpack.c.b16 %v3581, %v3573
        %v5278 = vpack.c.b16 %v3582, %v3574
        %v5279 = vpack.c.b16 %v3583, %v3575
        %v5280 = vpack.c.b16 %v3592, %v3584
        %v5281 = vpack.c.b16 %v3593, %v3585
        %v5282 = vpack.c.b16 %v3594, %v3586
        %v5283 = vpack.c.b16 %v3595, %v3587
        %v5284 = vpack.c.b16 %v3596, %v3588
        %v5285 = vpack.c.b16 %v3597, %v3589
        %v5286 = vpack.c.b16 %v3598, %v3590
        %v5287 = vpack.c.b16 %v3599, %v3591
        %v5288 = vpack.c.b16 %v3608, %v3600
        %v5289 = vpack.c.b16 %v3609, %v3601
        %v5290 = vpack.c.b16 %v3610, %v3602
        %v5291 = vpack.c.b16 %v3611, %v3603
        %v5292 = vpack.c.b16 %v3612, %v3604
        %v5293 = vpack.c.b16 %v3613, %v3605
        %v5294 = vpack.c.b16 %v3614, %v3606
        %v5295 = vpack.c.b16 %v3615, %v3607
        %v5296 = vpack.c.b16 %v3624, %v3616
        %v5297 = vpack.c.b16 %v3625, %v3617
        %v5298 = vpack.c.b16 %v3626, %v3618
        %v5299 = vpack.c.b16 %v3627, %v3619
        %v5300 = vpack.c.b16 %v3628, %v3620
        %v5301 = vpack.c.b16 %v3629, %v3621
        %v5302 = vpack.c.b16 %v3630, %v3622
        %v5303 = vpack.c.b16 %v3631, %v3623
        %v5304 = vpack.c.b16 %v3640, %v3632
        %v5305 = vpack.c.b16 %v3641, %v3633
        %v5306 = vpack.c.b16 %v3642, %v3634
        %v5307 = vpack.c.b16 %v3643, %v3635
        %v5308 = vpack.c.b16 %v3644, %v3636
        %v5309 = vpack.c.b16 %v3645, %v3637
        %v5310 = vpack.c.b16 %v3646, %v3638
        %v5311 = vpack.c.b16 %v3647, %v3639
        %v5312 = vpack.c.b16 %v3656, %v3648
        %v5313 = vpack.c.b16 %v3657, %v3649
        %v5314 = vpack.c.b16 %v3658, %v3650
        %v5315 = vpack.c.b16 %v3659, %v3651
        %v5316 = vpack.c.b16 %v3660, %v3652
        %v5317 = vpack.c.b16 %v3661, %v3653
        %v5318 = vpack.c.b16 %v3662, %v3654
        %v5319 = vpack.c.b16 %v3663, %v3655
        %v5320 = vpack.c.b16 %v3672, %v3664
        %v5321 = vpack.c.b16 %v3673, %v3665
        %v5322 = vpack.c.b16 %v3674, %v3666
        %v5323 = vpack.c.b16 %v3675, %v3667
        %v5324 = vpack.c.b16 %v3676, %v3668
        %v5325 = vpack.c.b16 %v3677, %v3669
        %v5326 = vpack.c.b16 %v3678, %v3670
        %v5327 = vpack.c.b16 %v3679, %v3671
        %v5328 = vpack.c.b16 %v3688, %v3680
        %v5329 = vpack.c.b16 %v3689, %v3681
        %v5330 = vpack.c.b16 %v3690, %v3682
        %v5331 = vpack.c.b16 %v3691, %v3683
        %v5332 = vpack.c.b16 %v3692, %v3684
        %v5333 = vpack.c.b16 %v3693, %v3685
        %v5334 = vpack.c.b16 %v3694, %v3686
        %v5335 = vpack.c.b16 %v3695, %v3687
        %v5336 = vpack.c.b16 %v3704, %v3696
        %v5337 = vpack.c.b16 %v3705, %v3697
        %v5338 = vpack.c.b16 %v3706, %v3698
        %v5339 = vpack.c.b16 %v3707, %v3699
        %v5340 = vpack.c.b16 %v3708, %v3700
        %v5341 = vpack.c.b16 %v3709, %v3701
        %v5342 = vpack.c.b16 %v3710, %v3702
        %v5343 = vpack.c.b16 %v3711, %v3703
        %v5344 = vpack.c.b16 %v3720, %v3712
        %v5345 = vpack.c.b16 %v3721, %v3713
        %v5346 = vpack.c.b16 %v3722, %v3714
        %v5347 = vpack.c.b16 %v3723, %v3715
        %v5348 = vpack.c.b16 %v3724, %v3716
        %v5349 = vpack.c.b16 %v3725, %v3717
        %v5350 = vpack.c.b16 %v3726, %v3718
        %v5351 = vpack.c.b16 %v3727, %v3719
        %v5352 = vpack.c.b16 %v3736, %v3728
        %v5353 = vpack.c.b16 %v3737, %v3729
        %v5354 = vpack.c.b16 %v3738, %v3730
        %v5355 = vpack.c.b16 %v3739, %v3731
        %v5356 = vpack.c.b16 %v3740, %v3732
        %v5357 = vpack.c.b16 %v3741, %v3733
        %v5358 = vpack.c.b16 %v3742, %v3734
        %v5359 = vpack.c.b16 %v3743, %v3735
        %v5360 = vpack.c.b16 %v3752, %v3744
        %v5361 = vpack.c.b16 %v3753, %v3745
        %v5362 = vpack.c.b16 %v3754, %v3746
        %v5363 = vpack.c.b16 %v3755, %v3747
        %v5364 = vpack.c.b16 %v3756, %v3748
        %v5365 = vpack.c.b16 %v3757, %v3749
        %v5366 = vpack.c.b16 %v3758, %v3750
        %v5367 = vpack.c.b16 %v3759, %v3751
        %v5368 = vpack.c.b16 %v3768, %v3760
        %v5369 = vpack.c.b16 %v3769, %v3761
        %v5370 = vpack.c.b16 %v3770, %v3762
        %v5371 = vpack.c.b16 %v3771, %v3763
        %v5372 = vpack.c.b16 %v3772, %v3764
        %v5373 = vpack.c.b16 %v3773, %v3765
        %v5374 = vpack.c.b16 %v3774, %v3766
        %v5375 = vpack.c.b16 %v3775, %v3767
        %v5376 = vpack.c.b16 %v3784, %v3776
        %v5377 = vpack.c.b16 %v3785, %v3777
        %v5378 = vpack.c.b16 %v3786, %v3778
        %v5379 = vpack.c.b16 %v3787, %v3779
        %v5380 = vpack.c.b16 %v3788, %v3780
        %v5381 = vpack.c.b16 %v3789, %v3781
        %v5382 = vpack.c.b16 %v3790, %v3782
        %v5383 = vpack.c.b16 %v3791, %v3783
        %v5384 = vpack.c.b16 %v3800, %v3792
        %v5385 = vpack.c.b16 %v3801, %v3793
        %v5386 = vpack.c.b16 %v3802, %v3794
        %v5387 = vpack.c.b16 %v3803, %v3795
        %v5388 = vpack.c.b16 %v3804, %v3796
        %v5389 = vpack.c.b16 %v3805, %v3797
        %v5390 = vpack.c.b16 %v3806, %v3798
        %v5391 = vpack.c.b16 %v3807, %v3799
        %v5392 = vpack.c.b16 %v3816, %v3808
        %v5393 = vpack.c.b16 %v3817, %v3809
        %v5394 = vpack.c.b16 %v3818, %v3810
        %v5395 = vpack.c.b16 %v3819, %v3811
        %v5396 = vpack.c.b16 %v3820, %v3812
        %v5397 = vpack.c.b16 %v3821, %v3813
        %v5398 = vpack.c.b16 %v3822, %v3814
        %v5399 = vpack.c.b16 %v3823, %v3815
        %v5400 = vpack.c.b16 %v3832, %v3824
        %v5401 = vpack.c.b16 %v3833, %v3825
        %v5402 = vpack.c.b16 %v3834, %v3826
        %v5403 = vpack.c.b16 %v3835, %v3827
        %v5404 = vpack.c.b16 %v3836, %v3828
        %v5405 = vpack.c.b16 %v3837, %v3829
        %v5406 = vpack.c.b16 %v3838, %v3830
        %v5407 = vpack.c.b16 %v3839, %v3831
        %v5408 = vpack.c.b16 %v3848, %v3840
        %v5409 = vpack.c.b16 %v3849, %v3841
        %v5410 = vpack.c.b16 %v3850, %v3842
        %v5411 = vpack.c.b16 %v3851, %v3843
        %v5412 = vpack.c.b16 %v3852, %v3844
        %v5413 = vpack.c.b16 %v3853, %v3845
        %v5414 = vpack.c.b16 %v3854, %v3846
        %v5415 = vpack.c.b16 %v3855, %v3847
        %v5416 = vpack.c.b16 %v3864, %v3856
        %v5417 = vpack.c.b16 %v3865, %v3857
        %v5418 = vpack.c.b16 %v3866, %v3858
        %v5419 = vpack.c.b16 %v3867, %v3859
        %v5420 = vpack.c.b16 %v3868, %v3860
        %v5421 = vpack.c.b16 %v3869, %v3861
        %v5422 = vpack.c.b16 %v3870, %v3862
        %v5423 = vpack.c.b16 %v3871, %v3863
        %v5424 = vpack.c.b16 %v3880, %v3872
        %v5425 = vpack.c.b16 %v3881, %v3873
        %v5426 = vpack.c.b16 %v3882, %v3874
        %v5427 = vpack.c.b16 %v3883, %v3875
        %v5428 = vpack.c.b16 %v3884, %v3876
        %v5429 = vpack.c.b16 %v3885, %v3877
        %v5430 = vpack.c.b16 %v3886, %v3878
        %v5431 = vpack.c.b16 %v3887, %v3879
        %v5432 = vpack.c.b16 %v3896, %v3888
        %v5433 = vpack.c.b16 %v3897, %v3889
        %v5434 = vpack.c.b16 %v3898, %v3890
        %v5435 = vpack.c.b16 %v3899, %v3891
        %v5436 = vpack.c.b16 %v3900, %v3892
        %v5437 = vpack.c.b16 %v3901, %v3893
        %v5438 = vpack.c.b16 %v3902, %v3894
        %v5439 = vpack.c.b16 %v3903, %v3895
        %v5440 = vpack.c.b16 %v3912, %v3904
        %v5441 = vpack.c.b16 %v3913, %v3905
        %v5442 = vpack.c.b16 %v3914, %v3906
        %v5443 = vpack.c.b16 %v3915, %v3907
        %v5444 = vpack.c.b16 %v3916, %v3908
        %v5445 = vpack.c.b16 %v3917, %v3909
        %v5446 = vpack.c.b16 %v3918, %v3910
        %v5447 = vpack.c.b16 %v3919, %v3911
        %v5448 = vpack.c.b16 %v3928, %v3920
        %v5449 = vpack.c.b16 %v3929, %v3921
        %v5450 = vpack.c.b16 %v3930, %v3922
        %v5451 = vpack.c.b16 %v3931, %v3923
        %v5452 = vpack.c.b16 %v3932, %v3924
        %v5453 = vpack.c.b16 %v3933, %v3925
        %v5454 = vpack.c.b16 %v3934, %v3926
        %v5455 = vpack.c.b16 %v3935, %v3927
        %v5456 = vpack.c.b16 %v3944, %v3936
        %v5457 = vpack.c.b16 %v3945, %v3937
        %v5458 = vpack.c.b16 %v3946, %v3938
        %v5459 = vpack.c.b16 %v3947, %v3939
        %v5460 = vpack.c.b16 %v3948, %v3940
        %v5461 = vpack.c.b16 %v3949, %v3941
        %v5462 = vpack.c.b16 %v3950, %v3942
        %v5463 = vpack.c.b16 %v3951, %v3943
        %v5464 = vpack.c.b16 %v3960, %v3952
        %v5465 = vpack.c.b16 %v3961, %v3953
        %v5466 = vpack.c.b16 %v3962, %v3954
        %v5467 = vpack.c.b16 %v3963, %v3955
        %v5468 = vpack.c.b16 %v3964, %v3956
        %v5469 = vpack.c.b16 %v3965, %v3957
        %v5470 = vpack.c.b16 %v3966, %v3958
        %v5471 = vpack.c.b16 %v3967, %v3959
        %v5472 = vpack.c.b16 %v3976, %v3968
        %v5473 = vpack.c.b16 %v3977, %v3969
        %v5474 = vpack.c.b16 %v3978, %v3970
        %v5475 = vpack.c.b16 %v3979, %v3971
        %v5476 = vpack.c.b16 %v3980, %v3972
        %v5477 = vpack.c.b16 %v3981, %v3973
        %v5478 = vpack.c.b16 %v3982, %v3974
        %v5479 = vpack.c.b16 %v3983, %v3975
        %v5480 = vpack.c.b16 %v3992, %v3984
        %v5481 = vpack.c.b16 %v3993, %v3985
        %v5482 = vpack.c.b16 %v3994, %v3986
        %v5483 = vpack.c.b16 %v3995, %v3987
        %v5484 = vpack.c.b16 %v3996, %v3988
        %v5485 = vpack.c.b16 %v3997, %v3989
        %v5486 = vpack.c.b16 %v3998, %v3990
        %v5487 = vpack.c.b16 %v3999, %v3991
        %v5488 = vpack.c.b16 %v4008, %v4000
        %v5489 = vpack.c.b16 %v4009, %v4001
        %v5490 = vpack.c.b16 %v4010, %v4002
        %v5491 = vpack.c.b16 %v4011, %v4003
        %v5492 = vpack.c.b16 %v4012, %v4004
        %v5493 = vpack.c.b16 %v4013, %v4005
        %v5494 = vpack.c.b16 %v4014, %v4006
        %v5495 = vpack.c.b16 %v4015, %v4007
        %v5496 = vpack.c.b16 %v4024, %v4016
        %v5497 = vpack.c.b16 %v4025, %v4017
        %v5498 = vpack.c.b16 %v4026, %v4018
        %v5499 = vpack.c.b16 %v4027, %v4019
        %v5500 = vpack.c.b16 %v4028, %v4020
        %v5501 = vpack.c.b16 %v4029, %v4021
        %v5502 = vpack.c.b16 %v4030, %v4022
        %v5503 = vpack.c.b16 %v4031, %v4023
        %v5504 = vpack.c.b16 %v4040, %v4032
        %v5505 = vpack.c.b16 %v4041, %v4033
        %v5506 = vpack.c.b16 %v4042, %v4034
        %v5507 = vpack.c.b16 %v4043, %v4035
        %v5508 = vpack.c.b16 %v4044, %v4036
        %v5509 = vpack.c.b16 %v4045, %v4037
        %v5510 = vpack.c.b16 %v4046, %v4038
        %v5511 = vpack.c.b16 %v4047, %v4039
        %v5512 = vpack.c.b16 %v4056, %v4048
        %v5513 = vpack.c.b16 %v4057, %v4049
        %v5514 = vpack.c.b16 %v4058, %v4050
        %v5515 = vpack.c.b16 %v4059, %v4051
        %v5516 = vpack.c.b16 %v4060, %v4052
        %v5517 = vpack.c.b16 %v4061, %v4053
        %v5518 = vpack.c.b16 %v4062, %v4054
        %v5519 = vpack.c.b16 %v4063, %v4055
        %v5520 = vpack.c.b16 %v4072, %v4064
        %v5521 = vpack.c.b16 %v4073, %v4065
        %v5522 = vpack.c.b16 %v4074, %v4066
        %v5523 = vpack.c.b16 %v4075, %v4067
        %v5524 = vpack.c.b16 %v4076, %v4068
        %v5525 = vpack.c.b16 %v4077, %v4069
        %v5526 = vpack.c.b16 %v4078, %v4070
        %v5527 = vpack.c.b16 %v4079, %v4071
        %v5528 = vpack.c.b16 %v4088, %v4080
        %v5529 = vpack.c.b16 %v4089, %v4081
        %v5530 = vpack.c.b16 %v4090, %v4082
        %v5531 = vpack.c.b16 %v4091, %v4083
        %v5532 = vpack.c.b16 %v4092, %v4084
        %v5533 = vpack.c.b16 %v4093, %v4085
        %v5534 = vpack.c.b16 %v4094, %v4086
        %v5535 = vpack.c.b16 %v4095, %v4087
        %v5536 = vpack.c.b16 %v4104, %v4096
        %v5537 = vpack.c.b16 %v4105, %v4097
        %v5538 = vpack.c.b16 %v4106, %v4098
        %v5539 = vpack.c.b16 %v4107, %v4099
        %v5540 = vpack.c.b16 %v4108, %v4100
        %v5541 = vpack.c.b16 %v4109, %v4101
        %v5542 = vpack.c.b16 %v4110, %v4102
        %v5543 = vpack.c.b16 %v4111, %v4103
        %v5544 = vpack.c.b16 %v4120, %v4112
        %v5545 = vpack.c.b16 %v4121, %v4113
        %v5546 = vpack.c.b16 %v4122, %v4114
        %v5547 = vpack.c.b16 %v4123, %v4115
        %v5548 = vpack.c.b16 %v4124, %v4116
        %v5549 = vpack.c.b16 %v4125, %v4117
        %v5550 = vpack.c.b16 %v4126, %v4118
        %v5551 = vpack.c.b16 %v4127, %v4119
        %v5552 = vpack.c.b16 %v4136, %v4128
        %v5553 = vpack.c.b16 %v4137, %v4129
        %v5554 = vpack.c.b16 %v4138, %v4130
        %v5555 = vpack.c.b16 %v4139, %v4131
        %v5556 = vpack.c.b16 %v4140, %v4132
        %v5557 = vpack.c.b16 %v4141, %v4133
        %v5558 = vpack.c.b16 %v4142, %v4134
        %v5559 = vpack.c.b16 %v4143, %v4135
        %v5560 = vpack.c.b16 %v4152, %v4144
        %v5561 = vpack.c.b16 %v4153, %v4145
        %v5562 = vpack.c.b16 %v4154, %v4146
        %v5563 = vpack.c.b16 %v4155, %v4147
        %v5564 = vpack.c.b16 %v4156, %v4148
        %v5565 = vpack.c.b16 %v4157, %v4149
        %v5566 = vpack.c.b16 %v4158, %v4150
        %v5567 = vpack.c.b16 %v4159, %v4151
        %v5568 = vpack.c.b16 %v4168, %v4160
        %v5569 = vpack.c.b16 %v4169, %v4161
        %v5570 = vpack.c.b16 %v4170, %v4162
        %v5571 = vpack.c.b16 %v4171, %v4163
        %v5572 = vpack.c.b16 %v4172, %v4164
        %v5573 = vpack.c.b16 %v4173, %v4165
        %v5574 = vpack.c.b16 %v4174, %v4166
        %v5575 = vpack.c.b16 %v4175, %v4167
        %v5576 = vpack.c.b16 %v4184, %v4176
        %v5577 = vpack.c.b16 %v4185, %v4177
        %v5578 = vpack.c.b16 %v4186, %v4178
        %v5579 = vpack.c.b16 %v4187, %v4179
        %v5580 = vpack.c.b16 %v4188, %v4180
        %v5581 = vpack.c.b16 %v4189, %v4181
        %v5582 = vpack.c.b16 %v4190, %v4182
        %v5583 = vpack.c.b16 %v4191, %v4183
        %v5584 = vpack.c.b16 %v4200, %v4192
        %v5585 = vpack.c.b16 %v4201, %v4193
        %v5586 = vpack.c.b16 %v4202, %v4194
        %v5587 = vpack.c.b16 %v4203, %v4195
        %v5588 = vpack.c.b16 %v4204, %v4196
        %v5589 = vpack.c.b16 %v4205, %v4197
        %v5590 = vpack.c.b16 %v4206, %v4198
        %v5591 = vpack.c.b16 %v4207, %v4199
        %v5592 = vpack.c.b16 %v4216, %v4208
        %v5593 = vpack.c.b16 %v4217, %v4209
        %v5594 = vpack.c.b16 %v4218, %v4210
        %v5595 = vpack.c.b16 %v4219, %v4211
        %v5596 = vpack.c.b16 %v4220, %v4212
        %v5597 = vpack.c.b16 %v4221, %v4213
        %v5598 = vpack.c.b16 %v4222, %v4214
        %v5599 = vpack.c.b16 %v4223, %v4215
        %v5600 = vpack.c.b16 %v4232, %v4224
        %v5601 = vpack.c.b16 %v4233, %v4225
        %v5602 = vpack.c.b16 %v4234, %v4226
        %v5603 = vpack.c.b16 %v4235, %v4227
        %v5604 = vpack.c.b16 %v4236, %v4228
        %v5605 = vpack.c.b16 %v4237, %v4229
        %v5606 = vpack.c.b16 %v4238, %v4230
        %v5607 = vpack.c.b16 %v4239, %v4231
        %v5608 = vpack.c.b16 %v4248, %v4240
        %v5609 = vpack.c.b16 %v4249, %v4241
        %v5610 = vpack.c.b16 %v4250, %v4242
        %v5611 = vpack.c.b16 %v4251, %v4243
        %v5612 = vpack.c.b16 %v4252, %v4244
        %v5613 = vpack.c.b16 %v4253, %v4245
        %v5614 = vpack.c.b16 %v4254, %v4246
        %v5615 = vpack.c.b16 %v4255, %v4247
        %v5616 = vpack.c.b16 %v4264, %v4256
        %v5617 = vpack.c.b16 %v4265, %v4257
        %v5618 = vpack.c.b16 %v4266, %v4258
        %v5619 = vpack.c.b16 %v4267, %v4259
        %v5620 = vpack.c.b16 %v4268, %v4260
        %v5621 = vpack.c.b16 %v4269, %v4261
        %v5622 = vpack.c.b16 %v4270, %v4262
        %v5623 = vpack.c.b16 %v4271, %v4263
        %v5624 = vpack.c.b16 %v4280, %v4272
        %v5625 = vpack.c.b16 %v4281, %v4273
        %v5626 = vpack.c.b16 %v4282, %v4274
        %v5627 = vpack.c.b16 %v4283, %v4275
        %v5628 = vpack.c.b16 %v4284, %v4276
        %v5629 = vpack.c.b16 %v4285, %v4277
        %v5630 = vpack.c.b16 %v4286, %v4278
        %v5631 = vpack.c.b16 %v4287, %v4279
        %v5632 = vpack.c.b16 %v4296, %v4288
        %v5633 = vpack.c.b16 %v4297, %v4289
        %v5634 = vpack.c.b16 %v4298, %v4290
        %v5635 = vpack.c.b16 %v4299, %v4291
        %v5636 = vpack.c.b16 %v4300, %v4292
        %v5637 = vpack.c.b16 %v4301, %v4293
        %v5638 = vpack.c.b16 %v4302, %v4294
        %v5639 = vpack.c.b16 %v4303, %v4295
        %v5640 = vpack.c.b16 %v4312, %v4304
        %v5641 = vpack.c.b16 %v4313, %v4305
        %v5642 = vpack.c.b16 %v4314, %v4306
        %v5643 = vpack.c.b16 %v4315, %v4307
        %v5644 = vpack.c.b16 %v4316, %v4308
        %v5645 = vpack.c.b16 %v4317, %v4309
        %v5646 = vpack.c.b16 %v4318, %v4310
        %v5647 = vpack.c.b16 %v4319, %v4311
        %v5648 = vpack.c.b16 %v4328, %v4320
        %v5649 = vpack.c.b16 %v4329, %v4321
        %v5650 = vpack.c.b16 %v4330, %v4322
        %v5651 = vpack.c.b16 %v4331, %v4323
        %v5652 = vpack.c.b16 %v4332, %v4324
        %v5653 = vpack.c.b16 %v4333, %v4325
        %v5654 = vpack.c.b16 %v4334, %v4326
        %v5655 = vpack.c.b16 %v4335, %v4327
        %v5656 = vpack.c.b16 %v4344, %v4336
        %v5657 = vpack.c.b16 %v4345, %v4337
        %v5658 = vpack.c.b16 %v4346, %v4338
        %v5659 = vpack.c.b16 %v4347, %v4339
        %v5660 = vpack.c.b16 %v4348, %v4340
        %v5661 = vpack.c.b16 %v4349, %v4341
        %v5662 = vpack.c.b16 %v4350, %v4342
        %v5663 = vpack.c.b16 %v4351, %v4343
        %v5664 = vpack.c.b16 %v4360, %v4352
        %v5665 = vpack.c.b16 %v4361, %v4353
        %v5666 = vpack.c.b16 %v4362, %v4354
        %v5667 = vpack.c.b16 %v4363, %v4355
        %v5668 = vpack.c.b16 %v4364, %v4356
        %v5669 = vpack.c.b16 %v4365, %v4357
        %v5670 = vpack.c.b16 %v4366, %v4358
        %v5671 = vpack.c.b16 %v4367, %v4359
        %v5672 = vpack.c.b16 %v4376, %v4368
        %v5673 = vpack.c.b16 %v4377, %v4369
        %v5674 = vpack.c.b16 %v4378, %v4370
        %v5675 = vpack.c.b16 %v4379, %v4371
        %v5676 = vpack.c.b16 %v4380, %v4372
        %v5677 = vpack.c.b16 %v4381, %v4373
        %v5678 = vpack.c.b16 %v4382, %v4374
        %v5679 = vpack.c.b16 %v4383, %v4375
        %v5680 = vpack.c.b16 %v4392, %v4384
        %v5681 = vpack.c.b16 %v4393, %v4385
        %v5682 = vpack.c.b16 %v4394, %v4386
        %v5683 = vpack.c.b16 %v4395, %v4387
        %v5684 = vpack.c.b16 %v4396, %v4388
        %v5685 = vpack.c.b16 %v4397, %v4389
        %v5686 = vpack.c.b16 %v4398, %v4390
        %v5687 = vpack.c.b16 %v4399, %v4391
        %v5688 = vpack.c.b16 %v4408, %v4400
        %v5689 = vpack.c.b16 %v4409, %v4401
        %v5690 = vpack.c.b16 %v4410, %v4402
        %v5691 = vpack.c.b16 %v4411, %v4403
        %v5692 = vpack.c.b16 %v4412, %v4404
        %v5693 = vpack.c.b16 %v4413, %v4405
        %v5694 = vpack.c.b16 %v4414, %v4406
        %v5695 = vpack.c.b16 %v4415, %v4407
        %v5696 = vpack.c.b16 %v4424, %v4416
        %v5697 = vpack.c.b16 %v4425, %v4417
        %v5698 = vpack.c.b16 %v4426, %v4418
        %v5699 = vpack.c.b16 %v4427, %v4419
        %v5700 = vpack.c.b16 %v4428, %v4420
        %v5701 = vpack.c.b16 %v4429, %v4421
        %v5702 = vpack.c.b16 %v4430, %v4422
        %v5703 = vpack.c.b16 %v4431, %v4423
        %v5704 = vpack.c.b16 %v4440, %v4432
        %v5705 = vpack.c.b16 %v4441, %v4433
        %v5706 = vpack.c.b16 %v4442, %v4434
        %v5707 = vpack.c.b16 %v4443, %v4435
        %v5708 = vpack.c.b16 %v4444, %v4436
        %v5709 = vpack.c.b16 %v4445, %v4437
        %v5710 = vpack.c.b16 %v4446, %v4438
        %v5711 = vpack.c.b16 %v4447, %v4439
        %v5712 = vpack.c.b16 %v4456, %v4448
        %v5713 = vpack.c.b16 %v4457, %v4449
        %v5714 = vpack.c.b16 %v4458, %v4450
        %v5715 = vpack.c.b16 %v4459, %v4451
        %v5716 = vpack.c.b16 %v4460, %v4452
        %v5717 = vpack.c.b16 %v4461, %v4453
        %v5718 = vpack.c.b16 %v4462, %v4454
        %v5719 = vpack.c.b16 %v4463, %v4455
        %v5720 = vpack.c.b16 %v4472, %v4464
        %v5721 = vpack.c.b16 %v4473, %v4465
        %v5722 = vpack.c.b16 %v4474, %v4466
        %v5723 = vpack.c.b16 %v4475, %v4467
        %v5724 = vpack.c.b16 %v4476, %v4468
        %v5725 = vpack.c.b16 %v4477, %v4469
        %v5726 = vpack.c.b16 %v4478, %v4470
        %v5727 = vpack.c.b16 %v4479, %v4471
        %v5728 = vpack.c.b16 %v4488, %v4480
        %v5729 = vpack.c.b16 %v4489, %v4481
        %v5730 = vpack.c.b16 %v4490, %v4482
        %v5731 = vpack.c.b16 %v4491, %v4483
        %v5732 = vpack.c.b16 %v4492, %v4484
        %v5733 = vpack.c.b16 %v4493, %v4485
        %v5734 = vpack.c.b16 %v4494, %v4486
        %v5735 = vpack.c.b16 %v4495, %v4487
        %v5736 = vpack.c.b16 %v4504, %v4496
        %v5737 = vpack.c.b16 %v4505, %v4497
        %v5738 = vpack.c.b16 %v4506, %v4498
        %v5739 = vpack.c.b16 %v4507, %v4499
        %v5740 = vpack.c.b16 %v4508, %v4500
        %v5741 = vpack.c.b16 %v4509, %v4501
        %v5742 = vpack.c.b16 %v4510, %v4502
        %v5743 = vpack.c.b16 %v4511, %v4503
        %v5744 = vpack.c.b16 %v4520, %v4512
        %v5745 = vpack.c.b16 %v4521, %v4513
        %v5746 = vpack.c.b16 %v4522, %v4514
        %v5747 = vpack.c.b16 %v4523, %v4515
        %v5748 = vpack.c.b16 %v4524, %v4516
        %v5749 = vpack.c.b16 %v4525, %v4517
        %v5750 = vpack.c.b16 %v4526, %v4518
        %v5751 = vpack.c.b16 %v4527, %v4519
        %v5752 = vpack.c.b16 %v4536, %v4528
        %v5753 = vpack.c.b16 %v4537, %v4529
        %v5754 = vpack.c.b16 %v4538, %v4530
        %v5755 = vpack.c.b16 %v4539, %v4531
        %v5756 = vpack.c.b16 %v4540, %v4532
        %v5757 = vpack.c.b16 %v4541, %v4533
        %v5758 = vpack.c.b16 %v4542, %v4534
        %v5759 = vpack.c.b16 %v4543, %v4535
        %v5760 = vpack.c.b16 %v4552, %v4544
        %v5761 = vpack.c.b16 %v4553, %v4545
        %v5762 = vpack.c.b16 %v4554, %v4546
        %v5763 = vpack.c.b16 %v4555, %v4547
        %v5764 = vpack.c.b16 %v4556, %v4548
        %v5765 = vpack.c.b16 %v4557, %v4549
        %v5766 = vpack.c.b16 %v4558, %v4550
        %v5767 = vpack.c.b16 %v4559, %v4551
        %v5768 = vpack.c.b16 %v4568, %v4560
        %v5769 = vpack.c.b16 %v4569, %v4561
        %v5770 = vpack.c.b16 %v4570, %v4562
        %v5771 = vpack.c.b16 %v4571, %v4563
        %v5772 = vpack.c.b16 %v4572, %v4564
        %v5773 = vpack.c.b16 %v4573, %v4565
        %v5774 = vpack.c.b16 %v4574, %v4566
        %v5775 = vpack.c.b16 %v4575, %v4567
        %v5776 = vpack.c.b16 %v4584, %v4576
        %v5777 = vpack.c.b16 %v4585, %v4577
        %v5778 = vpack.c.b16 %v4586, %v4578
        %v5779 = vpack.c.b16 %v4587, %v4579
        %v5780 = vpack.c.b16 %v4588, %v4580
        %v5781 = vpack.c.b16 %v4589, %v4581
        %v5782 = vpack.c.b16 %v4590, %v4582
        %v5783 = vpack.c.b16 %v4591, %v4583
        %v5784 = vpack.c.b16 %v4600, %v4592
        %v5785 = vpack.c.b16 %v4601, %v4593
        %v5786 = vpack.c.b16 %v4602, %v4594
        %v5787 = vpack.c.b16 %v4603, %v4595
        %v5788 = vpack.c.b16 %v4604, %v4596
        %v5789 = vpack.c.b16 %v4605, %v4597
        %v5790 = vpack.c.b16 %v4606, %v4598
        %v5791 = vpack.c.b16 %v4607, %v4599
        %v5792 = vpack.c.b16 %v4616, %v4608
        %v5793 = vpack.c.b16 %v4617, %v4609
        %v5794 = vpack.c.b16 %v4618, %v4610
        %v5795 = vpack.c.b16 %v4619, %v4611
        %v5796 = vpack.c.b16 %v4620, %v4612
        %v5797 = vpack.c.b16 %v4621, %v4613
        %v5798 = vpack.c.b16 %v4622, %v4614
        %v5799 = vpack.c.b16 %v4623, %v4615
        %v5800 = vpack.c.b16 %v4632, %v4624
        %v5801 = vpack.c.b16 %v4633, %v4625
        %v5802 = vpack.c.b16 %v4634, %v4626
        %v5803 = vpack.c.b16 %v4635, %v4627
        %v5804 = vpack.c.b16 %v4636, %v4628
        %v5805 = vpack.c.b16 %v4637, %v4629
        %v5806 = vpack.c.b16 %v4638, %v4630
        %v5807 = vpack.c.b16 %v4639, %v4631
        %v5808 = vpack.c.b16 %v4648, %v4640
        %v5809 = vpack.c.b16 %v4649, %v4641
        %v5810 = vpack.c.b16 %v4650, %v4642
        %v5811 = vpack.c.b16 %v4651, %v4643
        %v5812 = vpack.c.b16 %v4652, %v4644
        %v5813 = vpack.c.b16 %v4653, %v4645
        %v5814 = vpack.c.b16 %v4654, %v4646
        %v5815 = vpack.c.b16 %v4655, %v4647
        %v5816 = vpack.c.b16 %v4664, %v4656
        %v5817 = vpack.c.b16 %v4665, %v4657
        %v5818 = vpack.c.b16 %v4666, %v4658
        %v5819 = vpack.c.b16 %v4667, %v4659
        %v5820 = vpack.c.b16 %v4668, %v4660
        %v5821 = vpack.c.b16 %v4669, %v4661
        %v5822 = vpack.c.b16 %v4670, %v4662
        %v5823 = vpack.c.b16 %v4671, %v4663
        %v5824 = vpack.c.b16 %v4680, %v4672
        %v5825 = vpack.c.b16 %v4681, %v4673
        %v5826 = vpack.c.b16 %v4682, %v4674
        %v5827 = vpack.c.b16 %v4683, %v4675
        %v5828 = vpack.c.b16 %v4684, %v4676
        %v5829 = vpack.c.b16 %v4685, %v4677
        %v5830 = vpack.c.b16 %v4686, %v4678
        %v5831 = vpack.c.b16 %v4687, %v4679
        %v5832 = vpack.c.b16 %v4696, %v4688
        %v5833 = vpack.c.b16 %v4697, %v4689
        %v5834 = vpack.c.b16 %v4698, %v4690
        %v5835 = vpack.c.b16 %v4699, %v4691
        %v5836 = vpack.c.b16 %v4700, %v4692
        %v5837 = vpack.c.b16 %v4701, %v4693
        %v5838 = vpack.c.b16 %v4702, %v4694
        %v5839 = vpack.c.b16 %v4703, %v4695
        %v5840 = vpack.c.b16 %v4712, %v4704
        %v5841 = vpack.c.b16 %v4713, %v4705
        %v5842 = vpack.c.b16 %v4714, %v4706
        %v5843 = vpack.c.b16 %v4715, %v4707
        %v5844 = vpack.c.b16 %v4716, %v4708
        %v5845 = vpack.c.b16 %v4717, %v4709
        %v5846 = vpack.c.b16 %v4718, %v4710
        %v5847 = vpack.c.b16 %v4719, %v4711
        %v5848 = vpack.c.b16 %v4728, %v4720
        %v5849 = vpack.c.b16 %v4729, %v4721
        %v5850 = vpack.c.b16 %v4730, %v4722
        %v5851 = vpack.c.b16 %v4731, %v4723
        %v5852 = vpack.c.b16 %v4732, %v4724
        %v5853 = vpack.c.b16 %v4733, %v4725
        %v5854 = vpack.c.b16 %v4734, %v4726
        %v5855 = vpack.c.b16 %v4735, %v4727
        %v5856 = vpack.c.b16 %v4744, %v4736
        %v5857 = vpack.c.b16 %v4745, %v4737
        %v5858 = vpack.c.b16 %v4746, %v4738
        %v5859 = vpack.c.b16 %v4747, %v4739
        %v5860 = vpack.c.b16 %v4748, %v4740
        %v5861 = vpack.c.b16 %v4749, %v4741
        %v5862 = vpack.c.b16 %v4750, %v4742
        %v5863 = vpack.c.b16 %v4751, %v4743
        %v5864 = vpack.c.b16 %v4760, %v4752
        %v5865 = vpack.c.b16 %v4761, %v4753
        %v5866 = vpack.c.b16 %v4762, %v4754
        %v5867 = vpack.c.b16 %v4763, %v4755
        %v5868 = vpack.c.b16 %v4764, %v4756
        %v5869 = vpack.c.b16 %v4765, %v4757
        %v5870 = vpack.c.b16 %v4766, %v4758
        %v5871 = vpack.c.b16 %v4767, %v4759
        %v5872 = vpack.c.b16 %v4776, %v4768
        %v5873 = vpack.c.b16 %v4777, %v4769
        %v5874 = vpack.c.b16 %v4778, %v4770
        %v5875 = vpack.c.b16 %v4779, %v4771
        %v5876 = vpack.c.b16 %v4780, %v4772
        %v5877 = vpack.c.b16 %v4781, %v4773
        %v5878 = vpack.c.b16 %v4782, %v4774
        %v5879 = vpack.c.b16 %v4783, %v4775
        %v5880 = vpack.c.b16 %v4792, %v4784
        %v5881 = vpack.c.b16 %v4793, %v4785
        %v5882 = vpack.c.b16 %v4794, %v4786
        %v5883 = vpack.c.b16 %v4795, %v4787
        %v5884 = vpack.c.b16 %v4796, %v4788
        %v5885 = vpack.c.b16 %v4797, %v4789
        %v5886 = vpack.c.b16 %v4798, %v4790
        %v5887 = vpack.c.b16 %v4799, %v4791
        %v5888 = vpack.c.b16 %v4808, %v4800
        %v5889 = vpack.c.b16 %v4809, %v4801
        %v5890 = vpack.c.b16 %v4810, %v4802
        %v5891 = vpack.c.b16 %v4811, %v4803
        %v5892 = vpack.c.b16 %v4812, %v4804
        %v5893 = vpack.c.b16 %v4813, %v4805
        %v5894 = vpack.c.b16 %v4814, %v4806
        %v5895 = vpack.c.b16 %v4815, %v4807
        %v5896 = vpack.c.b16 %v4824, %v4816
        %v5897 = vpack.c.b16 %v4825, %v4817
        %v5898 = vpack.c.b16 %v4826, %v4818
        %v5899 = vpack.c.b16 %v4827, %v4819
        %v5900 = vpack.c.b16 %v4828, %v4820
        %v5901 = vpack.c.b16 %v4829, %v4821
        %v5902 = vpack.c.b16 %v4830, %v4822
        %v5903 = vpack.c.b16 %v4831, %v4823
        %v5904 = vpack.c.b16 %v4840, %v4832
        %v5905 = vpack.c.b16 %v4841, %v4833
        %v5906 = vpack.c.b16 %v4842, %v4834
        %v5907 = vpack.c.b16 %v4843, %v4835
        %v5908 = vpack.c.b16 %v4844, %v4836
        %v5909 = vpack.c.b16 %v4845, %v4837
        %v5910 = vpack.c.b16 %v4846, %v4838
        %v5911 = vpack.c.b16 %v4847, %v4839
        %v5912 = vpack.c.b16 %v4856, %v4848
        %v5913 = vpack.c.b16 %v4857, %v4849
        %v5914 = vpack.c.b16 %v4858, %v4850
        %v5915 = vpack.c.b16 %v4859, %v4851
        %v5916 = vpack.c.b16 %v4860, %v4852
        %v5917 = vpack.c.b16 %v4861, %v4853
        %v5918 = vpack.c.b16 %v4862, %v4854
        %v5919 = vpack.c.b16 %v4863, %v4855
        %v5920 = vpack.c.b16 %v4872, %v4864
        %v5921 = vpack.c.b16 %v4873, %v4865
        %v5922 = vpack.c.b16 %v4874, %v4866
        %v5923 = vpack.c.b16 %v4875, %v4867
        %v5924 = vpack.c.b16 %v4876, %v4868
        %v5925 = vpack.c.b16 %v4877, %v4869
        %v5926 = vpack.c.b16 %v4878, %v4870
        %v5927 = vpack.c.b16 %v4879, %v4871
        %v5928 = vpack.c.b16 %v4888, %v4880
        %v5929 = vpack.c.b16 %v4889, %v4881
        %v5930 = vpack.c.b16 %v4890, %v4882
        %v5931 = vpack.c.b16 %v4891, %v4883
        %v5932 = vpack.c.b16 %v4892, %v4884
        %v5933 = vpack.c.b16 %v4893, %v4885
        %v5934 = vpack.c.b16 %v4894, %v4886
        %v5935 = vpack.c.b16 %v4895, %v4887
        %v5936 = vpack.c.b16 %v4904, %v4896
        %v5937 = vpack.c.b16 %v4905, %v4897
        %v5938 = vpack.c.b16 %v4906, %v4898
        %v5939 = vpack.c.b16 %v4907, %v4899
        %v5940 = vpack.c.b16 %v4908, %v4900
        %v5941 = vpack.c.b16 %v4909, %v4901
        %v5942 = vpack.c.b16 %v4910, %v4902
        %v5943 = vpack.c.b16 %v4911, %v4903
        %v5944 = vpack.c.b16 %v4920, %v4912
        %v5945 = vpack.c.b16 %v4921, %v4913
        %v5946 = vpack.c.b16 %v4922, %v4914
        %v5947 = vpack.c.b16 %v4923, %v4915
        %v5948 = vpack.c.b16 %v4924, %v4916
        %v5949 = vpack.c.b16 %v4925, %v4917
        %v5950 = vpack.c.b16 %v4926, %v4918
        %v5951 = vpack.c.b16 %v4927, %v4919
        %6976 = vmatprep.subr.bf16.mxu0 %v4929
        %6977 = vmatpush1.bf16.msra.mxu0 %v4928
        %6978 = vmatprep.subr.bf16.mxu0 %v4937
        %6979 = vmatpush1.bf16.msra.mxu0 %v4936
        %6980 = vmatprep.subr.bf16.mxu0 %v4945
        %6981 = vmatpush1.bf16.msra.mxu0 %v4944
        %6982 = vmatprep.subr.bf16.mxu0 %v4953
        %6983 = vmatpush1.bf16.msra.mxu0 %v4952
        %6984 = vmatprep.subr.bf16.mxu0 %v4961
        %6985 = vmatpush1.bf16.msra.mxu0 %v4960
        %6986 = vmatprep.subr.bf16.mxu0 %v4969
        %6987 = vmatpush1.bf16.msra.mxu0 %v4968
        %6988 = vmatprep.subr.bf16.mxu0 %v4977
        %6989 = vmatpush1.bf16.msra.mxu0 %v4976
        %6990 = vmatprep.subr.bf16.mxu0 %v4985
        %6991 = vmatpush1.bf16.msra.mxu0 %v4984
        %6992 = vmatprep.subr.bf16.mxu0 %v4993
        %6993 = vmatpush1.bf16.msra.mxu0 %v4992
        %6994 = vmatprep.subr.bf16.mxu0 %v5001
        %6995 = vmatpush1.bf16.msra.mxu0 %v5000
        %6996 = vmatprep.subr.bf16.mxu0 %v5009
        %6997 = vmatpush1.bf16.msra.mxu0 %v5008
        %6998 = vmatprep.subr.bf16.mxu0 %v5017
        %6999 = vmatpush1.bf16.msra.mxu0 %v5016
        %7000 = vmatprep.subr.bf16.mxu0 %v5025
        %7001 = vmatpush1.bf16.msra.mxu0 %v5024
        %7002 = vmatprep.subr.bf16.mxu0 %v5033
        %7003 = vmatpush1.bf16.msra.mxu0 %v5032
        %7004 = vmatprep.subr.bf16.mxu0 %v5041
        %7005 = vmatpush1.bf16.msra.mxu0 %v5040
        %7006 = vmatprep.subr.bf16.mxu0 %v5049
        %7007 = vmatpush1.bf16.msra.mxu0 %v5048
        %7008 = vmatprep.mubr.bf16.mxu0 %v817
        %7009 = vmatmul.mubr.bf16.gmra.mrb[0].mxu0 %v816
        %v7010 = vpop.f32.mrb[0].mxu0
        %v7011 = vadd.f32 0.0, %v7010
        %v7012 = vpop.f32.mrb[0].mxu0
        %v7013 = vadd.f32 0.0, %v7012
        %v7014 = vpop.f32.mrb[0].mxu0
        %v7015 = vpop.f32.mrb[0].mxu0
        %7016 = vdwg.mxu0
        %7017 = vmatprep.subr.bf16.mxu0 %v5057
        %7018 = vmatpush1.bf16.msra.mxu0 %v5056
        %7019 = vmatprep.subr.bf16.mxu0 %v5065
        %7020 = vmatpush1.bf16.msra.mxu0 %v5064
        %7021 = vmatprep.subr.bf16.mxu0 %v5073
        %7022 = vmatpush1.bf16.msra.mxu0 %v5072
        %7023 = vmatprep.subr.bf16.mxu0 %v5081
        %7024 = vmatpush1.bf16.msra.mxu0 %v5080
        %7025 = vmatprep.subr.bf16.mxu0 %v5089
        %7026 = vmatpush1.bf16.msra.mxu0 %v5088
        %7027 = vmatprep.subr.bf16.mxu0 %v5097
        %7028 = vmatpush1.bf16.msra.mxu0 %v5096
        %7029 = vmatprep.subr.bf16.mxu0 %v5105
        %7030 = vmatpush1.bf16.msra.mxu0 %v5104
        %7031 = vmatprep.subr.bf16.mxu0 %v5113
        %7032 = vmatpush1.bf16.msra.mxu0 %v5112
        %7033 = vmatprep.subr.bf16.mxu0 %v5121
        %7034 = vmatpush1.bf16.msra.mxu0 %v5120
        %7035 = vmatprep.subr.bf16.mxu0 %v5129
        %7036 = vmatpush1.bf16.msra.mxu0 %v5128
        %7037 = vmatprep.subr.bf16.mxu0 %v5137
        %7038 = vmatpush1.bf16.msra.mxu0 %v5136
        %7039 = vmatprep.subr.bf16.mxu0 %v5145
        %7040 = vmatpush1.bf16.msra.mxu0 %v5144
        %7041 = vmatprep.subr.bf16.mxu0 %v5153
        %7042 = vmatpush1.bf16.msra.mxu0 %v5152
        %7043 = vmatprep.subr.bf16.mxu0 %v5161
        %7044 = vmatpush1.bf16.msra.mxu0 %v5160
        %7045 = vmatprep.subr.bf16.mxu0 %v5169
        %7046 = vmatpush1.bf16.msra.mxu0 %v5168
        %7047 = vmatprep.subr.bf16.mxu0 %v5177
        %7048 = vmatpush1.bf16.msra.mxu0 %v5176
        %7049 = vmatprep.mubr.bf16.mxu0 %v819
        %7050 = vmatmul.mubr.bf16.gmra.mrb[0].mxu0 %v818
        %v7051 = vpop.f32.mrb[0].mxu0
        %v7052 = vadd.f32 %v7011, %v7051
        %v7053 = vpop.f32.mrb[0].mxu0
        %v7054 = vadd.f32 %v7013, %v7053
        %v7055 = vpop.f32.mrb[0].mxu0
        %v7056 = vpop.f32.mrb[0].mxu0
        %7057 = vdwg.mxu0
        %7058 = vmatprep.subr.bf16.mxu0 %v5185
        %7059 = vmatpush1.bf16.msra.mxu0 %v5184
        %7060 = vmatprep.subr.bf16.mxu0 %v5193
        %7061 = vmatpush1.bf16.msra.mxu0 %v5192
        %7062 = vmatprep.subr.bf16.mxu0 %v5201
        %7063 = vmatpush1.bf16.msra.mxu0 %v5200
        %7064 = vmatprep.subr.bf16.mxu0 %v5209
        %7065 = vmatpush1.bf16.msra.mxu0 %v5208
        %7066 = vmatprep.subr.bf16.mxu0 %v5217
        %7067 = vmatpush1.bf16.msra.mxu0 %v5216
        %7068 = vmatprep.subr.bf16.mxu0 %v5225
        %7069 = vmatpush1.bf16.msra.mxu0 %v5224
        %7070 = vmatprep.subr.bf16.mxu0 %v5233
        %7071 = vmatpush1.bf16.msra.mxu0 %v5232
        %7072 = vmatprep.subr.bf16.mxu0 %v5241
        %7073 = vmatpush1.bf16.msra.mxu0 %v5240
        %7074 = vmatprep.subr.bf16.mxu0 %v5249
        %7075 = vmatpush1.bf16.msra.mxu0 %v5248
        %7076 = vmatprep.subr.bf16.mxu0 %v5257
        %7077 = vmatpush1.bf16.msra.mxu0 %v5256
        %7078 = vmatprep.subr.bf16.mxu0 %v5265
        %7079 = vmatpush1.bf16.msra.mxu0 %v5264
        %7080 = vmatprep.subr.bf16.mxu0 %v5273
        %7081 = vmatpush1.bf16.msra.mxu0 %v5272
        %7082 = vmatprep.subr.bf16.mxu0 %v5281
        %7083 = vmatpush1.bf16.msra.mxu0 %v5280
        %7084 = vmatprep.subr.bf16.mxu0 %v5289
        %7085 = vmatpush1.bf16.msra.mxu0 %v5288
        %7086 = vmatprep.subr.bf16.mxu0 %v5297
        %7087 = vmatpush1.bf16.msra.mxu0 %v5296
        %7088 = vmatprep.subr.bf16.mxu0 %v5305
        %7089 = vmatpush1.bf16.msra.mxu0 %v5304
        %7090 = vmatprep.mubr.bf16.mxu0 %v821
        %7091 = vmatmul.mubr.bf16.gmra.mrb[0].mxu0 %v820
        %v7092 = vpop.f32.mrb[0].mxu0
        %v7093 = vadd.f32 %v7052, %v7092
        %v7094 = vpop.f32.mrb[0].mxu0
        %v7095 = vadd.f32 %v7054, %v7094
        %v7096 = vpop.f32.mrb[0].mxu0
        %v7097 = vpop.f32.mrb[0].mxu0
        %7098 = vdwg.mxu0
        %7099 = vmatprep.subr.bf16.mxu0 %v5313
        %7100 = vmatpush1.bf16.msra.mxu0 %v5312
        %7101 = vmatprep.subr.bf16.mxu0 %v5321
        %7102 = vmatpush1.bf16.msra.mxu0 %v5320
        %7103 = vmatprep.subr.bf16.mxu0 %v5329
        %7104 = vmatpush1.bf16.msra.mxu0 %v5328
        %7105 = vmatprep.subr.bf16.mxu0 %v5337
        %7106 = vmatpush1.bf16.msra.mxu0 %v5336
        %7107 = vmatprep.subr.bf16.mxu0 %v5345
        %7108 = vmatpush1.bf16.msra.mxu0 %v5344
        %7109 = vmatprep.subr.bf16.mxu0 %v5353
        %7110 = vmatpush1.bf16.msra.mxu0 %v5352
        %7111 = vmatprep.subr.bf16.mxu0 %v5361
        %7112 = vmatpush1.bf16.msra.mxu0 %v5360
        %7113 = vmatprep.subr.bf16.mxu0 %v5369
        %7114 = vmatpush1.bf16.msra.mxu0 %v5368
        %7115 = vmatprep.subr.bf16.mxu0 %v5377
        %7116 = vmatpush1.bf16.msra.mxu0 %v5376
        %7117 = vmatprep.subr.bf16.mxu0 %v5385
        %7118 = vmatpush1.bf16.msra.mxu0 %v5384
        %7119 = vmatprep.subr.bf16.mxu0 %v5393
        %7120 = vmatpush1.bf16.msra.mxu0 %v5392
        %7121 = vmatprep.subr.bf16.mxu0 %v5401
        %7122 = vmatpush1.bf16.msra.mxu0 %v5400
        %7123 = vmatprep.subr.bf16.mxu0 %v5409
        %7124 = vmatpush1.bf16.msra.mxu0 %v5408
        %7125 = vmatprep.subr.bf16.mxu0 %v5417
        %7126 = vmatpush1.bf16.msra.mxu0 %v5416
        %7127 = vmatprep.subr.bf16.mxu0 %v5425
        %7128 = vmatpush1.bf16.msra.mxu0 %v5424
        %7129 = vmatprep.subr.bf16.mxu0 %v5433
        %7130 = vmatpush1.bf16.msra.mxu0 %v5432
        %7131 = vmatprep.mubr.bf16.mxu0 %v823
        %7132 = vmatmul.mubr.bf16.gmra.mrb[0].mxu0 %v822
        %v7133 = vpop.f32.mrb[0].mxu0
        %v7134 = vadd.f32 %v7093, %v7133
        %v7135 = vpop.f32.mrb[0].mxu0
        %v7136 = vadd.f32 %v7095, %v7135
        %v7137 = vpop.f32.mrb[0].mxu0
        %v7138 = vpop.f32.mrb[0].mxu0
        %7139 = vdwg.mxu0
        %7140 = vmatprep.subr.bf16.mxu0 %v5441
        %7141 = vmatpush1.bf16.msra.mxu0 %v5440
        %7142 = vmatprep.subr.bf16.mxu0 %v5449
        %7143 = vmatpush1.bf16.msra.mxu0 %v5448
        %7144 = vmatprep.subr.bf16.mxu0 %v5457
        %7145 = vmatpush1.bf16.msra.mxu0 %v5456
        %7146 = vmatprep.subr.bf16.mxu0 %v5465
        %7147 = vmatpush1.bf16.msra.mxu0 %v5464
        %7148 = vmatprep.subr.bf16.mxu0 %v5473
        %7149 = vmatpush1.bf16.msra.mxu0 %v5472
        %7150 = vmatprep.subr.bf16.mxu0 %v5481
        %7151 = vmatpush1.bf16.msra.mxu0 %v5480
        %7152 = vmatprep.subr.bf16.mxu0 %v5489
        %7153 = vmatpush1.bf16.msra.mxu0 %v5488
        %7154 = vmatprep.subr.bf16.mxu0 %v5497
        %7155 = vmatpush1.bf16.msra.mxu0 %v5496
        %7156 = vmatprep.subr.bf16.mxu0 %v5505
        %7157 = vmatpush1.bf16.msra.mxu0 %v5504
        %7158 = vmatprep.subr.bf16.mxu0 %v5513
        %7159 = vmatpush1.bf16.msra.mxu0 %v5512
        %7160 = vmatprep.subr.bf16.mxu0 %v5521
        %7161 = vmatpush1.bf16.msra.mxu0 %v5520
        %7162 = vmatprep.subr.bf16.mxu0 %v5529
        %7163 = vmatpush1.bf16.msra.mxu0 %v5528
        %7164 = vmatprep.subr.bf16.mxu0 %v5537
        %7165 = vmatpush1.bf16.msra.mxu0 %v5536
        %7166 = vmatprep.subr.bf16.mxu0 %v5545
        %7167 = vmatpush1.bf16.msra.mxu0 %v5544
        %7168 = vmatprep.subr.bf16.mxu0 %v5553
        %7169 = vmatpush1.bf16.msra.mxu0 %v5552
        %7170 = vmatprep.subr.bf16.mxu0 %v5561
        %7171 = vmatpush1.bf16.msra.mxu0 %v5560
        %7172 = vmatprep.mubr.bf16.mxu0 %v825
        %7173 = vmatmul.mubr.bf16.gmra.mrb[0].mxu0 %v824
        %v7174 = vpop.f32.mrb[0].mxu0
        %v7175 = vadd.f32 %v7134, %v7174
        %v7176 = vpop.f32.mrb[0].mxu0
        %v7177 = vadd.f32 %v7136, %v7176
        %v7178 = vpop.f32.mrb[0].mxu0
        %v7179 = vpop.f32.mrb[0].mxu0
        %7180 = vdwg.mxu0
        %7181 = vmatprep.subr.bf16.mxu0 %v5569
        %7182 = vmatpush1.bf16.msra.mxu0 %v5568
        %7183 = vmatprep.subr.bf16.mxu0 %v5577
        %7184 = vmatpush1.bf16.msra.mxu0 %v5576
        %7185 = vmatprep.subr.bf16.mxu0 %v5585
        %7186 = vmatpush1.bf16.msra.mxu0 %v5584
        %7187 = vmatprep.subr.bf16.mxu0 %v5593
        %7188 = vmatpush1.bf16.msra.mxu0 %v5592
        %7189 = vmatprep.subr.bf16.mxu0 %v5601
        %7190 = vmatpush1.bf16.msra.mxu0 %v5600
        %7191 = vmatprep.subr.bf16.mxu0 %v5609
        %7192 = vmatpush1.bf16.msra.mxu0 %v5608
        %7193 = vmatprep.subr.bf16.mxu0 %v5617
        %7194 = vmatpush1.bf16.msra.mxu0 %v5616
        %7195 = vmatprep.subr.bf16.mxu0 %v5625
        %7196 = vmatpush1.bf16.msra.mxu0 %v5624
        %7197 = vmatprep.subr.bf16.mxu0 %v5633
        %7198 = vmatpush1.bf16.msra.mxu0 %v5632
        %7199 = vmatprep.subr.bf16.mxu0 %v5641
        %7200 = vmatpush1.bf16.msra.mxu0 %v5640
        %7201 = vmatprep.subr.bf16.mxu0 %v5649
        %7202 = vmatpush1.bf16.msra.mxu0 %v5648
        %7203 = vmatprep.subr.bf16.mxu0 %v5657
        %7204 = vmatpush1.bf16.msra.mxu0 %v5656
        %7205 = vmatprep.subr.bf16.mxu0 %v5665
        %7206 = vmatpush1.bf16.msra.mxu0 %v5664
        %7207 = vmatprep.subr.bf16.mxu0 %v5673
        %7208 = vmatpush1.bf16.msra.mxu0 %v5672
        %7209 = vmatprep.subr.bf16.mxu0 %v5681
        %7210 = vmatpush1.bf16.msra.mxu0 %v5680
        %7211 = vmatprep.subr.bf16.mxu0 %v5689
        %7212 = vmatpush1.bf16.msra.mxu0 %v5688
        %7213 = vmatprep.mubr.bf16.mxu0 %v827
        %7214 = vmatmul.mubr.bf16.gmra.mrb[0].mxu0 %v826
        %v7215 = vpop.f32.mrb[0].mxu0
        %v7216 = vadd.f32 %v7175, %v7215
        %v7217 = vpop.f32.mrb[0].mxu0
        %v7218 = vadd.f32 %v7177, %v7217
        %v7219 = vpop.f32.mrb[0].mxu0
        %v7220 = vpop.f32.mrb[0].mxu0
        %7221 = vdwg.mxu0
        %7222 = vmatprep.subr.bf16.mxu0 %v5697
        %7223 = vmatpush1.bf16.msra.mxu0 %v5696
        %7224 = vmatprep.subr.bf16.mxu0 %v5705
        %7225 = vmatpush1.bf16.msra.mxu0 %v5704
        %7226 = vmatprep.subr.bf16.mxu0 %v5713
        %7227 = vmatpush1.bf16.msra.mxu0 %v5712
        %7228 = vmatprep.subr.bf16.mxu0 %v5721
        %7229 = vmatpush1.bf16.msra.mxu0 %v5720
        %7230 = vmatprep.subr.bf16.mxu0 %v5729
        %7231 = vmatpush1.bf16.msra.mxu0 %v5728
        %7232 = vmatprep.subr.bf16.mxu0 %v5737
        %7233 = vmatpush1.bf16.msra.mxu0 %v5736
        %7234 = vmatprep.subr.bf16.mxu0 %v5745
        %7235 = vmatpush1.bf16.msra.mxu0 %v5744
        %7236 = vmatprep.subr.bf16.mxu0 %v5753
        %7237 = vmatpush1.bf16.msra.mxu0 %v5752
        %7238 = vmatprep.subr.bf16.mxu0 %v5761
        %7239 = vmatpush1.bf16.msra.mxu0 %v5760
        %7240 = vmatprep.subr.bf16.mxu0 %v5769
        %7241 = vmatpush1.bf16.msra.mxu0 %v5768
        %7242 = vmatprep.subr.bf16.mxu0 %v5777
        %7243 = vmatpush1.bf16.msra.mxu0 %v5776
        %7244 = vmatprep.subr.bf16.mxu0 %v5785
        %7245 = vmatpush1.bf16.msra.mxu0 %v5784
        %7246 = vmatprep.subr.bf16.mxu0 %v5793
        %7247 = vmatpush1.bf16.msra.mxu0 %v5792
        %7248 = vmatprep.subr.bf16.mxu0 %v5801
        %7249 = vmatpush1.bf16.msra.mxu0 %v5800
        %7250 = vmatprep.subr.bf16.mxu0 %v5809
        %7251 = vmatpush1.bf16.msra.mxu0 %v5808
        %7252 = vmatprep.subr.bf16.mxu0 %v5817
        %7253 = vmatpush1.bf16.msra.mxu0 %v5816
        %7254 = vmatprep.mubr.bf16.mxu0 %v829
        %7255 = vmatmul.mubr.bf16.gmra.mrb[0].mxu0 %v828
        %v7256 = vpop.f32.mrb[0].mxu0
        %v7257 = vadd.f32 %v7216, %v7256
        %v7258 = vpop.f32.mrb[0].mxu0
        %v7259 = vadd.f32 %v7218, %v7258
        %v7260 = vpop.f32.mrb[0].mxu0
        %v7261 = vpop.f32.mrb[0].mxu0
        %7262 = vdwg.mxu0
        %7263 = vmatprep.subr.bf16.mxu0 %v5825
        %7264 = vmatpush1.bf16.msra.mxu0 %v5824
        %7265 = vmatprep.subr.bf16.mxu0 %v5833
        %7266 = vmatpush1.bf16.msra.mxu0 %v5832
        %7267 = vmatprep.subr.bf16.mxu0 %v5841
        %7268 = vmatpush1.bf16.msra.mxu0 %v5840
        %7269 = vmatprep.subr.bf16.mxu0 %v5849
        %7270 = vmatpush1.bf16.msra.mxu0 %v5848
        %7271 = vmatprep.subr.bf16.mxu0 %v5857
        %7272 = vmatpush1.bf16.msra.mxu0 %v5856
        %7273 = vmatprep.subr.bf16.mxu0 %v5865
        %7274 = vmatpush1.bf16.msra.mxu0 %v5864
        %7275 = vmatprep.subr.bf16.mxu0 %v5873
        %7276 = vmatpush1.bf16.msra.mxu0 %v5872
        %7277 = vmatprep.subr.bf16.mxu0 %v5881
        %7278 = vmatpush1.bf16.msra.mxu0 %v5880
        %7279 = vmatprep.subr.bf16.mxu0 %v5889
        %7280 = vmatpush1.bf16.msra.mxu0 %v5888
        %7281 = vmatprep.subr.bf16.mxu0 %v5897
        %7282 = vmatpush1.bf16.msra.mxu0 %v5896
        %7283 = vmatprep.subr.bf16.mxu0 %v5905
        %7284 = vmatpush1.bf16.msra.mxu0 %v5904
        %7285 = vmatprep.subr.bf16.mxu0 %v5913
        %7286 = vmatpush1.bf16.msra.mxu0 %v5912
        %7287 = vmatprep.subr.bf16.mxu0 %v5921
        %7288 = vmatpush1.bf16.msra.mxu0 %v5920
        %7289 = vmatprep.subr.bf16.mxu0 %v5929
        %7290 = vmatpush1.bf16.msra.mxu0 %v5928
        %7291 = vmatprep.subr.bf16.mxu0 %v5937
        %7292 = vmatpush1.bf16.msra.mxu0 %v5936
        %7293 = vmatprep.subr.bf16.mxu0 %v5945
        %7294 = vmatpush1.bf16.msra.mxu0 %v5944
        %7295 = vmatprep.mubr.bf16.mxu0 %v831
        %7296 = vmatmul.mubr.bf16.gmra.mrb[0].mxu0 %v830
        %v7297 = vpop.f32.mrb[0].mxu0
        %v7298 = vadd.f32 %v7257, %v7297
        %v7299 = vpop.f32.mrb[0].mxu0
        %v7300 = vadd.f32 %v7259, %v7299
        %v7301 = vpop.f32.mrb[0].mxu0
        %v7302 = vpop.f32.mrb[0].mxu0
        %7303 = vdwg.mxu0
        %7304 = vmatprep.subr.bf16.mxu0 %v4931
        %7305 = vmatpush1.bf16.msra.mxu0 %v4930
        %7306 = vmatprep.subr.bf16.mxu0 %v4939
        %7307 = vmatpush1.bf16.msra.mxu0 %v4938
        %7308 = vmatprep.subr.bf16.mxu0 %v4947
        %7309 = vmatpush1.bf16.msra.mxu0 %v4946
        %7310 = vmatprep.subr.bf16.mxu0 %v4955
        %7311 = vmatpush1.bf16.msra.mxu0 %v4954
        %7312 = vmatprep.subr.bf16.mxu0 %v4963
        %7313 = vmatpush1.bf16.msra.mxu0 %v4962
        %7314 = vmatprep.subr.bf16.mxu0 %v4971
        %7315 = vmatpush1.bf16.msra.mxu0 %v4970
        %7316 = vmatprep.subr.bf16.mxu0 %v4979
        %7317 = vmatpush1.bf16.msra.mxu0 %v4978
        %7318 = vmatprep.subr.bf16.mxu0 %v4987
        %7319 = vmatpush1.bf16.msra.mxu0 %v4986
        %7320 = vmatprep.subr.bf16.mxu0 %v4995
        %7321 = vmatpush1.bf16.msra.mxu0 %v4994
        %7322 = vmatprep.subr.bf16.mxu0 %v5003
        %7323 = vmatpush1.bf16.msra.mxu0 %v5002
        %7324 = vmatprep.subr.bf16.mxu0 %v5011
        %7325 = vmatpush1.bf16.msra.mxu0 %v5010
        %7326 = vmatprep.subr.bf16.mxu0 %v5019
        %7327 = vmatpush1.bf16.msra.mxu0 %v5018
        %7328 = vmatprep.subr.bf16.mxu0 %v5027
        %7329 = vmatpush1.bf16.msra.mxu0 %v5026
        %7330 = vmatprep.subr.bf16.mxu0 %v5035
        %7331 = vmatpush1.bf16.msra.mxu0 %v5034
        %7332 = vmatprep.subr.bf16.mxu0 %v5043
        %7333 = vmatpush1.bf16.msra.mxu0 %v5042
        %7334 = vmatprep.subr.bf16.mxu0 %v5051
        %7335 = vmatpush1.bf16.msra.mxu0 %v5050
        %7336 = vmatprep.mubr.bf16.mxu0 %v817
        %7337 = vmatmul.mubr.bf16.gmra.mrb[0].mxu0 %v816
        %v7338 = vpop.f32.mrb[0].mxu0
        %v7339 = vadd.f32 0.0, %v7338
        %v7340 = vpop.f32.mrb[0].mxu0
        %v7341 = vadd.f32 0.0, %v7340
        %v7342 = vpop.f32.mrb[0].mxu0
        %v7343 = vpop.f32.mrb[0].mxu0
        %7344 = vdwg.mxu0
        %7345 = vmatprep.subr.bf16.mxu0 %v5059
        %7346 = vmatpush1.bf16.msra.mxu0 %v5058
        %7347 = vmatprep.subr.bf16.mxu0 %v5067
        %7348 = vmatpush1.bf16.msra.mxu0 %v5066
        %7349 = vmatprep.subr.bf16.mxu0 %v5075
        %7350 = vmatpush1.bf16.msra.mxu0 %v5074
        %7351 = vmatprep.subr.bf16.mxu0 %v5083
        %7352 = vmatpush1.bf16.msra.mxu0 %v5082
        %7353 = vmatprep.subr.bf16.mxu0 %v5091
        %7354 = vmatpush1.bf16.msra.mxu0 %v5090
        %7355 = vmatprep.subr.bf16.mxu0 %v5099
        %7356 = vmatpush1.bf16.msra.mxu0 %v5098
        %7357 = vmatprep.subr.bf16.mxu0 %v5107
        %7358 = vmatpush1.bf16.msra.mxu0 %v5106
        %7359 = vmatprep.subr.bf16.mxu0 %v5115
        %7360 = vmatpush1.bf16.msra.mxu0 %v5114
        %7361 = vmatprep.subr.bf16.mxu0 %v5123
        %7362 = vmatpush1.bf16.msra.mxu0 %v5122
        %7363 = vmatprep.subr.bf16.mxu0 %v5131
        %7364 = vmatpush1.bf16.msra.mxu0 %v5130
        %7365 = vmatprep.subr.bf16.mxu0 %v5139
        %7366 = vmatpush1.bf16.msra.mxu0 %v5138
        %7367 = vmatprep.subr.bf16.mxu0 %v5147
        %7368 = vmatpush1.bf16.msra.mxu0 %v5146
        %7369 = vmatprep.subr.bf16.mxu0 %v5155
        %7370 = vmatpush1.bf16.msra.mxu0 %v5154
        %7371 = vmatprep.subr.bf16.mxu0 %v5163
        %7372 = vmatpush1.bf16.msra.mxu0 %v5162
        %7373 = vmatprep.subr.bf16.mxu0 %v5171
        %7374 = vmatpush1.bf16.msra.mxu0 %v5170
        %7375 = vmatprep.subr.bf16.mxu0 %v5179
        %7376 = vmatpush1.bf16.msra.mxu0 %v5178
        %7377 = vmatprep.mubr.bf16.mxu0 %v819
        %7378 = vmatmul.mubr.bf16.gmra.mrb[0].mxu0 %v818
        %v7379 = vpop.f32.mrb[0].mxu0
        %v7380 = vadd.f32 %v7339, %v7379
        %v7381 = vpop.f32.mrb[0].mxu0
        %v7382 = vadd.f32 %v7341, %v7381
        %v7383 = vpop.f32.mrb[0].mxu0
        %v7384 = vpop.f32.mrb[0].mxu0
        %7385 = vdwg.mxu0
        %7386 = vmatprep.subr.bf16.mxu0 %v5187
        %7387 = vmatpush1.bf16.msra.mxu0 %v5186
        %7388 = vmatprep.subr.bf16.mxu0 %v5195
        %7389 = vmatpush1.bf16.msra.mxu0 %v5194
        %7390 = vmatprep.subr.bf16.mxu0 %v5203
        %7391 = vmatpush1.bf16.msra.mxu0 %v5202
        %7392 = vmatprep.subr.bf16.mxu0 %v5211
        %7393 = vmatpush1.bf16.msra.mxu0 %v5210
        %7394 = vmatprep.subr.bf16.mxu0 %v5219
        %7395 = vmatpush1.bf16.msra.mxu0 %v5218
        %7396 = vmatprep.subr.bf16.mxu0 %v5227
        %7397 = vmatpush1.bf16.msra.mxu0 %v5226
        %7398 = vmatprep.subr.bf16.mxu0 %v5235
        %7399 = vmatpush1.bf16.msra.mxu0 %v5234
        %7400 = vmatprep.subr.bf16.mxu0 %v5243
        %7401 = vmatpush1.bf16.msra.mxu0 %v5242
        %7402 = vmatprep.subr.bf16.mxu0 %v5251
        %7403 = vmatpush1.bf16.msra.mxu0 %v5250
        %7404 = vmatprep.subr.bf16.mxu0 %v5259
        %7405 = vmatpush1.bf16.msra.mxu0 %v5258
        %7406 = vmatprep.subr.bf16.mxu0 %v5267
        %7407 = vmatpush1.bf16.msra.mxu0 %v5266
        %7408 = vmatprep.subr.bf16.mxu0 %v5275
        %7409 = vmatpush1.bf16.msra.mxu0 %v5274
        %7410 = vmatprep.subr.bf16.mxu0 %v5283
        %7411 = vmatpush1.bf16.msra.mxu0 %v5282
        %7412 = vmatprep.subr.bf16.mxu0 %v5291
        %7413 = vmatpush1.bf16.msra.mxu0 %v5290
        %7414 = vmatprep.subr.bf16.mxu0 %v5299
        %7415 = vmatpush1.bf16.msra.mxu0 %v5298
        %7416 = vmatprep.subr.bf16.mxu0 %v5307
        %7417 = vmatpush1.bf16.msra.mxu0 %v5306
        %7418 = vmatprep.mubr.bf16.mxu0 %v821
        %7419 = vmatmul.mubr.bf16.gmra.mrb[0].mxu0 %v820
        %v7420 = vpop.f32.mrb[0].mxu0
        %v7421 = vadd.f32 %v7380, %v7420
        %v7422 = vpop.f32.mrb[0].mxu0
        %v7423 = vadd.f32 %v7382, %v7422
        %v7424 = vpop.f32.mrb[0].mxu0
        %v7425 = vpop.f32.mrb[0].mxu0
        %7426 = vdwg.mxu0
        %7427 = vmatprep.subr.bf16.mxu0 %v5315
        %7428 = vmatpush1.bf16.msra.mxu0 %v5314
        %7429 = vmatprep.subr.bf16.mxu0 %v5323
        %7430 = vmatpush1.bf16.msra.mxu0 %v5322
        %7431 = vmatprep.subr.bf16.mxu0 %v5331
        %7432 = vmatpush1.bf16.msra.mxu0 %v5330
        %7433 = vmatprep.subr.bf16.mxu0 %v5339
        %7434 = vmatpush1.bf16.msra.mxu0 %v5338
        %7435 = vmatprep.subr.bf16.mxu0 %v5347
        %7436 = vmatpush1.bf16.msra.mxu0 %v5346
        %7437 = vmatprep.subr.bf16.mxu0 %v5355
        %7438 = vmatpush1.bf16.msra.mxu0 %v5354
        %7439 = vmatprep.subr.bf16.mxu0 %v5363
        %7440 = vmatpush1.bf16.msra.mxu0 %v5362
        %7441 = vmatprep.subr.bf16.mxu0 %v5371
        %7442 = vmatpush1.bf16.msra.mxu0 %v5370
        %7443 = vmatprep.subr.bf16.mxu0 %v5379
        %7444 = vmatpush1.bf16.msra.mxu0 %v5378
        %7445 = vmatprep.subr.bf16.mxu0 %v5387
        %7446 = vmatpush1.bf16.msra.mxu0 %v5386
        %7447 = vmatprep.subr.bf16.mxu0 %v5395
        %7448 = vmatpush1.bf16.msra.mxu0 %v5394
        %7449 = vmatprep.subr.bf16.mxu0 %v5403
        %7450 = vmatpush1.bf16.msra.mxu0 %v5402
        %7451 = vmatprep.subr.bf16.mxu0 %v5411
        %7452 = vmatpush1.bf16.msra.mxu0 %v5410
        %7453 = vmatprep.subr.bf16.mxu0 %v5419
        %7454 = vmatpush1.bf16.msra.mxu0 %v5418
        %7455 = vmatprep.subr.bf16.mxu0 %v5427
        %7456 = vmatpush1.bf16.msra.mxu0 %v5426
        %7457 = vmatprep.subr.bf16.mxu0 %v5435
        %7458 = vmatpush1.bf16.msra.mxu0 %v5434
        %7459 = vmatprep.mubr.bf16.mxu0 %v823
        %7460 = vmatmul.mubr.bf16.gmra.mrb[0].mxu0 %v822
        %v7461 = vpop.f32.mrb[0].mxu0
        %v7462 = vadd.f32 %v7421, %v7461
        %v7463 = vpop.f32.mrb[0].mxu0
        %v7464 = vadd.f32 %v7423, %v7463
        %v7465 = vpop.f32.mrb[0].mxu0
        %v7466 = vpop.f32.mrb[0].mxu0
        %7467 = vdwg.mxu0
        %7468 = vmatprep.subr.bf16.mxu0 %v5443
        %7469 = vmatpush1.bf16.msra.mxu0 %v5442
        %7470 = vmatprep.subr.bf16.mxu0 %v5451
        %7471 = vmatpush1.bf16.msra.mxu0 %v5450
        %7472 = vmatprep.subr.bf16.mxu0 %v5459
        %7473 = vmatpush1.bf16.msra.mxu0 %v5458
        %7474 = vmatprep.subr.bf16.mxu0 %v5467
        %7475 = vmatpush1.bf16.msra.mxu0 %v5466
        %7476 = vmatprep.subr.bf16.mxu0 %v5475
        %7477 = vmatpush1.bf16.msra.mxu0 %v5474
        %7478 = vmatprep.subr.bf16.mxu0 %v5483
        %7479 = vmatpush1.bf16.msra.mxu0 %v5482
        %7480 = vmatprep.subr.bf16.mxu0 %v5491
        %7481 = vmatpush1.bf16.msra.mxu0 %v5490
        %7482 = vmatprep.subr.bf16.mxu0 %v5499
        %7483 = vmatpush1.bf16.msra.mxu0 %v5498
        %7484 = vmatprep.subr.bf16.mxu0 %v5507
        %7485 = vmatpush1.bf16.msra.mxu0 %v5506
        %7486 = vmatprep.subr.bf16.mxu0 %v5515
        %7487 = vmatpush1.bf16.msra.mxu0 %v5514
        %7488 = vmatprep.subr.bf16.mxu0 %v5523
        %7489 = vmatpush1.bf16.msra.mxu0 %v5522
        %7490 = vmatprep.subr.bf16.mxu0 %v5531
        %7491 = vmatpush1.bf16.msra.mxu0 %v5530
        %7492 = vmatprep.subr.bf16.mxu0 %v5539
        %7493 = vmatpush1.bf16.msra.mxu0 %v5538
        %7494 = vmatprep.subr.bf16.mxu0 %v5547
        %7495 = vmatpush1.bf16.msra.mxu0 %v5546
        %7496 = vmatprep.subr.bf16.mxu0 %v5555
        %7497 = vmatpush1.bf16.msra.mxu0 %v5554
        %7498 = vmatprep.subr.bf16.mxu0 %v5563
        %7499 = vmatpush1.bf16.msra.mxu0 %v5562
        %7500 = vmatprep.mubr.bf16.mxu0 %v825
        %7501 = vmatmul.mubr.bf16.gmra.mrb[0].mxu0 %v824
        %v7502 = vpop.f32.mrb[0].mxu0
        %v7503 = vadd.f32 %v7462, %v7502
        %v7504 = vpop.f32.mrb[0].mxu0
        %v7505 = vadd.f32 %v7464, %v7504
        %v7506 = vpop.f32.mrb[0].mxu0
        %v7507 = vpop.f32.mrb[0].mxu0
        %7508 = vdwg.mxu0
        %7509 = vmatprep.subr.bf16.mxu0 %v5571
        %7510 = vmatpush1.bf16.msra.mxu0 %v5570
        %7511 = vmatprep.subr.bf16.mxu0 %v5579
        %7512 = vmatpush1.bf16.msra.mxu0 %v5578
        %7513 = vmatprep.subr.bf16.mxu0 %v5587
        %7514 = vmatpush1.bf16.msra.mxu0 %v5586
        %7515 = vmatprep.subr.bf16.mxu0 %v5595
        %7516 = vmatpush1.bf16.msra.mxu0 %v5594
        %7517 = vmatprep.subr.bf16.mxu0 %v5603
        %7518 = vmatpush1.bf16.msra.mxu0 %v5602
        %7519 = vmatprep.subr.bf16.mxu0 %v5611
        %7520 = vmatpush1.bf16.msra.mxu0 %v5610
        %7521 = vmatprep.subr.bf16.mxu0 %v5619
        %7522 = vmatpush1.bf16.msra.mxu0 %v5618
        %7523 = vmatprep.subr.bf16.mxu0 %v5627
        %7524 = vmatpush1.bf16.msra.mxu0 %v5626
        %7525 = vmatprep.subr.bf16.mxu0 %v5635
        %7526 = vmatpush1.bf16.msra.mxu0 %v5634
        %7527 = vmatprep.subr.bf16.mxu0 %v5643
        %7528 = vmatpush1.bf16.msra.mxu0 %v5642
        %7529 = vmatprep.subr.bf16.mxu0 %v5651
        %7530 = vmatpush1.bf16.msra.mxu0 %v5650
        %7531 = vmatprep.subr.bf16.mxu0 %v5659
        %7532 = vmatpush1.bf16.msra.mxu0 %v5658
        %7533 = vmatprep.subr.bf16.mxu0 %v5667
        %7534 = vmatpush1.bf16.msra.mxu0 %v5666
        %7535 = vmatprep.subr.bf16.mxu0 %v5675
        %7536 = vmatpush1.bf16.msra.mxu0 %v5674
        %7537 = vmatprep.subr.bf16.mxu0 %v5683
        %7538 = vmatpush1.bf16.msra.mxu0 %v5682
        %7539 = vmatprep.subr.bf16.mxu0 %v5691
        %7540 = vmatpush1.bf16.msra.mxu0 %v5690
        %7541 = vmatprep.mubr.bf16.mxu0 %v827
        %7542 = vmatmul.mubr.bf16.gmra.mrb[0].mxu0 %v826
        %v7543 = vpop.f32.mrb[0].mxu0
        %v7544 = vadd.f32 %v7503, %v7543
        %v7545 = vpop.f32.mrb[0].mxu0
        %v7546 = vadd.f32 %v7505, %v7545
        %v7547 = vpop.f32.mrb[0].mxu0
        %v7548 = vpop.f32.mrb[0].mxu0
        %7549 = vdwg.mxu0
        %7550 = vmatprep.subr.bf16.mxu0 %v5699
        %7551 = vmatpush1.bf16.msra.mxu0 %v5698
        %7552 = vmatprep.subr.bf16.mxu0 %v5707
        %7553 = vmatpush1.bf16.msra.mxu0 %v5706
        %7554 = vmatprep.subr.bf16.mxu0 %v5715
        %7555 = vmatpush1.bf16.msra.mxu0 %v5714
        %7556 = vmatprep.subr.bf16.mxu0 %v5723
        %7557 = vmatpush1.bf16.msra.mxu0 %v5722
        %7558 = vmatprep.subr.bf16.mxu0 %v5731
        %7559 = vmatpush1.bf16.msra.mxu0 %v5730
        %7560 = vmatprep.subr.bf16.mxu0 %v5739
        %7561 = vmatpush1.bf16.msra.mxu0 %v5738
        %7562 = vmatprep.subr.bf16.mxu0 %v5747
        %7563 = vmatpush1.bf16.msra.mxu0 %v5746
        %7564 = vmatprep.subr.bf16.mxu0 %v5755
        %7565 = vmatpush1.bf16.msra.mxu0 %v5754
        %7566 = vmatprep.subr.bf16.mxu0 %v5763
        %7567 = vmatpush1.bf16.msra.mxu0 %v5762
        %7568 = vmatprep.subr.bf16.mxu0 %v5771
        %7569 = vmatpush1.bf16.msra.mxu0 %v5770
        %7570 = vmatprep.subr.bf16.mxu0 %v5779
        %7571 = vmatpush1.bf16.msra.mxu0 %v5778
        %7572 = vmatprep.subr.bf16.mxu0 %v5787
        %7573 = vmatpush1.bf16.msra.mxu0 %v5786
        %7574 = vmatprep.subr.bf16.mxu0 %v5795
        %7575 = vmatpush1.bf16.msra.mxu0 %v5794
        %7576 = vmatprep.subr.bf16.mxu0 %v5803
        %7577 = vmatpush1.bf16.msra.mxu0 %v5802
        %7578 = vmatprep.subr.bf16.mxu0 %v5811
        %7579 = vmatpush1.bf16.msra.mxu0 %v5810
        %7580 = vmatprep.subr.bf16.mxu0 %v5819
        %7581 = vmatpush1.bf16.msra.mxu0 %v5818
        %7582 = vmatprep.mubr.bf16.mxu0 %v829
        %7583 = vmatmul.mubr.bf16.gmra.mrb[0].mxu0 %v828
        %v7584 = vpop.f32.mrb[0].mxu0
        %v7585 = vadd.f32 %v7544, %v7584
        %v7586 = vpop.f32.mrb[0].mxu0
        %v7587 = vadd.f32 %v7546, %v7586
        %v7588 = vpop.f32.mrb[0].mxu0
        %v7589 = vpop.f32.mrb[0].mxu0
        %7590 = vdwg.mxu0
        %7591 = vmatprep.subr.bf16.mxu0 %v5827
        %7592 = vmatpush1.bf16.msra.mxu0 %v5826
        %7593 = vmatprep.subr.bf16.mxu0 %v5835
        %7594 = vmatpush1.bf16.msra.mxu0 %v5834
        %7595 = vmatprep.subr.bf16.mxu0 %v5843
        %7596 = vmatpush1.bf16.msra.mxu0 %v5842
        %7597 = vmatprep.subr.bf16.mxu0 %v5851
        %7598 = vmatpush1.bf16.msra.mxu0 %v5850
        %7599 = vmatprep.subr.bf16.mxu0 %v5859
        %7600 = vmatpush1.bf16.msra.mxu0 %v5858
        %7601 = vmatprep.subr.bf16.mxu0 %v5867
        %7602 = vmatpush1.bf16.msra.mxu0 %v5866
        %7603 = vmatprep.subr.bf16.mxu0 %v5875
        %7604 = vmatpush1.bf16.msra.mxu0 %v5874
        %7605 = vmatprep.subr.bf16.mxu0 %v5883
        %7606 = vmatpush1.bf16.msra.mxu0 %v5882
        %7607 = vmatprep.subr.bf16.mxu0 %v5891
        %7608 = vmatpush1.bf16.msra.mxu0 %v5890
        %7609 = vmatprep.subr.bf16.mxu0 %v5899
        %7610 = vmatpush1.bf16.msra.mxu0 %v5898
        %7611 = vmatprep.subr.bf16.mxu0 %v5907
        %7612 = vmatpush1.bf16.msra.mxu0 %v5906
        %7613 = vmatprep.subr.bf16.mxu0 %v5915
        %7614 = vmatpush1.bf16.msra.mxu0 %v5914
        %7615 = vmatprep.subr.bf16.mxu0 %v5923
        %7616 = vmatpush1.bf16.msra.mxu0 %v5922
        %7617 = vmatprep.subr.bf16.mxu0 %v5931
        %7618 = vmatpush1.bf16.msra.mxu0 %v5930
        %7619 = vmatprep.subr.bf16.mxu0 %v5939
        %7620 = vmatpush1.bf16.msra.mxu0 %v5938
        %7621 = vmatprep.subr.bf16.mxu0 %v5947
        %7622 = vmatpush1.bf16.msra.mxu0 %v5946
        %7623 = vmatprep.mubr.bf16.mxu0 %v831
        %7624 = vmatmul.mubr.bf16.gmra.mrb[0].mxu0 %v830
        %v7625 = vpop.f32.mrb[0].mxu0
        %v7626 = vadd.f32 %v7585, %v7625
        %v7627 = vpop.f32.mrb[0].mxu0
        %v7628 = vadd.f32 %v7587, %v7627
        %v7629 = vpop.f32.mrb[0].mxu0
        %v7630 = vpop.f32.mrb[0].mxu0
        %7631 = vdwg.mxu0
        %7632 = vmatprep.subr.bf16.mxu0 %v4933
        %7633 = vmatpush1.bf16.msra.mxu0 %v4932
        %7634 = vmatprep.subr.bf16.mxu0 %v4941
        %7635 = vmatpush1.bf16.msra.mxu0 %v4940
        %7636 = vmatprep.subr.bf16.mxu0 %v4949
        %7637 = vmatpush1.bf16.msra.mxu0 %v4948
        %7638 = vmatprep.subr.bf16.mxu0 %v4957
        %7639 = vmatpush1.bf16.msra.mxu0 %v4956
        %7640 = vmatprep.subr.bf16.mxu0 %v4965
        %7641 = vmatpush1.bf16.msra.mxu0 %v4964
        %7642 = vmatprep.subr.bf16.mxu0 %v4973
        %7643 = vmatpush1.bf16.msra.mxu0 %v4972
        %7644 = vmatprep.subr.bf16.mxu0 %v4981
        %7645 = vmatpush1.bf16.msra.mxu0 %v4980
        %7646 = vmatprep.subr.bf16.mxu0 %v4989
        %7647 = vmatpush1.bf16.msra.mxu0 %v4988
        %7648 = vmatprep.subr.bf16.mxu0 %v4997
        %7649 = vmatpush1.bf16.msra.mxu0 %v4996
        %7650 = vmatprep.subr.bf16.mxu0 %v5005
        %7651 = vmatpush1.bf16.msra.mxu0 %v5004
        %7652 = vmatprep.subr.bf16.mxu0 %v5013
        %7653 = vmatpush1.bf16.msra.mxu0 %v5012
        %7654 = vmatprep.subr.bf16.mxu0 %v5021
        %7655 = vmatpush1.bf16.msra.mxu0 %v5020
        %7656 = vmatprep.subr.bf16.mxu0 %v5029
        %7657 = vmatpush1.bf16.msra.mxu0 %v5028
        %7658 = vmatprep.subr.bf16.mxu0 %v5037
        %7659 = vmatpush1.bf16.msra.mxu0 %v5036
        %7660 = vmatprep.subr.bf16.mxu0 %v5045
        %7661 = vmatpush1.bf16.msra.mxu0 %v5044
        %7662 = vmatprep.subr.bf16.mxu0 %v5053
        %7663 = vmatpush1.bf16.msra.mxu0 %v5052
        %7664 = vmatprep.mubr.bf16.mxu0 %v817
        %7665 = vmatmul.mubr.bf16.gmra.mrb[0].mxu0 %v816
        %v7666 = vpop.f32.mrb[0].mxu0
        %v7667 = vadd.f32 0.0, %v7666
        %v7668 = vpop.f32.mrb[0].mxu0
        %v7669 = vadd.f32 0.0, %v7668
        %v7670 = vpop.f32.mrb[0].mxu0
        %v7671 = vpop.f32.mrb[0].mxu0
        %7672 = vdwg.mxu0
        %7673 = vmatprep.subr.bf16.mxu0 %v5061
        %7674 = vmatpush1.bf16.msra.mxu0 %v5060
        %7675 = vmatprep.subr.bf16.mxu0 %v5069
        %7676 = vmatpush1.bf16.msra.mxu0 %v5068
        %7677 = vmatprep.subr.bf16.mxu0 %v5077
        %7678 = vmatpush1.bf16.msra.mxu0 %v5076
        %7679 = vmatprep.subr.bf16.mxu0 %v5085
        %7680 = vmatpush1.bf16.msra.mxu0 %v5084
        %7681 = vmatprep.subr.bf16.mxu0 %v5093
        %7682 = vmatpush1.bf16.msra.mxu0 %v5092
        %7683 = vmatprep.subr.bf16.mxu0 %v5101
        %7684 = vmatpush1.bf16.msra.mxu0 %v5100
        %7685 = vmatprep.subr.bf16.mxu0 %v5109
        %7686 = vmatpush1.bf16.msra.mxu0 %v5108
        %7687 = vmatprep.subr.bf16.mxu0 %v5117
        %7688 = vmatpush1.bf16.msra.mxu0 %v5116
        %7689 = vmatprep.subr.bf16.mxu0 %v5125
        %7690 = vmatpush1.bf16.msra.mxu0 %v5124
        %7691 = vmatprep.subr.bf16.mxu0 %v5133
        %7692 = vmatpush1.bf16.msra.mxu0 %v5132
        %7693 = vmatprep.subr.bf16.mxu0 %v5141
        %7694 = vmatpush1.bf16.msra.mxu0 %v5140
        %7695 = vmatprep.subr.bf16.mxu0 %v5149
        %7696 = vmatpush1.bf16.msra.mxu0 %v5148
        %7697 = vmatprep.subr.bf16.mxu0 %v5157
        %7698 = vmatpush1.bf16.msra.mxu0 %v5156
        %7699 = vmatprep.subr.bf16.mxu0 %v5165
        %7700 = vmatpush1.bf16.msra.mxu0 %v5164
        %7701 = vmatprep.subr.bf16.mxu0 %v5173
        %7702 = vmatpush1.bf16.msra.mxu0 %v5172
        %7703 = vmatprep.subr.bf16.mxu0 %v5181
        %7704 = vmatpush1.bf16.msra.mxu0 %v5180
        %7705 = vmatprep.mubr.bf16.mxu0 %v819
        %7706 = vmatmul.mubr.bf16.gmra.mrb[0].mxu0 %v818
        %v7707 = vpop.f32.mrb[0].mxu0
        %v7708 = vadd.f32 %v7667, %v7707
        %v7709 = vpop.f32.mrb[0].mxu0
        %v7710 = vadd.f32 %v7669, %v7709
        %v7711 = vpop.f32.mrb[0].mxu0
        %v7712 = vpop.f32.mrb[0].mxu0
        %7713 = vdwg.mxu0
        %7714 = vmatprep.subr.bf16.mxu0 %v5189
        %7715 = vmatpush1.bf16.msra.mxu0 %v5188
        %7716 = vmatprep.subr.bf16.mxu0 %v5197
        %7717 = vmatpush1.bf16.msra.mxu0 %v5196
        %7718 = vmatprep.subr.bf16.mxu0 %v5205
        %7719 = vmatpush1.bf16.msra.mxu0 %v5204
        %7720 = vmatprep.subr.bf16.mxu0 %v5213
        %7721 = vmatpush1.bf16.msra.mxu0 %v5212
        %7722 = vmatprep.subr.bf16.mxu0 %v5221
        %7723 = vmatpush1.bf16.msra.mxu0 %v5220
        %7724 = vmatprep.subr.bf16.mxu0 %v5229
        %7725 = vmatpush1.bf16.msra.mxu0 %v5228
        %7726 = vmatprep.subr.bf16.mxu0 %v5237
        %7727 = vmatpush1.bf16.msra.mxu0 %v5236
        %7728 = vmatprep.subr.bf16.mxu0 %v5245
        %7729 = vmatpush1.bf16.msra.mxu0 %v5244
        %7730 = vmatprep.subr.bf16.mxu0 %v5253
        %7731 = vmatpush1.bf16.msra.mxu0 %v5252
        %7732 = vmatprep.subr.bf16.mxu0 %v5261
        %7733 = vmatpush1.bf16.msra.mxu0 %v5260
        %7734 = vmatprep.subr.bf16.mxu0 %v5269
        %7735 = vmatpush1.bf16.msra.mxu0 %v5268
        %7736 = vmatprep.subr.bf16.mxu0 %v5277
        %7737 = vmatpush1.bf16.msra.mxu0 %v5276
        %7738 = vmatprep.subr.bf16.mxu0 %v5285
        %7739 = vmatpush1.bf16.msra.mxu0 %v5284
        %7740 = vmatprep.subr.bf16.mxu0 %v5293
        %7741 = vmatpush1.bf16.msra.mxu0 %v5292
        %7742 = vmatprep.subr.bf16.mxu0 %v5301
        %7743 = vmatpush1.bf16.msra.mxu0 %v5300
        %7744 = vmatprep.subr.bf16.mxu0 %v5309
        %7745 = vmatpush1.bf16.msra.mxu0 %v5308
        %7746 = vmatprep.mubr.bf16.mxu0 %v821
        %7747 = vmatmul.mubr.bf16.gmra.mrb[0].mxu0 %v820
        %v7748 = vpop.f32.mrb[0].mxu0
        %v7749 = vadd.f32 %v7708, %v7748
        %v7750 = vpop.f32.mrb[0].mxu0
        %v7751 = vadd.f32 %v7710, %v7750
        %v7752 = vpop.f32.mrb[0].mxu0
        %v7753 = vpop.f32.mrb[0].mxu0
        %7754 = vdwg.mxu0
        %7755 = vmatprep.subr.bf16.mxu0 %v5317
        %7756 = vmatpush1.bf16.msra.mxu0 %v5316
        %7757 = vmatprep.subr.bf16.mxu0 %v5325
        %7758 = vmatpush1.bf16.msra.mxu0 %v5324
        %7759 = vmatprep.subr.bf16.mxu0 %v5333
        %7760 = vmatpush1.bf16.msra.mxu0 %v5332
        %7761 = vmatprep.subr.bf16.mxu0 %v5341
        %7762 = vmatpush1.bf16.msra.mxu0 %v5340
        %7763 = vmatprep.subr.bf16.mxu0 %v5349
        %7764 = vmatpush1.bf16.msra.mxu0 %v5348
        %7765 = vmatprep.subr.bf16.mxu0 %v5357
        %7766 = vmatpush1.bf16.msra.mxu0 %v5356
        %7767 = vmatprep.subr.bf16.mxu0 %v5365
        %7768 = vmatpush1.bf16.msra.mxu0 %v5364
        %7769 = vmatprep.subr.bf16.mxu0 %v5373
        %7770 = vmatpush1.bf16.msra.mxu0 %v5372
        %7771 = vmatprep.subr.bf16.mxu0 %v5381
        %7772 = vmatpush1.bf16.msra.mxu0 %v5380
        %7773 = vmatprep.subr.bf16.mxu0 %v5389
        %7774 = vmatpush1.bf16.msra.mxu0 %v5388
        %7775 = vmatprep.subr.bf16.mxu0 %v5397
        %7776 = vmatpush1.bf16.msra.mxu0 %v5396
        %7777 = vmatprep.subr.bf16.mxu0 %v5405
        %7778 = vmatpush1.bf16.msra.mxu0 %v5404
        %7779 = vmatprep.subr.bf16.mxu0 %v5413
        %7780 = vmatpush1.bf16.msra.mxu0 %v5412
        %7781 = vmatprep.subr.bf16.mxu0 %v5421
        %7782 = vmatpush1.bf16.msra.mxu0 %v5420
        %7783 = vmatprep.subr.bf16.mxu0 %v5429
        %7784 = vmatpush1.bf16.msra.mxu0 %v5428
        %7785 = vmatprep.subr.bf16.mxu0 %v5437
        %7786 = vmatpush1.bf16.msra.mxu0 %v5436
        %7787 = vmatprep.mubr.bf16.mxu0 %v823
        %7788 = vmatmul.mubr.bf16.gmra.mrb[0].mxu0 %v822
        %v7789 = vpop.f32.mrb[0].mxu0
        %v7790 = vadd.f32 %v7749, %v7789
        %v7791 = vpop.f32.mrb[0].mxu0
        %v7792 = vadd.f32 %v7751, %v7791
        %v7793 = vpop.f32.mrb[0].mxu0
        %v7794 = vpop.f32.mrb[0].mxu0
        %7795 = vdwg.mxu0
        %7796 = vmatprep.subr.bf16.mxu0 %v5445
        %7797 = vmatpush1.bf16.msra.mxu0 %v5444
        %7798 = vmatprep.subr.bf16.mxu0 %v5453
        %7799 = vmatpush1.bf16.msra.mxu0 %v5452
        %7800 = vmatprep.subr.bf16.mxu0 %v5461
        %7801 = vmatpush1.bf16.msra.mxu0 %v5460
        %7802 = vmatprep.subr.bf16.mxu0 %v5469
        %7803 = vmatpush1.bf16.msra.mxu0 %v5468
        %7804 = vmatprep.subr.bf16.mxu0 %v5477
        %7805 = vmatpush1.bf16.msra.mxu0 %v5476
        %7806 = vmatprep.subr.bf16.mxu0 %v5485
        %7807 = vmatpush1.bf16.msra.mxu0 %v5484
        %7808 = vmatprep.subr.bf16.mxu0 %v5493
        %7809 = vmatpush1.bf16.msra.mxu0 %v5492
        %7810 = vmatprep.subr.bf16.mxu0 %v5501
        %7811 = vmatpush1.bf16.msra.mxu0 %v5500
        %7812 = vmatprep.subr.bf16.mxu0 %v5509
        %7813 = vmatpush1.bf16.msra.mxu0 %v5508
        %7814 = vmatprep.subr.bf16.mxu0 %v5517
        %7815 = vmatpush1.bf16.msra.mxu0 %v5516
        %7816 = vmatprep.subr.bf16.mxu0 %v5525
        %7817 = vmatpush1.bf16.msra.mxu0 %v5524
        %7818 = vmatprep.subr.bf16.mxu0 %v5533
        %7819 = vmatpush1.bf16.msra.mxu0 %v5532
        %7820 = vmatprep.subr.bf16.mxu0 %v5541
        %7821 = vmatpush1.bf16.msra.mxu0 %v5540
        %7822 = vmatprep.subr.bf16.mxu0 %v5549
        %7823 = vmatpush1.bf16.msra.mxu0 %v5548
        %7824 = vmatprep.subr.bf16.mxu0 %v5557
        %7825 = vmatpush1.bf16.msra.mxu0 %v5556
        %7826 = vmatprep.subr.bf16.mxu0 %v5565
        %7827 = vmatpush1.bf16.msra.mxu0 %v5564
        %7828 = vmatprep.mubr.bf16.mxu0 %v825
        %7829 = vmatmul.mubr.bf16.gmra.mrb[0].mxu0 %v824
        %v7830 = vpop.f32.mrb[0].mxu0
        %v7831 = vadd.f32 %v7790, %v7830
        %v7832 = vpop.f32.mrb[0].mxu0
        %v7833 = vadd.f32 %v7792, %v7832
        %v7834 = vpop.f32.mrb[0].mxu0
        %v7835 = vpop.f32.mrb[0].mxu0
        %7836 = vdwg.mxu0
        %7837 = vmatprep.subr.bf16.mxu0 %v5573
        %7838 = vmatpush1.bf16.msra.mxu0 %v5572
        %7839 = vmatprep.subr.bf16.mxu0 %v5581
        %7840 = vmatpush1.bf16.msra.mxu0 %v5580
        %7841 = vmatprep.subr.bf16.mxu0 %v5589
        %7842 = vmatpush1.bf16.msra.mxu0 %v5588
        %7843 = vmatprep.subr.bf16.mxu0 %v5597
        %7844 = vmatpush1.bf16.msra.mxu0 %v5596
        %7845 = vmatprep.subr.bf16.mxu0 %v5605
        %7846 = vmatpush1.bf16.msra.mxu0 %v5604
        %7847 = vmatprep.subr.bf16.mxu0 %v5613
        %7848 = vmatpush1.bf16.msra.mxu0 %v5612
        %7849 = vmatprep.subr.bf16.mxu0 %v5621
        %7850 = vmatpush1.bf16.msra.mxu0 %v5620
        %7851 = vmatprep.subr.bf16.mxu0 %v5629
        %7852 = vmatpush1.bf16.msra.mxu0 %v5628
        %7853 = vmatprep.subr.bf16.mxu0 %v5637
        %7854 = vmatpush1.bf16.msra.mxu0 %v5636
        %7855 = vmatprep.subr.bf16.mxu0 %v5645
        %7856 = vmatpush1.bf16.msra.mxu0 %v5644
        %7857 = vmatprep.subr.bf16.mxu0 %v5653
        %7858 = vmatpush1.bf16.msra.mxu0 %v5652
        %7859 = vmatprep.subr.bf16.mxu0 %v5661
        %7860 = vmatpush1.bf16.msra.mxu0 %v5660
        %7861 = vmatprep.subr.bf16.mxu0 %v5669
        %7862 = vmatpush1.bf16.msra.mxu0 %v5668
        %7863 = vmatprep.subr.bf16.mxu0 %v5677
        %7864 = vmatpush1.bf16.msra.mxu0 %v5676
        %7865 = vmatprep.subr.bf16.mxu0 %v5685
        %7866 = vmatpush1.bf16.msra.mxu0 %v5684
        %7867 = vmatprep.subr.bf16.mxu0 %v5693
        %7868 = vmatpush1.bf16.msra.mxu0 %v5692
        %7869 = vmatprep.mubr.bf16.mxu0 %v827
        %7870 = vmatmul.mubr.bf16.gmra.mrb[0].mxu0 %v826
        %v7871 = vpop.f32.mrb[0].mxu0
        %v7872 = vadd.f32 %v7831, %v7871
        %v7873 = vpop.f32.mrb[0].mxu0
        %v7874 = vadd.f32 %v7833, %v7873
        %v7875 = vpop.f32.mrb[0].mxu0
        %v7876 = vpop.f32.mrb[0].mxu0
        %7877 = vdwg.mxu0
        %7878 = vmatprep.subr.bf16.mxu0 %v5701
        %7879 = vmatpush1.bf16.msra.mxu0 %v5700
        %7880 = vmatprep.subr.bf16.mxu0 %v5709
        %7881 = vmatpush1.bf16.msra.mxu0 %v5708
        %7882 = vmatprep.subr.bf16.mxu0 %v5717
        %7883 = vmatpush1.bf16.msra.mxu0 %v5716
        %7884 = vmatprep.subr.bf16.mxu0 %v5725
        %7885 = vmatpush1.bf16.msra.mxu0 %v5724
        %7886 = vmatprep.subr.bf16.mxu0 %v5733
        %7887 = vmatpush1.bf16.msra.mxu0 %v5732
        %7888 = vmatprep.subr.bf16.mxu0 %v5741
        %7889 = vmatpush1.bf16.msra.mxu0 %v5740
        %7890 = vmatprep.subr.bf16.mxu0 %v5749
        %7891 = vmatpush1.bf16.msra.mxu0 %v5748
        %7892 = vmatprep.subr.bf16.mxu0 %v5757
        %7893 = vmatpush1.bf16.msra.mxu0 %v5756
        %7894 = vmatprep.subr.bf16.mxu0 %v5765
        %7895 = vmatpush1.bf16.msra.mxu0 %v5764
        %7896 = vmatprep.subr.bf16.mxu0 %v5773
        %7897 = vmatpush1.bf16.msra.mxu0 %v5772
        %7898 = vmatprep.subr.bf16.mxu0 %v5781
        %7899 = vmatpush1.bf16.msra.mxu0 %v5780
        %7900 = vmatprep.subr.bf16.mxu0 %v5789
        %7901 = vmatpush1.bf16.msra.mxu0 %v5788
        %7902 = vmatprep.subr.bf16.mxu0 %v5797
        %7903 = vmatpush1.bf16.msra.mxu0 %v5796
        %7904 = vmatprep.subr.bf16.mxu0 %v5805
        %7905 = vmatpush1.bf16.msra.mxu0 %v5804
        %7906 = vmatprep.subr.bf16.mxu0 %v5813
        %7907 = vmatpush1.bf16.msra.mxu0 %v5812
        %7908 = vmatprep.subr.bf16.mxu0 %v5821
        %7909 = vmatpush1.bf16.msra.mxu0 %v5820
        %7910 = vmatprep.mubr.bf16.mxu0 %v829
        %7911 = vmatmul.mubr.bf16.gmra.mrb[0].mxu0 %v828
        %v7912 = vpop.f32.mrb[0].mxu0
        %v7913 = vadd.f32 %v7872, %v7912
        %v7914 = vpop.f32.mrb[0].mxu0
        %v7915 = vadd.f32 %v7874, %v7914
        %v7916 = vpop.f32.mrb[0].mxu0
        %v7917 = vpop.f32.mrb[0].mxu0
        %7918 = vdwg.mxu0
        %7919 = vmatprep.subr.bf16.mxu0 %v5829
        %7920 = vmatpush1.bf16.msra.mxu0 %v5828
        %7921 = vmatprep.subr.bf16.mxu0 %v5837
        %7922 = vmatpush1.bf16.msra.mxu0 %v5836
        %7923 = vmatprep.subr.bf16.mxu0 %v5845
        %7924 = vmatpush1.bf16.msra.mxu0 %v5844
        %7925 = vmatprep.subr.bf16.mxu0 %v5853
        %7926 = vmatpush1.bf16.msra.mxu0 %v5852
        %7927 = vmatprep.subr.bf16.mxu0 %v5861
        %7928 = vmatpush1.bf16.msra.mxu0 %v5860
        %7929 = vmatprep.subr.bf16.mxu0 %v5869
        %7930 = vmatpush1.bf16.msra.mxu0 %v5868
        %7931 = vmatprep.subr.bf16.mxu0 %v5877
        %7932 = vmatpush1.bf16.msra.mxu0 %v5876
        %7933 = vmatprep.subr.bf16.mxu0 %v5885
        %7934 = vmatpush1.bf16.msra.mxu0 %v5884
        %7935 = vmatprep.subr.bf16.mxu0 %v5893
        %7936 = vmatpush1.bf16.msra.mxu0 %v5892
        %7937 = vmatprep.subr.bf16.mxu0 %v5901
        %7938 = vmatpush1.bf16.msra.mxu0 %v5900
        %7939 = vmatprep.subr.bf16.mxu0 %v5909
        %7940 = vmatpush1.bf16.msra.mxu0 %v5908
        %7941 = vmatprep.subr.bf16.mxu0 %v5917
        %7942 = vmatpush1.bf16.msra.mxu0 %v5916
        %7943 = vmatprep.subr.bf16.mxu0 %v5925
        %7944 = vmatpush1.bf16.msra.mxu0 %v5924
        %7945 = vmatprep.subr.bf16.mxu0 %v5933
        %7946 = vmatpush1.bf16.msra.mxu0 %v5932
        %7947 = vmatprep.subr.bf16.mxu0 %v5941
        %7948 = vmatpush1.bf16.msra.mxu0 %v5940
        %7949 = vmatprep.subr.bf16.mxu0 %v5949
        %7950 = vmatpush1.bf16.msra.mxu0 %v5948
        %7951 = vmatprep.mubr.bf16.mxu0 %v831
        %7952 = vmatmul.mubr.bf16.gmra.mrb[0].mxu0 %v830
        %v7953 = vpop.f32.mrb[0].mxu0
        %v7954 = vadd.f32 %v7913, %v7953
        %v7955 = vpop.f32.mrb[0].mxu0
        %v7956 = vadd.f32 %v7915, %v7955
        %v7957 = vpop.f32.mrb[0].mxu0
        %v7958 = vpop.f32.mrb[0].mxu0
        %7959 = vdwg.mxu0
        %7960 = vmatprep.subr.bf16.mxu0 %v4935
        %7961 = vmatpush1.bf16.msra.mxu0 %v4934
        %7962 = vmatprep.subr.bf16.mxu0 %v4943
        %7963 = vmatpush1.bf16.msra.mxu0 %v4942
        %7964 = vmatprep.subr.bf16.mxu0 %v4951
        %7965 = vmatpush1.bf16.msra.mxu0 %v4950
        %7966 = vmatprep.subr.bf16.mxu0 %v4959
        %7967 = vmatpush1.bf16.msra.mxu0 %v4958
        %7968 = vmatprep.subr.bf16.mxu0 %v4967
        %7969 = vmatpush1.bf16.msra.mxu0 %v4966
        %7970 = vmatprep.subr.bf16.mxu0 %v4975
        %7971 = vmatpush1.bf16.msra.mxu0 %v4974
        %7972 = vmatprep.subr.bf16.mxu0 %v4983
        %7973 = vmatpush1.bf16.msra.mxu0 %v4982
        %7974 = vmatprep.subr.bf16.mxu0 %v4991
        %7975 = vmatpush1.bf16.msra.mxu0 %v4990
        %7976 = vmatprep.subr.bf16.mxu0 %v4999
        %7977 = vmatpush1.bf16.msra.mxu0 %v4998
        %7978 = vmatprep.subr.bf16.mxu0 %v5007
        %7979 = vmatpush1.bf16.msra.mxu0 %v5006
        %7980 = vmatprep.subr.bf16.mxu0 %v5015
        %7981 = vmatpush1.bf16.msra.mxu0 %v5014
        %7982 = vmatprep.subr.bf16.mxu0 %v5023
        %7983 = vmatpush1.bf16.msra.mxu0 %v5022
        %7984 = vmatprep.subr.bf16.mxu0 %v5031
        %7985 = vmatpush1.bf16.msra.mxu0 %v5030
        %7986 = vmatprep.subr.bf16.mxu0 %v5039
        %7987 = vmatpush1.bf16.msra.mxu0 %v5038
        %7988 = vmatprep.subr.bf16.mxu0 %v5047
        %7989 = vmatpush1.bf16.msra.mxu0 %v5046
        %7990 = vmatprep.subr.bf16.mxu0 %v5055
        %7991 = vmatpush1.bf16.msra.mxu0 %v5054
        %7992 = vmatprep.mubr.bf16.mxu0 %v817
        %7993 = vmatmul.mubr.bf16.gmra.mrb[0].mxu0 %v816
        %v7994 = vpop.f32.mrb[0].mxu0
        %v7995 = vadd.f32 0.0, %v7994
        %v7996 = vpop.f32.mrb[0].mxu0
        %v7997 = vadd.f32 0.0, %v7996
        %v7998 = vpop.f32.mrb[0].mxu0
        %v7999 = vpop.f32.mrb[0].mxu0
        %8000 = vdwg.mxu0
        %8001 = vmatprep.subr.bf16.mxu0 %v5063
        %8002 = vmatpush1.bf16.msra.mxu0 %v5062
        %8003 = vmatprep.subr.bf16.mxu0 %v5071
        %8004 = vmatpush1.bf16.msra.mxu0 %v5070
        %8005 = vmatprep.subr.bf16.mxu0 %v5079
        %8006 = vmatpush1.bf16.msra.mxu0 %v5078
        %8007 = vmatprep.subr.bf16.mxu0 %v5087
        %8008 = vmatpush1.bf16.msra.mxu0 %v5086
        %8009 = vmatprep.subr.bf16.mxu0 %v5095
        %8010 = vmatpush1.bf16.msra.mxu0 %v5094
        %8011 = vmatprep.subr.bf16.mxu0 %v5103
        %8012 = vmatpush1.bf16.msra.mxu0 %v5102
        %8013 = vmatprep.subr.bf16.mxu0 %v5111
        %8014 = vmatpush1.bf16.msra.mxu0 %v5110
        %8015 = vmatprep.subr.bf16.mxu0 %v5119
        %8016 = vmatpush1.bf16.msra.mxu0 %v5118
        %8017 = vmatprep.subr.bf16.mxu0 %v5127
        %8018 = vmatpush1.bf16.msra.mxu0 %v5126
        %8019 = vmatprep.subr.bf16.mxu0 %v5135
        %8020 = vmatpush1.bf16.msra.mxu0 %v5134
        %8021 = vmatprep.subr.bf16.mxu0 %v5143
        %8022 = vmatpush1.bf16.msra.mxu0 %v5142
        %8023 = vmatprep.subr.bf16.mxu0 %v5151
        %8024 = vmatpush1.bf16.msra.mxu0 %v5150
        %8025 = vmatprep.subr.bf16.mxu0 %v5159
        %8026 = vmatpush1.bf16.msra.mxu0 %v5158
        %8027 = vmatprep.subr.bf16.mxu0 %v5167
        %8028 = vmatpush1.bf16.msra.mxu0 %v5166
        %8029 = vmatprep.subr.bf16.mxu0 %v5175
        %8030 = vmatpush1.bf16.msra.mxu0 %v5174
        %8031 = vmatprep.subr.bf16.mxu0 %v5183
        %8032 = vmatpush1.bf16.msra.mxu0 %v5182
        %8033 = vmatprep.mubr.bf16.mxu0 %v819
        %8034 = vmatmul.mubr.bf16.gmra.mrb[0].mxu0 %v818
        %v8035 = vpop.f32.mrb[0].mxu0
        %v8036 = vadd.f32 %v7995, %v8035
        %v8037 = vpop.f32.mrb[0].mxu0
        %v8038 = vadd.f32 %v7997, %v8037
        %v8039 = vpop.f32.mrb[0].mxu0
        %v8040 = vpop.f32.mrb[0].mxu0
        %8041 = vdwg.mxu0
        %8042 = vmatprep.subr.bf16.mxu0 %v5191
        %8043 = vmatpush1.bf16.msra.mxu0 %v5190
        %8044 = vmatprep.subr.bf16.mxu0 %v5199
        %8045 = vmatpush1.bf16.msra.mxu0 %v5198
        %8046 = vmatprep.subr.bf16.mxu0 %v5207
        %8047 = vmatpush1.bf16.msra.mxu0 %v5206
        %8048 = vmatprep.subr.bf16.mxu0 %v5215
        %8049 = vmatpush1.bf16.msra.mxu0 %v5214
        %8050 = vmatprep.subr.bf16.mxu0 %v5223
        %8051 = vmatpush1.bf16.msra.mxu0 %v5222
        %8052 = vmatprep.subr.bf16.mxu0 %v5231
        %8053 = vmatpush1.bf16.msra.mxu0 %v5230
        %8054 = vmatprep.subr.bf16.mxu0 %v5239
        %8055 = vmatpush1.bf16.msra.mxu0 %v5238
        %8056 = vmatprep.subr.bf16.mxu0 %v5247
        %8057 = vmatpush1.bf16.msra.mxu0 %v5246
        %8058 = vmatprep.subr.bf16.mxu0 %v5255
        %8059 = vmatpush1.bf16.msra.mxu0 %v5254
        %8060 = vmatprep.subr.bf16.mxu0 %v5263
        %8061 = vmatpush1.bf16.msra.mxu0 %v5262
        %8062 = vmatprep.subr.bf16.mxu0 %v5271
        %8063 = vmatpush1.bf16.msra.mxu0 %v5270
        %8064 = vmatprep.subr.bf16.mxu0 %v5279
        %8065 = vmatpush1.bf16.msra.mxu0 %v5278
        %8066 = vmatprep.subr.bf16.mxu0 %v5287
        %8067 = vmatpush1.bf16.msra.mxu0 %v5286
        %8068 = vmatprep.subr.bf16.mxu0 %v5295
        %8069 = vmatpush1.bf16.msra.mxu0 %v5294
        %8070 = vmatprep.subr.bf16.mxu0 %v5303
        %8071 = vmatpush1.bf16.msra.mxu0 %v5302
        %8072 = vmatprep.subr.bf16.mxu0 %v5311
        %8073 = vmatpush1.bf16.msra.mxu0 %v5310
        %8074 = vmatprep.mubr.bf16.mxu0 %v821
        %8075 = vmatmul.mubr.bf16.gmra.mrb[0].mxu0 %v820
        %v8076 = vpop.f32.mrb[0].mxu0
        %v8077 = vadd.f32 %v8036, %v8076
        %v8078 = vpop.f32.mrb[0].mxu0
        %v8079 = vadd.f32 %v8038, %v8078
        %v8080 = vpop.f32.mrb[0].mxu0
        %v8081 = vpop.f32.mrb[0].mxu0
        %8082 = vdwg.mxu0
        %8083 = vmatprep.subr.bf16.mxu0 %v5319
        %8084 = vmatpush1.bf16.msra.mxu0 %v5318
        %8085 = vmatprep.subr.bf16.mxu0 %v5327
        %8086 = vmatpush1.bf16.msra.mxu0 %v5326
        %8087 = vmatprep.subr.bf16.mxu0 %v5335
        %8088 = vmatpush1.bf16.msra.mxu0 %v5334
        %8089 = vmatprep.subr.bf16.mxu0 %v5343
        %8090 = vmatpush1.bf16.msra.mxu0 %v5342
        %8091 = vmatprep.subr.bf16.mxu0 %v5351
        %8092 = vmatpush1.bf16.msra.mxu0 %v5350
        %8093 = vmatprep.subr.bf16.mxu0 %v5359
        %8094 = vmatpush1.bf16.msra.mxu0 %v5358
        %8095 = vmatprep.subr.bf16.mxu0 %v5367
        %8096 = vmatpush1.bf16.msra.mxu0 %v5366
        %8097 = vmatprep.subr.bf16.mxu0 %v5375
        %8098 = vmatpush1.bf16.msra.mxu0 %v5374
        %8099 = vmatprep.subr.bf16.mxu0 %v5383
        %8100 = vmatpush1.bf16.msra.mxu0 %v5382
        %8101 = vmatprep.subr.bf16.mxu0 %v5391
        %8102 = vmatpush1.bf16.msra.mxu0 %v5390
        %8103 = vmatprep.subr.bf16.mxu0 %v5399
        %8104 = vmatpush1.bf16.msra.mxu0 %v5398
        %8105 = vmatprep.subr.bf16.mxu0 %v5407
        %8106 = vmatpush1.bf16.msra.mxu0 %v5406
        %8107 = vmatprep.subr.bf16.mxu0 %v5415
        %8108 = vmatpush1.bf16.msra.mxu0 %v5414
        %8109 = vmatprep.subr.bf16.mxu0 %v5423
        %8110 = vmatpush1.bf16.msra.mxu0 %v5422
        %8111 = vmatprep.subr.bf16.mxu0 %v5431
        %8112 = vmatpush1.bf16.msra.mxu0 %v5430
        %8113 = vmatprep.subr.bf16.mxu0 %v5439
        %8114 = vmatpush1.bf16.msra.mxu0 %v5438
        %8115 = vmatprep.mubr.bf16.mxu0 %v823
        %8116 = vmatmul.mubr.bf16.gmra.mrb[0].mxu0 %v822
        %v8117 = vpop.f32.mrb[0].mxu0
        %v8118 = vadd.f32 %v8077, %v8117
        %v8119 = vpop.f32.mrb[0].mxu0
        %v8120 = vadd.f32 %v8079, %v8119
        %v8121 = vpop.f32.mrb[0].mxu0
        %v8122 = vpop.f32.mrb[0].mxu0
        %8123 = vdwg.mxu0
        %8124 = vmatprep.subr.bf16.mxu0 %v5447
        %8125 = vmatpush1.bf16.msra.mxu0 %v5446
        %8126 = vmatprep.subr.bf16.mxu0 %v5455
        %8127 = vmatpush1.bf16.msra.mxu0 %v5454
        %8128 = vmatprep.subr.bf16.mxu0 %v5463
        %8129 = vmatpush1.bf16.msra.mxu0 %v5462
        %8130 = vmatprep.subr.bf16.mxu0 %v5471
        %8131 = vmatpush1.bf16.msra.mxu0 %v5470
        %8132 = vmatprep.subr.bf16.mxu0 %v5479
        %8133 = vmatpush1.bf16.msra.mxu0 %v5478
        %8134 = vmatprep.subr.bf16.mxu0 %v5487
        %8135 = vmatpush1.bf16.msra.mxu0 %v5486
        %8136 = vmatprep.subr.bf16.mxu0 %v5495
        %8137 = vmatpush1.bf16.msra.mxu0 %v5494
        %8138 = vmatprep.subr.bf16.mxu0 %v5503
        %8139 = vmatpush1.bf16.msra.mxu0 %v5502
        %8140 = vmatprep.subr.bf16.mxu0 %v5511
        %8141 = vmatpush1.bf16.msra.mxu0 %v5510
        %8142 = vmatprep.subr.bf16.mxu0 %v5519
        %8143 = vmatpush1.bf16.msra.mxu0 %v5518
        %8144 = vmatprep.subr.bf16.mxu0 %v5527
        %8145 = vmatpush1.bf16.msra.mxu0 %v5526
        %8146 = vmatprep.subr.bf16.mxu0 %v5535
        %8147 = vmatpush1.bf16.msra.mxu0 %v5534
        %8148 = vmatprep.subr.bf16.mxu0 %v5543
        %8149 = vmatpush1.bf16.msra.mxu0 %v5542
        %8150 = vmatprep.subr.bf16.mxu0 %v5551
        %8151 = vmatpush1.bf16.msra.mxu0 %v5550
        %8152 = vmatprep.subr.bf16.mxu0 %v5559
        %8153 = vmatpush1.bf16.msra.mxu0 %v5558
        %8154 = vmatprep.subr.bf16.mxu0 %v5567
        %8155 = vmatpush1.bf16.msra.mxu0 %v5566
        %8156 = vmatprep.mubr.bf16.mxu0 %v825
        %8157 = vmatmul.mubr.bf16.gmra.mrb[0].mxu0 %v824
        %v8158 = vpop.f32.mrb[0].mxu0
        %v8159 = vadd.f32 %v8118, %v8158
        %v8160 = vpop.f32.mrb[0].mxu0
        %v8161 = vadd.f32 %v8120, %v8160
        %v8162 = vpop.f32.mrb[0].mxu0
        %v8163 = vpop.f32.mrb[0].mxu0
        %8164 = vdwg.mxu0
        %8165 = vmatprep.subr.bf16.mxu0 %v5575
        %8166 = vmatpush1.bf16.msra.mxu0 %v5574
        %8167 = vmatprep.subr.bf16.mxu0 %v5583
        %8168 = vmatpush1.bf16.msra.mxu0 %v5582
        %8169 = vmatprep.subr.bf16.mxu0 %v5591
        %8170 = vmatpush1.bf16.msra.mxu0 %v5590
        %8171 = vmatprep.subr.bf16.mxu0 %v5599
        %8172 = vmatpush1.bf16.msra.mxu0 %v5598
        %8173 = vmatprep.subr.bf16.mxu0 %v5607
        %8174 = vmatpush1.bf16.msra.mxu0 %v5606
        %8175 = vmatprep.subr.bf16.mxu0 %v5615
        %8176 = vmatpush1.bf16.msra.mxu0 %v5614
        %8177 = vmatprep.subr.bf16.mxu0 %v5623
        %8178 = vmatpush1.bf16.msra.mxu0 %v5622
        %8179 = vmatprep.subr.bf16.mxu0 %v5631
        %8180 = vmatpush1.bf16.msra.mxu0 %v5630
        %8181 = vmatprep.subr.bf16.mxu0 %v5639
        %8182 = vmatpush1.bf16.msra.mxu0 %v5638
        %8183 = vmatprep.subr.bf16.mxu0 %v5647
        %8184 = vmatpush1.bf16.msra.mxu0 %v5646
        %8185 = vmatprep.subr.bf16.mxu0 %v5655
        %8186 = vmatpush1.bf16.msra.mxu0 %v5654
        %8187 = vmatprep.subr.bf16.mxu0 %v5663
        %8188 = vmatpush1.bf16.msra.mxu0 %v5662
        %8189 = vmatprep.subr.bf16.mxu0 %v5671
        %8190 = vmatpush1.bf16.msra.mxu0 %v5670
        %8191 = vmatprep.subr.bf16.mxu0 %v5679
        %8192 = vmatpush1.bf16.msra.mxu0 %v5678
        %8193 = vmatprep.subr.bf16.mxu0 %v5687
        %8194 = vmatpush1.bf16.msra.mxu0 %v5686
        %8195 = vmatprep.subr.bf16.mxu0 %v5695
        %8196 = vmatpush1.bf16.msra.mxu0 %v5694
        %8197 = vmatprep.mubr.bf16.mxu0 %v827
        %8198 = vmatmul.mubr.bf16.gmra.mrb[0].mxu0 %v826
        %v8199 = vpop.f32.mrb[0].mxu0
        %v8200 = vadd.f32 %v8159, %v8199
        %v8201 = vpop.f32.mrb[0].mxu0
        %v8202 = vadd.f32 %v8161, %v8201
        %v8203 = vpop.f32.mrb[0].mxu0
        %v8204 = vpop.f32.mrb[0].mxu0
        %8205 = vdwg.mxu0
        %8206 = vmatprep.subr.bf16.mxu0 %v5703
        %8207 = vmatpush1.bf16.msra.mxu0 %v5702
        %8208 = vmatprep.subr.bf16.mxu0 %v5711
        %8209 = vmatpush1.bf16.msra.mxu0 %v5710
        %8210 = vmatprep.subr.bf16.mxu0 %v5719
        %8211 = vmatpush1.bf16.msra.mxu0 %v5718
        %8212 = vmatprep.subr.bf16.mxu0 %v5727
        %8213 = vmatpush1.bf16.msra.mxu0 %v5726
        %8214 = vmatprep.subr.bf16.mxu0 %v5735
        %8215 = vmatpush1.bf16.msra.mxu0 %v5734
        %8216 = vmatprep.subr.bf16.mxu0 %v5743
        %8217 = vmatpush1.bf16.msra.mxu0 %v5742
        %8218 = vmatprep.subr.bf16.mxu0 %v5751
        %8219 = vmatpush1.bf16.msra.mxu0 %v5750
        %8220 = vmatprep.subr.bf16.mxu0 %v5759
        %8221 = vmatpush1.bf16.msra.mxu0 %v5758
        %8222 = vmatprep.subr.bf16.mxu0 %v5767
        %8223 = vmatpush1.bf16.msra.mxu0 %v5766
        %8224 = vmatprep.subr.bf16.mxu0 %v5775
        %8225 = vmatpush1.bf16.msra.mxu0 %v5774
        %8226 = vmatprep.subr.bf16.mxu0 %v5783
        %8227 = vmatpush1.bf16.msra.mxu0 %v5782
        %8228 = vmatprep.subr.bf16.mxu0 %v5791
        %8229 = vmatpush1.bf16.msra.mxu0 %v5790
        %8230 = vmatprep.subr.bf16.mxu0 %v5799
        %8231 = vmatpush1.bf16.msra.mxu0 %v5798
        %8232 = vmatprep.subr.bf16.mxu0 %v5807
        %8233 = vmatpush1.bf16.msra.mxu0 %v5806
        %8234 = vmatprep.subr.bf16.mxu0 %v5815
        %8235 = vmatpush1.bf16.msra.mxu0 %v5814
        %8236 = vmatprep.subr.bf16.mxu0 %v5823
        %8237 = vmatpush1.bf16.msra.mxu0 %v5822
        %8238 = vmatprep.mubr.bf16.mxu0 %v829
        %8239 = vmatmul.mubr.bf16.gmra.mrb[0].mxu0 %v828
        %v8240 = vpop.f32.mrb[0].mxu0
        %v8241 = vadd.f32 %v8200, %v8240
        %v8242 = vpop.f32.mrb[0].mxu0
        %v8243 = vadd.f32 %v8202, %v8242
        %v8244 = vpop.f32.mrb[0].mxu0
        %v8245 = vpop.f32.mrb[0].mxu0
        %8246 = vdwg.mxu0
        %8247 = vmatprep.subr.bf16.mxu0 %v5831
        %8248 = vmatpush1.bf16.msra.mxu0 %v5830
        %8249 = vmatprep.subr.bf16.mxu0 %v5839
        %8250 = vmatpush1.bf16.msra.mxu0 %v5838
        %8251 = vmatprep.subr.bf16.mxu0 %v5847
        %8252 = vmatpush1.bf16.msra.mxu0 %v5846
        %8253 = vmatprep.subr.bf16.mxu0 %v5855
        %8254 = vmatpush1.bf16.msra.mxu0 %v5854
        %8255 = vmatprep.subr.bf16.mxu0 %v5863
        %8256 = vmatpush1.bf16.msra.mxu0 %v5862
        %8257 = vmatprep.subr.bf16.mxu0 %v5871
        %8258 = vmatpush1.bf16.msra.mxu0 %v5870
        %8259 = vmatprep.subr.bf16.mxu0 %v5879
        %8260 = vmatpush1.bf16.msra.mxu0 %v5878
        %8261 = vmatprep.subr.bf16.mxu0 %v5887
        %8262 = vmatpush1.bf16.msra.mxu0 %v5886
        %8263 = vmatprep.subr.bf16.mxu0 %v5895
        %8264 = vmatpush1.bf16.msra.mxu0 %v5894
        %8265 = vmatprep.subr.bf16.mxu0 %v5903
        %8266 = vmatpush1.bf16.msra.mxu0 %v5902
        %8267 = vmatprep.subr.bf16.mxu0 %v5911
        %8268 = vmatpush1.bf16.msra.mxu0 %v5910
        %8269 = vmatprep.subr.bf16.mxu0 %v5919
        %8270 = vmatpush1.bf16.msra.mxu0 %v5918
        %8271 = vmatprep.subr.bf16.mxu0 %v5927
        %8272 = vmatpush1.bf16.msra.mxu0 %v5926
        %8273 = vmatprep.subr.bf16.mxu0 %v5935
        %8274 = vmatpush1.bf16.msra.mxu0 %v5934
        %8275 = vmatprep.subr.bf16.mxu0 %v5943
        %8276 = vmatpush1.bf16.msra.mxu0 %v5942
        %8277 = vmatprep.subr.bf16.mxu0 %v5951
        %8278 = vmatpush1.bf16.msra.mxu0 %v5950
        %8279 = vmatprep.mubr.bf16.mxu0 %v831
        %8280 = vmatmul.mubr.bf16.gmra.mrb[0].mxu0 %v830
        %v8281 = vpop.f32.mrb[0].mxu0
        %v8282 = vadd.f32 %v8241, %v8281
        %v8283 = vpop.f32.mrb[0].mxu0
        %v8284 = vadd.f32 %v8243, %v8283
        %v8285 = vpop.f32.mrb[0].mxu0
        %v8286 = vpop.f32.mrb[0].mxu0
        %8287 = vdwg.mxu0
        %v8288 = vadd.f32 %v808, %v7298
        %v8289 = vadd.f32 %v809, %v7300
        %v8290 = vadd.f32 %v810, %v7626
        %v8291 = vadd.f32 %v811, %v7628
        %v8292 = vadd.f32 %v812, %v7954
        %v8293 = vadd.f32 %v813, %v7956
        %v8294 = vadd.f32 %v814, %v8282
        %v8295 = vadd.f32 %v815, %v8284
        %8296 = vst [vmem:[#allocation2] sm:$0xff] %v8288
        %8297 = vst [vmem:[#allocation2 + $0x8] sm:$0xff] %v8289
        %8298 = vst [vmem:[#allocation2 + $0x10] sm:$0xff] %v8290
        %8299 = vst [vmem:[#allocation2 + $0x18] sm:$0xff] %v8291
        %8300 = vst [vmem:[#allocation2 + $0x20] sm:$0xff] %v8292
        %8301 = vst [vmem:[#allocation2 + $0x28] sm:$0xff] %v8293
        %8302 = vst [vmem:[#allocation2 + $0x30] sm:$0xff] %v8294
        %8303 = vst [vmem:[#allocation2 + $0x38] sm:$0xff] %v8295
        %p8304 = scmp.eq.s32.totalorder %s32, 1
        // Predicated region
        $region97: #{tpu_custom_call.1} parent=55 // pred_check
          %p8305 = pneg %p8304
        $region98: #{tpu_custom_call.1} parent=55 // pred_check_branch
          %8307 = sbr.rel (%p8305) target = $region100
        $region99: #{tpu_custom_call.1} parent=55 // pred_region
          %v8308 = vld [vmem:[#allocation2] sm:$0xff]
          %v8309 = vld [vmem:[#allocation2 + $0x8] sm:$0xff]
          %v8310 = vld [vmem:[#allocation2 + $0x10] sm:$0xff]
          %v8311 = vld [vmem:[#allocation2 + $0x18] sm:$0xff]
          %v8312 = vld [vmem:[#allocation2 + $0x20] sm:$0xff]
          %v8313 = vld [vmem:[#allocation2 + $0x28] sm:$0xff]
          %v8314 = vld [vmem:[#allocation2 + $0x30] sm:$0xff]
          %v8315 = vld [vmem:[#allocation2 + $0x38] sm:$0xff]
          %v8316 = vmax.f32 %v8308, 0.0
          %v8317 = vmax.f32 %v8309, 0.0
          %v8318 = vmax.f32 %v8310, 0.0
          %v8319 = vmax.f32 %v8311, 0.0
          %v8320 = vmax.f32 %v8312, 0.0
          %v8321 = vmax.f32 %v8313, 0.0
          %v8322 = vmax.f32 %v8314, 0.0
          %v8323 = vmax.f32 %v8315, 0.0
          %v8324 = vpack.c.bf16 %v8316, %v8316
          %v8325 = vpack.c.bf16 %v8317, %v8317
          %v8326 = vpack.c.bf16 %v8318, %v8318
          %v8327 = vpack.c.bf16 %v8319, %v8319
          %v8328 = vpack.c.bf16 %v8320, %v8320
          %v8329 = vpack.c.bf16 %v8321, %v8321
          %v8330 = vpack.c.bf16 %v8322, %v8322
          %v8331 = vpack.c.bf16 %v8323, %v8323
          %v8332 = vld [vmem:[#allocation12] sm:$0xff]
          %v8333 = vld [vmem:[#allocation12 + $0x8] sm:$0xff]
          %v8334 = vld [vmem:[#allocation12 + $0x10] sm:$0xff]
          %v8335 = vld [vmem:[#allocation12 + $0x18] sm:$0xff]
          %v8336 = vld [vmem:[#allocation12 + $0x20] sm:$0xff]
          %v8337 = vld [vmem:[#allocation12 + $0x28] sm:$0xff]
          %v8338 = vld [vmem:[#allocation12 + $0x30] sm:$0xff]
          %v8339 = vld [vmem:[#allocation12 + $0x38] sm:$0xff]
          %v8340 = vld [vmem:[#allocation12 + $0x40] sm:$0xff]
          %v8341 = vld [vmem:[#allocation12 + $0x48] sm:$0xff]
          %v8342 = vld [vmem:[#allocation12 + $0x50] sm:$0xff]
          %v8343 = vld [vmem:[#allocation12 + $0x58] sm:$0xff]
          %v8344 = vld [vmem:[#allocation12 + $0x60] sm:$0xff]
          %v8345 = vld [vmem:[#allocation12 + $0x68] sm:$0xff]
          %v8346 = vld [vmem:[#allocation12 + $0x70] sm:$0xff]
          %v8347 = vld [vmem:[#allocation12 + $0x78] sm:$0xff]
          %v8348 = vld [vmem:[#allocation12 + $0x80] sm:$0xff]
          %v8349 = vld [vmem:[#allocation12 + $0x88] sm:$0xff]
          %v8350 = vld [vmem:[#allocation12 + $0x90] sm:$0xff]
          %v8351 = vld [vmem:[#allocation12 + $0x98] sm:$0xff]
          %v8352 = vld [vmem:[#allocation12 + $0xa0] sm:$0xff]
          %v8353 = vld [vmem:[#allocation12 + $0xa8] sm:$0xff]
          %v8354 = vld [vmem:[#allocation12 + $0xb0] sm:$0xff]
          %v8355 = vld [vmem:[#allocation12 + $0xb8] sm:$0xff]
          %v8356 = vld [vmem:[#allocation12 + $0xc0] sm:$0xff]
          %v8357 = vld [vmem:[#allocation12 + $0xc8] sm:$0xff]
          %v8358 = vld [vmem:[#allocation12 + $0xd0] sm:$0xff]
          %v8359 = vld [vmem:[#allocation12 + $0xd8] sm:$0xff]
          %v8360 = vld [vmem:[#allocation12 + $0xe0] sm:$0xff]
          %v8361 = vld [vmem:[#allocation12 + $0xe8] sm:$0xff]
          %v8362 = vld [vmem:[#allocation12 + $0xf0] sm:$0xff]
          %v8363 = vld [vmem:[#allocation12 + $0xf8] sm:$0xff]
          %v8364 = vld [vmem:[#allocation12 + $0x100] sm:$0xff]
          %v8365 = vld [vmem:[#allocation12 + $0x108] sm:$0xff]
          %v8366 = vld [vmem:[#allocation12 + $0x110] sm:$0xff]
          %v8367 = vld [vmem:[#allocation12 + $0x118] sm:$0xff]
          %v8368 = vld [vmem:[#allocation12 + $0x120] sm:$0xff]
          %v8369 = vld [vmem:[#allocation12 + $0x128] sm:$0xff]
          %v8370 = vld [vmem:[#allocation12 + $0x130] sm:$0xff]
          %v8371 = vld [vmem:[#allocation12 + $0x138] sm:$0xff]
          %v8372 = vld [vmem:[#allocation12 + $0x140] sm:$0xff]
          %v8373 = vld [vmem:[#allocation12 + $0x148] sm:$0xff]
          %v8374 = vld [vmem:[#allocation12 + $0x150] sm:$0xff]
          %v8375 = vld [vmem:[#allocation12 + $0x158] sm:$0xff]
          %v8376 = vld [vmem:[#allocation12 + $0x160] sm:$0xff]
          %v8377 = vld [vmem:[#allocation12 + $0x168] sm:$0xff]
          %v8378 = vld [vmem:[#allocation12 + $0x170] sm:$0xff]
          %v8379 = vld [vmem:[#allocation12 + $0x178] sm:$0xff]
          %v8380 = vld [vmem:[#allocation12 + $0x180] sm:$0xff]
          %v8381 = vld [vmem:[#allocation12 + $0x188] sm:$0xff]
          %v8382 = vld [vmem:[#allocation12 + $0x190] sm:$0xff]
          %v8383 = vld [vmem:[#allocation12 + $0x198] sm:$0xff]
          %v8384 = vld [vmem:[#allocation12 + $0x1a0] sm:$0xff]
          %v8385 = vld [vmem:[#allocation12 + $0x1a8] sm:$0xff]
          %v8386 = vld [vmem:[#allocation12 + $0x1b0] sm:$0xff]
          %v8387 = vld [vmem:[#allocation12 + $0x1b8] sm:$0xff]
          %v8388 = vld [vmem:[#allocation12 + $0x1c0] sm:$0xff]
          %v8389 = vld [vmem:[#allocation12 + $0x1c8] sm:$0xff]
          %v8390 = vld [vmem:[#allocation12 + $0x1d0] sm:$0xff]
          %v8391 = vld [vmem:[#allocation12 + $0x1d8] sm:$0xff]
          %v8392 = vld [vmem:[#allocation12 + $0x1e0] sm:$0xff]
          %v8393 = vld [vmem:[#allocation12 + $0x1e8] sm:$0xff]
          %v8394 = vld [vmem:[#allocation12 + $0x1f0] sm:$0xff]
          %v8395 = vld [vmem:[#allocation12 + $0x1f8] sm:$0xff]
          %v8396 = vld [vmem:[#allocation12 + $0x200] sm:$0xff]
          %v8397 = vld [vmem:[#allocation12 + $0x208] sm:$0xff]
          %v8398 = vld [vmem:[#allocation12 + $0x210] sm:$0xff]
          %v8399 = vld [vmem:[#allocation12 + $0x218] sm:$0xff]
          %v8400 = vld [vmem:[#allocation12 + $0x220] sm:$0xff]
          %v8401 = vld [vmem:[#allocation12 + $0x228] sm:$0xff]
          %v8402 = vld [vmem:[#allocation12 + $0x230] sm:$0xff]
          %v8403 = vld [vmem:[#allocation12 + $0x238] sm:$0xff]
          %v8404 = vld [vmem:[#allocation12 + $0x240] sm:$0xff]
          %v8405 = vld [vmem:[#allocation12 + $0x248] sm:$0xff]
          %v8406 = vld [vmem:[#allocation12 + $0x250] sm:$0xff]
          %v8407 = vld [vmem:[#allocation12 + $0x258] sm:$0xff]
          %v8408 = vld [vmem:[#allocation12 + $0x260] sm:$0xff]
          %v8409 = vld [vmem:[#allocation12 + $0x268] sm:$0xff]
          %v8410 = vld [vmem:[#allocation12 + $0x270] sm:$0xff]
          %v8411 = vld [vmem:[#allocation12 + $0x278] sm:$0xff]
          %v8412 = vld [vmem:[#allocation12 + $0x280] sm:$0xff]
          %v8413 = vld [vmem:[#allocation12 + $0x288] sm:$0xff]
          %v8414 = vld [vmem:[#allocation12 + $0x290] sm:$0xff]
          %v8415 = vld [vmem:[#allocation12 + $0x298] sm:$0xff]
          %v8416 = vld [vmem:[#allocation12 + $0x2a0] sm:$0xff]
          %v8417 = vld [vmem:[#allocation12 + $0x2a8] sm:$0xff]
          %v8418 = vld [vmem:[#allocation12 + $0x2b0] sm:$0xff]
          %v8419 = vld [vmem:[#allocation12 + $0x2b8] sm:$0xff]
          %v8420 = vld [vmem:[#allocation12 + $0x2c0] sm:$0xff]
          %v8421 = vld [vmem:[#allocation12 + $0x2c8] sm:$0xff]
          %v8422 = vld [vmem:[#allocation12 + $0x2d0] sm:$0xff]
          %v8423 = vld [vmem:[#allocation12 + $0x2d8] sm:$0xff]
          %v8424 = vld [vmem:[#allocation12 + $0x2e0] sm:$0xff]
          %v8425 = vld [vmem:[#allocation12 + $0x2e8] sm:$0xff]
          %v8426 = vld [vmem:[#allocation12 + $0x2f0] sm:$0xff]
          %v8427 = vld [vmem:[#allocation12 + $0x2f8] sm:$0xff]
          %v8428 = vld [vmem:[#allocation12 + $0x300] sm:$0xff]
          %v8429 = vld [vmem:[#allocation12 + $0x308] sm:$0xff]
          %v8430 = vld [vmem:[#allocation12 + $0x310] sm:$0xff]
          %v8431 = vld [vmem:[#allocation12 + $0x318] sm:$0xff]
          %v8432 = vld [vmem:[#allocation12 + $0x320] sm:$0xff]
          %v8433 = vld [vmem:[#allocation12 + $0x328] sm:$0xff]
          %v8434 = vld [vmem:[#allocation12 + $0x330] sm:$0xff]
          %v8435 = vld [vmem:[#allocation12 + $0x338] sm:$0xff]
          %v8436 = vld [vmem:[#allocation12 + $0x340] sm:$0xff]
          %v8437 = vld [vmem:[#allocation12 + $0x348] sm:$0xff]
          %v8438 = vld [vmem:[#allocation12 + $0x350] sm:$0xff]
          %v8439 = vld [vmem:[#allocation12 + $0x358] sm:$0xff]
          %v8440 = vld [vmem:[#allocation12 + $0x360] sm:$0xff]
          %v8441 = vld [vmem:[#allocation12 + $0x368] sm:$0xff]
          %v8442 = vld [vmem:[#allocation12 + $0x370] sm:$0xff]
          %v8443 = vld [vmem:[#allocation12 + $0x378] sm:$0xff]
          %v8444 = vld [vmem:[#allocation12 + $0x380] sm:$0xff]
          %v8445 = vld [vmem:[#allocation12 + $0x388] sm:$0xff]
          %v8446 = vld [vmem:[#allocation12 + $0x390] sm:$0xff]
          %v8447 = vld [vmem:[#allocation12 + $0x398] sm:$0xff]
          %v8448 = vld [vmem:[#allocation12 + $0x3a0] sm:$0xff]
          %v8449 = vld [vmem:[#allocation12 + $0x3a8] sm:$0xff]
          %v8450 = vld [vmem:[#allocation12 + $0x3b0] sm:$0xff]
          %v8451 = vld [vmem:[#allocation12 + $0x3b8] sm:$0xff]
          %v8452 = vld [vmem:[#allocation12 + $0x3c0] sm:$0xff]
          %v8453 = vld [vmem:[#allocation12 + $0x3c8] sm:$0xff]
          %v8454 = vld [vmem:[#allocation12 + $0x3d0] sm:$0xff]
          %v8455 = vld [vmem:[#allocation12 + $0x3d8] sm:$0xff]
          %v8456 = vld [vmem:[#allocation12 + $0x3e0] sm:$0xff]
          %v8457 = vld [vmem:[#allocation12 + $0x3e8] sm:$0xff]
          %v8458 = vld [vmem:[#allocation12 + $0x3f0] sm:$0xff]
          %v8459 = vld [vmem:[#allocation12 + $0x3f8] sm:$0xff]
          %v8460 = vld [vmem:[#allocation14] sm:$0x3]
          %v8462 = vlaneseq
          %v8463 = vshrl.u32 %v8462, 7
          %v8464 = vsub.s32 0, %v8463
          %v8465 = vrot.slane %v8460, %v8464
          %v8466 = vlaneseq
          %v8467 = vshrl.u32 %v8466, 7
          %v8468 = vsub.s32 1, %v8467
          %v8469 = vrot.slane %v8460, %v8468
          %v8600 = vunpack.c.l.b16 %v8332
          %v8601 = vunpack.c.h.b16 %v8332
          %v8602 = vunpack.c.l.b16 %v8333
          %v8603 = vunpack.c.h.b16 %v8333
          %v8604 = vunpack.c.l.b16 %v8334
          %v8605 = vunpack.c.h.b16 %v8334
          %v8606 = vunpack.c.l.b16 %v8335
          %v8607 = vunpack.c.h.b16 %v8335
          %v8608 = vunpack.c.l.b16 %v8336
          %v8609 = vunpack.c.h.b16 %v8336
          %v8610 = vunpack.c.l.b16 %v8337
          %v8611 = vunpack.c.h.b16 %v8337
          %v8612 = vunpack.c.l.b16 %v8338
          %v8613 = vunpack.c.h.b16 %v8338
          %v8614 = vunpack.c.l.b16 %v8339
          %v8615 = vunpack.c.h.b16 %v8339
          %v8616 = vunpack.c.l.b16 %v8340
          %v8617 = vunpack.c.h.b16 %v8340
          %v8618 = vunpack.c.l.b16 %v8341
          %v8619 = vunpack.c.h.b16 %v8341
          %v8620 = vunpack.c.l.b16 %v8342
          %v8621 = vunpack.c.h.b16 %v8342
          %v8622 = vunpack.c.l.b16 %v8343
          %v8623 = vunpack.c.h.b16 %v8343
          %v8624 = vunpack.c.l.b16 %v8344
          %v8625 = vunpack.c.h.b16 %v8344
          %v8626 = vunpack.c.l.b16 %v8345
          %v8627 = vunpack.c.h.b16 %v8345
          %v8628 = vunpack.c.l.b16 %v8346
          %v8629 = vunpack.c.h.b16 %v8346
          %v8630 = vunpack.c.l.b16 %v8347
          %v8631 = vunpack.c.h.b16 %v8347
          %v8632 = vunpack.c.l.b16 %v8348
          %v8633 = vunpack.c.h.b16 %v8348
          %v8634 = vunpack.c.l.b16 %v8349
          %v8635 = vunpack.c.h.b16 %v8349
          %v8636 = vunpack.c.l.b16 %v8350
          %v8637 = vunpack.c.h.b16 %v8350
          %v8638 = vunpack.c.l.b16 %v8351
          %v8639 = vunpack.c.h.b16 %v8351
          %v8640 = vunpack.c.l.b16 %v8352
          %v8641 = vunpack.c.h.b16 %v8352
          %v8642 = vunpack.c.l.b16 %v8353
          %v8643 = vunpack.c.h.b16 %v8353
          %v8644 = vunpack.c.l.b16 %v8354
          %v8645 = vunpack.c.h.b16 %v8354
          %v8646 = vunpack.c.l.b16 %v8355
          %v8647 = vunpack.c.h.b16 %v8355
          %v8648 = vunpack.c.l.b16 %v8356
          %v8649 = vunpack.c.h.b16 %v8356
          %v8650 = vunpack.c.l.b16 %v8357
          %v8651 = vunpack.c.h.b16 %v8357
          %v8652 = vunpack.c.l.b16 %v8358
          %v8653 = vunpack.c.h.b16 %v8358
          %v8654 = vunpack.c.l.b16 %v8359
          %v8655 = vunpack.c.h.b16 %v8359
          %v8656 = vunpack.c.l.b16 %v8360
          %v8657 = vunpack.c.h.b16 %v8360
          %v8658 = vunpack.c.l.b16 %v8361
          %v8659 = vunpack.c.h.b16 %v8361
          %v8660 = vunpack.c.l.b16 %v8362
          %v8661 = vunpack.c.h.b16 %v8362
          %v8662 = vunpack.c.l.b16 %v8363
          %v8663 = vunpack.c.h.b16 %v8363
          %v8664 = vunpack.c.l.b16 %v8364
          %v8665 = vunpack.c.h.b16 %v8364
          %v8666 = vunpack.c.l.b16 %v8365
          %v8667 = vunpack.c.h.b16 %v8365
          %v8668 = vunpack.c.l.b16 %v8366
          %v8669 = vunpack.c.h.b16 %v8366
          %v8670 = vunpack.c.l.b16 %v8367
          %v8671 = vunpack.c.h.b16 %v8367
          %v8672 = vunpack.c.l.b16 %v8368
          %v8673 = vunpack.c.h.b16 %v8368
          %v8674 = vunpack.c.l.b16 %v8369
          %v8675 = vunpack.c.h.b16 %v8369
          %v8676 = vunpack.c.l.b16 %v8370
          %v8677 = vunpack.c.h.b16 %v8370
          %v8678 = vunpack.c.l.b16 %v8371
          %v8679 = vunpack.c.h.b16 %v8371
          %v8680 = vunpack.c.l.b16 %v8372
          %v8681 = vunpack.c.h.b16 %v8372
          %v8682 = vunpack.c.l.b16 %v8373
          %v8683 = vunpack.c.h.b16 %v8373
          %v8684 = vunpack.c.l.b16 %v8374
          %v8685 = vunpack.c.h.b16 %v8374
          %v8686 = vunpack.c.l.b16 %v8375
          %v8687 = vunpack.c.h.b16 %v8375
          %v8688 = vunpack.c.l.b16 %v8376
          %v8689 = vunpack.c.h.b16 %v8376
          %v8690 = vunpack.c.l.b16 %v8377
          %v8691 = vunpack.c.h.b16 %v8377
          %v8692 = vunpack.c.l.b16 %v8378
          %v8693 = vunpack.c.h.b16 %v8378
          %v8694 = vunpack.c.l.b16 %v8379
          %v8695 = vunpack.c.h.b16 %v8379
          %v8696 = vunpack.c.l.b16 %v8380
          %v8697 = vunpack.c.h.b16 %v8380
          %v8698 = vunpack.c.l.b16 %v8381
          %v8699 = vunpack.c.h.b16 %v8381
          %v8700 = vunpack.c.l.b16 %v8382
          %v8701 = vunpack.c.h.b16 %v8382
          %v8702 = vunpack.c.l.b16 %v8383
          %v8703 = vunpack.c.h.b16 %v8383
          %v8704 = vunpack.c.l.b16 %v8384
          %v8705 = vunpack.c.h.b16 %v8384
          %v8706 = vunpack.c.l.b16 %v8385
          %v8707 = vunpack.c.h.b16 %v8385
          %v8708 = vunpack.c.l.b16 %v8386
          %v8709 = vunpack.c.h.b16 %v8386
          %v8710 = vunpack.c.l.b16 %v8387
          %v8711 = vunpack.c.h.b16 %v8387
          %v8712 = vunpack.c.l.b16 %v8388
          %v8713 = vunpack.c.h.b16 %v8388
          %v8714 = vunpack.c.l.b16 %v8389
          %v8715 = vunpack.c.h.b16 %v8389
          %v8716 = vunpack.c.l.b16 %v8390
          %v8717 = vunpack.c.h.b16 %v8390
          %v8718 = vunpack.c.l.b16 %v8391
          %v8719 = vunpack.c.h.b16 %v8391
          %v8720 = vunpack.c.l.b16 %v8392
          %v8721 = vunpack.c.h.b16 %v8392
          %v8722 = vunpack.c.l.b16 %v8393
          %v8723 = vunpack.c.h.b16 %v8393
          %v8724 = vunpack.c.l.b16 %v8394
          %v8725 = vunpack.c.h.b16 %v8394
          %v8726 = vunpack.c.l.b16 %v8395
          %v8727 = vunpack.c.h.b16 %v8395
          %v8728 = vunpack.c.l.b16 %v8396
          %v8729 = vunpack.c.h.b16 %v8396
          %v8730 = vunpack.c.l.b16 %v8397
          %v8731 = vunpack.c.h.b16 %v8397
          %v8732 = vunpack.c.l.b16 %v8398
          %v8733 = vunpack.c.h.b16 %v8398
          %v8734 = vunpack.c.l.b16 %v8399
          %v8735 = vunpack.c.h.b16 %v8399
          %v8736 = vunpack.c.l.b16 %v8400
          %v8737 = vunpack.c.h.b16 %v8400
          %v8738 = vunpack.c.l.b16 %v8401
          %v8739 = vunpack.c.h.b16 %v8401
          %v8740 = vunpack.c.l.b16 %v8402
          %v8741 = vunpack.c.h.b16 %v8402
          %v8742 = vunpack.c.l.b16 %v8403
          %v8743 = vunpack.c.h.b16 %v8403
          %v8744 = vunpack.c.l.b16 %v8404
          %v8745 = vunpack.c.h.b16 %v8404
          %v8746 = vunpack.c.l.b16 %v8405
          %v8747 = vunpack.c.h.b16 %v8405
          %v8748 = vunpack.c.l.b16 %v8406
          %v8749 = vunpack.c.h.b16 %v8406
          %v8750 = vunpack.c.l.b16 %v8407
          %v8751 = vunpack.c.h.b16 %v8407
          %v8752 = vunpack.c.l.b16 %v8408
          %v8753 = vunpack.c.h.b16 %v8408
          %v8754 = vunpack.c.l.b16 %v8409
          %v8755 = vunpack.c.h.b16 %v8409
          %v8756 = vunpack.c.l.b16 %v8410
          %v8757 = vunpack.c.h.b16 %v8410
          %v8758 = vunpack.c.l.b16 %v8411
          %v8759 = vunpack.c.h.b16 %v8411
          %v8760 = vunpack.c.l.b16 %v8412
          %v8761 = vunpack.c.h.b16 %v8412
          %v8762 = vunpack.c.l.b16 %v8413
          %v8763 = vunpack.c.h.b16 %v8413
          %v8764 = vunpack.c.l.b16 %v8414
          %v8765 = vunpack.c.h.b16 %v8414
          %v8766 = vunpack.c.l.b16 %v8415
          %v8767 = vunpack.c.h.b16 %v8415
          %v8768 = vunpack.c.l.b16 %v8416
          %v8769 = vunpack.c.h.b16 %v8416
          %v8770 = vunpack.c.l.b16 %v8417
          %v8771 = vunpack.c.h.b16 %v8417
          %v8772 = vunpack.c.l.b16 %v8418
          %v8773 = vunpack.c.h.b16 %v8418
          %v8774 = vunpack.c.l.b16 %v8419
          %v8775 = vunpack.c.h.b16 %v8419
          %v8776 = vunpack.c.l.b16 %v8420
          %v8777 = vunpack.c.h.b16 %v8420
          %v8778 = vunpack.c.l.b16 %v8421
          %v8779 = vunpack.c.h.b16 %v8421
          %v8780 = vunpack.c.l.b16 %v8422
          %v8781 = vunpack.c.h.b16 %v8422
          %v8782 = vunpack.c.l.b16 %v8423
          %v8783 = vunpack.c.h.b16 %v8423
          %v8784 = vunpack.c.l.b16 %v8424
          %v8785 = vunpack.c.h.b16 %v8424
          %v8786 = vunpack.c.l.b16 %v8425
          %v8787 = vunpack.c.h.b16 %v8425
          %v8788 = vunpack.c.l.b16 %v8426
          %v8789 = vunpack.c.h.b16 %v8426
          %v8790 = vunpack.c.l.b16 %v8427
          %v8791 = vunpack.c.h.b16 %v8427
          %v8792 = vunpack.c.l.b16 %v8428
          %v8793 = vunpack.c.h.b16 %v8428
          %v8794 = vunpack.c.l.b16 %v8429
          %v8795 = vunpack.c.h.b16 %v8429
          %v8796 = vunpack.c.l.b16 %v8430
          %v8797 = vunpack.c.h.b16 %v8430
          %v8798 = vunpack.c.l.b16 %v8431
          %v8799 = vunpack.c.h.b16 %v8431
          %v8800 = vunpack.c.l.b16 %v8432
          %v8801 = vunpack.c.h.b16 %v8432
          %v8802 = vunpack.c.l.b16 %v8433
          %v8803 = vunpack.c.h.b16 %v8433
          %v8804 = vunpack.c.l.b16 %v8434
          %v8805 = vunpack.c.h.b16 %v8434
          %v8806 = vunpack.c.l.b16 %v8435
          %v8807 = vunpack.c.h.b16 %v8435
          %v8808 = vunpack.c.l.b16 %v8436
          %v8809 = vunpack.c.h.b16 %v8436
          %v8810 = vunpack.c.l.b16 %v8437
          %v8811 = vunpack.c.h.b16 %v8437
          %v8812 = vunpack.c.l.b16 %v8438
          %v8813 = vunpack.c.h.b16 %v8438
          %v8814 = vunpack.c.l.b16 %v8439
          %v8815 = vunpack.c.h.b16 %v8439
          %v8816 = vunpack.c.l.b16 %v8440
          %v8817 = vunpack.c.h.b16 %v8440
          %v8818 = vunpack.c.l.b16 %v8441
          %v8819 = vunpack.c.h.b16 %v8441
          %v8820 = vunpack.c.l.b16 %v8442
          %v8821 = vunpack.c.h.b16 %v8442
          %v8822 = vunpack.c.l.b16 %v8443
          %v8823 = vunpack.c.h.b16 %v8443
          %v8824 = vunpack.c.l.b16 %v8444
          %v8825 = vunpack.c.h.b16 %v8444
          %v8826 = vunpack.c.l.b16 %v8445
          %v8827 = vunpack.c.h.b16 %v8445
          %v8828 = vunpack.c.l.b16 %v8446
          %v8829 = vunpack.c.h.b16 %v8446
          %v8830 = vunpack.c.l.b16 %v8447
          %v8831 = vunpack.c.h.b16 %v8447
          %v8832 = vunpack.c.l.b16 %v8448
          %v8833 = vunpack.c.h.b16 %v8448
          %v8834 = vunpack.c.l.b16 %v8449
          %v8835 = vunpack.c.h.b16 %v8449
          %v8836 = vunpack.c.l.b16 %v8450
          %v8837 = vunpack.c.h.b16 %v8450
          %v8838 = vunpack.c.l.b16 %v8451
          %v8839 = vunpack.c.h.b16 %v8451
          %v8840 = vunpack.c.l.b16 %v8452
          %v8841 = vunpack.c.h.b16 %v8452
          %v8842 = vunpack.c.l.b16 %v8453
          %v8843 = vunpack.c.h.b16 %v8453
          %v8844 = vunpack.c.l.b16 %v8454
          %v8845 = vunpack.c.h.b16 %v8454
          %v8846 = vunpack.c.l.b16 %v8455
          %v8847 = vunpack.c.h.b16 %v8455
          %v8848 = vunpack.c.l.b16 %v8456
          %v8849 = vunpack.c.h.b16 %v8456
          %v8850 = vunpack.c.l.b16 %v8457
          %v8851 = vunpack.c.h.b16 %v8457
          %v8852 = vunpack.c.l.b16 %v8458
          %v8853 = vunpack.c.h.b16 %v8458
          %v8854 = vunpack.c.l.b16 %v8459
          %v8855 = vunpack.c.h.b16 %v8459
          %v8856 = vpack.c.b16 %v8602, %v8600
          %v8857 = vpack.c.b16 %v8603, %v8601
          %v8858 = vpack.c.b16 %v8606, %v8604
          %v8859 = vpack.c.b16 %v8607, %v8605
          %v8860 = vpack.c.b16 %v8610, %v8608
          %v8861 = vpack.c.b16 %v8611, %v8609
          %v8862 = vpack.c.b16 %v8614, %v8612
          %v8863 = vpack.c.b16 %v8615, %v8613
          %v8864 = vpack.c.b16 %v8618, %v8616
          %v8865 = vpack.c.b16 %v8619, %v8617
          %v8866 = vpack.c.b16 %v8622, %v8620
          %v8867 = vpack.c.b16 %v8623, %v8621
          %v8868 = vpack.c.b16 %v8626, %v8624
          %v8869 = vpack.c.b16 %v8627, %v8625
          %v8870 = vpack.c.b16 %v8630, %v8628
          %v8871 = vpack.c.b16 %v8631, %v8629
          %v8872 = vpack.c.b16 %v8634, %v8632
          %v8873 = vpack.c.b16 %v8635, %v8633
          %v8874 = vpack.c.b16 %v8638, %v8636
          %v8875 = vpack.c.b16 %v8639, %v8637
          %v8876 = vpack.c.b16 %v8642, %v8640
          %v8877 = vpack.c.b16 %v8643, %v8641
          %v8878 = vpack.c.b16 %v8646, %v8644
          %v8879 = vpack.c.b16 %v8647, %v8645
          %v8880 = vpack.c.b16 %v8650, %v8648
          %v8881 = vpack.c.b16 %v8651, %v8649
          %v8882 = vpack.c.b16 %v8654, %v8652
          %v8883 = vpack.c.b16 %v8655, %v8653
          %v8884 = vpack.c.b16 %v8658, %v8656
          %v8885 = vpack.c.b16 %v8659, %v8657
          %v8886 = vpack.c.b16 %v8662, %v8660
          %v8887 = vpack.c.b16 %v8663, %v8661
          %v8888 = vpack.c.b16 %v8666, %v8664
          %v8889 = vpack.c.b16 %v8667, %v8665
          %v8890 = vpack.c.b16 %v8670, %v8668
          %v8891 = vpack.c.b16 %v8671, %v8669
          %v8892 = vpack.c.b16 %v8674, %v8672
          %v8893 = vpack.c.b16 %v8675, %v8673
          %v8894 = vpack.c.b16 %v8678, %v8676
          %v8895 = vpack.c.b16 %v8679, %v8677
          %v8896 = vpack.c.b16 %v8682, %v8680
          %v8897 = vpack.c.b16 %v8683, %v8681
          %v8898 = vpack.c.b16 %v8686, %v8684
          %v8899 = vpack.c.b16 %v8687, %v8685
          %v8900 = vpack.c.b16 %v8690, %v8688
          %v8901 = vpack.c.b16 %v8691, %v8689
          %v8902 = vpack.c.b16 %v8694, %v8692
          %v8903 = vpack.c.b16 %v8695, %v8693
          %v8904 = vpack.c.b16 %v8698, %v8696
          %v8905 = vpack.c.b16 %v8699, %v8697
          %v8906 = vpack.c.b16 %v8702, %v8700
          %v8907 = vpack.c.b16 %v8703, %v8701
          %v8908 = vpack.c.b16 %v8706, %v8704
          %v8909 = vpack.c.b16 %v8707, %v8705
          %v8910 = vpack.c.b16 %v8710, %v8708
          %v8911 = vpack.c.b16 %v8711, %v8709
          %v8912 = vpack.c.b16 %v8714, %v8712
          %v8913 = vpack.c.b16 %v8715, %v8713
          %v8914 = vpack.c.b16 %v8718, %v8716
          %v8915 = vpack.c.b16 %v8719, %v8717
          %v8916 = vpack.c.b16 %v8722, %v8720
          %v8917 = vpack.c.b16 %v8723, %v8721
          %v8918 = vpack.c.b16 %v8726, %v8724
          %v8919 = vpack.c.b16 %v8727, %v8725
          %v8920 = vpack.c.b16 %v8730, %v8728
          %v8921 = vpack.c.b16 %v8731, %v8729
          %v8922 = vpack.c.b16 %v8734, %v8732
          %v8923 = vpack.c.b16 %v8735, %v8733
          %v8924 = vpack.c.b16 %v8738, %v8736
          %v8925 = vpack.c.b16 %v8739, %v8737
          %v8926 = vpack.c.b16 %v8742, %v8740
          %v8927 = vpack.c.b16 %v8743, %v8741
          %v8928 = vpack.c.b16 %v8746, %v8744
          %v8929 = vpack.c.b16 %v8747, %v8745
          %v8930 = vpack.c.b16 %v8750, %v8748
          %v8931 = vpack.c.b16 %v8751, %v8749
          %v8932 = vpack.c.b16 %v8754, %v8752
          %v8933 = vpack.c.b16 %v8755, %v8753
          %v8934 = vpack.c.b16 %v8758, %v8756
          %v8935 = vpack.c.b16 %v8759, %v8757
          %v8936 = vpack.c.b16 %v8762, %v8760
          %v8937 = vpack.c.b16 %v8763, %v8761
          %v8938 = vpack.c.b16 %v8766, %v8764
          %v8939 = vpack.c.b16 %v8767, %v8765
          %v8940 = vpack.c.b16 %v8770, %v8768
          %v8941 = vpack.c.b16 %v8771, %v8769
          %v8942 = vpack.c.b16 %v8774, %v8772
          %v8943 = vpack.c.b16 %v8775, %v8773
          %v8944 = vpack.c.b16 %v8778, %v8776
          %v8945 = vpack.c.b16 %v8779, %v8777
          %v8946 = vpack.c.b16 %v8782, %v8780
          %v8947 = vpack.c.b16 %v8783, %v8781
          %v8948 = vpack.c.b16 %v8786, %v8784
          %v8949 = vpack.c.b16 %v8787, %v8785
          %v8950 = vpack.c.b16 %v8790, %v8788
          %v8951 = vpack.c.b16 %v8791, %v8789
          %v8952 = vpack.c.b16 %v8794, %v8792
          %v8953 = vpack.c.b16 %v8795, %v8793
          %v8954 = vpack.c.b16 %v8798, %v8796
          %v8955 = vpack.c.b16 %v8799, %v8797
          %v8956 = vpack.c.b16 %v8802, %v8800
          %v8957 = vpack.c.b16 %v8803, %v8801
          %v8958 = vpack.c.b16 %v8806, %v8804
          %v8959 = vpack.c.b16 %v8807, %v8805
          %v8960 = vpack.c.b16 %v8810, %v8808
          %v8961 = vpack.c.b16 %v8811, %v8809
          %v8962 = vpack.c.b16 %v8814, %v8812
          %v8963 = vpack.c.b16 %v8815, %v8813
          %v8964 = vpack.c.b16 %v8818, %v8816
          %v8965 = vpack.c.b16 %v8819, %v8817
          %v8966 = vpack.c.b16 %v8822, %v8820
          %v8967 = vpack.c.b16 %v8823, %v8821
          %v8968 = vpack.c.b16 %v8826, %v8824
          %v8969 = vpack.c.b16 %v8827, %v8825
          %v8970 = vpack.c.b16 %v8830, %v8828
          %v8971 = vpack.c.b16 %v8831, %v8829
          %v8972 = vpack.c.b16 %v8834, %v8832
          %v8973 = vpack.c.b16 %v8835, %v8833
          %v8974 = vpack.c.b16 %v8838, %v8836
          %v8975 = vpack.c.b16 %v8839, %v8837
          %v8976 = vpack.c.b16 %v8842, %v8840
          %v8977 = vpack.c.b16 %v8843, %v8841
          %v8978 = vpack.c.b16 %v8846, %v8844
          %v8979 = vpack.c.b16 %v8847, %v8845
          %v8980 = vpack.c.b16 %v8850, %v8848
          %v8981 = vpack.c.b16 %v8851, %v8849
          %v8982 = vpack.c.b16 %v8854, %v8852
          %v8983 = vpack.c.b16 %v8855, %v8853
          %9112 = vmatprep.subr.bf16.mxu0 %v8857
          %9113 = vmatpush1.bf16.msra.mxu0 %v8856
          %9114 = vmatprep.subr.bf16.mxu0 %v8859
          %9115 = vmatpush1.bf16.msra.mxu0 %v8858
          %9116 = vmatprep.subr.bf16.mxu0 %v8861
          %9117 = vmatpush1.bf16.msra.mxu0 %v8860
          %9118 = vmatprep.subr.bf16.mxu0 %v8863
          %9119 = vmatpush1.bf16.msra.mxu0 %v8862
          %9120 = vmatprep.subr.bf16.mxu0 %v8865
          %9121 = vmatpush1.bf16.msra.mxu0 %v8864
          %9122 = vmatprep.subr.bf16.mxu0 %v8867
          %9123 = vmatpush1.bf16.msra.mxu0 %v8866
          %9124 = vmatprep.subr.bf16.mxu0 %v8869
          %9125 = vmatpush1.bf16.msra.mxu0 %v8868
          %9126 = vmatprep.subr.bf16.mxu0 %v8871
          %9127 = vmatpush1.bf16.msra.mxu0 %v8870
          %9128 = vmatprep.subr.bf16.mxu0 %v8873
          %9129 = vmatpush1.bf16.msra.mxu0 %v8872
          %9130 = vmatprep.subr.bf16.mxu0 %v8875
          %9131 = vmatpush1.bf16.msra.mxu0 %v8874
          %9132 = vmatprep.subr.bf16.mxu0 %v8877
          %9133 = vmatpush1.bf16.msra.mxu0 %v8876
          %9134 = vmatprep.subr.bf16.mxu0 %v8879
          %9135 = vmatpush1.bf16.msra.mxu0 %v8878
          %9136 = vmatprep.subr.bf16.mxu0 %v8881
          %9137 = vmatpush1.bf16.msra.mxu0 %v8880
          %9138 = vmatprep.subr.bf16.mxu0 %v8883
          %9139 = vmatpush1.bf16.msra.mxu0 %v8882
          %9140 = vmatprep.subr.bf16.mxu0 %v8885
          %9141 = vmatpush1.bf16.msra.mxu0 %v8884
          %9142 = vmatprep.subr.bf16.mxu0 %v8887
          %9143 = vmatpush1.bf16.msra.mxu0 %v8886
          %9144 = vmatprep.mubr.bf16.mxu0 %v8325
          %9145 = vmatmul.mubr.bf16.gmra.mrb[0].mxu0 %v8324
          %v9146 = vpop.f32.mrb[0].mxu0
          %v9147 = vadd.f32 %v8465, %v9146
          %v9148 = vpop.f32.mrb[0].mxu0
          %v9149 = vadd.f32 %v8469, %v9148
          %v9150 = vpop.f32.mrb[0].mxu0
          %v9151 = vpop.f32.mrb[0].mxu0
          %9152 = vdwg.mxu0
          %9153 = vmatprep.subr.bf16.mxu0 %v8889
          %9154 = vmatpush1.bf16.msra.mxu0 %v8888
          %9155 = vmatprep.subr.bf16.mxu0 %v8891
          %9156 = vmatpush1.bf16.msra.mxu0 %v8890
          %9157 = vmatprep.subr.bf16.mxu0 %v8893
          %9158 = vmatpush1.bf16.msra.mxu0 %v8892
          %9159 = vmatprep.subr.bf16.mxu0 %v8895
          %9160 = vmatpush1.bf16.msra.mxu0 %v8894
          %9161 = vmatprep.subr.bf16.mxu0 %v8897
          %9162 = vmatpush1.bf16.msra.mxu0 %v8896
          %9163 = vmatprep.subr.bf16.mxu0 %v8899
          %9164 = vmatpush1.bf16.msra.mxu0 %v8898
          %9165 = vmatprep.subr.bf16.mxu0 %v8901
          %9166 = vmatpush1.bf16.msra.mxu0 %v8900
          %9167 = vmatprep.subr.bf16.mxu0 %v8903
          %9168 = vmatpush1.bf16.msra.mxu0 %v8902
          %9169 = vmatprep.subr.bf16.mxu0 %v8905
          %9170 = vmatpush1.bf16.msra.mxu0 %v8904
          %9171 = vmatprep.subr.bf16.mxu0 %v8907
          %9172 = vmatpush1.bf16.msra.mxu0 %v8906
          %9173 = vmatprep.subr.bf16.mxu0 %v8909
          %9174 = vmatpush1.bf16.msra.mxu0 %v8908
          %9175 = vmatprep.subr.bf16.mxu0 %v8911
          %9176 = vmatpush1.bf16.msra.mxu0 %v8910
          %9177 = vmatprep.subr.bf16.mxu0 %v8913
          %9178 = vmatpush1.bf16.msra.mxu0 %v8912
          %9179 = vmatprep.subr.bf16.mxu0 %v8915
          %9180 = vmatpush1.bf16.msra.mxu0 %v8914
          %9181 = vmatprep.subr.bf16.mxu0 %v8917
          %9182 = vmatpush1.bf16.msra.mxu0 %v8916
          %9183 = vmatprep.subr.bf16.mxu0 %v8919
          %9184 = vmatpush1.bf16.msra.mxu0 %v8918
          %9185 = vmatprep.mubr.bf16.mxu0 %v8327
          %9186 = vmatmul.mubr.bf16.gmra.mrb[0].mxu0 %v8326
          %v9187 = vpop.f32.mrb[0].mxu0
          %v9188 = vadd.f32 %v9147, %v9187
          %v9189 = vpop.f32.mrb[0].mxu0
          %v9190 = vadd.f32 %v9149, %v9189
          %v9191 = vpop.f32.mrb[0].mxu0
          %v9192 = vpop.f32.mrb[0].mxu0
          %9193 = vdwg.mxu0
          %9194 = vmatprep.subr.bf16.mxu0 %v8921
          %9195 = vmatpush1.bf16.msra.mxu0 %v8920
          %9196 = vmatprep.subr.bf16.mxu0 %v8923
          %9197 = vmatpush1.bf16.msra.mxu0 %v8922
          %9198 = vmatprep.subr.bf16.mxu0 %v8925
          %9199 = vmatpush1.bf16.msra.mxu0 %v8924
          %9200 = vmatprep.subr.bf16.mxu0 %v8927
          %9201 = vmatpush1.bf16.msra.mxu0 %v8926
          %9202 = vmatprep.subr.bf16.mxu0 %v8929
          %9203 = vmatpush1.bf16.msra.mxu0 %v8928
          %9204 = vmatprep.subr.bf16.mxu0 %v8931
          %9205 = vmatpush1.bf16.msra.mxu0 %v8930
          %9206 = vmatprep.subr.bf16.mxu0 %v8933
          %9207 = vmatpush1.bf16.msra.mxu0 %v8932
          %9208 = vmatprep.subr.bf16.mxu0 %v8935
          %9209 = vmatpush1.bf16.msra.mxu0 %v8934
          %9210 = vmatprep.subr.bf16.mxu0 %v8937
          %9211 = vmatpush1.bf16.msra.mxu0 %v8936
          %9212 = vmatprep.subr.bf16.mxu0 %v8939
          %9213 = vmatpush1.bf16.msra.mxu0 %v8938
          %9214 = vmatprep.subr.bf16.mxu0 %v8941
          %9215 = vmatpush1.bf16.msra.mxu0 %v8940
          %9216 = vmatprep.subr.bf16.mxu0 %v8943
          %9217 = vmatpush1.bf16.msra.mxu0 %v8942
          %9218 = vmatprep.subr.bf16.mxu0 %v8945
          %9219 = vmatpush1.bf16.msra.mxu0 %v8944
          %9220 = vmatprep.subr.bf16.mxu0 %v8947
          %9221 = vmatpush1.bf16.msra.mxu0 %v8946
          %9222 = vmatprep.subr.bf16.mxu0 %v8949
          %9223 = vmatpush1.bf16.msra.mxu0 %v8948
          %9224 = vmatprep.subr.bf16.mxu0 %v8951
          %9225 = vmatpush1.bf16.msra.mxu0 %v8950
          %9226 = vmatprep.mubr.bf16.mxu0 %v8329
          %9227 = vmatmul.mubr.bf16.gmra.mrb[0].mxu0 %v8328
          %v9228 = vpop.f32.mrb[0].mxu0
          %v9229 = vadd.f32 %v9188, %v9228
          %v9230 = vpop.f32.mrb[0].mxu0
          %v9231 = vadd.f32 %v9190, %v9230
          %v9232 = vpop.f32.mrb[0].mxu0
          %v9233 = vpop.f32.mrb[0].mxu0
          %9234 = vdwg.mxu0
          %9235 = vmatprep.subr.bf16.mxu0 %v8953
          %9236 = vmatpush1.bf16.msra.mxu0 %v8952
          %9237 = vmatprep.subr.bf16.mxu0 %v8955
          %9238 = vmatpush1.bf16.msra.mxu0 %v8954
          %9239 = vmatprep.subr.bf16.mxu0 %v8957
          %9240 = vmatpush1.bf16.msra.mxu0 %v8956
          %9241 = vmatprep.subr.bf16.mxu0 %v8959
          %9242 = vmatpush1.bf16.msra.mxu0 %v8958
          %9243 = vmatprep.subr.bf16.mxu0 %v8961
          %9244 = vmatpush1.bf16.msra.mxu0 %v8960
          %9245 = vmatprep.subr.bf16.mxu0 %v8963
          %9246 = vmatpush1.bf16.msra.mxu0 %v8962
          %9247 = vmatprep.subr.bf16.mxu0 %v8965
          %9248 = vmatpush1.bf16.msra.mxu0 %v8964
          %9249 = vmatprep.subr.bf16.mxu0 %v8967
          %9250 = vmatpush1.bf16.msra.mxu0 %v8966
          %9251 = vmatprep.subr.bf16.mxu0 %v8969
          %9252 = vmatpush1.bf16.msra.mxu0 %v8968
          %9253 = vmatprep.subr.bf16.mxu0 %v8971
          %9254 = vmatpush1.bf16.msra.mxu0 %v8970
          %9255 = vmatprep.subr.bf16.mxu0 %v8973
          %9256 = vmatpush1.bf16.msra.mxu0 %v8972
          %9257 = vmatprep.subr.bf16.mxu0 %v8975
          %9258 = vmatpush1.bf16.msra.mxu0 %v8974
          %9259 = vmatprep.subr.bf16.mxu0 %v8977
          %9260 = vmatpush1.bf16.msra.mxu0 %v8976
          %9261 = vmatprep.subr.bf16.mxu0 %v8979
          %9262 = vmatpush1.bf16.msra.mxu0 %v8978
          %9263 = vmatprep.subr.bf16.mxu0 %v8981
          %9264 = vmatpush1.bf16.msra.mxu0 %v8980
          %9265 = vmatprep.subr.bf16.mxu0 %v8983
          %9266 = vmatpush1.bf16.msra.mxu0 %v8982
          %9267 = vmatprep.mubr.bf16.mxu0 %v8331
          %9268 = vmatmul.mubr.bf16.gmra.mrb[0].mxu0 %v8330
          %v9269 = vpop.f32.mrb[0].mxu0
          %v9270 = vadd.f32 %v9229, %v9269
          %v9271 = vpop.f32.mrb[0].mxu0
          %v9272 = vadd.f32 %v9231, %v9271
          %v9273 = vpop.f32.mrb[0].mxu0
          %v9274 = vpop.f32.mrb[0].mxu0
          %9275 = vdwg.mxu0
          %v9276 = vmax.f32 %v9270, 0.0
          %v9277 = vmax.f32 %v9272, 0.0
          %v9278 = vpack.c.bf16 %v9276, %v9276
          %v9279 = vpack.c.bf16 %v9277, %v9277
          %v9280 = vld [vmem:[#allocation15] sm:$0xf]
          %v9281 = vld [vmem:[#allocation15 + $0x4] sm:$0xf]
          %v9282 = vld [vmem:[#allocation15 + $0x8] sm:$0xf]
          %v9283 = vld [vmem:[#allocation15 + $0xc] sm:$0xf]
          %v9284 = vld [vmem:[#allocation15 + $0x10] sm:$0xf]
          %v9285 = vld [vmem:[#allocation15 + $0x14] sm:$0xf]
          %v9286 = vld [vmem:[#allocation15 + $0x18] sm:$0xf]
          %v9287 = vld [vmem:[#allocation15 + $0x1c] sm:$0xf]
          %v9288 = vld [vmem:[#allocation15 + $0x20] sm:$0xf]
          %v9289 = vld [vmem:[#allocation15 + $0x24] sm:$0xf]
          %v9290 = vld [vmem:[#allocation15 + $0x28] sm:$0xf]
          %v9291 = vld [vmem:[#allocation15 + $0x2c] sm:$0xf]
          %v9292 = vld [vmem:[#allocation15 + $0x30] sm:$0xf]
          %v9293 = vld [vmem:[#allocation15 + $0x34] sm:$0xf]
          %v9294 = vld [vmem:[#allocation15 + $0x38] sm:$0xf]
          %v9295 = vld [vmem:[#allocation15 + $0x3c] sm:$0xf]
          %v9296 = vld [vmem:[#allocation15 + $0x40] sm:$0xf]
          %v9297 = vld [vmem:[#allocation15 + $0x44] sm:$0xf]
          %v9298 = vld [vmem:[#allocation15 + $0x48] sm:$0xf]
          %v9299 = vld [vmem:[#allocation15 + $0x4c] sm:$0xf]
          %v9300 = vld [vmem:[#allocation15 + $0x50] sm:$0xf]
          %v9301 = vld [vmem:[#allocation15 + $0x54] sm:$0xf]
          %v9302 = vld [vmem:[#allocation15 + $0x58] sm:$0xf]
          %v9303 = vld [vmem:[#allocation15 + $0x5c] sm:$0xf]
          %v9304 = vld [vmem:[#allocation15 + $0x60] sm:$0xf]
          %v9305 = vld [vmem:[#allocation15 + $0x64] sm:$0xf]
          %v9306 = vld [vmem:[#allocation15 + $0x68] sm:$0xf]
          %v9307 = vld [vmem:[#allocation15 + $0x6c] sm:$0xf]
          %v9308 = vld [vmem:[#allocation15 + $0x70] sm:$0xf]
          %v9309 = vld [vmem:[#allocation15 + $0x74] sm:$0xf]
          %v9310 = vld [vmem:[#allocation15 + $0x78] sm:$0xf]
          %v9311 = vld [vmem:[#allocation15 + $0x7c] sm:$0xf]
          %v9312 = vld [vmem:[#allocation17] sm:$0x1]
          %v9314 = vlaneseq
          %v9315 = vshrl.u32 %v9314, 7
          %v9316 = vsub.s32 0, %v9315
          %v9317 = vrot.slane %v9312, %v9316
          %v9351 = vunpack.c.l.b16 %v9280
          %v9352 = vunpack.c.l.b16 %v9281
          %v9353 = vunpack.c.l.b16 %v9282
          %v9354 = vunpack.c.l.b16 %v9283
          %v9355 = vunpack.c.l.b16 %v9284
          %v9356 = vunpack.c.l.b16 %v9285
          %v9357 = vunpack.c.l.b16 %v9286
          %v9358 = vunpack.c.l.b16 %v9287
          %v9359 = vunpack.c.l.b16 %v9288
          %v9360 = vunpack.c.l.b16 %v9289
          %v9361 = vunpack.c.l.b16 %v9290
          %v9362 = vunpack.c.l.b16 %v9291
          %v9363 = vunpack.c.l.b16 %v9292
          %v9364 = vunpack.c.l.b16 %v9293
          %v9365 = vunpack.c.l.b16 %v9294
          %v9366 = vunpack.c.l.b16 %v9295
          %v9367 = vunpack.c.l.b16 %v9296
          %v9368 = vunpack.c.l.b16 %v9297
          %v9369 = vunpack.c.l.b16 %v9298
          %v9370 = vunpack.c.l.b16 %v9299
          %v9371 = vunpack.c.l.b16 %v9300
          %v9372 = vunpack.c.l.b16 %v9301
          %v9373 = vunpack.c.l.b16 %v9302
          %v9374 = vunpack.c.l.b16 %v9303
          %v9375 = vunpack.c.l.b16 %v9304
          %v9376 = vunpack.c.l.b16 %v9305
          %v9377 = vunpack.c.l.b16 %v9306
          %v9378 = vunpack.c.l.b16 %v9307
          %v9379 = vunpack.c.l.b16 %v9308
          %v9380 = vunpack.c.l.b16 %v9309
          %v9381 = vunpack.c.l.b16 %v9310
          %v9382 = vunpack.c.l.b16 %v9311
          %v9383 = vpack.c.b16 %v9352, %v9351
          %v9384 = vpack.c.b16 %v9354, %v9353
          %v9385 = vpack.c.b16 %v9356, %v9355
          %v9386 = vpack.c.b16 %v9358, %v9357
          %v9387 = vpack.c.b16 %v9360, %v9359
          %v9388 = vpack.c.b16 %v9362, %v9361
          %v9389 = vpack.c.b16 %v9364, %v9363
          %v9390 = vpack.c.b16 %v9366, %v9365
          %v9391 = vpack.c.b16 %v9368, %v9367
          %v9392 = vpack.c.b16 %v9370, %v9369
          %v9393 = vpack.c.b16 %v9372, %v9371
          %v9394 = vpack.c.b16 %v9374, %v9373
          %v9395 = vpack.c.b16 %v9376, %v9375
          %v9396 = vpack.c.b16 %v9378, %v9377
          %v9397 = vpack.c.b16 %v9380, %v9379
          %v9398 = vpack.c.b16 %v9382, %v9381
          %9415 = vmatprep.subr.bf16.mxu0 0
          %9416 = vmatpush1.bf16.msra.mxu0 %v9383
          %9417 = vmatprep.subr.bf16.mxu0 0
          %9418 = vmatpush1.bf16.msra.mxu0 %v9384
          %9419 = vmatprep.subr.bf16.mxu0 0
          %9420 = vmatpush1.bf16.msra.mxu0 %v9385
          %9421 = vmatprep.subr.bf16.mxu0 0
          %9422 = vmatpush1.bf16.msra.mxu0 %v9386
          %9423 = vmatprep.subr.bf16.mxu0 0
          %9424 = vmatpush1.bf16.msra.mxu0 %v9387
          %9425 = vmatprep.subr.bf16.mxu0 0
          %9426 = vmatpush1.bf16.msra.mxu0 %v9388
          %9427 = vmatprep.subr.bf16.mxu0 0
          %9428 = vmatpush1.bf16.msra.mxu0 %v9389
          %9429 = vmatprep.subr.bf16.mxu0 0
          %9430 = vmatpush1.bf16.msra.mxu0 %v9390
          %9431 = vmatprep.subr.bf16.mxu0 0
          %9432 = vmatpush1.bf16.msra.mxu0 %v9391
          %9433 = vmatprep.subr.bf16.mxu0 0
          %9434 = vmatpush1.bf16.msra.mxu0 %v9392
          %9435 = vmatprep.subr.bf16.mxu0 0
          %9436 = vmatpush1.bf16.msra.mxu0 %v9393
          %9437 = vmatprep.subr.bf16.mxu0 0
          %9438 = vmatpush1.bf16.msra.mxu0 %v9394
          %9439 = vmatprep.subr.bf16.mxu0 0
          %9440 = vmatpush1.bf16.msra.mxu0 %v9395
          %9441 = vmatprep.subr.bf16.mxu0 0
          %9442 = vmatpush1.bf16.msra.mxu0 %v9396
          %9443 = vmatprep.subr.bf16.mxu0 0
          %9444 = vmatpush1.bf16.msra.mxu0 %v9397
          %9445 = vmatprep.subr.bf16.mxu0 0
          %9446 = vmatpush1.bf16.msra.mxu0 %v9398
          %9447 = vmatprep.mubr.bf16.mxu0 %v9279
          %9448 = vmatmul.mubr.bf16.gmra.mrb[0].mxu0 %v9278
          %v9449 = vpop.f32.mrb[0].mxu0
          %v9450 = vadd.f32 %v9317, %v9449
          %v9451 = vpop.f32.mrb[0].mxu0
          %v9452 = vpop.f32.mrb[0].mxu0
          %v9453 = vpop.f32.mrb[0].mxu0
          %9454 = vdwg.mxu0
          %9455 = vst [vmem:[#allocation18] sm:$0xff] %v9450
        $region100: #{tpu_custom_call.1} parent=55 // pred_fallthru
          _
        // Predicated region
        $region101: #{tpu_custom_call.1} parent=55 // pred_check
          %p9456 = pneg %p254
        $region102: #{tpu_custom_call.1} parent=55 // pred_check_branch
          %9458 = sbr.rel (%p9456) target = $region104
        $region103: #{tpu_custom_call.1} parent=55 // pred_region
          %s9460 = ssub.s32 128, 128
          %9461 = vsyncadd [#allocation5], %s9460
          %s9463 = sshll.u32 [#allocation18], 4
          %s9464 = int_to_ptr.vmem [resolvable:$true] %s9463
          %9466 = dma.vmem_to_hbm [thread:$0]  %s9464, 128, %s9, [#allocation5]
        $region104: #{tpu_custom_call.1} parent=55 // pred_fallthru
          _
        // Predicated region
        $region105: #{tpu_custom_call.1} parent=55 // pred_check
          %p9467 = pneg %p254
        $region106: #{tpu_custom_call.1} parent=55 // pred_check_branch
          %9469 = sbr.rel (%p9467) target = $region108
        $region107: #{tpu_custom_call.1} parent=55 // pred_region
          %9470 = dma.done [#allocation5], 128
        $region108: #{tpu_custom_call.1} parent=55 // pred_fallthru
          _
      $region56: #{tpu_custom_call.1} parent=5 // pred_fallthru
        _
      %p9471 = scmp.le.s32.totalorder 2, %s27
      // Predicated region
      $region109: #{tpu_custom_call.1} parent=5 // pred_check
        %p9472 = pneg %p9471
      $region110: #{tpu_custom_call.1} parent=5 // pred_check_branch
        %9474 = sbr.rel (%p9472) target = $region112
      $region111: #{tpu_custom_call.1} parent=5 // pred_region
        %s9475 = ssub.s32 %s27, 2
      $region112: #{tpu_custom_call.1} parent=5 // pred_fallthru
        _
    $region6: #{tpu_custom_call.1} parent=1 // loop_footer
      %s31 = sadd.s32 1, %s27
    $region7: #{tpu_custom_call.1} parent=1 // loop_footer_branch
      %26 = sbr.rel target = $region3
    $region8: #{tpu_custom_call.1} parent=1 // loop_exit
      _
    %9476 = vsyncpa [#allocation4], 1
    %s9477 = scalar_lea.sflag [#allocation4], 1
    %9478 = vsyncpa %s9477, 1
    %9479 = vsyncpa [#allocation7], 1
    %s9480 = scalar_lea.sflag [#allocation7], 1
    %9481 = vsyncpa %s9480, 1
    %9482 = vsyncpa [#allocation10], 1
    %s9483 = scalar_lea.sflag [#allocation10], 1
    %9484 = vsyncpa %s9483, 1
    %9485 = vsyncpa [#allocation13], 1
    %9486 = vsyncpa [#allocation16], 1
    %9487 = vsyncpa [#allocation5], 1
    %s9488 = scalar_lea.sflag [#allocation5], 1
    %9489 = vsyncpa %s9488, 1

</llo_original>
